<compile_context>
chip_gen: v6e
topology: v6e:2x2x1
jax: 0.10.0
libtpu: 0.0.40
codegen_flags: <defaults>
</compile_context>

<pallas_src>
import functools

import jax
import jax.numpy as jnp
from jax.experimental import pallas as pl
from jax.experimental.pallas import tpu as pltpu

MATMUL_DTYPE = jnp.bfloat16  # MXU operand dtype; accumulation / state stay f32

# Set to pl.Buffered(1) on v7x to single-buffer invariant weights (see TODO above).
INVARIANT_WEIGHT_PIPELINE_MODE = None


def _wspec(block_shape, index_map):
    """BlockSpec for grid-invariant (constant index_map) weight operands."""
    if INVARIANT_WEIGHT_PIPELINE_MODE is None:
        return pl.BlockSpec(block_shape, index_map)
    return pl.BlockSpec(block_shape, index_map,
                        pipeline_mode=INVARIANT_WEIGHT_PIPELINE_MODE)


# --------------------------------------------------------------------------
# Tiling helpers
# --------------------------------------------------------------------------

def _row_block(m, cap=512):
    """Largest row-block <= cap that tiles m and is a multiple of 8, else m."""
    if m <= cap:
        return m
    for cand in range(cap - cap % 8, 7, -8):
        if m % cand == 0:
            return cand
    return m


def _col_block(n, cap=512):
    """Largest column-block <= cap that tiles n and is a multiple of 128, else n."""
    if n <= cap:
        return n
    for cand in range(cap - cap % 128, 127, -128):
        if n % cand == 0:
            return cand
    return n


def _time_block(s, per_step_bytes, cap=16, vmem_budget=8 << 20):
    """Largest divisor of s <= cap whose streamed per-block buffers fit the budget."""
    cap = max(1, min(cap, vmem_budget // max(per_step_bytes, 1)))
    for cand in range(min(s, cap), 0, -1):
        if s % cand == 0:
            return cand
    return 1


# --------------------------------------------------------------------------
# Linear kernel (bias fused, optional ReLU), tiled over rows and columns
# --------------------------------------------------------------------------

def _linear_kernel(x_ref, w_ref, b_ref, o_ref, *, relu):
    y = jnp.dot(x_ref[...].astype(MATMUL_DTYPE), w_ref[...],
                preferred_element_type=jnp.float32)
    y = y + b_ref[...]
    if relu:
        y = jnp.maximum(y, 0.0)
    o_ref[...] = y.astype(o_ref.dtype)


def linear(x, w_t, b, relu=False, out_dtype=jnp.float32):
    """x: (M, K) f32, w_t: (K, N) bf16 (pre-transposed), b: (N,) f32 -> (M, N)."""
    M, K = x.shape
    N = w_t.shape[1]
    mb = _row_block(M)
    nb = _col_block(N)
    return pl.pallas_call(
        functools.partial(_linear_kernel, relu=relu),
        out_shape=jax.ShapeDtypeStruct((M, N), out_dtype),
        grid=(M // mb, N // nb),
        in_specs=[
            pl.BlockSpec((mb, K), lambda i, j: (i, 0)),
            _wspec((K, nb), lambda i, j: (0, j)),
            _wspec((1, nb), lambda i, j: (0, j)),
        ],
        out_specs=pl.BlockSpec((mb, nb), lambda i, j: (i, j)),
        compiler_params=pltpu.CompilerParams(
            dimension_semantics=("parallel", "parallel")),
    )(x, w_t, b.reshape(1, N))


# --------------------------------------------------------------------------
# Fused bidirectional LSTM recurrence (x-projection already hoisted out)
# --------------------------------------------------------------------------

def _bilstm_kernel(gxf_ref, gxr_ref, whh_ref, of_ref, or_ref, h_s, c_s, *,
                   hidden, t_blk, unroll, split):
    H = hidden

    @pl.when(pl.program_id(0) == 0)
    def _():
        h_s[...] = jnp.zeros_like(h_s)
        c_s[...] = jnp.zeros_like(c_s)

    # Block-diagonal recurrent weights, loaded once per grid step.
    w_hh = whh_ref[...]                                   # (2H, 8H) bf16

    def cell(gates, c_prev):
        # gate layout along 4H: [i, f, o, g] -> one sigmoid on a 3H slab
        sig = jax.nn.sigmoid(gates[:, :3 * H])
        g = jnp.tanh(gates[:, 3 * H:])
        c = sig[:, H:2 * H] * c_prev + sig[:, :H] * g
        h = sig[:, 2 * H:3 * H] * jnp.tanh(c)
        return h, c

    def step(i, carry):
        ri = t_blk - 1 - i
        # Single MXU push for BOTH directions (block-diagonal W_hh).
        m = jnp.dot(h_s[...].astype(MATMUL_DTYPE), w_hh,
                    preferred_element_type=jnp.float32)   # (B, 8H)
        if split:
            gx_f = gxf_ref[i].astype(jnp.float32)
            gx_r = gxr_ref[ri].astype(jnp.float32)
        else:
            gx_f = gxf_ref[i][:, :4 * H].astype(jnp.float32)
            gx_r = gxr_ref[ri][:, 4 * H:].astype(jnp.float32)

        h_f, c_f = cell(gx_f + m[:, :4 * H], c_s[:, :H])   # forward, time i
        h_r, c_r = cell(gx_r + m[:, 4 * H:], c_s[:, H:])   # reverse, time ri
        h_s[:, :H] = h_f
        h_s[:, H:] = h_r
        c_s[:, :H] = c_f
        c_s[:, H:] = c_r
        of_ref[i] = h_f
        or_ref[ri] = h_r
        return carry

    jax.lax.fori_loop(0, t_blk, step, 0, unroll=unroll)


def bilstm(gx, w_hh_bd_t, hidden):
    """gx: (S, B, 8H) bf16 precomputed x-projection gates (+bias); columns
    [0:4H] = forward, [4H:8H] = reverse, each in [i, f, o, g] layout.
    w_hh_bd_t: (2H, 8H) bf16 block-diagonal recurrent weights.
    Returns (out_f, out_r), each (S, B, H) f32."""
    S, B, _ = gx.shape
    H = hidden
    # VMEM-aware time block: gx (bf16, 2 specs) + 2 f32 outputs, double-buffered.
    per_step_bytes = B * (8 * H * 2 * 2 + 2 * H * 4 * 2)
    t_blk = _time_block(S, per_step_bytes)
    nblk = S // t_blk

    # Adaptive unroll: full unroll only while the per-step gate tensors stay a
    # handful of vregs, otherwise a small divisor of t_blk.
    gate_vregs = ((B + 7) // 8) * ((8 * H + 127) // 128)
    if gate_vregs <= 8:
        unroll = t_blk
    else:
        unroll = max(d for d in (1, 2, 4, 8) if t_blk % d == 0)

    # Column-blocked gx specs: each direction streams only its own 4H half
    # (falls back to full-width + in-kernel slice when 4H is not lane-aligned).
    split = (4 * H) % 128 == 0
    if split:
        gx_specs = [
            pl.BlockSpec((t_blk, B, 4 * H), lambda j: (j, 0, 0)),
            pl.BlockSpec((t_blk, B, 4 * H), lambda j: (nblk - 1 - j, 0, 1)),
        ]
    else:
        gx_specs = [
            pl.BlockSpec((t_blk, B, 8 * H), lambda j: (j, 0, 0)),
            pl.BlockSpec((t_blk, B, 8 * H), lambda j: (nblk - 1 - j, 0, 0)),
        ]

    return pl.pallas_call(
        functools.partial(_bilstm_kernel, hidden=H, t_blk=t_blk,
                          unroll=unroll, split=split),
        out_shape=(jax.ShapeDtypeStruct((S, B, H), jnp.float32),
                   jax.ShapeDtypeStruct((S, B, H), jnp.float32)),
        grid=(nblk,),
        in_specs=gx_specs + [_wspec((2 * H, 8 * H), lambda j: (0, 0))],
        out_specs=(pl.BlockSpec((t_blk, B, H), lambda j: (j, 0, 0)),
                   pl.BlockSpec((t_blk, B, H), lambda j: (nblk - 1 - j, 0, 0))),
        scratch_shapes=[pltpu.VMEM((B, 2 * H), jnp.float32),
                        pltpu.VMEM((B, 2 * H), jnp.float32)],
        compiler_params=pltpu.CompilerParams(dimension_semantics=("arbitrary",)),
    )(gx, gx, w_hh_bd_t)


# --------------------------------------------------------------------------
# Fused (residual projection) + add + LayerNorm (stats over halves, no concat)
# --------------------------------------------------------------------------

def _add_ln_store(res, of_ref, or_ref, g_ref, beta_ref, o_ref, H, eps):
    xf = res[:, :H] + of_ref[...]
    xr = res[:, H:] + or_ref[...]
    n = 2.0 * H
    mean = (jnp.sum(xf, -1, keepdims=True) + jnp.sum(xr, -1, keepdims=True)) / n
    xf = xf - mean
    xr = xr - mean
    var = (jnp.sum(xf * xf, -1, keepdims=True)
           + jnp.sum(xr * xr, -1, keepdims=True)) / n
    inv = jax.lax.rsqrt(var + eps)
    o_ref[:, :H] = xf * inv * g_ref[:, :H] + beta_ref[:, :H]
    o_ref[:, H:] = xr * inv * g_ref[:, H:] + beta_ref[:, H:]


def _res_proj_ln_kernel(x_ref, w_ref, b_ref, of_ref, or_ref, g_ref, beta_ref,
                        o_ref, *, hidden, eps):
    res = jnp.dot(x_ref[...].astype(MATMUL_DTYPE), w_ref[...],
                  preferred_element_type=jnp.float32) + b_ref[...]
    _add_ln_store(res, of_ref, or_ref, g_ref, beta_ref, o_ref, hidden, eps)


def _res_id_ln_kernel(x_ref, of_ref, or_ref, g_ref, beta_ref, o_ref, *,
                      hidden, eps):
    _add_ln_store(x_ref[...], of_ref, or_ref, g_ref, beta_ref, o_ref, hidden, eps)


def res_layernorm(x2d, of2d, or2d, w_res_t, b_res, ln_g, ln_b, eps=1e-5):
    M, Din = x2d.shape
    H = of2d.shape[-1]
    N = 2 * H
    mb = _row_block(M, cap=256)
    if w_res_t is not None:
        kernel = functools.partial(_res_proj_ln_kernel, hidden=H, eps=eps)
        in_specs = [
            pl.BlockSpec((mb, Din), lambda i: (i, 0)),
            _wspec((Din, N), lambda i: (0, 0)),
            _wspec((1, N), lambda i: (0, 0)),
            pl.BlockSpec((mb, H), lambda i: (i, 0)),
            pl.BlockSpec((mb, H), lambda i: (i, 0)),
            _wspec((1, N), lambda i: (0, 0)),
            _wspec((1, N), lambda i: (0, 0)),
        ]
        args = (x2d, w_res_t, b_res.reshape(1, N), of2d, or2d,
                ln_g.reshape(1, N), ln_b.reshape(1, N))
    else:
        kernel = functools.partial(_res_id_ln_kernel, hidden=H, eps=eps)
        in_specs = [
            pl.BlockSpec((mb, Din), lambda i: (i, 0)),
            pl.BlockSpec((mb, H), lambda i: (i, 0)),
            pl.BlockSpec((mb, H), lambda i: (i, 0)),
            _wspec((1, N), lambda i: (0, 0)),
            _wspec((1, N), lambda i: (0, 0)),
        ]
        args = (x2d, of2d, or2d, ln_g.reshape(1, N), ln_b.reshape(1, N))
    return pl.pallas_call(
        kernel,
        out_shape=jax.ShapeDtypeStruct((M, N), jnp.float32),
        grid=(M // mb,),
        in_specs=in_specs,
        out_specs=pl.BlockSpec((mb, N), lambda i: (i, 0)),
        compiler_params=pltpu.CompilerParams(dimension_semantics=("parallel",)),
    )(*args)


# --------------------------------------------------------------------------
# Fused 4-layer MLP head
# --------------------------------------------------------------------------

def _head_kernel(x_ref, w1_ref, b1_ref, w2_ref, b2_ref, w3_ref, b3_ref,
                 w4_ref, b4_ref, o_ref):
    def dense(z, w_ref, b_ref, relu):
        y = jnp.dot(z.astype(MATMUL_DTYPE), w_ref[...],
                    preferred_element_type=jnp.float32) + b_ref[...]
        return jnp.maximum(y, 0.0) if relu else y

    z = dense(x_ref[...], w1_ref, b1_ref, True)
    z = dense(z, w2_ref, b2_ref, True)
    z = dense(z, w3_ref, b3_ref, True)
    o_ref[...] = dense(z, w4_ref, b4_ref, False)


def mlp_head(x, hd):
    B = x.shape[0]
    return pl.pallas_call(
        _head_kernel,
        out_shape=jax.ShapeDtypeStruct((B, 1), jnp.float32),
    )(x, hd['w1_t'], hd['b1'].reshape(1, -1),
      hd['w2_t'], hd['b2'].reshape(1, -1),
      hd['w3_t'], hd['b3'].reshape(1, -1),
      hd['w4_t'], hd['b4'].reshape(1, -1))


# --------------------------------------------------------------------------
# Parameter construction (deterministic, synthetic; pre-transposed, BN folded,
# bf16-cast matmul weights, gate layout [i, f, o, g])
# --------------------------------------------------------------------------

def _kaiming_fan_out(key, out_f, in_f):
    std = (2.0 / out_f) ** 0.5
    return std * jax.random.normal(key, (out_f, in_f), jnp.float32)


def make_params(key, input_size, hidden, num_layers):
    keys = iter(jax.random.split(key, 128))
    nk = lambda: next(keys)
    ortho = jax.nn.initializers.orthogonal()
    bn_eps = 1e-5

    # input projection: Linear + eval-mode BatchNorm1d (default running stats)
    # folded into the weight: y = (x @ W + b) / sqrt(1 + eps)
    w_ip = _kaiming_fan_out(nk(), hidden, input_size)
    bn_scale = 1.0 / (1.0 + bn_eps) ** 0.5
    params = {'input_projection': dict(
        w_t=(w_ip.T * bn_scale).astype(MATMUL_DTYPE),
        b=jnp.zeros((hidden,), jnp.float32),
    )}

    blocks = []
    for i in range(num_layers):
        din = hidden if i == 0 else hidden * 2
        lim = (6.0 / (din + 4 * hidden)) ** 0.5          # xavier-uniform for w_ih
        w_ih_f = jax.random.uniform(nk(), (4 * hidden, din), jnp.float32, -lim, lim)
        w_ih_r = jax.random.uniform(nk(), (4 * hidden, din), jnp.float32, -lim, lim)
        w_hh_f = ortho(nk(), (4 * hidden, hidden), jnp.float32)
        w_hh_r = ortho(nk(), (4 * hidden, hidden), jnp.float32)
        # bias = b_ih + b_hh, forget-gate slice filled with 1 each -> 2
        bias = jnp.zeros((4 * hidden,), jnp.float32).at[hidden:2 * hidden].set(2.0)
        # block-diagonal recurrent weight: one MXU push drives both directions
        w_hh_bd = jnp.zeros((2 * hidden, 8 * hidden), jnp.float32)
        w_hh_bd = w_hh_bd.at[:hidden, :4 * hidden].set(w_hh_f.T)
        w_hh_bd = w_hh_bd.at[hidden:, 4 * hidden:].set(w_hh_r.T)
        blk = dict(
            w_ih_cat_t=jnp.concatenate([w_ih_f.T, w_ih_r.T], axis=1).astype(MATMUL_DTYPE),
            b_cat=jnp.concatenate([bias, bias]),
            w_hh_bd_t=w_hh_bd.astype(MATMUL_DTYPE),
            # separate copies kept only for the pure-JAX reference check
            w_hh_f_t=w_hh_f.T.astype(MATMUL_DTYPE),
            w_hh_r_t=w_hh_r.T.astype(MATMUL_DTYPE),
            ln_g=jnp.ones((hidden * 2,), jnp.float32),
            ln_b=jnp.zeros((hidden * 2,), jnp.float32),
        )
        if din != hidden * 2:
            blk['w_res_t'] = _kaiming_fan_out(nk(), hidden * 2, din).T.astype(MATMUL_DTYPE)
            blk['b_res'] = jnp.zeros((hidden * 2,), jnp.float32)
        else:
            blk['w_res_t'] = None
            blk['b_res'] = None
        blocks.append(blk)
    params['lstm_blocks'] = blocks

    params['head'] = dict(
        w1_t=_kaiming_fan_out(nk(), 128, hidden * 2).T.astype(MATMUL_DTYPE),
        b1=jnp.zeros((128,), jnp.float32),
        w2_t=_kaiming_fan_out(nk(), 64, 128).T.astype(MATMUL_DTYPE),
        b2=jnp.zeros((64,), jnp.float32),
        w3_t=_kaiming_fan_out(nk(), 32, 64).T.astype(MATMUL_DTYPE),
        b3=jnp.zeros((32,), jnp.float32),
        w4_t=_kaiming_fan_out(nk(), 1, 32).T.astype(MATMUL_DTYPE),
        b4=jnp.zeros((1,), jnp.float32),
    )
    return params


# --------------------------------------------------------------------------
# Model forward (eval semantics: dropout = identity)
# --------------------------------------------------------------------------

def forward(params, x):
    """x: (B, S, input_size) -> (B, 1)."""
    B, S, D = x.shape
    x2d = jnp.transpose(x, (1, 0, 2)).reshape(S * B, D)    # time-major rows

    ip = params['input_projection']
    h2d = linear(x2d, ip['w_t'], ip['b'], relu=True)        # (S*B, hidden) f32

    for blk in params['lstm_blocks']:
        H = blk['w_hh_f_t'].shape[0]
        # hoisted x-projection for BOTH directions (+bias), stored bf16
        gx = linear(h2d, blk['w_ih_cat_t'], blk['b_cat'],
                    out_dtype=MATMUL_DTYPE)                  # (S*B, 8H) bf16
        out_f, out_r = bilstm(gx.reshape(S, B, 8 * H), blk['w_hh_bd_t'], H)
        # fused residual(-projection) + add + LayerNorm (stats over halves)
        h2d = res_layernorm(h2d,
                            out_f.reshape(S * B, H), out_r.reshape(S * B, H),
                            blk['w_res_t'], blk['b_res'],
                            blk['ln_g'], blk['ln_b'])        # (S*B, 2H) f32

    two_h = h2d.shape[-1]
    final_repr = h2d.reshape(S, B, two_h)[-1]                # (B, 2H), last step
    return mlp_head(final_repr, params['head'])              # (B, 1)


# --------------------------------------------------------------------------
# Pure-JAX reference (matched precision: bf16 matmul operands, f32 state)
# --------------------------------------------------------------------------

def _reference_forward(params, x):
    f32 = jnp.float32

    def mm(a, w_bf16):
        return jnp.dot(a.astype(MATMUL_DTYPE), w_bf16, preferred_element_type=f32)

    B, S, D = x.shape
    x2d = jnp.transpose(x, (1, 0, 2)).reshape(S * B, D)
    ip = params['input_projection']
    h2d = jnp.maximum(mm(x2d, ip['w_t']) + ip['b'], 0.0)

    for blk in params['lstm_blocks']:
        H = blk['w_hh_f_t'].shape[0]
        gx = (mm(h2d, blk['w_ih_cat_t']) + blk['b_cat']).astype(MATMUL_DTYPE)
        gx3 = gx.reshape(S, B, 8 * H)

        def cell(g, c):
            sig = jax.nn.sigmoid(g[:, :3 * H])
            gg = jnp.tanh(g[:, 3 * H:])
            c_new = sig[:, H:2 * H] * c + sig[:, :H] * gg
            h_new = sig[:, 2 * H:3 * H] * jnp.tanh(c_new)
            return h_new, c_new

        def step(carry, gx_pair):
            h, c = carry
            gxf_t, gxr_t = gx_pair
            m_f = jnp.dot(h[:, :H].astype(MATMUL_DTYPE), blk['w_hh_f_t'],
                          preferred_element_type=f32)
            m_r = jnp.dot(h[:, H:].astype(MATMUL_DTYPE), blk['w_hh_r_t'],
                          preferred_element_type=f32)
            h_f, c_f = cell(gxf_t.astype(f32) + m_f, c[:, :H])
            h_r, c_r = cell(gxr_t.astype(f32) + m_r, c[:, H:])
            h_new = jnp.concatenate([h_f, h_r], -1)
            c_new = jnp.concatenate([c_f, c_r], -1)
            return (h_new, c_new), (h_f, h_r)

        init = (jnp.zeros((B, 2 * H), f32), jnp.zeros((B, 2 * H), f32))
        xs = (gx3[:, :, :4 * H], gx3[::-1, :, 4 * H:])
        _, (hf_seq, hr_seq) = jax.lax.scan(step, init, xs)
        lstm_out = jnp.concatenate([hf_seq, hr_seq[::-1]], -1).reshape(S * B, 2 * H)

        if blk['w_res_t'] is not None:
            res = mm(h2d, blk['w_res_t']) + blk['b_res']
        else:
            res = h2d
        y = res + lstm_out
        mean = jnp.mean(y, -1, keepdims=True)
        var = jnp.mean((y - mean) ** 2, -1, keepdims=True)
        h2d = (y - mean) * jax.lax.rsqrt(var + 1e-5) * blk['ln_g'] + blk['ln_b']

    fr = h2d.reshape(S, B, h2d.shape[-1])[-1]
    hd = params['head']
    z = jnp.maximum(mm(fr, hd['w1_t']) + hd['b1'], 0.0)
    z = jnp.maximum(mm(z, hd['w2_t']) + hd['b2'], 0.0)
    z = jnp.maximum(mm(z, hd['w3_t']) + hd['b3'], 0.0)
    return mm(z, hd['w4_t']) + hd['b4']


# --------------------------------------------------------------------------

if __name__ == "__main__":
    # S=32 (vs hidden=32, batch=2) deliberately spans 2 time blocks so the
    # reversed-block index_maps of the recurrence kernel are exercised.
    B, S, INPUT_SIZE, HIDDEN, NUM_LAYERS = 2, 32, 8, 32, 2

    key = jax.random.PRNGKey(0)
    pkey, xkey = jax.random.split(key)
    params = make_params(pkey, INPUT_SIZE, HIDDEN, NUM_LAYERS)
    x = jax.random.normal(xkey, (B, S, INPUT_SIZE), jnp.float32)

    fwd = jax.jit(forward)
    out = jax.block_until_ready(fwd(params, x))
    assert out.shape == (B, 1), out.shape
    assert bool(jnp.all(jnp.isfinite(out)))

    # Implementation check against a precision-matched pure-JAX reference
    # (validates bf16 gx path, block-diagonal W_hh packing, reversed blocks).
    ref = jax.block_until_ready(jax.jit(_reference_forward)(params, x))
    assert bool(jnp.allclose(out, ref, rtol=2e-2, atol=2e-2)), (out, ref)

    print("KERNEL_OK")
</pallas_src>

<mosaic_0001>
module attributes {stable_mosaic.version = 11 : i64} {
  func.func @_linear_kernel(%arg0: i32, %arg1: i32, %arg2: memref<64x8xf32, #tpu.memory_space<vmem>>, %arg3: memref<8x32xbf16, #tpu.memory_space<vmem>>, %arg4: memref<1x32xf32, #tpu.memory_space<vmem>>, %arg5: memref<64x32xf32, #tpu.memory_space<vmem>>) attributes {dimension_semantics = [#tpu.dimension_semantics<parallel>, #tpu.dimension_semantics<parallel>], iteration_bounds = array<i64: 1, 1>, scalar_prefetch = 0 : i64, scratch_operands = 0 : i64, tpu.core_type = #tpu.core_type<tc>, window_params = [{transform_indices = @transform_0, window_bounds = array<i64: 64, 8>}, {transform_indices = @transform_1, window_bounds = array<i64: 8, 32>}, {transform_indices = @transform_2, window_bounds = array<i64: 1, 32>}, {transform_indices = @transform_3, window_bounds = array<i64: 64, 32>}]} {
    %c0 = arith.constant 0 : index
    %c0_0 = arith.constant 0 : index
    %0 = vector.load %arg2[%c0, %c0_0] : memref<64x8xf32, #tpu.memory_space<vmem>>, vector<64x8xf32>
    %1 = arith.truncf %0 : vector<64x8xf32> to vector<64x8xbf16>
    %c0_1 = arith.constant 0 : index
    %c0_2 = arith.constant 0 : index
    %2 = vector.load %arg3[%c0_1, %c0_2] : memref<8x32xbf16, #tpu.memory_space<vmem>>, vector<8x32xbf16>
    %cst = arith.constant dense<0.000000e+00> : vector<64x32xf32>
    %3 = tpu.matmul %1, %2, %cst {dimension_numbers = #tpu.dot_dimension_numbers<[1], [0], [0], [1], [0, 0, 1, 1], [], []>} : vector<64x8xbf16>, vector<8x32xbf16>, vector<64x32xf32> -> vector<64x32xf32>
    %c0_3 = arith.constant 0 : index
    %c0_4 = arith.constant 0 : index
    %4 = vector.load %arg4[%c0_3, %c0_4] : memref<1x32xf32, #tpu.memory_space<vmem>>, vector<1x32xf32>
    %5 = vector.broadcast %4 : vector<1x32xf32> to vector<64x32xf32>
    %6 = arith.addf %3, %5 : vector<64x32xf32>
    %cst_5 = arith.constant 0.000000e+00 : f32
    %7 = vector.broadcast %cst_5 : f32 to vector<64x32xf32>
    %8 = arith.maximumf %6, %7 : vector<64x32xf32>
    %c0_6 = arith.constant 0 : index
    %c0_7 = arith.constant 0 : index
    %9 = vector.load %arg5[%c0_6, %c0_7] : memref<64x32xf32, #tpu.memory_space<vmem>>, vector<64x32xf32>
    tpu.vector_store %arg5[%c0_6, %c0_7], %8 {strides = array<i32>} : memref<64x32xf32, #tpu.memory_space<vmem>>, vector<64x32xf32>,
    return
  }
  func.func @transform_0(%arg0: i32, %arg1: i32) -> (i32, i32) {
    %c0_i32 = arith.constant 0 : i32
    %c0_i32_0 = arith.constant 0 : i32
    return %arg0, %c0_i32 : i32, i32
  }
  func.func @transform_1(%arg0: i32, %arg1: i32) -> (i32, i32) {
    %c0_i32 = arith.constant 0 : i32
    %c0_i32_0 = arith.constant 0 : i32
    return %c0_i32, %arg1 : i32, i32
  }
  func.func @transform_2(%arg0: i32, %arg1: i32) -> (i32, i32) {
    %c0_i32 = arith.constant 0 : i32
    %c0_i32_0 = arith.constant 0 : i32
    return %c0_i32, %arg1 : i32, i32
  }
  func.func @transform_3(%arg0: i32, %arg1: i32) -> (i32, i32) {
    %c0_i32 = arith.constant 0 : i32
    return %arg0, %arg1 : i32, i32
  }
}

module attributes {stable_mosaic.version = 11 : i64} {
  func.func @_linear_kernel(%arg0: i32, %arg1: i32, %arg2: memref<64x32xf32, #tpu.memory_space<vmem>>, %arg3: memref<32x256xbf16, #tpu.memory_space<vmem>>, %arg4: memref<1x256xf32, #tpu.memory_space<vmem>>, %arg5: memref<64x256xbf16, #tpu.memory_space<vmem>>) attributes {dimension_semantics = [#tpu.dimension_semantics<parallel>, #tpu.dimension_semantics<parallel>], iteration_bounds = array<i64: 1, 1>, scalar_prefetch = 0 : i64, scratch_operands = 0 : i64, tpu.core_type = #tpu.core_type<tc>, window_params = [{transform_indices = @transform_0, window_bounds = array<i64: 64, 32>}, {transform_indices = @transform_1, window_bounds = array<i64: 32, 256>}, {transform_indices = @transform_2, window_bounds = array<i64: 1, 256>}, {transform_indices = @transform_3, window_bounds = array<i64: 64, 256>}]} {
    %c0 = arith.constant 0 : index
    %c0_0 = arith.constant 0 : index
    %0 = vector.load %arg2[%c0, %c0_0] : memref<64x32xf32, #tpu.memory_space<vmem>>, vector<64x32xf32>
    %1 = arith.truncf %0 : vector<64x32xf32> to vector<64x32xbf16>
    %c0_1 = arith.constant 0 : index
    %c0_2 = arith.constant 0 : index
    %2 = vector.load %arg3[%c0_1, %c0_2] : memref<32x256xbf16, #tpu.memory_space<vmem>>, vector<32x256xbf16>
    %cst = arith.constant dense<0.000000e+00> : vector<64x256xf32>
    %3 = tpu.matmul %1, %2, %cst {dimension_numbers = #tpu.dot_dimension_numbers<[1], [0], [0], [1], [0, 0, 1, 1], [], []>} : vector<64x32xbf16>, vector<32x256xbf16>, vector<64x256xf32> -> vector<64x256xf32>
    %c0_3 = arith.constant 0 : index
    %c0_4 = arith.constant 0 : index
    %4 = vector.load %arg4[%c0_3, %c0_4] : memref<1x256xf32, #tpu.memory_space<vmem>>, vector<1x256xf32>
    %5 = vector.broadcast %4 : vector<1x256xf32> to vector<64x256xf32>
    %6 = arith.addf %3, %5 : vector<64x256xf32>
    %7 = arith.truncf %6 : vector<64x256xf32> to vector<64x256xbf16>
    %c0_5 = arith.constant 0 : index
    %c0_6 = arith.constant 0 : index
    %8 = vector.load %arg5[%c0_5, %c0_6] : memref<64x256xbf16, #tpu.memory_space<vmem>>, vector<64x256xbf16>
    tpu.vector_store %arg5[%c0_5, %c0_6], %7 {strides = array<i32>} : memref<64x256xbf16, #tpu.memory_space<vmem>>, vector<64x256xbf16>,
    return
  }
  func.func @transform_0(%arg0: i32, %arg1: i32) -> (i32, i32) {
    %c0_i32 = arith.constant 0 : i32
    %c0_i32_0 = arith.constant 0 : i32
    return %arg0, %c0_i32 : i32, i32
  }
  func.func @transform_1(%arg0: i32, %arg1: i32) -> (i32, i32) {
    %c0_i32 = arith.constant 0 : i32
    %c0_i32_0 = arith.constant 0 : i32
    return %c0_i32, %arg1 : i32, i32
  }
  func.func @transform_2(%arg0: i32, %arg1: i32) -> (i32, i32) {
    %c0_i32 = arith.constant 0 : i32
    %c0_i32_0 = arith.constant 0 : i32
    return %c0_i32, %arg1 : i32, i32
  }
  func.func @transform_3(%arg0: i32, %arg1: i32) -> (i32, i32) {
    %c0_i32 = arith.constant 0 : i32
    return %arg0, %arg1 : i32, i32
  }
}

module attributes {stable_mosaic.version = 11 : i64} {
  func.func @_res_proj_ln_kernel(%arg0: i32, %arg1: memref<64x32xf32, #tpu.memory_space<vmem>>, %arg2: memref<32x64xbf16, #tpu.memory_space<vmem>>, %arg3: memref<1x64xf32, #tpu.memory_space<vmem>>, %arg4: memref<64x32xf32, #tpu.memory_space<vmem>>, %arg5: memref<64x32xf32, #tpu.memory_space<vmem>>, %arg6: memref<1x64xf32, #tpu.memory_space<vmem>>, %arg7: memref<1x64xf32, #tpu.memory_space<vmem>>, %arg8: memref<64x64xf32, #tpu.memory_space<vmem>>) attributes {dimension_semantics = [#tpu.dimension_semantics<parallel>], iteration_bounds = array<i64: 1>, scalar_prefetch = 0 : i64, scratch_operands = 0 : i64, tpu.core_type = #tpu.core_type<tc>, window_params = [{transform_indices = @transform_0, window_bounds = array<i64: 64, 32>}, {pipeline_mode = #tpu.pipeline_mode<synchronous>, transform_indices = @transform_1, window_bounds = array<i64: 32, 64>}, {pipeline_mode = #tpu.pipeline_mode<synchronous>, transform_indices = @transform_2, window_bounds = array<i64: 1, 64>}, {transform_indices = @transform_3, window_bounds = array<i64: 64, 32>}, {transform_indices = @transform_4, window_bounds = array<i64: 64, 32>}, {pipeline_mode = #tpu.pipeline_mode<synchronous>, transform_indices = @transform_5, window_bounds = array<i64: 1, 64>}, {pipeline_mode = #tpu.pipeline_mode<synchronous>, transform_indices = @transform_6, window_bounds = array<i64: 1, 64>}, {transform_indices = @transform_7, window_bounds = array<i64: 64, 64>}]} {
    %c0 = arith.constant 0 : index
    %c0_0 = arith.constant 0 : index
    %0 = vector.load %arg1[%c0, %c0_0] : memref<64x32xf32, #tpu.memory_space<vmem>>, vector<64x32xf32>
    %1 = arith.truncf %0 : vector<64x32xf32> to vector<64x32xbf16>
    %c0_1 = arith.constant 0 : index
    %c0_2 = arith.constant 0 : index
    %2 = vector.load %arg2[%c0_1, %c0_2] : memref<32x64xbf16, #tpu.memory_space<vmem>>, vector<32x64xbf16>
    %cst = arith.constant dense<0.000000e+00> : vector<64x64xf32>
    %3 = tpu.matmul %1, %2, %cst {dimension_numbers = #tpu.dot_dimension_numbers<[1], [0], [0], [1], [0, 0, 1, 1], [], []>} : vector<64x32xbf16>, vector<32x64xbf16>, vector<64x64xf32> -> vector<64x64xf32>
    %c0_3 = arith.constant 0 : index
    %c0_4 = arith.constant 0 : index
    %4 = vector.load %arg3[%c0_3, %c0_4] : memref<1x64xf32, #tpu.memory_space<vmem>>, vector<1x64xf32>
    %5 = vector.broadcast %4 : vector<1x64xf32> to vector<64x64xf32>
    %6 = arith.addf %3, %5 : vector<64x64xf32>
    %7 = vector.extract_strided_slice %6 {offsets = [0, 0], sizes = [64, 32], strides = [1, 1]} : vector<64x64xf32> to vector<64x32xf32>
    %c0_5 = arith.constant 0 : index
    %c0_6 = arith.constant 0 : index
    %8 = vector.load %arg4[%c0_5, %c0_6] : memref<64x32xf32, #tpu.memory_space<vmem>>, vector<64x32xf32>
    %9 = arith.addf %7, %8 : vector<64x32xf32>
    %10 = vector.extract_strided_slice %6 {offsets = [0, 32], sizes = [64, 32], strides = [1, 1]} : vector<64x64xf32> to vector<64x32xf32>
    %c0_7 = arith.constant 0 : index
    %c0_8 = arith.constant 0 : index
    %11 = vector.load %arg5[%c0_7, %c0_8] : memref<64x32xf32, #tpu.memory_space<vmem>>, vector<64x32xf32>
    %12 = arith.addf %10, %11 : vector<64x32xf32>
    %cst_9 = arith.constant dense<0.000000e+00> : vector<64xf32>
    %13 = vector.multi_reduction <add>, %9, %cst_9 [1] : vector<64x32xf32> to vector<64xf32>
    %14 = vector.shape_cast %13 : vector<64xf32> to vector<64x1xf32>
    %cst_10 = arith.constant dense<0.000000e+00> : vector<64xf32>
    %15 = vector.multi_reduction <add>, %12, %cst_10 [1] : vector<64x32xf32> to vector<64xf32>
    %16 = vector.shape_cast %15 : vector<64xf32> to vector<64x1xf32>
    %17 = arith.addf %14, %16 : vector<64x1xf32>
    %cst_11 = arith.constant 6.400000e+01 : f32
    %18 = vector.broadcast %cst_11 : f32 to vector<64x1xf32>
    %19 = arith.divf %17, %18 : vector<64x1xf32>
    %20 = vector.broadcast %19 : vector<64x1xf32> to vector<64x32xf32>
    %21 = arith.subf %9, %20 : vector<64x32xf32>
    %22 = vector.broadcast %19 : vector<64x1xf32> to vector<64x32xf32>
    %23 = arith.subf %12, %22 : vector<64x32xf32>
    %24 = arith.mulf %21, %21 : vector<64x32xf32>
    %cst_12 = arith.constant dense<0.000000e+00> : vector<64xf32>
    %25 = vector.multi_reduction <add>, %24, %cst_12 [1] : vector<64x32xf32> to vector<64xf32>
    %26 = vector.shape_cast %25 : vector<64xf32> to vector<64x1xf32>
    %27 = arith.mulf %23, %23 : vector<64x32xf32>
    %cst_13 = arith.constant dense<0.000000e+00> : vector<64xf32>
    %28 = vector.multi_reduction <add>, %27, %cst_13 [1] : vector<64x32xf32> to vector<64xf32>
    %29 = vector.shape_cast %28 : vector<64xf32> to vector<64x1xf32>
    %30 = arith.addf %26, %29 : vector<64x1xf32>
    %cst_14 = arith.constant 6.400000e+01 : f32
    %31 = vector.broadcast %cst_14 : f32 to vector<64x1xf32>
    %32 = arith.divf %30, %31 : vector<64x1xf32>
    %cst_15 = arith.constant 9.99999974E-6 : f32
    %33 = vector.broadcast %cst_15 : f32 to vector<64x1xf32>
    %34 = arith.addf %32, %33 : vector<64x1xf32>
    %35 = math.rsqrt %34 : vector<64x1xf32>
    %36 = vector.broadcast %35 : vector<64x1xf32> to vector<64x32xf32>
    %37 = arith.mulf %21, %36 : vector<64x32xf32>
    %c0_16 = arith.constant 0 : index
    %c0_17 = arith.constant 0 : index
    %38 = vector.load %arg6[%c0_16, %c0_17] : memref<1x64xf32, #tpu.memory_space<vmem>>, vector<1x32xf32>
    %39 = vector.broadcast %38 : vector<1x32xf32> to vector<64x32xf32>
    %40 = arith.mulf %37, %39 : vector<64x32xf32>
    %c0_18 = arith.constant 0 : index
    %c0_19 = arith.constant 0 : index
    %41 = vector.load %arg7[%c0_18, %c0_19] : memref<1x64xf32, #tpu.memory_space<vmem>>, vector<1x32xf32>
    %42 = vector.broadcast %41 : vector<1x32xf32> to vector<64x32xf32>
    %43 = arith.addf %40, %42 : vector<64x32xf32>
    %c0_20 = arith.constant 0 : index
    %c0_21 = arith.constant 0 : index
    %44 = vector.load %arg8[%c0_20, %c0_21] : memref<64x64xf32, #tpu.memory_space<vmem>>, vector<64x32xf32>
    tpu.vector_store %arg8[%c0_20, %c0_21], %43 {strides = array<i32>} : memref<64x64xf32, #tpu.memory_space<vmem>>, vector<64x32xf32>,
    %45 = vector.broadcast %35 : vector<64x1xf32> to vector<64x32xf32>
    %46 = arith.mulf %23, %45 : vector<64x32xf32>
    %c0_22 = arith.constant 0 : index
    %c32 = arith.constant 32 : index
    %47 = vector.load %arg6[%c0_22, %c32] : memref<1x64xf32, #tpu.memory_space<vmem>>, vector<1x32xf32>
    %48 = vector.broadcast %47 : vector<1x32xf32> to vector<64x32xf32>
    %49 = arith.mulf %46, %48 : vector<64x32xf32>
    %c0_23 = arith.constant 0 : index
    %c32_24 = arith.constant 32 : index
    %50 = vector.load %arg7[%c0_23, %c32_24] : memref<1x64xf32, #tpu.memory_space<vmem>>, vector<1x32xf32>
    %51 = vector.broadcast %50 : vector<1x32xf32> to vector<64x32xf32>
    %52 = arith.addf %49, %51 : vector<64x32xf32>
    %c0_25 = arith.constant 0 : index
    %c32_26 = arith.constant 32 : index
    %53 = vector.load %arg8[%c0_25, %c32_26] : memref<64x64xf32, #tpu.memory_space<vmem>>, vector<64x32xf32>
    tpu.vector_store %arg8[%c0_25, %c32_26], %52 {strides = array<i32>} : memref<64x64xf32, #tpu.memory_space<vmem>>, vector<64x32xf32>,
    return
  }
  func.func @transform_0(%arg0: i32) -> (i32, i32) {
    %c0_i32 = arith.constant 0 : i32
    %c0_i32_0 = arith.constant 0 : i32
    return %arg0, %c0_i32 : i32, i32
  }
  func.func @transform_1(%arg0: i32) -> (i32, i32) {
    %c0_i32 = arith.constant 0 : i32
    %c0_i32_0 = arith.constant 0 : i32
    %c0_i32_1 = arith.constant 0 : i32
    return %c0_i32, %c0_i32_0 : i32, i32
  }
  func.func @transform_2(%arg0: i32) -> (i32, i32) {
    %c0_i32 = arith.constant 0 : i32
    %c0_i32_0 = arith.constant 0 : i32
    %c0_i32_1 = arith.constant 0 : i32
    return %c0_i32, %c0_i32_0 : i32, i32
  }
  func.func @transform_3(%arg0: i32) -> (i32, i32) {
    %c0_i32 = arith.constant 0 : i32
    %c0_i32_0 = arith.constant 0 : i32
    return %arg0, %c0_i32 : i32, i32
  }
  func.func @transform_4(%arg0: i32) -> (i32, i32) {
    %c0_i32 = arith.constant 0 : i32
    %c0_i32_0 = arith.constant 0 : i32
    return %arg0, %c0_i32 : i32, i32
  }
  func.func @transform_5(%arg0: i32) -> (i32, i32) {
    %c0_i32 = arith.constant 0 : i32
    %c0_i32_0 = arith.constant 0 : i32
    %c0_i32_1 = arith.constant 0 : i32
    return %c0_i32, %c0_i32_0 : i32, i32
  }
  func.func @transform_6(%arg0: i32) -> (i32, i32) {
    %c0_i32 = arith.constant 0 : i32
    %c0_i32_0 = arith.constant 0 : i32
    %c0_i32_1 = arith.constant 0 : i32
    return %c0_i32, %c0_i32_0 : i32, i32
  }
  func.func @transform_7(%arg0: i32) -> (i32, i32) {
    %c0_i32 = arith.constant 0 : i32
    %c0_i32_0 = arith.constant 0 : i32
    return %arg0, %c0_i32 : i32, i32
  }
}

module attributes {stable_mosaic.version = 11 : i64} {
  func.func @_bilstm_kernel(%arg0: i32, %arg1: memref<16x2x128xbf16, #tpu.memory_space<vmem>>, %arg2: memref<16x2x128xbf16, #tpu.memory_space<vmem>>, %arg3: memref<64x256xbf16, #tpu.memory_space<vmem>>, %arg4: memref<16x2x32xf32, #tpu.memory_space<vmem>>, %arg5: memref<16x2x32xf32, #tpu.memory_space<vmem>>, %arg6: memref<2x64xf32, #tpu.memory_space<vmem>>, %arg7: memref<2x64xf32, #tpu.memory_space<vmem>>) attributes {dimension_semantics = [#tpu.dimension_semantics<arbitrary>], iteration_bounds = array<i64: 2>, scalar_prefetch = 0 : i64, scratch_operands = 2 : i64, tpu.core_type = #tpu.core_type<tc>, window_params = [{transform_indices = @transform_0, window_bounds = array<i64: 16, 2, 128>}, {transform_indices = @transform_1, window_bounds = array<i64: 16, 2, 128>}, {pipeline_mode = #tpu.pipeline_mode<synchronous>, transform_indices = @transform_2, window_bounds = array<i64: 64, 256>}, {transform_indices = @transform_3, window_bounds = array<i64: 16, 2, 32>}, {transform_indices = @transform_4, window_bounds = array<i64: 16, 2, 32>}]} {
    %c0_i32 = arith.constant 0 : i32
    %0 = arith.cmpi eq, %arg0, %c0_i32 : i32
    %1 = arith.extui %0 : i1 to i32
    %c0_i32_0 = arith.constant 0 : i32
    %2 = arith.cmpi ne, %1, %c0_i32_0 : i32
    scf.if %2 {
      %cst_417 = arith.constant 0.000000e+00 : f32
      %996 = vector.broadcast %cst_417 : f32 to vector<2x64xf32>
      %c0_418 = arith.constant 0 : index
      %c0_419 = arith.constant 0 : index
      %997 = vector.load %arg6[%c0_418, %c0_419] : memref<2x64xf32, #tpu.memory_space<vmem>>, vector<2x64xf32>
      tpu.vector_store %arg6[%c0_418, %c0_419], %996 {strides = array<i32>} : memref<2x64xf32, #tpu.memory_space<vmem>>, vector<2x64xf32>,
      %cst_420 = arith.constant 0.000000e+00 : f32
      %998 = vector.broadcast %cst_420 : f32 to vector<2x64xf32>
      %c0_421 = arith.constant 0 : index
      %c0_422 = arith.constant 0 : index
      %999 = vector.load %arg7[%c0_421, %c0_422] : memref<2x64xf32, #tpu.memory_space<vmem>>, vector<2x64xf32>
      tpu.vector_store %arg7[%c0_421, %c0_422], %998 {strides = array<i32>} : memref<2x64xf32, #tpu.memory_space<vmem>>, vector<2x64xf32>,
    } else {
    }
    %c0 = arith.constant 0 : index
    %c0_1 = arith.constant 0 : index
    %3 = vector.load %arg3[%c0, %c0_1] : memref<64x256xbf16, #tpu.memory_space<vmem>>, vector<64x256xbf16>
    %c0_i32_2 = arith.constant 0 : i32
    %c15_i32 = arith.constant 15 : i32
    %4 = arith.subi %c15_i32, %c0_i32_2 : i32
    %c0_3 = arith.constant 0 : index
    %c0_4 = arith.constant 0 : index
    %5 = vector.load %arg6[%c0_3, %c0_4] : memref<2x64xf32, #tpu.memory_space<vmem>>, vector<2x64xf32>
    %6 = arith.truncf %5 : vector<2x64xf32> to vector<2x64xbf16>
    %cst = arith.constant dense<0.000000e+00> : vector<2x256xf32>
    %7 = tpu.matmul %6, %3, %cst {dimension_numbers = #tpu.dot_dimension_numbers<[1], [0], [0], [1], [0, 0, 1, 1], [], []>} : vector<2x64xbf16>, vector<64x256xbf16>, vector<2x256xf32> -> vector<2x256xf32>
    %8 = arith.index_cast %c0_i32_2 : i32 to index
    %c0_5 = arith.constant 0 : index
    %c0_6 = arith.constant 0 : index
    %9 = vector.load %arg1[%8, %c0_5, %c0_6] : memref<16x2x128xbf16, #tpu.memory_space<vmem>>, vector<1x2x128xbf16>
    %10 = vector.shape_cast %9 : vector<1x2x128xbf16> to vector<2x128xbf16>
    %11 = arith.extf %10 : vector<2x128xbf16> to vector<2x128xf32>
    %12 = arith.index_cast %4 : i32 to index
    %c0_7 = arith.constant 0 : index
    %c0_8 = arith.constant 0 : index
    %13 = vector.load %arg2[%12, %c0_7, %c0_8] : memref<16x2x128xbf16, #tpu.memory_space<vmem>>, vector<1x2x128xbf16>
    %14 = vector.shape_cast %13 : vector<1x2x128xbf16> to vector<2x128xbf16>
    %15 = arith.extf %14 : vector<2x128xbf16> to vector<2x128xf32>
    %16 = vector.extract_strided_slice %7 {offsets = [0, 0], sizes = [2, 128], strides = [1, 1]} : vector<2x256xf32> to vector<2x128xf32>
    %17 = arith.addf %11, %16 : vector<2x128xf32>
    %c0_9 = arith.constant 0 : index
    %c0_10 = arith.constant 0 : index
    %18 = vector.load %arg7[%c0_9, %c0_10] : memref<2x64xf32, #tpu.memory_space<vmem>>, vector<2x32xf32>
    %19 = vector.extract_strided_slice %17 {offsets = [0, 0], sizes = [2, 96], strides = [1, 1]} : vector<2x128xf32> to vector<2x96xf32>
    %20 = arith.negf %19 : vector<2x96xf32>
    %21 = math.exp %20 : vector<2x96xf32>
    %cst_11 = arith.constant 1.000000e+00 : f32
    %22 = vector.broadcast %cst_11 : f32 to vector<2x96xf32>
    %23 = arith.addf %22, %21 : vector<2x96xf32>
    %24 = arith.divf %22, %23 : vector<2x96xf32>
    %25 = vector.extract_strided_slice %17 {offsets = [0, 96], sizes = [2, 32], strides = [1, 1]} : vector<2x128xf32> to vector<2x32xf32>
    %26 = math.tanh %25 : vector<2x32xf32>
    %27 = vector.extract_strided_slice %24 {offsets = [0, 32], sizes = [2, 32], strides = [1, 1]} : vector<2x96xf32> to vector<2x32xf32>
    %28 = arith.mulf %27, %18 : vector<2x32xf32>
    %29 = vector.extract_strided_slice %24 {offsets = [0, 0], sizes = [2, 32], strides = [1, 1]} : vector<2x96xf32> to vector<2x32xf32>
    %30 = arith.mulf %29, %26 : vector<2x32xf32>
    %31 = arith.addf %28, %30 : vector<2x32xf32>
    %32 = vector.extract_strided_slice %24 {offsets = [0, 64], sizes = [2, 32], strides = [1, 1]} : vector<2x96xf32> to vector<2x32xf32>
    %33 = math.tanh %31 : vector<2x32xf32>
    %34 = arith.mulf %32, %33 : vector<2x32xf32>
    %35 = vector.extract_strided_slice %7 {offsets = [0, 128], sizes = [2, 128], strides = [1, 1]} : vector<2x256xf32> to vector<2x128xf32>
    %36 = arith.addf %15, %35 : vector<2x128xf32>
    %c0_12 = arith.constant 0 : index
    %c32 = arith.constant 32 : index
    %37 = vector.load %arg7[%c0_12, %c32] : memref<2x64xf32, #tpu.memory_space<vmem>>, vector<2x32xf32>
    %38 = vector.extract_strided_slice %36 {offsets = [0, 0], sizes = [2, 96], strides = [1, 1]} : vector<2x128xf32> to vector<2x96xf32>
    %39 = arith.negf %38 : vector<2x96xf32>
    %40 = math.exp %39 : vector<2x96xf32>
    %cst_13 = arith.constant 1.000000e+00 : f32
    %41 = vector.broadcast %cst_13 : f32 to vector<2x96xf32>
    %42 = arith.addf %41, %40 : vector<2x96xf32>
    %43 = arith.divf %41, %42 : vector<2x96xf32>
    %44 = vector.extract_strided_slice %36 {offsets = [0, 96], sizes = [2, 32], strides = [1, 1]} : vector<2x128xf32> to vector<2x32xf32>
    %45 = math.tanh %44 : vector<2x32xf32>
    %46 = vector.extract_strided_slice %43 {offsets = [0, 32], sizes = [2, 32], strides = [1, 1]} : vector<2x96xf32> to vector<2x32xf32>
    %47 = arith.mulf %46, %37 : vector<2x32xf32>
    %48 = vector.extract_strided_slice %43 {offsets = [0, 0], sizes = [2, 32], strides = [1, 1]} : vector<2x96xf32> to vector<2x32xf32>
    %49 = arith.mulf %48, %45 : vector<2x32xf32>
    %50 = arith.addf %47, %49 : vector<2x32xf32>
    %51 = vector.extract_strided_slice %43 {offsets = [0, 64], sizes = [2, 32], strides = [1, 1]} : vector<2x96xf32> to vector<2x32xf32>
    %52 = math.tanh %50 : vector<2x32xf32>
    %53 = arith.mulf %51, %52 : vector<2x32xf32>
    %c0_14 = arith.constant 0 : index
    %c0_15 = arith.constant 0 : index
    %54 = vector.load %arg6[%c0_14, %c0_15] : memref<2x64xf32, #tpu.memory_space<vmem>>, vector<2x32xf32>
    tpu.vector_store %arg6[%c0_14, %c0_15], %34 {strides = array<i32>} : memref<2x64xf32, #tpu.memory_space<vmem>>, vector<2x32xf32>,
    %c0_16 = arith.constant 0 : index
    %c32_17 = arith.constant 32 : index
    %55 = vector.load %arg6[%c0_16, %c32_17] : memref<2x64xf32, #tpu.memory_space<vmem>>, vector<2x32xf32>
    tpu.vector_store %arg6[%c0_16, %c32_17], %53 {strides = array<i32>} : memref<2x64xf32, #tpu.memory_space<vmem>>, vector<2x32xf32>,
    %c0_18 = arith.constant 0 : index
    %c0_19 = arith.constant 0 : index
    %56 = vector.load %arg7[%c0_18, %c0_19] : memref<2x64xf32, #tpu.memory_space<vmem>>, vector<2x32xf32>
    tpu.vector_store %arg7[%c0_18, %c0_19], %31 {strides = array<i32>} : memref<2x64xf32, #tpu.memory_space<vmem>>, vector<2x32xf32>,
    %c0_20 = arith.constant 0 : index
    %c32_21 = arith.constant 32 : index
    %57 = vector.load %arg7[%c0_20, %c32_21] : memref<2x64xf32, #tpu.memory_space<vmem>>, vector<2x32xf32>
    tpu.vector_store %arg7[%c0_20, %c32_21], %50 {strides = array<i32>} : memref<2x64xf32, #tpu.memory_space<vmem>>, vector<2x32xf32>,
    %58 = arith.index_cast %c0_i32_2 : i32 to index
    %c0_22 = arith.constant 0 : index
    %c0_23 = arith.constant 0 : index
    %59 = vector.load %arg4[%58, %c0_22, %c0_23] : memref<16x2x32xf32, #tpu.memory_space<vmem>>, vector<1x2x32xf32>
    %60 = vector.shape_cast %59 : vector<1x2x32xf32> to vector<2x32xf32>
    %61 = vector.shape_cast %34 : vector<2x32xf32> to vector<1x2x32xf32>
    tpu.vector_store %arg4[%58, %c0_22, %c0_23], %61 {strides = array<i32>} : memref<16x2x32xf32, #tpu.memory_space<vmem>>, vector<1x2x32xf32>,
    %62 = arith.index_cast %4 : i32 to index
    %c0_24 = arith.constant 0 : index
    %c0_25 = arith.constant 0 : index
    %63 = vector.load %arg5[%62, %c0_24, %c0_25] : memref<16x2x32xf32, #tpu.memory_space<vmem>>, vector<1x2x32xf32>
    %64 = vector.shape_cast %63 : vector<1x2x32xf32> to vector<2x32xf32>
    %65 = vector.shape_cast %53 : vector<2x32xf32> to vector<1x2x32xf32>
    tpu.vector_store %arg5[%62, %c0_24, %c0_25], %65 {strides = array<i32>} : memref<16x2x32xf32, #tpu.memory_space<vmem>>, vector<1x2x32xf32>,
    %c1_i32 = arith.constant 1 : i32
    %c15_i32_26 = arith.constant 15 : i32
    %66 = arith.subi %c15_i32_26, %c1_i32 : i32
    %c0_27 = arith.constant 0 : index
    %c0_28 = arith.constant 0 : index
    %67 = vector.load %arg6[%c0_27, %c0_28] : memref<2x64xf32, #tpu.memory_space<vmem>>, vector<2x64xf32>
    %68 = arith.truncf %67 : vector<2x64xf32> to vector<2x64xbf16>
    %cst_29 = arith.constant dense<0.000000e+00> : vector<2x256xf32>
    %69 = tpu.matmul %68, %3, %cst_29 {dimension_numbers = #tpu.dot_dimension_numbers<[1], [0], [0], [1], [0, 0, 1, 1], [], []>} : vector<2x64xbf16>, vector<64x256xbf16>, vector<2x256xf32> -> vector<2x256xf32>
    %70 = arith.index_cast %c1_i32 : i32 to index
    %c0_30 = arith.constant 0 : index
    %c0_31 = arith.constant 0 : index
    %71 = vector.load %arg1[%70, %c0_30, %c0_31] : memref<16x2x128xbf16, #tpu.memory_space<vmem>>, vector<1x2x128xbf16>
    %72 = vector.shape_cast %71 : vector<1x2x128xbf16> to vector<2x128xbf16>
    %73 = arith.extf %72 : vector<2x128xbf16> to vector<2x128xf32>
    %74 = arith.index_cast %66 : i32 to index
    %c0_32 = arith.constant 0 : index
    %c0_33 = arith.constant 0 : index
    %75 = vector.load %arg2[%74, %c0_32, %c0_33] : memref<16x2x128xbf16, #tpu.memory_space<vmem>>, vector<1x2x128xbf16>
    %76 = vector.shape_cast %75 : vector<1x2x128xbf16> to vector<2x128xbf16>
    %77 = arith.extf %76 : vector<2x128xbf16> to vector<2x128xf32>
    %78 = vector.extract_strided_slice %69 {offsets = [0, 0], sizes = [2, 128], strides = [1, 1]} : vector<2x256xf32> to vector<2x128xf32>
    %79 = arith.addf %73, %78 : vector<2x128xf32>
    %c0_34 = arith.constant 0 : index
    %c0_35 = arith.constant 0 : index
    %80 = vector.load %arg7[%c0_34, %c0_35] : memref<2x64xf32, #tpu.memory_space<vmem>>, vector<2x32xf32>
    %81 = vector.extract_strided_slice %79 {offsets = [0, 0], sizes = [2, 96], strides = [1, 1]} : vector<2x128xf32> to vector<2x96xf32>
    %82 = arith.negf %81 : vector<2x96xf32>
    %83 = math.exp %82 : vector<2x96xf32>
    %cst_36 = arith.constant 1.000000e+00 : f32
    %84 = vector.broadcast %cst_36 : f32 to vector<2x96xf32>
    %85 = arith.addf %84, %83 : vector<2x96xf32>
    %86 = arith.divf %84, %85 : vector<2x96xf32>
    %87 = vector.extract_strided_slice %79 {offsets = [0, 96], sizes = [2, 32], strides = [1, 1]} : vector<2x128xf32> to vector<2x32xf32>
    %88 = math.tanh %87 : vector<2x32xf32>
    %89 = vector.extract_strided_slice %86 {offsets = [0, 32], sizes = [2, 32], strides = [1, 1]} : vector<2x96xf32> to vector<2x32xf32>
    %90 = arith.mulf %89, %80 : vector<2x32xf32>
    %91 = vector.extract_strided_slice %86 {offsets = [0, 0], sizes = [2, 32], strides = [1, 1]} : vector<2x96xf32> to vector<2x32xf32>
    %92 = arith.mulf %91, %88 : vector<2x32xf32>
    %93 = arith.addf %90, %92 : vector<2x32xf32>
    %94 = vector.extract_strided_slice %86 {offsets = [0, 64], sizes = [2, 32], strides = [1, 1]} : vector<2x96xf32> to vector<2x32xf32>
    %95 = math.tanh %93 : vector<2x32xf32>
    %96 = arith.mulf %94, %95 : vector<2x32xf32>
    %97 = vector.extract_strided_slice %69 {offsets = [0, 128], sizes = [2, 128], strides = [1, 1]} : vector<2x256xf32> to vector<2x128xf32>
    %98 = arith.addf %77, %97 : vector<2x128xf32>
    %c0_37 = arith.constant 0 : index
    %c32_38 = arith.constant 32 : index
    %99 = vector.load %arg7[%c0_37, %c32_38] : memref<2x64xf32, #tpu.memory_space<vmem>>, vector<2x32xf32>
    %100 = vector.extract_strided_slice %98 {offsets = [0, 0], sizes = [2, 96], strides = [1, 1]} : vector<2x128xf32> to vector<2x96xf32>
    %101 = arith.negf %100 : vector<2x96xf32>
    %102 = math.exp %101 : vector<2x96xf32>
    %cst_39 = arith.constant 1.000000e+00 : f32
    %103 = vector.broadcast %cst_39 : f32 to vector<2x96xf32>
    %104 = arith.addf %103, %102 : vector<2x96xf32>
    %105 = arith.divf %103, %104 : vector<2x96xf32>
    %106 = vector.extract_strided_slice %98 {offsets = [0, 96], sizes = [2, 32], strides = [1, 1]} : vector<2x128xf32> to vector<2x32xf32>
    %107 = math.tanh %106 : vector<2x32xf32>
    %108 = vector.extract_strided_slice %105 {offsets = [0, 32], sizes = [2, 32], strides = [1, 1]} : vector<2x96xf32> to vector<2x32xf32>
    %109 = arith.mulf %108, %99 : vector<2x32xf32>
    %110 = vector.extract_strided_slice %105 {offsets = [0, 0], sizes = [2, 32], strides = [1, 1]} : vector<2x96xf32> to vector<2x32xf32>
    %111 = arith.mulf %110, %107 : vector<2x32xf32>
    %112 = arith.addf %109, %111 : vector<2x32xf32>
    %113 = vector.extract_strided_slice %105 {offsets = [0, 64], sizes = [2, 32], strides = [1, 1]} : vector<2x96xf32> to vector<2x32xf32>
    %114 = math.tanh %112 : vector<2x32xf32>
    %115 = arith.mulf %113, %114 : vector<2x32xf32>
    %c0_40 = arith.constant 0 : index
    %c0_41 = arith.constant 0 : index
    %116 = vector.load %arg6[%c0_40, %c0_41] : memref<2x64xf32, #tpu.memory_space<vmem>>, vector<2x32xf32>
    tpu.vector_store %arg6[%c0_40, %c0_41], %96 {strides = array<i32>} : memref<2x64xf32, #tpu.memory_space<vmem>>, vector<2x32xf32>,
    %c0_42 = arith.constant 0 : index
    %c32_43 = arith.constant 32 : index
    %117 = vector.load %arg6[%c0_42, %c32_43] : memref<2x64xf32, #tpu.memory_space<vmem>>, vector<2x32xf32>
    tpu.vector_store %arg6[%c0_42, %c32_43], %115 {strides = array<i32>} : memref<2x64xf32, #tpu.memory_space<vmem>>, vector<2x32xf32>,
    %c0_44 = arith.constant 0 : index
    %c0_45 = arith.constant 0 : index
    %118 = vector.load %arg7[%c0_44, %c0_45] : memref<2x64xf32, #tpu.memory_space<vmem>>, vector<2x32xf32>
    tpu.vector_store %arg7[%c0_44, %c0_45], %93 {strides = array<i32>} : memref<2x64xf32, #tpu.memory_space<vmem>>, vector<2x32xf32>,
    %c0_46 = arith.constant 0 : index
    %c32_47 = arith.constant 32 : index
    %119 = vector.load %arg7[%c0_46, %c32_47] : memref<2x64xf32, #tpu.memory_space<vmem>>, vector<2x32xf32>
    tpu.vector_store %arg7[%c0_46, %c32_47], %112 {strides = array<i32>} : memref<2x64xf32, #tpu.memory_space<vmem>>, vector<2x32xf32>,
    %120 = arith.index_cast %c1_i32 : i32 to index
    %c0_48 = arith.constant 0 : index
    %c0_49 = arith.constant 0 : index
    %121 = vector.load %arg4[%120, %c0_48, %c0_49] : memref<16x2x32xf32, #tpu.memory_space<vmem>>, vector<1x2x32xf32>
    %122 = vector.shape_cast %121 : vector<1x2x32xf32> to vector<2x32xf32>
    %123 = vector.shape_cast %96 : vector<2x32xf32> to vector<1x2x32xf32>
    tpu.vector_store %arg4[%120, %c0_48, %c0_49], %123 {strides = array<i32>} : memref<16x2x32xf32, #tpu.memory_space<vmem>>, vector<1x2x32xf32>,
    %124 = arith.index_cast %66 : i32 to index
    %c0_50 = arith.constant 0 : index
    %c0_51 = arith.constant 0 : index
    %125 = vector.load %arg5[%124, %c0_50, %c0_51] : memref<16x2x32xf32, #tpu.memory_space<vmem>>, vector<1x2x32xf32>
    %126 = vector.shape_cast %125 : vector<1x2x32xf32> to vector<2x32xf32>
    %127 = vector.shape_cast %115 : vector<2x32xf32> to vector<1x2x32xf32>
    tpu.vector_store %arg5[%124, %c0_50, %c0_51], %127 {strides = array<i32>} : memref<16x2x32xf32, #tpu.memory_space<vmem>>, vector<1x2x32xf32>,
    %c2_i32 = arith.constant 2 : i32
    %c15_i32_52 = arith.constant 15 : i32
    %128 = arith.subi %c15_i32_52, %c2_i32 : i32
    %c0_53 = arith.constant 0 : index
    %c0_54 = arith.constant 0 : index
    %129 = vector.load %arg6[%c0_53, %c0_54] : memref<2x64xf32, #tpu.memory_space<vmem>>, vector<2x64xf32>
    %130 = arith.truncf %129 : vector<2x64xf32> to vector<2x64xbf16>
    %cst_55 = arith.constant dense<0.000000e+00> : vector<2x256xf32>
    %131 = tpu.matmul %130, %3, %cst_55 {dimension_numbers = #tpu.dot_dimension_numbers<[1], [0], [0], [1], [0, 0, 1, 1], [], []>} : vector<2x64xbf16>, vector<64x256xbf16>, vector<2x256xf32> -> vector<2x256xf32>
    %132 = arith.index_cast %c2_i32 : i32 to index
    %c0_56 = arith.constant 0 : index
    %c0_57 = arith.constant 0 : index
    %133 = vector.load %arg1[%132, %c0_56, %c0_57] : memref<16x2x128xbf16, #tpu.memory_space<vmem>>, vector<1x2x128xbf16>
    %134 = vector.shape_cast %133 : vector<1x2x128xbf16> to vector<2x128xbf16>
    %135 = arith.extf %134 : vector<2x128xbf16> to vector<2x128xf32>
    %136 = arith.index_cast %128 : i32 to index
    %c0_58 = arith.constant 0 : index
    %c0_59 = arith.constant 0 : index
    %137 = vector.load %arg2[%136, %c0_58, %c0_59] : memref<16x2x128xbf16, #tpu.memory_space<vmem>>, vector<1x2x128xbf16>
    %138 = vector.shape_cast %137 : vector<1x2x128xbf16> to vector<2x128xbf16>
    %139 = arith.extf %138 : vector<2x128xbf16> to vector<2x128xf32>
    %140 = vector.extract_strided_slice %131 {offsets = [0, 0], sizes = [2, 128], strides = [1, 1]} : vector<2x256xf32> to vector<2x128xf32>
    %141 = arith.addf %135, %140 : vector<2x128xf32>
    %c0_60 = arith.constant 0 : index
    %c0_61 = arith.constant 0 : index
    %142 = vector.load %arg7[%c0_60, %c0_61] : memref<2x64xf32, #tpu.memory_space<vmem>>, vector<2x32xf32>
    %143 = vector.extract_strided_slice %141 {offsets = [0, 0], sizes = [2, 96], strides = [1, 1]} : vector<2x128xf32> to vector<2x96xf32>
    %144 = arith.negf %143 : vector<2x96xf32>
    %145 = math.exp %144 : vector<2x96xf32>
    %cst_62 = arith.constant 1.000000e+00 : f32
    %146 = vector.broadcast %cst_62 : f32 to vector<2x96xf32>
    %147 = arith.addf %146, %145 : vector<2x96xf32>
    %148 = arith.divf %146, %147 : vector<2x96xf32>
    %149 = vector.extract_strided_slice %141 {offsets = [0, 96], sizes = [2, 32], strides = [1, 1]} : vector<2x128xf32> to vector<2x32xf32>
    %150 = math.tanh %149 : vector<2x32xf32>
    %151 = vector.extract_strided_slice %148 {offsets = [0, 32], sizes = [2, 32], strides = [1, 1]} : vector<2x96xf32> to vector<2x32xf32>
    %152 = arith.mulf %151, %142 : vector<2x32xf32>
    %153 = vector.extract_strided_slice %148 {offsets = [0, 0], sizes = [2, 32], strides = [1, 1]} : vector<2x96xf32> to vector<2x32xf32>
    %154 = arith.mulf %153, %150 : vector<2x32xf32>
    %155 = arith.addf %152, %154 : vector<2x32xf32>
    %156 = vector.extract_strided_slice %148 {offsets = [0, 64], sizes = [2, 32], strides = [1, 1]} : vector<2x96xf32> to vector<2x32xf32>
    %157 = math.tanh %155 : vector<2x32xf32>
    %158 = arith.mulf %156, %157 : vector<2x32xf32>
    %159 = vector.extract_strided_slice %131 {offsets = [0, 128], sizes = [2, 128], strides = [1, 1]} : vector<2x256xf32> to vector<2x128xf32>
    %160 = arith.addf %139, %159 : vector<2x128xf32>
    %c0_63 = arith.constant 0 : index
    %c32_64 = arith.constant 32 : index
    %161 = vector.load %arg7[%c0_63, %c32_64] : memref<2x64xf32, #tpu.memory_space<vmem>>, vector<2x32xf32>
    %162 = vector.extract_strided_slice %160 {offsets = [0, 0], sizes = [2, 96], strides = [1, 1]} : vector<2x128xf32> to vector<2x96xf32>
    %163 = arith.negf %162 : vector<2x96xf32>
    %164 = math.exp %163 : vector<2x96xf32>
    %cst_65 = arith.constant 1.000000e+00 : f32
    %165 = vector.broadcast %cst_65 : f32 to vector<2x96xf32>
    %166 = arith.addf %165, %164 : vector<2x96xf32>
    %167 = arith.divf %165, %166 : vector<2x96xf32>
    %168 = vector.extract_strided_slice %160 {offsets = [0, 96], sizes = [2, 32], strides = [1, 1]} : vector<2x128xf32> to vector<2x32xf32>
    %169 = math.tanh %168 : vector<2x32xf32>
    %170 = vector.extract_strided_slice %167 {offsets = [0, 32], sizes = [2, 32], strides = [1, 1]} : vector<2x96xf32> to vector<2x32xf32>
    %171 = arith.mulf %170, %161 : vector<2x32xf32>
    %172 = vector.extract_strided_slice %167 {offsets = [0, 0], sizes = [2, 32], strides = [1, 1]} : vector<2x96xf32> to vector<2x32xf32>
    %173 = arith.mulf %172, %169 : vector<2x32xf32>
    %174 = arith.addf %171, %173 : vector<2x32xf32>
    %175 = vector.extract_strided_slice %167 {offsets = [0, 64], sizes = [2, 32], strides = [1, 1]} : vector<2x96xf32> to vector<2x32xf32>
    %176 = math.tanh %174 : vector<2x32xf32>
    %177 = arith.mulf %175, %176 : vector<2x32xf32>
    %c0_66 = arith.constant 0 : index
    %c0_67 = arith.constant 0 : index
    %178 = vector.load %arg6[%c0_66, %c0_67] : memref<2x64xf32, #tpu.memory_space<vmem>>, vector<2x32xf32>
    tpu.vector_store %arg6[%c0_66, %c0_67], %158 {strides = array<i32>} : memref<2x64xf32, #tpu.memory_space<vmem>>, vector<2x32xf32>,
    %c0_68 = arith.constant 0 : index
    %c32_69 = arith.constant 32 : index
    %179 = vector.load %arg6[%c0_68, %c32_69] : memref<2x64xf32, #tpu.memory_space<vmem>>, vector<2x32xf32>
    tpu.vector_store %arg6[%c0_68, %c32_69], %177 {strides = array<i32>} : memref<2x64xf32, #tpu.memory_space<vmem>>, vector<2x32xf32>,
    %c0_70 = arith.constant 0 : index
    %c0_71 = arith.constant 0 : index
    %180 = vector.load %arg7[%c0_70, %c0_71] : memref<2x64xf32, #tpu.memory_space<vmem>>, vector<2x32xf32>
    tpu.vector_store %arg7[%c0_70, %c0_71], %155 {strides = array<i32>} : memref<2x64xf32, #tpu.memory_space<vmem>>, vector<2x32xf32>,
    %c0_72 = arith.constant 0 : index
    %c32_73 = arith.constant 32 : index
    %181 = vector.load %arg7[%c0_72, %c32_73] : memref<2x64xf32, #tpu.memory_space<vmem>>, vector<2x32xf32>
    tpu.vector_store %arg7[%c0_72, %c32_73], %174 {strides = array<i32>} : memref<2x64xf32, #tpu.memory_space<vmem>>, vector<2x32xf32>,
    %182 = arith.index_cast %c2_i32 : i32 to index
    %c0_74 = arith.constant 0 : index
    %c0_75 = arith.constant 0 : index
    %183 = vector.load %arg4[%182, %c0_74, %c0_75] : memref<16x2x32xf32, #tpu.memory_space<vmem>>, vector<1x2x32xf32>
    %184 = vector.shape_cast %183 : vector<1x2x32xf32> to vector<2x32xf32>
    %185 = vector.shape_cast %158 : vector<2x32xf32> to vector<1x2x32xf32>
    tpu.vector_store %arg4[%182, %c0_74, %c0_75], %185 {strides = array<i32>} : memref<16x2x32xf32, #tpu.memory_space<vmem>>, vector<1x2x32xf32>,
    %186 = arith.index_cast %128 : i32 to index
    %c0_76 = arith.constant 0 : index
    %c0_77 = arith.constant 0 : index
    %187 = vector.load %arg5[%186, %c0_76, %c0_77] : memref<16x2x32xf32, #tpu.memory_space<vmem>>, vector<1x2x32xf32>
    %188 = vector.shape_cast %187 : vector<1x2x32xf32> to vector<2x32xf32>
    %189 = vector.shape_cast %177 : vector<2x32xf32> to vector<1x2x32xf32>
    tpu.vector_store %arg5[%186, %c0_76, %c0_77], %189 {strides = array<i32>} : memref<16x2x32xf32, #tpu.memory_space<vmem>>, vector<1x2x32xf32>,
    %c3_i32 = arith.constant 3 : i32
    %c15_i32_78 = arith.constant 15 : i32
    %190 = arith.subi %c15_i32_78, %c3_i32 : i32
    %c0_79 = arith.constant 0 : index
    %c0_80 = arith.constant 0 : index
    %191 = vector.load %arg6[%c0_79, %c0_80] : memref<2x64xf32, #tpu.memory_space<vmem>>, vector<2x64xf32>
    %192 = arith.truncf %191 : vector<2x64xf32> to vector<2x64xbf16>
    %cst_81 = arith.constant dense<0.000000e+00> : vector<2x256xf32>
    %193 = tpu.matmul %192, %3, %cst_81 {dimension_numbers = #tpu.dot_dimension_numbers<[1], [0], [0], [1], [0, 0, 1, 1], [], []>} : vector<2x64xbf16>, vector<64x256xbf16>, vector<2x256xf32> -> vector<2x256xf32>
    %194 = arith.index_cast %c3_i32 : i32 to index
    %c0_82 = arith.constant 0 : index
    %c0_83 = arith.constant 0 : index
    %195 = vector.load %arg1[%194, %c0_82, %c0_83] : memref<16x2x128xbf16, #tpu.memory_space<vmem>>, vector<1x2x128xbf16>
    %196 = vector.shape_cast %195 : vector<1x2x128xbf16> to vector<2x128xbf16>
    %197 = arith.extf %196 : vector<2x128xbf16> to vector<2x128xf32>
    %198 = arith.index_cast %190 : i32 to index
    %c0_84 = arith.constant 0 : index
    %c0_85 = arith.constant 0 : index
    %199 = vector.load %arg2[%198, %c0_84, %c0_85] : memref<16x2x128xbf16, #tpu.memory_space<vmem>>, vector<1x2x128xbf16>
    %200 = vector.shape_cast %199 : vector<1x2x128xbf16> to vector<2x128xbf16>
    %201 = arith.extf %200 : vector<2x128xbf16> to vector<2x128xf32>
    %202 = vector.extract_strided_slice %193 {offsets = [0, 0], sizes = [2, 128], strides = [1, 1]} : vector<2x256xf32> to vector<2x128xf32>
    %203 = arith.addf %197, %202 : vector<2x128xf32>
    %c0_86 = arith.constant 0 : index
    %c0_87 = arith.constant 0 : index
    %204 = vector.load %arg7[%c0_86, %c0_87] : memref<2x64xf32, #tpu.memory_space<vmem>>, vector<2x32xf32>
    %205 = vector.extract_strided_slice %203 {offsets = [0, 0], sizes = [2, 96], strides = [1, 1]} : vector<2x128xf32> to vector<2x96xf32>
    %206 = arith.negf %205 : vector<2x96xf32>
    %207 = math.exp %206 : vector<2x96xf32>
    %cst_88 = arith.constant 1.000000e+00 : f32
    %208 = vector.broadcast %cst_88 : f32 to vector<2x96xf32>
    %209 = arith.addf %208, %207 : vector<2x96xf32>
    %210 = arith.divf %208, %209 : vector<2x96xf32>
    %211 = vector.extract_strided_slice %203 {offsets = [0, 96], sizes = [2, 32], strides = [1, 1]} : vector<2x128xf32> to vector<2x32xf32>
    %212 = math.tanh %211 : vector<2x32xf32>
    %213 = vector.extract_strided_slice %210 {offsets = [0, 32], sizes = [2, 32], strides = [1, 1]} : vector<2x96xf32> to vector<2x32xf32>
    %214 = arith.mulf %213, %204 : vector<2x32xf32>
    %215 = vector.extract_strided_slice %210 {offsets = [0, 0], sizes = [2, 32], strides = [1, 1]} : vector<2x96xf32> to vector<2x32xf32>
    %216 = arith.mulf %215, %212 : vector<2x32xf32>
    %217 = arith.addf %214, %216 : vector<2x32xf32>
    %218 = vector.extract_strided_slice %210 {offsets = [0, 64], sizes = [2, 32], strides = [1, 1]} : vector<2x96xf32> to vector<2x32xf32>
    %219 = math.tanh %217 : vector<2x32xf32>
    %220 = arith.mulf %218, %219 : vector<2x32xf32>
    %221 = vector.extract_strided_slice %193 {offsets = [0, 128], sizes = [2, 128], strides = [1, 1]} : vector<2x256xf32> to vector<2x128xf32>
    %222 = arith.addf %201, %221 : vector<2x128xf32>
    %c0_89 = arith.constant 0 : index
    %c32_90 = arith.constant 32 : index
    %223 = vector.load %arg7[%c0_89, %c32_90] : memref<2x64xf32, #tpu.memory_space<vmem>>, vector<2x32xf32>
    %224 = vector.extract_strided_slice %222 {offsets = [0, 0], sizes = [2, 96], strides = [1, 1]} : vector<2x128xf32> to vector<2x96xf32>
    %225 = arith.negf %224 : vector<2x96xf32>
    %226 = math.exp %225 : vector<2x96xf32>
    %cst_91 = arith.constant 1.000000e+00 : f32
    %227 = vector.broadcast %cst_91 : f32 to vector<2x96xf32>
    %228 = arith.addf %227, %226 : vector<2x96xf32>
    %229 = arith.divf %227, %228 : vector<2x96xf32>
    %230 = vector.extract_strided_slice %222 {offsets = [0, 96], sizes = [2, 32], strides = [1, 1]} : vector<2x128xf32> to vector<2x32xf32>
    %231 = math.tanh %230 : vector<2x32xf32>
    %232 = vector.extract_strided_slice %229 {offsets = [0, 32], sizes = [2, 32], strides = [1, 1]} : vector<2x96xf32> to vector<2x32xf32>
    %233 = arith.mulf %232, %223 : vector<2x32xf32>
    %234 = vector.extract_strided_slice %229 {offsets = [0, 0], sizes = [2, 32], strides = [1, 1]} : vector<2x96xf32> to vector<2x32xf32>
    %235 = arith.mulf %234, %231 : vector<2x32xf32>
    %236 = arith.addf %233, %235 : vector<2x32xf32>
    %237 = vector.extract_strided_slice %229 {offsets = [0, 64], sizes = [2, 32], strides = [1, 1]} : vector<2x96xf32> to vector<2x32xf32>
    %238 = math.tanh %236 : vector<2x32xf32>
    %239 = arith.mulf %237, %238 : vector<2x32xf32>
    %c0_92 = arith.constant 0 : index
    %c0_93 = arith.constant 0 : index
    %240 = vector.load %arg6[%c0_92, %c0_93] : memref<2x64xf32, #tpu.memory_space<vmem>>, vector<2x32xf32>
    tpu.vector_store %arg6[%c0_92, %c0_93], %220 {strides = array<i32>} : memref<2x64xf32, #tpu.memory_space<vmem>>, vector<2x32xf32>,
    %c0_94 = arith.constant 0 : index
    %c32_95 = arith.constant 32 : index
    %241 = vector.load %arg6[%c0_94, %c32_95] : memref<2x64xf32, #tpu.memory_space<vmem>>, vector<2x32xf32>
    tpu.vector_store %arg6[%c0_94, %c32_95], %239 {strides = array<i32>} : memref<2x64xf32, #tpu.memory_space<vmem>>, vector<2x32xf32>,
    %c0_96 = arith.constant 0 : index
    %c0_97 = arith.constant 0 : index
    %242 = vector.load %arg7[%c0_96, %c0_97] : memref<2x64xf32, #tpu.memory_space<vmem>>, vector<2x32xf32>
    tpu.vector_store %arg7[%c0_96, %c0_97], %217 {strides = array<i32>} : memref<2x64xf32, #tpu.memory_space<vmem>>, vector<2x32xf32>,
    %c0_98 = arith.constant 0 : index
    %c32_99 = arith.constant 32 : index
    %243 = vector.load %arg7[%c0_98, %c32_99] : memref<2x64xf32, #tpu.memory_space<vmem>>, vector<2x32xf32>
    tpu.vector_store %arg7[%c0_98, %c32_99], %236 {strides = array<i32>} : memref<2x64xf32, #tpu.memory_space<vmem>>, vector<2x32xf32>,
    %244 = arith.index_cast %c3_i32 : i32 to index
    %c0_100 = arith.constant 0 : index
    %c0_101 = arith.constant 0 : index
    %245 = vector.load %arg4[%244, %c0_100, %c0_101] : memref<16x2x32xf32, #tpu.memory_space<vmem>>, vector<1x2x32xf32>
    %246 = vector.shape_cast %245 : vector<1x2x32xf32> to vector<2x32xf32>
    %247 = vector.shape_cast %220 : vector<2x32xf32> to vector<1x2x32xf32>
    tpu.vector_store %arg4[%244, %c0_100, %c0_101], %247 {strides = array<i32>} : memref<16x2x32xf32, #tpu.memory_space<vmem>>, vector<1x2x32xf32>,
    %248 = arith.index_cast %190 : i32 to index
    %c0_102 = arith.constant 0 : index
    %c0_103 = arith.constant 0 : index
    %249 = vector.load %arg5[%248, %c0_102, %c0_103] : memref<16x2x32xf32, #tpu.memory_space<vmem>>, vector<1x2x32xf32>
    %250 = vector.shape_cast %249 : vector<1x2x32xf32> to vector<2x32xf32>
    %251 = vector.shape_cast %239 : vector<2x32xf32> to vector<1x2x32xf32>
    tpu.vector_store %arg5[%248, %c0_102, %c0_103], %251 {strides = array<i32>} : memref<16x2x32xf32, #tpu.memory_space<vmem>>, vector<1x2x32xf32>,
    %c4_i32 = arith.constant 4 : i32
    %c15_i32_104 = arith.constant 15 : i32
    %252 = arith.subi %c15_i32_104, %c4_i32 : i32
    %c0_105 = arith.constant 0 : index
    %c0_106 = arith.constant 0 : index
    %253 = vector.load %arg6[%c0_105, %c0_106] : memref<2x64xf32, #tpu.memory_space<vmem>>, vector<2x64xf32>
    %254 = arith.truncf %253 : vector<2x64xf32> to vector<2x64xbf16>
    %cst_107 = arith.constant dense<0.000000e+00> : vector<2x256xf32>
    %255 = tpu.matmul %254, %3, %cst_107 {dimension_numbers = #tpu.dot_dimension_numbers<[1], [0], [0], [1], [0, 0, 1, 1], [], []>} : vector<2x64xbf16>, vector<64x256xbf16>, vector<2x256xf32> -> vector<2x256xf32>
    %256 = arith.index_cast %c4_i32 : i32 to index
    %c0_108 = arith.constant 0 : index
    %c0_109 = arith.constant 0 : index
    %257 = vector.load %arg1[%256, %c0_108, %c0_109] : memref<16x2x128xbf16, #tpu.memory_space<vmem>>, vector<1x2x128xbf16>
    %258 = vector.shape_cast %257 : vector<1x2x128xbf16> to vector<2x128xbf16>
    %259 = arith.extf %258 : vector<2x128xbf16> to vector<2x128xf32>
    %260 = arith.index_cast %252 : i32 to index
    %c0_110 = arith.constant 0 : index
    %c0_111 = arith.constant 0 : index
    %261 = vector.load %arg2[%260, %c0_110, %c0_111] : memref<16x2x128xbf16, #tpu.memory_space<vmem>>, vector<1x2x128xbf16>
    %262 = vector.shape_cast %261 : vector<1x2x128xbf16> to vector<2x128xbf16>
    %263 = arith.extf %262 : vector<2x128xbf16> to vector<2x128xf32>
    %264 = vector.extract_strided_slice %255 {offsets = [0, 0], sizes = [2, 128], strides = [1, 1]} : vector<2x256xf32> to vector<2x128xf32>
    %265 = arith.addf %259, %264 : vector<2x128xf32>
    %c0_112 = arith.constant 0 : index
    %c0_113 = arith.constant 0 : index
    %266 = vector.load %arg7[%c0_112, %c0_113] : memref<2x64xf32, #tpu.memory_space<vmem>>, vector<2x32xf32>
    %267 = vector.extract_strided_slice %265 {offsets = [0, 0], sizes = [2, 96], strides = [1, 1]} : vector<2x128xf32> to vector<2x96xf32>
    %268 = arith.negf %267 : vector<2x96xf32>
    %269 = math.exp %268 : vector<2x96xf32>
    %cst_114 = arith.constant 1.000000e+00 : f32
    %270 = vector.broadcast %cst_114 : f32 to vector<2x96xf32>
    %271 = arith.addf %270, %269 : vector<2x96xf32>
    %272 = arith.divf %270, %271 : vector<2x96xf32>
    %273 = vector.extract_strided_slice %265 {offsets = [0, 96], sizes = [2, 32], strides = [1, 1]} : vector<2x128xf32> to vector<2x32xf32>
    %274 = math.tanh %273 : vector<2x32xf32>
    %275 = vector.extract_strided_slice %272 {offsets = [0, 32], sizes = [2, 32], strides = [1, 1]} : vector<2x96xf32> to vector<2x32xf32>
    %276 = arith.mulf %275, %266 : vector<2x32xf32>
    %277 = vector.extract_strided_slice %272 {offsets = [0, 0], sizes = [2, 32], strides = [1, 1]} : vector<2x96xf32> to vector<2x32xf32>
    %278 = arith.mulf %277, %274 : vector<2x32xf32>
    %279 = arith.addf %276, %278 : vector<2x32xf32>
    %280 = vector.extract_strided_slice %272 {offsets = [0, 64], sizes = [2, 32], strides = [1, 1]} : vector<2x96xf32> to vector<2x32xf32>
    %281 = math.tanh %279 : vector<2x32xf32>
    %282 = arith.mulf %280, %281 : vector<2x32xf32>
    %283 = vector.extract_strided_slice %255 {offsets = [0, 128], sizes = [2, 128], strides = [1, 1]} : vector<2x256xf32> to vector<2x128xf32>
    %284 = arith.addf %263, %283 : vector<2x128xf32>
    %c0_115 = arith.constant 0 : index
    %c32_116 = arith.constant 32 : index
    %285 = vector.load %arg7[%c0_115, %c32_116] : memref<2x64xf32, #tpu.memory_space<vmem>>, vector<2x32xf32>
    %286 = vector.extract_strided_slice %284 {offsets = [0, 0], sizes = [2, 96], strides = [1, 1]} : vector<2x128xf32> to vector<2x96xf32>
    %287 = arith.negf %286 : vector<2x96xf32>
    %288 = math.exp %287 : vector<2x96xf32>
    %cst_117 = arith.constant 1.000000e+00 : f32
    %289 = vector.broadcast %cst_117 : f32 to vector<2x96xf32>
    %290 = arith.addf %289, %288 : vector<2x96xf32>
    %291 = arith.divf %289, %290 : vector<2x96xf32>
    %292 = vector.extract_strided_slice %284 {offsets = [0, 96], sizes = [2, 32], strides = [1, 1]} : vector<2x128xf32> to vector<2x32xf32>
    %293 = math.tanh %292 : vector<2x32xf32>
    %294 = vector.extract_strided_slice %291 {offsets = [0, 32], sizes = [2, 32], strides = [1, 1]} : vector<2x96xf32> to vector<2x32xf32>
    %295 = arith.mulf %294, %285 : vector<2x32xf32>
    %296 = vector.extract_strided_slice %291 {offsets = [0, 0], sizes = [2, 32], strides = [1, 1]} : vector<2x96xf32> to vector<2x32xf32>
    %297 = arith.mulf %296, %293 : vector<2x32xf32>
    %298 = arith.addf %295, %297 : vector<2x32xf32>
    %299 = vector.extract_strided_slice %291 {offsets = [0, 64], sizes = [2, 32], strides = [1, 1]} : vector<2x96xf32> to vector<2x32xf32>
    %300 = math.tanh %298 : vector<2x32xf32>
    %301 = arith.mulf %299, %300 : vector<2x32xf32>
    %c0_118 = arith.constant 0 : index
    %c0_119 = arith.constant 0 : index
    %302 = vector.load %arg6[%c0_118, %c0_119] : memref<2x64xf32, #tpu.memory_space<vmem>>, vector<2x32xf32>
    tpu.vector_store %arg6[%c0_118, %c0_119], %282 {strides = array<i32>} : memref<2x64xf32, #tpu.memory_space<vmem>>, vector<2x32xf32>,
    %c0_120 = arith.constant 0 : index
    %c32_121 = arith.constant 32 : index
    %303 = vector.load %arg6[%c0_120, %c32_121] : memref<2x64xf32, #tpu.memory_space<vmem>>, vector<2x32xf32>
    tpu.vector_store %arg6[%c0_120, %c32_121], %301 {strides = array<i32>} : memref<2x64xf32, #tpu.memory_space<vmem>>, vector<2x32xf32>,
    %c0_122 = arith.constant 0 : index
    %c0_123 = arith.constant 0 : index
    %304 = vector.load %arg7[%c0_122, %c0_123] : memref<2x64xf32, #tpu.memory_space<vmem>>, vector<2x32xf32>
    tpu.vector_store %arg7[%c0_122, %c0_123], %279 {strides = array<i32>} : memref<2x64xf32, #tpu.memory_space<vmem>>, vector<2x32xf32>,
    %c0_124 = arith.constant 0 : index
    %c32_125 = arith.constant 32 : index
    %305 = vector.load %arg7[%c0_124, %c32_125] : memref<2x64xf32, #tpu.memory_space<vmem>>, vector<2x32xf32>
    tpu.vector_store %arg7[%c0_124, %c32_125], %298 {strides = array<i32>} : memref<2x64xf32, #tpu.memory_space<vmem>>, vector<2x32xf32>,
    %306 = arith.index_cast %c4_i32 : i32 to index
    %c0_126 = arith.constant 0 : index
    %c0_127 = arith.constant 0 : index
    %307 = vector.load %arg4[%306, %c0_126, %c0_127] : memref<16x2x32xf32, #tpu.memory_space<vmem>>, vector<1x2x32xf32>
    %308 = vector.shape_cast %307 : vector<1x2x32xf32> to vector<2x32xf32>
    %309 = vector.shape_cast %282 : vector<2x32xf32> to vector<1x2x32xf32>
    tpu.vector_store %arg4[%306, %c0_126, %c0_127], %309 {strides = array<i32>} : memref<16x2x32xf32, #tpu.memory_space<vmem>>, vector<1x2x32xf32>,
    %310 = arith.index_cast %252 : i32 to index
    %c0_128 = arith.constant 0 : index
    %c0_129 = arith.constant 0 : index
    %311 = vector.load %arg5[%310, %c0_128, %c0_129] : memref<16x2x32xf32, #tpu.memory_space<vmem>>, vector<1x2x32xf32>
    %312 = vector.shape_cast %311 : vector<1x2x32xf32> to vector<2x32xf32>
    %313 = vector.shape_cast %301 : vector<2x32xf32> to vector<1x2x32xf32>
    tpu.vector_store %arg5[%310, %c0_128, %c0_129], %313 {strides = array<i32>} : memref<16x2x32xf32, #tpu.memory_space<vmem>>, vector<1x2x32xf32>,
    %c5_i32 = arith.constant 5 : i32
    %c15_i32_130 = arith.constant 15 : i32
    %314 = arith.subi %c15_i32_130, %c5_i32 : i32
    %c0_131 = arith.constant 0 : index
    %c0_132 = arith.constant 0 : index
    %315 = vector.load %arg6[%c0_131, %c0_132] : memref<2x64xf32, #tpu.memory_space<vmem>>, vector<2x64xf32>
    %316 = arith.truncf %315 : vector<2x64xf32> to vector<2x64xbf16>
    %cst_133 = arith.constant dense<0.000000e+00> : vector<2x256xf32>
    %317 = tpu.matmul %316, %3, %cst_133 {dimension_numbers = #tpu.dot_dimension_numbers<[1], [0], [0], [1], [0, 0, 1, 1], [], []>} : vector<2x64xbf16>, vector<64x256xbf16>, vector<2x256xf32> -> vector<2x256xf32>
    %318 = arith.index_cast %c5_i32 : i32 to index
    %c0_134 = arith.constant 0 : index
    %c0_135 = arith.constant 0 : index
    %319 = vector.load %arg1[%318, %c0_134, %c0_135] : memref<16x2x128xbf16, #tpu.memory_space<vmem>>, vector<1x2x128xbf16>
    %320 = vector.shape_cast %319 : vector<1x2x128xbf16> to vector<2x128xbf16>
    %321 = arith.extf %320 : vector<2x128xbf16> to vector<2x128xf32>
    %322 = arith.index_cast %314 : i32 to index
    %c0_136 = arith.constant 0 : index
    %c0_137 = arith.constant 0 : index
    %323 = vector.load %arg2[%322, %c0_136, %c0_137] : memref<16x2x128xbf16, #tpu.memory_space<vmem>>, vector<1x2x128xbf16>
    %324 = vector.shape_cast %323 : vector<1x2x128xbf16> to vector<2x128xbf16>
    %325 = arith.extf %324 : vector<2x128xbf16> to vector<2x128xf32>
    %326 = vector.extract_strided_slice %317 {offsets = [0, 0], sizes = [2, 128], strides = [1, 1]} : vector<2x256xf32> to vector<2x128xf32>
    %327 = arith.addf %321, %326 : vector<2x128xf32>
    %c0_138 = arith.constant 0 : index
    %c0_139 = arith.constant 0 : index
    %328 = vector.load %arg7[%c0_138, %c0_139] : memref<2x64xf32, #tpu.memory_space<vmem>>, vector<2x32xf32>
    %329 = vector.extract_strided_slice %327 {offsets = [0, 0], sizes = [2, 96], strides = [1, 1]} : vector<2x128xf32> to vector<2x96xf32>
    %330 = arith.negf %329 : vector<2x96xf32>
    %331 = math.exp %330 : vector<2x96xf32>
    %cst_140 = arith.constant 1.000000e+00 : f32
    %332 = vector.broadcast %cst_140 : f32 to vector<2x96xf32>
    %333 = arith.addf %332, %331 : vector<2x96xf32>
    %334 = arith.divf %332, %333 : vector<2x96xf32>
    %335 = vector.extract_strided_slice %327 {offsets = [0, 96], sizes = [2, 32], strides = [1, 1]} : vector<2x128xf32> to vector<2x32xf32>
    %336 = math.tanh %335 : vector<2x32xf32>
    %337 = vector.extract_strided_slice %334 {offsets = [0, 32], sizes = [2, 32], strides = [1, 1]} : vector<2x96xf32> to vector<2x32xf32>
    %338 = arith.mulf %337, %328 : vector<2x32xf32>
    %339 = vector.extract_strided_slice %334 {offsets = [0, 0], sizes = [2, 32], strides = [1, 1]} : vector<2x96xf32> to vector<2x32xf32>
    %340 = arith.mulf %339, %336 : vector<2x32xf32>
    %341 = arith.addf %338, %340 : vector<2x32xf32>
    %342 = vector.extract_strided_slice %334 {offsets = [0, 64], sizes = [2, 32], strides = [1, 1]} : vector<2x96xf32> to vector<2x32xf32>
    %343 = math.tanh %341 : vector<2x32xf32>
    %344 = arith.mulf %342, %343 : vector<2x32xf32>
    %345 = vector.extract_strided_slice %317 {offsets = [0, 128], sizes = [2, 128], strides = [1, 1]} : vector<2x256xf32> to vector<2x128xf32>
    %346 = arith.addf %325, %345 : vector<2x128xf32>
    %c0_141 = arith.constant 0 : index
    %c32_142 = arith.constant 32 : index
    %347 = vector.load %arg7[%c0_141, %c32_142] : memref<2x64xf32, #tpu.memory_space<vmem>>, vector<2x32xf32>
    %348 = vector.extract_strided_slice %346 {offsets = [0, 0], sizes = [2, 96], strides = [1, 1]} : vector<2x128xf32> to vector<2x96xf32>
    %349 = arith.negf %348 : vector<2x96xf32>
    %350 = math.exp %349 : vector<2x96xf32>
    %cst_143 = arith.constant 1.000000e+00 : f32
    %351 = vector.broadcast %cst_143 : f32 to vector<2x96xf32>
    %352 = arith.addf %351, %350 : vector<2x96xf32>
    %353 = arith.divf %351, %352 : vector<2x96xf32>
    %354 = vector.extract_strided_slice %346 {offsets = [0, 96], sizes = [2, 32], strides = [1, 1]} : vector<2x128xf32> to vector<2x32xf32>
    %355 = math.tanh %354 : vector<2x32xf32>
    %356 = vector.extract_strided_slice %353 {offsets = [0, 32], sizes = [2, 32], strides = [1, 1]} : vector<2x96xf32> to vector<2x32xf32>
    %357 = arith.mulf %356, %347 : vector<2x32xf32>
    %358 = vector.extract_strided_slice %353 {offsets = [0, 0], sizes = [2, 32], strides = [1, 1]} : vector<2x96xf32> to vector<2x32xf32>
    %359 = arith.mulf %358, %355 : vector<2x32xf32>
    %360 = arith.addf %357, %359 : vector<2x32xf32>
    %361 = vector.extract_strided_slice %353 {offsets = [0, 64], sizes = [2, 32], strides = [1, 1]} : vector<2x96xf32> to vector<2x32xf32>
    %362 = math.tanh %360 : vector<2x32xf32>
    %363 = arith.mulf %361, %362 : vector<2x32xf32>
    %c0_144 = arith.constant 0 : index
    %c0_145 = arith.constant 0 : index
    %364 = vector.load %arg6[%c0_144, %c0_145] : memref<2x64xf32, #tpu.memory_space<vmem>>, vector<2x32xf32>
    tpu.vector_store %arg6[%c0_144, %c0_145], %344 {strides = array<i32>} : memref<2x64xf32, #tpu.memory_space<vmem>>, vector<2x32xf32>,
    %c0_146 = arith.constant 0 : index
    %c32_147 = arith.constant 32 : index
    %365 = vector.load %arg6[%c0_146, %c32_147] : memref<2x64xf32, #tpu.memory_space<vmem>>, vector<2x32xf32>
    tpu.vector_store %arg6[%c0_146, %c32_147], %363 {strides = array<i32>} : memref<2x64xf32, #tpu.memory_space<vmem>>, vector<2x32xf32>,
    %c0_148 = arith.constant 0 : index
    %c0_149 = arith.constant 0 : index
    %366 = vector.load %arg7[%c0_148, %c0_149] : memref<2x64xf32, #tpu.memory_space<vmem>>, vector<2x32xf32>
    tpu.vector_store %arg7[%c0_148, %c0_149], %341 {strides = array<i32>} : memref<2x64xf32, #tpu.memory_space<vmem>>, vector<2x32xf32>,
    %c0_150 = arith.constant 0 : index
    %c32_151 = arith.constant 32 : index
    %367 = vector.load %arg7[%c0_150, %c32_151] : memref<2x64xf32, #tpu.memory_space<vmem>>, vector<2x32xf32>
    tpu.vector_store %arg7[%c0_150, %c32_151], %360 {strides = array<i32>} : memref<2x64xf32, #tpu.memory_space<vmem>>, vector<2x32xf32>,
    %368 = arith.index_cast %c5_i32 : i32 to index
    %c0_152 = arith.constant 0 : index
    %c0_153 = arith.constant 0 : index
    %369 = vector.load %arg4[%368, %c0_152, %c0_153] : memref<16x2x32xf32, #tpu.memory_space<vmem>>, vector<1x2x32xf32>
    %370 = vector.shape_cast %369 : vector<1x2x32xf32> to vector<2x32xf32>
    %371 = vector.shape_cast %344 : vector<2x32xf32> to vector<1x2x32xf32>
    tpu.vector_store %arg4[%368, %c0_152, %c0_153], %371 {strides = array<i32>} : memref<16x2x32xf32, #tpu.memory_space<vmem>>, vector<1x2x32xf32>,
    %372 = arith.index_cast %314 : i32 to index
    %c0_154 = arith.constant 0 : index
    %c0_155 = arith.constant 0 : index
    %373 = vector.load %arg5[%372, %c0_154, %c0_155] : memref<16x2x32xf32, #tpu.memory_space<vmem>>, vector<1x2x32xf32>
    %374 = vector.shape_cast %373 : vector<1x2x32xf32> to vector<2x32xf32>
    %375 = vector.shape_cast %363 : vector<2x32xf32> to vector<1x2x32xf32>
    tpu.vector_store %arg5[%372, %c0_154, %c0_155], %375 {strides = array<i32>} : memref<16x2x32xf32, #tpu.memory_space<vmem>>, vector<1x2x32xf32>,
    %c6_i32 = arith.constant 6 : i32
    %c15_i32_156 = arith.constant 15 : i32
    %376 = arith.subi %c15_i32_156, %c6_i32 : i32
    %c0_157 = arith.constant 0 : index
    %c0_158 = arith.constant 0 : index
    %377 = vector.load %arg6[%c0_157, %c0_158] : memref<2x64xf32, #tpu.memory_space<vmem>>, vector<2x64xf32>
    %378 = arith.truncf %377 : vector<2x64xf32> to vector<2x64xbf16>
    %cst_159 = arith.constant dense<0.000000e+00> : vector<2x256xf32>
    %379 = tpu.matmul %378, %3, %cst_159 {dimension_numbers = #tpu.dot_dimension_numbers<[1], [0], [0], [1], [0, 0, 1, 1], [], []>} : vector<2x64xbf16>, vector<64x256xbf16>, vector<2x256xf32> -> vector<2x256xf32>
    %380 = arith.index_cast %c6_i32 : i32 to index
    %c0_160 = arith.constant 0 : index
    %c0_161 = arith.constant 0 : index
    %381 = vector.load %arg1[%380, %c0_160, %c0_161] : memref<16x2x128xbf16, #tpu.memory_space<vmem>>, vector<1x2x128xbf16>
    %382 = vector.shape_cast %381 : vector<1x2x128xbf16> to vector<2x128xbf16>
    %383 = arith.extf %382 : vector<2x128xbf16> to vector<2x128xf32>
    %384 = arith.index_cast %376 : i32 to index
    %c0_162 = arith.constant 0 : index
    %c0_163 = arith.constant 0 : index
    %385 = vector.load %arg2[%384, %c0_162, %c0_163] : memref<16x2x128xbf16, #tpu.memory_space<vmem>>, vector<1x2x128xbf16>
    %386 = vector.shape_cast %385 : vector<1x2x128xbf16> to vector<2x128xbf16>
    %387 = arith.extf %386 : vector<2x128xbf16> to vector<2x128xf32>
    %388 = vector.extract_strided_slice %379 {offsets = [0, 0], sizes = [2, 128], strides = [1, 1]} : vector<2x256xf32> to vector<2x128xf32>
    %389 = arith.addf %383, %388 : vector<2x128xf32>
    %c0_164 = arith.constant 0 : index
    %c0_165 = arith.constant 0 : index
    %390 = vector.load %arg7[%c0_164, %c0_165] : memref<2x64xf32, #tpu.memory_space<vmem>>, vector<2x32xf32>
    %391 = vector.extract_strided_slice %389 {offsets = [0, 0], sizes = [2, 96], strides = [1, 1]} : vector<2x128xf32> to vector<2x96xf32>
    %392 = arith.negf %391 : vector<2x96xf32>
    %393 = math.exp %392 : vector<2x96xf32>
    %cst_166 = arith.constant 1.000000e+00 : f32
    %394 = vector.broadcast %cst_166 : f32 to vector<2x96xf32>
    %395 = arith.addf %394, %393 : vector<2x96xf32>
    %396 = arith.divf %394, %395 : vector<2x96xf32>
    %397 = vector.extract_strided_slice %389 {offsets = [0, 96], sizes = [2, 32], strides = [1, 1]} : vector<2x128xf32> to vector<2x32xf32>
    %398 = math.tanh %397 : vector<2x32xf32>
    %399 = vector.extract_strided_slice %396 {offsets = [0, 32], sizes = [2, 32], strides = [1, 1]} : vector<2x96xf32> to vector<2x32xf32>
    %400 = arith.mulf %399, %390 : vector<2x32xf32>
    %401 = vector.extract_strided_slice %396 {offsets = [0, 0], sizes = [2, 32], strides = [1, 1]} : vector<2x96xf32> to vector<2x32xf32>
    %402 = arith.mulf %401, %398 : vector<2x32xf32>
    %403 = arith.addf %400, %402 : vector<2x32xf32>
    %404 = vector.extract_strided_slice %396 {offsets = [0, 64], sizes = [2, 32], strides = [1, 1]} : vector<2x96xf32> to vector<2x32xf32>
    %405 = math.tanh %403 : vector<2x32xf32>
    %406 = arith.mulf %404, %405 : vector<2x32xf32>
    %407 = vector.extract_strided_slice %379 {offsets = [0, 128], sizes = [2, 128], strides = [1, 1]} : vector<2x256xf32> to vector<2x128xf32>
    %408 = arith.addf %387, %407 : vector<2x128xf32>
    %c0_167 = arith.constant 0 : index
    %c32_168 = arith.constant 32 : index
    %409 = vector.load %arg7[%c0_167, %c32_168] : memref<2x64xf32, #tpu.memory_space<vmem>>, vector<2x32xf32>
    %410 = vector.extract_strided_slice %408 {offsets = [0, 0], sizes = [2, 96], strides = [1, 1]} : vector<2x128xf32> to vector<2x96xf32>
    %411 = arith.negf %410 : vector<2x96xf32>
    %412 = math.exp %411 : vector<2x96xf32>
    %cst_169 = arith.constant 1.000000e+00 : f32
    %413 = vector.broadcast %cst_169 : f32 to vector<2x96xf32>
    %414 = arith.addf %413, %412 : vector<2x96xf32>
    %415 = arith.divf %413, %414 : vector<2x96xf32>
    %416 = vector.extract_strided_slice %408 {offsets = [0, 96], sizes = [2, 32], strides = [1, 1]} : vector<2x128xf32> to vector<2x32xf32>
    %417 = math.tanh %416 : vector<2x32xf32>
    %418 = vector.extract_strided_slice %415 {offsets = [0, 32], sizes = [2, 32], strides = [1, 1]} : vector<2x96xf32> to vector<2x32xf32>
    %419 = arith.mulf %418, %409 : vector<2x32xf32>
    %420 = vector.extract_strided_slice %415 {offsets = [0, 0], sizes = [2, 32], strides = [1, 1]} : vector<2x96xf32> to vector<2x32xf32>
    %421 = arith.mulf %420, %417 : vector<2x32xf32>
    %422 = arith.addf %419, %421 : vector<2x32xf32>
    %423 = vector.extract_strided_slice %415 {offsets = [0, 64], sizes = [2, 32], strides = [1, 1]} : vector<2x96xf32> to vector<2x32xf32>
    %424 = math.tanh %422 : vector<2x32xf32>
    %425 = arith.mulf %423, %424 : vector<2x32xf32>
    %c0_170 = arith.constant 0 : index
    %c0_171 = arith.constant 0 : index
    %426 = vector.load %arg6[%c0_170, %c0_171] : memref<2x64xf32, #tpu.memory_space<vmem>>, vector<2x32xf32>
    tpu.vector_store %arg6[%c0_170, %c0_171], %406 {strides = array<i32>} : memref<2x64xf32, #tpu.memory_space<vmem>>, vector<2x32xf32>,
    %c0_172 = arith.constant 0 : index
    %c32_173 = arith.constant 32 : index
    %427 = vector.load %arg6[%c0_172, %c32_173] : memref<2x64xf32, #tpu.memory_space<vmem>>, vector<2x32xf32>
    tpu.vector_store %arg6[%c0_172, %c32_173], %425 {strides = array<i32>} : memref<2x64xf32, #tpu.memory_space<vmem>>, vector<2x32xf32>,
    %c0_174 = arith.constant 0 : index
    %c0_175 = arith.constant 0 : index
    %428 = vector.load %arg7[%c0_174, %c0_175] : memref<2x64xf32, #tpu.memory_space<vmem>>, vector<2x32xf32>
    tpu.vector_store %arg7[%c0_174, %c0_175], %403 {strides = array<i32>} : memref<2x64xf32, #tpu.memory_space<vmem>>, vector<2x32xf32>,
    %c0_176 = arith.constant 0 : index
    %c32_177 = arith.constant 32 : index
    %429 = vector.load %arg7[%c0_176, %c32_177] : memref<2x64xf32, #tpu.memory_space<vmem>>, vector<2x32xf32>
    tpu.vector_store %arg7[%c0_176, %c32_177], %422 {strides = array<i32>} : memref<2x64xf32, #tpu.memory_space<vmem>>, vector<2x32xf32>,
    %430 = arith.index_cast %c6_i32 : i32 to index
    %c0_178 = arith.constant 0 : index
    %c0_179 = arith.constant 0 : index
    %431 = vector.load %arg4[%430, %c0_178, %c0_179] : memref<16x2x32xf32, #tpu.memory_space<vmem>>, vector<1x2x32xf32>
    %432 = vector.shape_cast %431 : vector<1x2x32xf32> to vector<2x32xf32>
    %433 = vector.shape_cast %406 : vector<2x32xf32> to vector<1x2x32xf32>
    tpu.vector_store %arg4[%430, %c0_178, %c0_179], %433 {strides = array<i32>} : memref<16x2x32xf32, #tpu.memory_space<vmem>>, vector<1x2x32xf32>,
    %434 = arith.index_cast %376 : i32 to index
    %c0_180 = arith.constant 0 : index
    %c0_181 = arith.constant 0 : index
    %435 = vector.load %arg5[%434, %c0_180, %c0_181] : memref<16x2x32xf32, #tpu.memory_space<vmem>>, vector<1x2x32xf32>
    %436 = vector.shape_cast %435 : vector<1x2x32xf32> to vector<2x32xf32>
    %437 = vector.shape_cast %425 : vector<2x32xf32> to vector<1x2x32xf32>
    tpu.vector_store %arg5[%434, %c0_180, %c0_181], %437 {strides = array<i32>} : memref<16x2x32xf32, #tpu.memory_space<vmem>>, vector<1x2x32xf32>,
    %c7_i32 = arith.constant 7 : i32
    %c15_i32_182 = arith.constant 15 : i32
    %438 = arith.subi %c15_i32_182, %c7_i32 : i32
    %c0_183 = arith.constant 0 : index
    %c0_184 = arith.constant 0 : index
    %439 = vector.load %arg6[%c0_183, %c0_184] : memref<2x64xf32, #tpu.memory_space<vmem>>, vector<2x64xf32>
    %440 = arith.truncf %439 : vector<2x64xf32> to vector<2x64xbf16>
    %cst_185 = arith.constant dense<0.000000e+00> : vector<2x256xf32>
    %441 = tpu.matmul %440, %3, %cst_185 {dimension_numbers = #tpu.dot_dimension_numbers<[1], [0], [0], [1], [0, 0, 1, 1], [], []>} : vector<2x64xbf16>, vector<64x256xbf16>, vector<2x256xf32> -> vector<2x256xf32>
    %442 = arith.index_cast %c7_i32 : i32 to index
    %c0_186 = arith.constant 0 : index
    %c0_187 = arith.constant 0 : index
    %443 = vector.load %arg1[%442, %c0_186, %c0_187] : memref<16x2x128xbf16, #tpu.memory_space<vmem>>, vector<1x2x128xbf16>
    %444 = vector.shape_cast %443 : vector<1x2x128xbf16> to vector<2x128xbf16>
    %445 = arith.extf %444 : vector<2x128xbf16> to vector<2x128xf32>
    %446 = arith.index_cast %438 : i32 to index
    %c0_188 = arith.constant 0 : index
    %c0_189 = arith.constant 0 : index
    %447 = vector.load %arg2[%446, %c0_188, %c0_189] : memref<16x2x128xbf16, #tpu.memory_space<vmem>>, vector<1x2x128xbf16>
    %448 = vector.shape_cast %447 : vector<1x2x128xbf16> to vector<2x128xbf16>
    %449 = arith.extf %448 : vector<2x128xbf16> to vector<2x128xf32>
    %450 = vector.extract_strided_slice %441 {offsets = [0, 0], sizes = [2, 128], strides = [1, 1]} : vector<2x256xf32> to vector<2x128xf32>
    %451 = arith.addf %445, %450 : vector<2x128xf32>
    %c0_190 = arith.constant 0 : index
    %c0_191 = arith.constant 0 : index
    %452 = vector.load %arg7[%c0_190, %c0_191] : memref<2x64xf32, #tpu.memory_space<vmem>>, vector<2x32xf32>
    %453 = vector.extract_strided_slice %451 {offsets = [0, 0], sizes = [2, 96], strides = [1, 1]} : vector<2x128xf32> to vector<2x96xf32>
    %454 = arith.negf %453 : vector<2x96xf32>
    %455 = math.exp %454 : vector<2x96xf32>
    %cst_192 = arith.constant 1.000000e+00 : f32
    %456 = vector.broadcast %cst_192 : f32 to vector<2x96xf32>
    %457 = arith.addf %456, %455 : vector<2x96xf32>
    %458 = arith.divf %456, %457 : vector<2x96xf32>
    %459 = vector.extract_strided_slice %451 {offsets = [0, 96], sizes = [2, 32], strides = [1, 1]} : vector<2x128xf32> to vector<2x32xf32>
    %460 = math.tanh %459 : vector<2x32xf32>
    %461 = vector.extract_strided_slice %458 {offsets = [0, 32], sizes = [2, 32], strides = [1, 1]} : vector<2x96xf32> to vector<2x32xf32>
    %462 = arith.mulf %461, %452 : vector<2x32xf32>
    %463 = vector.extract_strided_slice %458 {offsets = [0, 0], sizes = [2, 32], strides = [1, 1]} : vector<2x96xf32> to vector<2x32xf32>
    %464 = arith.mulf %463, %460 : vector<2x32xf32>
    %465 = arith.addf %462, %464 : vector<2x32xf32>
    %466 = vector.extract_strided_slice %458 {offsets = [0, 64], sizes = [2, 32], strides = [1, 1]} : vector<2x96xf32> to vector<2x32xf32>
    %467 = math.tanh %465 : vector<2x32xf32>
    %468 = arith.mulf %466, %467 : vector<2x32xf32>
    %469 = vector.extract_strided_slice %441 {offsets = [0, 128], sizes = [2, 128], strides = [1, 1]} : vector<2x256xf32> to vector<2x128xf32>
    %470 = arith.addf %449, %469 : vector<2x128xf32>
    %c0_193 = arith.constant 0 : index
    %c32_194 = arith.constant 32 : index
    %471 = vector.load %arg7[%c0_193, %c32_194] : memref<2x64xf32, #tpu.memory_space<vmem>>, vector<2x32xf32>
    %472 = vector.extract_strided_slice %470 {offsets = [0, 0], sizes = [2, 96], strides = [1, 1]} : vector<2x128xf32> to vector<2x96xf32>
    %473 = arith.negf %472 : vector<2x96xf32>
    %474 = math.exp %473 : vector<2x96xf32>
    %cst_195 = arith.constant 1.000000e+00 : f32
    %475 = vector.broadcast %cst_195 : f32 to vector<2x96xf32>
    %476 = arith.addf %475, %474 : vector<2x96xf32>
    %477 = arith.divf %475, %476 : vector<2x96xf32>
    %478 = vector.extract_strided_slice %470 {offsets = [0, 96], sizes = [2, 32], strides = [1, 1]} : vector<2x128xf32> to vector<2x32xf32>
    %479 = math.tanh %478 : vector<2x32xf32>
    %480 = vector.extract_strided_slice %477 {offsets = [0, 32], sizes = [2, 32], strides = [1, 1]} : vector<2x96xf32> to vector<2x32xf32>
    %481 = arith.mulf %480, %471 : vector<2x32xf32>
    %482 = vector.extract_strided_slice %477 {offsets = [0, 0], sizes = [2, 32], strides = [1, 1]} : vector<2x96xf32> to vector<2x32xf32>
    %483 = arith.mulf %482, %479 : vector<2x32xf32>
    %484 = arith.addf %481, %483 : vector<2x32xf32>
    %485 = vector.extract_strided_slice %477 {offsets = [0, 64], sizes = [2, 32], strides = [1, 1]} : vector<2x96xf32> to vector<2x32xf32>
    %486 = math.tanh %484 : vector<2x32xf32>
    %487 = arith.mulf %485, %486 : vector<2x32xf32>
    %c0_196 = arith.constant 0 : index
    %c0_197 = arith.constant 0 : index
    %488 = vector.load %arg6[%c0_196, %c0_197] : memref<2x64xf32, #tpu.memory_space<vmem>>, vector<2x32xf32>
    tpu.vector_store %arg6[%c0_196, %c0_197], %468 {strides = array<i32>} : memref<2x64xf32, #tpu.memory_space<vmem>>, vector<2x32xf32>,
    %c0_198 = arith.constant 0 : index
    %c32_199 = arith.constant 32 : index
    %489 = vector.load %arg6[%c0_198, %c32_199] : memref<2x64xf32, #tpu.memory_space<vmem>>, vector<2x32xf32>
    tpu.vector_store %arg6[%c0_198, %c32_199], %487 {strides = array<i32>} : memref<2x64xf32, #tpu.memory_space<vmem>>, vector<2x32xf32>,
    %c0_200 = arith.constant 0 : index
    %c0_201 = arith.constant 0 : index
    %490 = vector.load %arg7[%c0_200, %c0_201] : memref<2x64xf32, #tpu.memory_space<vmem>>, vector<2x32xf32>
    tpu.vector_store %arg7[%c0_200, %c0_201], %465 {strides = array<i32>} : memref<2x64xf32, #tpu.memory_space<vmem>>, vector<2x32xf32>,
    %c0_202 = arith.constant 0 : index
    %c32_203 = arith.constant 32 : index
    %491 = vector.load %arg7[%c0_202, %c32_203] : memref<2x64xf32, #tpu.memory_space<vmem>>, vector<2x32xf32>
    tpu.vector_store %arg7[%c0_202, %c32_203], %484 {strides = array<i32>} : memref<2x64xf32, #tpu.memory_space<vmem>>, vector<2x32xf32>,
    %492 = arith.index_cast %c7_i32 : i32 to index
    %c0_204 = arith.constant 0 : index
    %c0_205 = arith.constant 0 : index
    %493 = vector.load %arg4[%492, %c0_204, %c0_205] : memref<16x2x32xf32, #tpu.memory_space<vmem>>, vector<1x2x32xf32>
    %494 = vector.shape_cast %493 : vector<1x2x32xf32> to vector<2x32xf32>
    %495 = vector.shape_cast %468 : vector<2x32xf32> to vector<1x2x32xf32>
    tpu.vector_store %arg4[%492, %c0_204, %c0_205], %495 {strides = array<i32>} : memref<16x2x32xf32, #tpu.memory_space<vmem>>, vector<1x2x32xf32>,
    %496 = arith.index_cast %438 : i32 to index
    %c0_206 = arith.constant 0 : index
    %c0_207 = arith.constant 0 : index
    %497 = vector.load %arg5[%496, %c0_206, %c0_207] : memref<16x2x32xf32, #tpu.memory_space<vmem>>, vector<1x2x32xf32>
    %498 = vector.shape_cast %497 : vector<1x2x32xf32> to vector<2x32xf32>
    %499 = vector.shape_cast %487 : vector<2x32xf32> to vector<1x2x32xf32>
    tpu.vector_store %arg5[%496, %c0_206, %c0_207], %499 {strides = array<i32>} : memref<16x2x32xf32, #tpu.memory_space<vmem>>, vector<1x2x32xf32>,
    %c8_i32 = arith.constant 8 : i32
    %c15_i32_208 = arith.constant 15 : i32
    %500 = arith.subi %c15_i32_208, %c8_i32 : i32
    %c0_209 = arith.constant 0 : index
    %c0_210 = arith.constant 0 : index
    %501 = vector.load %arg6[%c0_209, %c0_210] : memref<2x64xf32, #tpu.memory_space<vmem>>, vector<2x64xf32>
    %502 = arith.truncf %501 : vector<2x64xf32> to vector<2x64xbf16>
    %cst_211 = arith.constant dense<0.000000e+00> : vector<2x256xf32>
    %503 = tpu.matmul %502, %3, %cst_211 {dimension_numbers = #tpu.dot_dimension_numbers<[1], [0], [0], [1], [0, 0, 1, 1], [], []>} : vector<2x64xbf16>, vector<64x256xbf16>, vector<2x256xf32> -> vector<2x256xf32>
    %504 = arith.index_cast %c8_i32 : i32 to index
    %c0_212 = arith.constant 0 : index
    %c0_213 = arith.constant 0 : index
    %505 = vector.load %arg1[%504, %c0_212, %c0_213] : memref<16x2x128xbf16, #tpu.memory_space<vmem>>, vector<1x2x128xbf16>
    %506 = vector.shape_cast %505 : vector<1x2x128xbf16> to vector<2x128xbf16>
    %507 = arith.extf %506 : vector<2x128xbf16> to vector<2x128xf32>
    %508 = arith.index_cast %500 : i32 to index
    %c0_214 = arith.constant 0 : index
    %c0_215 = arith.constant 0 : index
    %509 = vector.load %arg2[%508, %c0_214, %c0_215] : memref<16x2x128xbf16, #tpu.memory_space<vmem>>, vector<1x2x128xbf16>
    %510 = vector.shape_cast %509 : vector<1x2x128xbf16> to vector<2x128xbf16>
    %511 = arith.extf %510 : vector<2x128xbf16> to vector<2x128xf32>
    %512 = vector.extract_strided_slice %503 {offsets = [0, 0], sizes = [2, 128], strides = [1, 1]} : vector<2x256xf32> to vector<2x128xf32>
    %513 = arith.addf %507, %512 : vector<2x128xf32>
    %c0_216 = arith.constant 0 : index
    %c0_217 = arith.constant 0 : index
    %514 = vector.load %arg7[%c0_216, %c0_217] : memref<2x64xf32, #tpu.memory_space<vmem>>, vector<2x32xf32>
    %515 = vector.extract_strided_slice %513 {offsets = [0, 0], sizes = [2, 96], strides = [1, 1]} : vector<2x128xf32> to vector<2x96xf32>
    %516 = arith.negf %515 : vector<2x96xf32>
    %517 = math.exp %516 : vector<2x96xf32>
    %cst_218 = arith.constant 1.000000e+00 : f32
    %518 = vector.broadcast %cst_218 : f32 to vector<2x96xf32>
    %519 = arith.addf %518, %517 : vector<2x96xf32>
    %520 = arith.divf %518, %519 : vector<2x96xf32>
    %521 = vector.extract_strided_slice %513 {offsets = [0, 96], sizes = [2, 32], strides = [1, 1]} : vector<2x128xf32> to vector<2x32xf32>
    %522 = math.tanh %521 : vector<2x32xf32>
    %523 = vector.extract_strided_slice %520 {offsets = [0, 32], sizes = [2, 32], strides = [1, 1]} : vector<2x96xf32> to vector<2x32xf32>
    %524 = arith.mulf %523, %514 : vector<2x32xf32>
    %525 = vector.extract_strided_slice %520 {offsets = [0, 0], sizes = [2, 32], strides = [1, 1]} : vector<2x96xf32> to vector<2x32xf32>
    %526 = arith.mulf %525, %522 : vector<2x32xf32>
    %527 = arith.addf %524, %526 : vector<2x32xf32>
    %528 = vector.extract_strided_slice %520 {offsets = [0, 64], sizes = [2, 32], strides = [1, 1]} : vector<2x96xf32> to vector<2x32xf32>
    %529 = math.tanh %527 : vector<2x32xf32>
    %530 = arith.mulf %528, %529 : vector<2x32xf32>
    %531 = vector.extract_strided_slice %503 {offsets = [0, 128], sizes = [2, 128], strides = [1, 1]} : vector<2x256xf32> to vector<2x128xf32>
    %532 = arith.addf %511, %531 : vector<2x128xf32>
    %c0_219 = arith.constant 0 : index
    %c32_220 = arith.constant 32 : index
    %533 = vector.load %arg7[%c0_219, %c32_220] : memref<2x64xf32, #tpu.memory_space<vmem>>, vector<2x32xf32>
    %534 = vector.extract_strided_slice %532 {offsets = [0, 0], sizes = [2, 96], strides = [1, 1]} : vector<2x128xf32> to vector<2x96xf32>
    %535 = arith.negf %534 : vector<2x96xf32>
    %536 = math.exp %535 : vector<2x96xf32>
    %cst_221 = arith.constant 1.000000e+00 : f32
    %537 = vector.broadcast %cst_221 : f32 to vector<2x96xf32>
    %538 = arith.addf %537, %536 : vector<2x96xf32>
    %539 = arith.divf %537, %538 : vector<2x96xf32>
    %540 = vector.extract_strided_slice %532 {offsets = [0, 96], sizes = [2, 32], strides = [1, 1]} : vector<2x128xf32> to vector<2x32xf32>
    %541 = math.tanh %540 : vector<2x32xf32>
    %542 = vector.extract_strided_slice %539 {offsets = [0, 32], sizes = [2, 32], strides = [1, 1]} : vector<2x96xf32> to vector<2x32xf32>
    %543 = arith.mulf %542, %533 : vector<2x32xf32>
    %544 = vector.extract_strided_slice %539 {offsets = [0, 0], sizes = [2, 32], strides = [1, 1]} : vector<2x96xf32> to vector<2x32xf32>
    %545 = arith.mulf %544, %541 : vector<2x32xf32>
    %546 = arith.addf %543, %545 : vector<2x32xf32>
    %547 = vector.extract_strided_slice %539 {offsets = [0, 64], sizes = [2, 32], strides = [1, 1]} : vector<2x96xf32> to vector<2x32xf32>
    %548 = math.tanh %546 : vector<2x32xf32>
    %549 = arith.mulf %547, %548 : vector<2x32xf32>
    %c0_222 = arith.constant 0 : index
    %c0_223 = arith.constant 0 : index
    %550 = vector.load %arg6[%c0_222, %c0_223] : memref<2x64xf32, #tpu.memory_space<vmem>>, vector<2x32xf32>
    tpu.vector_store %arg6[%c0_222, %c0_223], %530 {strides = array<i32>} : memref<2x64xf32, #tpu.memory_space<vmem>>, vector<2x32xf32>,
    %c0_224 = arith.constant 0 : index
    %c32_225 = arith.constant 32 : index
    %551 = vector.load %arg6[%c0_224, %c32_225] : memref<2x64xf32, #tpu.memory_space<vmem>>, vector<2x32xf32>
    tpu.vector_store %arg6[%c0_224, %c32_225], %549 {strides = array<i32>} : memref<2x64xf32, #tpu.memory_space<vmem>>, vector<2x32xf32>,
    %c0_226 = arith.constant 0 : index
    %c0_227 = arith.constant 0 : index
    %552 = vector.load %arg7[%c0_226, %c0_227] : memref<2x64xf32, #tpu.memory_space<vmem>>, vector<2x32xf32>
    tpu.vector_store %arg7[%c0_226, %c0_227], %527 {strides = array<i32>} : memref<2x64xf32, #tpu.memory_space<vmem>>, vector<2x32xf32>,
    %c0_228 = arith.constant 0 : index
    %c32_229 = arith.constant 32 : index
    %553 = vector.load %arg7[%c0_228, %c32_229] : memref<2x64xf32, #tpu.memory_space<vmem>>, vector<2x32xf32>
    tpu.vector_store %arg7[%c0_228, %c32_229], %546 {strides = array<i32>} : memref<2x64xf32, #tpu.memory_space<vmem>>, vector<2x32xf32>,
    %554 = arith.index_cast %c8_i32 : i32 to index
    %c0_230 = arith.constant 0 : index
    %c0_231 = arith.constant 0 : index
    %555 = vector.load %arg4[%554, %c0_230, %c0_231] : memref<16x2x32xf32, #tpu.memory_space<vmem>>, vector<1x2x32xf32>
    %556 = vector.shape_cast %555 : vector<1x2x32xf32> to vector<2x32xf32>
    %557 = vector.shape_cast %530 : vector<2x32xf32> to vector<1x2x32xf32>
    tpu.vector_store %arg4[%554, %c0_230, %c0_231], %557 {strides = array<i32>} : memref<16x2x32xf32, #tpu.memory_space<vmem>>, vector<1x2x32xf32>,
    %558 = arith.index_cast %500 : i32 to index
    %c0_232 = arith.constant 0 : index
    %c0_233 = arith.constant 0 : index
    %559 = vector.load %arg5[%558, %c0_232, %c0_233] : memref<16x2x32xf32, #tpu.memory_space<vmem>>, vector<1x2x32xf32>
    %560 = vector.shape_cast %559 : vector<1x2x32xf32> to vector<2x32xf32>
    %561 = vector.shape_cast %549 : vector<2x32xf32> to vector<1x2x32xf32>
    tpu.vector_store %arg5[%558, %c0_232, %c0_233], %561 {strides = array<i32>} : memref<16x2x32xf32, #tpu.memory_space<vmem>>, vector<1x2x32xf32>,
    %c9_i32 = arith.constant 9 : i32
    %c15_i32_234 = arith.constant 15 : i32
    %562 = arith.subi %c15_i32_234, %c9_i32 : i32
    %c0_235 = arith.constant 0 : index
    %c0_236 = arith.constant 0 : index
    %563 = vector.load %arg6[%c0_235, %c0_236] : memref<2x64xf32, #tpu.memory_space<vmem>>, vector<2x64xf32>
    %564 = arith.truncf %563 : vector<2x64xf32> to vector<2x64xbf16>
    %cst_237 = arith.constant dense<0.000000e+00> : vector<2x256xf32>
    %565 = tpu.matmul %564, %3, %cst_237 {dimension_numbers = #tpu.dot_dimension_numbers<[1], [0], [0], [1], [0, 0, 1, 1], [], []>} : vector<2x64xbf16>, vector<64x256xbf16>, vector<2x256xf32> -> vector<2x256xf32>
    %566 = arith.index_cast %c9_i32 : i32 to index
    %c0_238 = arith.constant 0 : index
    %c0_239 = arith.constant 0 : index
    %567 = vector.load %arg1[%566, %c0_238, %c0_239] : memref<16x2x128xbf16, #tpu.memory_space<vmem>>, vector<1x2x128xbf16>
    %568 = vector.shape_cast %567 : vector<1x2x128xbf16> to vector<2x128xbf16>
    %569 = arith.extf %568 : vector<2x128xbf16> to vector<2x128xf32>
    %570 = arith.index_cast %562 : i32 to index
    %c0_240 = arith.constant 0 : index
    %c0_241 = arith.constant 0 : index
    %571 = vector.load %arg2[%570, %c0_240, %c0_241] : memref<16x2x128xbf16, #tpu.memory_space<vmem>>, vector<1x2x128xbf16>
    %572 = vector.shape_cast %571 : vector<1x2x128xbf16> to vector<2x128xbf16>
    %573 = arith.extf %572 : vector<2x128xbf16> to vector<2x128xf32>
    %574 = vector.extract_strided_slice %565 {offsets = [0, 0], sizes = [2, 128], strides = [1, 1]} : vector<2x256xf32> to vector<2x128xf32>
    %575 = arith.addf %569, %574 : vector<2x128xf32>
    %c0_242 = arith.constant 0 : index
    %c0_243 = arith.constant 0 : index
    %576 = vector.load %arg7[%c0_242, %c0_243] : memref<2x64xf32, #tpu.memory_space<vmem>>, vector<2x32xf32>
    %577 = vector.extract_strided_slice %575 {offsets = [0, 0], sizes = [2, 96], strides = [1, 1]} : vector<2x128xf32> to vector<2x96xf32>
    %578 = arith.negf %577 : vector<2x96xf32>
    %579 = math.exp %578 : vector<2x96xf32>
    %cst_244 = arith.constant 1.000000e+00 : f32
    %580 = vector.broadcast %cst_244 : f32 to vector<2x96xf32>
    %581 = arith.addf %580, %579 : vector<2x96xf32>
    %582 = arith.divf %580, %581 : vector<2x96xf32>
    %583 = vector.extract_strided_slice %575 {offsets = [0, 96], sizes = [2, 32], strides = [1, 1]} : vector<2x128xf32> to vector<2x32xf32>
    %584 = math.tanh %583 : vector<2x32xf32>
    %585 = vector.extract_strided_slice %582 {offsets = [0, 32], sizes = [2, 32], strides = [1, 1]} : vector<2x96xf32> to vector<2x32xf32>
    %586 = arith.mulf %585, %576 : vector<2x32xf32>
    %587 = vector.extract_strided_slice %582 {offsets = [0, 0], sizes = [2, 32], strides = [1, 1]} : vector<2x96xf32> to vector<2x32xf32>
    %588 = arith.mulf %587, %584 : vector<2x32xf32>
    %589 = arith.addf %586, %588 : vector<2x32xf32>
    %590 = vector.extract_strided_slice %582 {offsets = [0, 64], sizes = [2, 32], strides = [1, 1]} : vector<2x96xf32> to vector<2x32xf32>
    %591 = math.tanh %589 : vector<2x32xf32>
    %592 = arith.mulf %590, %591 : vector<2x32xf32>
    %593 = vector.extract_strided_slice %565 {offsets = [0, 128], sizes = [2, 128], strides = [1, 1]} : vector<2x256xf32> to vector<2x128xf32>
    %594 = arith.addf %573, %593 : vector<2x128xf32>
    %c0_245 = arith.constant 0 : index
    %c32_246 = arith.constant 32 : index
    %595 = vector.load %arg7[%c0_245, %c32_246] : memref<2x64xf32, #tpu.memory_space<vmem>>, vector<2x32xf32>
    %596 = vector.extract_strided_slice %594 {offsets = [0, 0], sizes = [2, 96], strides = [1, 1]} : vector<2x128xf32> to vector<2x96xf32>
    %597 = arith.negf %596 : vector<2x96xf32>
    %598 = math.exp %597 : vector<2x96xf32>
    %cst_247 = arith.constant 1.000000e+00 : f32
    %599 = vector.broadcast %cst_247 : f32 to vector<2x96xf32>
    %600 = arith.addf %599, %598 : vector<2x96xf32>
    %601 = arith.divf %599, %600 : vector<2x96xf32>
    %602 = vector.extract_strided_slice %594 {offsets = [0, 96], sizes = [2, 32], strides = [1, 1]} : vector<2x128xf32> to vector<2x32xf32>
    %603 = math.tanh %602 : vector<2x32xf32>
    %604 = vector.extract_strided_slice %601 {offsets = [0, 32], sizes = [2, 32], strides = [1, 1]} : vector<2x96xf32> to vector<2x32xf32>
    %605 = arith.mulf %604, %595 : vector<2x32xf32>
    %606 = vector.extract_strided_slice %601 {offsets = [0, 0], sizes = [2, 32], strides = [1, 1]} : vector<2x96xf32> to vector<2x32xf32>
    %607 = arith.mulf %606, %603 : vector<2x32xf32>
    %608 = arith.addf %605, %607 : vector<2x32xf32>
    %609 = vector.extract_strided_slice %601 {offsets = [0, 64], sizes = [2, 32], strides = [1, 1]} : vector<2x96xf32> to vector<2x32xf32>
    %610 = math.tanh %608 : vector<2x32xf32>
    %611 = arith.mulf %609, %610 : vector<2x32xf32>
    %c0_248 = arith.constant 0 : index
    %c0_249 = arith.constant 0 : index
    %612 = vector.load %arg6[%c0_248, %c0_249] : memref<2x64xf32, #tpu.memory_space<vmem>>, vector<2x32xf32>
    tpu.vector_store %arg6[%c0_248, %c0_249], %592 {strides = array<i32>} : memref<2x64xf32, #tpu.memory_space<vmem>>, vector<2x32xf32>,
    %c0_250 = arith.constant 0 : index
    %c32_251 = arith.constant 32 : index
    %613 = vector.load %arg6[%c0_250, %c32_251] : memref<2x64xf32, #tpu.memory_space<vmem>>, vector<2x32xf32>
    tpu.vector_store %arg6[%c0_250, %c32_251], %611 {strides = array<i32>} : memref<2x64xf32, #tpu.memory_space<vmem>>, vector<2x32xf32>,
    %c0_252 = arith.constant 0 : index
    %c0_253 = arith.constant 0 : index
    %614 = vector.load %arg7[%c0_252, %c0_253] : memref<2x64xf32, #tpu.memory_space<vmem>>, vector<2x32xf32>
    tpu.vector_store %arg7[%c0_252, %c0_253], %589 {strides = array<i32>} : memref<2x64xf32, #tpu.memory_space<vmem>>, vector<2x32xf32>,
    %c0_254 = arith.constant 0 : index
    %c32_255 = arith.constant 32 : index
    %615 = vector.load %arg7[%c0_254, %c32_255] : memref<2x64xf32, #tpu.memory_space<vmem>>, vector<2x32xf32>
    tpu.vector_store %arg7[%c0_254, %c32_255], %608 {strides = array<i32>} : memref<2x64xf32, #tpu.memory_space<vmem>>, vector<2x32xf32>,
    %616 = arith.index_cast %c9_i32 : i32 to index
    %c0_256 = arith.constant 0 : index
    %c0_257 = arith.constant 0 : index
    %617 = vector.load %arg4[%616, %c0_256, %c0_257] : memref<16x2x32xf32, #tpu.memory_space<vmem>>, vector<1x2x32xf32>
    %618 = vector.shape_cast %617 : vector<1x2x32xf32> to vector<2x32xf32>
    %619 = vector.shape_cast %592 : vector<2x32xf32> to vector<1x2x32xf32>
    tpu.vector_store %arg4[%616, %c0_256, %c0_257], %619 {strides = array<i32>} : memref<16x2x32xf32, #tpu.memory_space<vmem>>, vector<1x2x32xf32>,
    %620 = arith.index_cast %562 : i32 to index
    %c0_258 = arith.constant 0 : index
    %c0_259 = arith.constant 0 : index
    %621 = vector.load %arg5[%620, %c0_258, %c0_259] : memref<16x2x32xf32, #tpu.memory_space<vmem>>, vector<1x2x32xf32>
    %622 = vector.shape_cast %621 : vector<1x2x32xf32> to vector<2x32xf32>
    %623 = vector.shape_cast %611 : vector<2x32xf32> to vector<1x2x32xf32>
    tpu.vector_store %arg5[%620, %c0_258, %c0_259], %623 {strides = array<i32>} : memref<16x2x32xf32, #tpu.memory_space<vmem>>, vector<1x2x32xf32>,
    %c10_i32 = arith.constant 10 : i32
    %c15_i32_260 = arith.constant 15 : i32
    %624 = arith.subi %c15_i32_260, %c10_i32 : i32
    %c0_261 = arith.constant 0 : index
    %c0_262 = arith.constant 0 : index
    %625 = vector.load %arg6[%c0_261, %c0_262] : memref<2x64xf32, #tpu.memory_space<vmem>>, vector<2x64xf32>
    %626 = arith.truncf %625 : vector<2x64xf32> to vector<2x64xbf16>
    %cst_263 = arith.constant dense<0.000000e+00> : vector<2x256xf32>
    %627 = tpu.matmul %626, %3, %cst_263 {dimension_numbers = #tpu.dot_dimension_numbers<[1], [0], [0], [1], [0, 0, 1, 1], [], []>} : vector<2x64xbf16>, vector<64x256xbf16>, vector<2x256xf32> -> vector<2x256xf32>
    %628 = arith.index_cast %c10_i32 : i32 to index
    %c0_264 = arith.constant 0 : index
    %c0_265 = arith.constant 0 : index
    %629 = vector.load %arg1[%628, %c0_264, %c0_265] : memref<16x2x128xbf16, #tpu.memory_space<vmem>>, vector<1x2x128xbf16>
    %630 = vector.shape_cast %629 : vector<1x2x128xbf16> to vector<2x128xbf16>
    %631 = arith.extf %630 : vector<2x128xbf16> to vector<2x128xf32>
    %632 = arith.index_cast %624 : i32 to index
    %c0_266 = arith.constant 0 : index
    %c0_267 = arith.constant 0 : index
    %633 = vector.load %arg2[%632, %c0_266, %c0_267] : memref<16x2x128xbf16, #tpu.memory_space<vmem>>, vector<1x2x128xbf16>
    %634 = vector.shape_cast %633 : vector<1x2x128xbf16> to vector<2x128xbf16>
    %635 = arith.extf %634 : vector<2x128xbf16> to vector<2x128xf32>
    %636 = vector.extract_strided_slice %627 {offsets = [0, 0], sizes = [2, 128], strides = [1, 1]} : vector<2x256xf32> to vector<2x128xf32>
    %637 = arith.addf %631, %636 : vector<2x128xf32>
    %c0_268 = arith.constant 0 : index
    %c0_269 = arith.constant 0 : index
    %638 = vector.load %arg7[%c0_268, %c0_269] : memref<2x64xf32, #tpu.memory_space<vmem>>, vector<2x32xf32>
    %639 = vector.extract_strided_slice %637 {offsets = [0, 0], sizes = [2, 96], strides = [1, 1]} : vector<2x128xf32> to vector<2x96xf32>
    %640 = arith.negf %639 : vector<2x96xf32>
    %641 = math.exp %640 : vector<2x96xf32>
    %cst_270 = arith.constant 1.000000e+00 : f32
    %642 = vector.broadcast %cst_270 : f32 to vector<2x96xf32>
    %643 = arith.addf %642, %641 : vector<2x96xf32>
    %644 = arith.divf %642, %643 : vector<2x96xf32>
    %645 = vector.extract_strided_slice %637 {offsets = [0, 96], sizes = [2, 32], strides = [1, 1]} : vector<2x128xf32> to vector<2x32xf32>
    %646 = math.tanh %645 : vector<2x32xf32>
    %647 = vector.extract_strided_slice %644 {offsets = [0, 32], sizes = [2, 32], strides = [1, 1]} : vector<2x96xf32> to vector<2x32xf32>
    %648 = arith.mulf %647, %638 : vector<2x32xf32>
    %649 = vector.extract_strided_slice %644 {offsets = [0, 0], sizes = [2, 32], strides = [1, 1]} : vector<2x96xf32> to vector<2x32xf32>
    %650 = arith.mulf %649, %646 : vector<2x32xf32>
    %651 = arith.addf %648, %650 : vector<2x32xf32>
    %652 = vector.extract_strided_slice %644 {offsets = [0, 64], sizes = [2, 32], strides = [1, 1]} : vector<2x96xf32> to vector<2x32xf32>
    %653 = math.tanh %651 : vector<2x32xf32>
    %654 = arith.mulf %652, %653 : vector<2x32xf32>
    %655 = vector.extract_strided_slice %627 {offsets = [0, 128], sizes = [2, 128], strides = [1, 1]} : vector<2x256xf32> to vector<2x128xf32>
    %656 = arith.addf %635, %655 : vector<2x128xf32>
    %c0_271 = arith.constant 0 : index
    %c32_272 = arith.constant 32 : index
    %657 = vector.load %arg7[%c0_271, %c32_272] : memref<2x64xf32, #tpu.memory_space<vmem>>, vector<2x32xf32>
    %658 = vector.extract_strided_slice %656 {offsets = [0, 0], sizes = [2, 96], strides = [1, 1]} : vector<2x128xf32> to vector<2x96xf32>
    %659 = arith.negf %658 : vector<2x96xf32>
    %660 = math.exp %659 : vector<2x96xf32>
    %cst_273 = arith.constant 1.000000e+00 : f32
    %661 = vector.broadcast %cst_273 : f32 to vector<2x96xf32>
    %662 = arith.addf %661, %660 : vector<2x96xf32>
    %663 = arith.divf %661, %662 : vector<2x96xf32>
    %664 = vector.extract_strided_slice %656 {offsets = [0, 96], sizes = [2, 32], strides = [1, 1]} : vector<2x128xf32> to vector<2x32xf32>
    %665 = math.tanh %664 : vector<2x32xf32>
    %666 = vector.extract_strided_slice %663 {offsets = [0, 32], sizes = [2, 32], strides = [1, 1]} : vector<2x96xf32> to vector<2x32xf32>
    %667 = arith.mulf %666, %657 : vector<2x32xf32>
    %668 = vector.extract_strided_slice %663 {offsets = [0, 0], sizes = [2, 32], strides = [1, 1]} : vector<2x96xf32> to vector<2x32xf32>
    %669 = arith.mulf %668, %665 : vector<2x32xf32>
    %670 = arith.addf %667, %669 : vector<2x32xf32>
    %671 = vector.extract_strided_slice %663 {offsets = [0, 64], sizes = [2, 32], strides = [1, 1]} : vector<2x96xf32> to vector<2x32xf32>
    %672 = math.tanh %670 : vector<2x32xf32>
    %673 = arith.mulf %671, %672 : vector<2x32xf32>
    %c0_274 = arith.constant 0 : index
    %c0_275 = arith.constant 0 : index
    %674 = vector.load %arg6[%c0_274, %c0_275] : memref<2x64xf32, #tpu.memory_space<vmem>>, vector<2x32xf32>
    tpu.vector_store %arg6[%c0_274, %c0_275], %654 {strides = array<i32>} : memref<2x64xf32, #tpu.memory_space<vmem>>, vector<2x32xf32>,
    %c0_276 = arith.constant 0 : index
    %c32_277 = arith.constant 32 : index
    %675 = vector.load %arg6[%c0_276, %c32_277] : memref<2x64xf32, #tpu.memory_space<vmem>>, vector<2x32xf32>
    tpu.vector_store %arg6[%c0_276, %c32_277], %673 {strides = array<i32>} : memref<2x64xf32, #tpu.memory_space<vmem>>, vector<2x32xf32>,
    %c0_278 = arith.constant 0 : index
    %c0_279 = arith.constant 0 : index
    %676 = vector.load %arg7[%c0_278, %c0_279] : memref<2x64xf32, #tpu.memory_space<vmem>>, vector<2x32xf32>
    tpu.vector_store %arg7[%c0_278, %c0_279], %651 {strides = array<i32>} : memref<2x64xf32, #tpu.memory_space<vmem>>, vector<2x32xf32>,
    %c0_280 = arith.constant 0 : index
    %c32_281 = arith.constant 32 : index
    %677 = vector.load %arg7[%c0_280, %c32_281] : memref<2x64xf32, #tpu.memory_space<vmem>>, vector<2x32xf32>
    tpu.vector_store %arg7[%c0_280, %c32_281], %670 {strides = array<i32>} : memref<2x64xf32, #tpu.memory_space<vmem>>, vector<2x32xf32>,
    %678 = arith.index_cast %c10_i32 : i32 to index
    %c0_282 = arith.constant 0 : index
    %c0_283 = arith.constant 0 : index
    %679 = vector.load %arg4[%678, %c0_282, %c0_283] : memref<16x2x32xf32, #tpu.memory_space<vmem>>, vector<1x2x32xf32>
    %680 = vector.shape_cast %679 : vector<1x2x32xf32> to vector<2x32xf32>
    %681 = vector.shape_cast %654 : vector<2x32xf32> to vector<1x2x32xf32>
    tpu.vector_store %arg4[%678, %c0_282, %c0_283], %681 {strides = array<i32>} : memref<16x2x32xf32, #tpu.memory_space<vmem>>, vector<1x2x32xf32>,
    %682 = arith.index_cast %624 : i32 to index
    %c0_284 = arith.constant 0 : index
    %c0_285 = arith.constant 0 : index
    %683 = vector.load %arg5[%682, %c0_284, %c0_285] : memref<16x2x32xf32, #tpu.memory_space<vmem>>, vector<1x2x32xf32>
    %684 = vector.shape_cast %683 : vector<1x2x32xf32> to vector<2x32xf32>
    %685 = vector.shape_cast %673 : vector<2x32xf32> to vector<1x2x32xf32>
    tpu.vector_store %arg5[%682, %c0_284, %c0_285], %685 {strides = array<i32>} : memref<16x2x32xf32, #tpu.memory_space<vmem>>, vector<1x2x32xf32>,
    %c11_i32 = arith.constant 11 : i32
    %c15_i32_286 = arith.constant 15 : i32
    %686 = arith.subi %c15_i32_286, %c11_i32 : i32
    %c0_287 = arith.constant 0 : index
    %c0_288 = arith.constant 0 : index
    %687 = vector.load %arg6[%c0_287, %c0_288] : memref<2x64xf32, #tpu.memory_space<vmem>>, vector<2x64xf32>
    %688 = arith.truncf %687 : vector<2x64xf32> to vector<2x64xbf16>
    %cst_289 = arith.constant dense<0.000000e+00> : vector<2x256xf32>
    %689 = tpu.matmul %688, %3, %cst_289 {dimension_numbers = #tpu.dot_dimension_numbers<[1], [0], [0], [1], [0, 0, 1, 1], [], []>} : vector<2x64xbf16>, vector<64x256xbf16>, vector<2x256xf32> -> vector<2x256xf32>
    %690 = arith.index_cast %c11_i32 : i32 to index
    %c0_290 = arith.constant 0 : index
    %c0_291 = arith.constant 0 : index
    %691 = vector.load %arg1[%690, %c0_290, %c0_291] : memref<16x2x128xbf16, #tpu.memory_space<vmem>>, vector<1x2x128xbf16>
    %692 = vector.shape_cast %691 : vector<1x2x128xbf16> to vector<2x128xbf16>
    %693 = arith.extf %692 : vector<2x128xbf16> to vector<2x128xf32>
    %694 = arith.index_cast %686 : i32 to index
    %c0_292 = arith.constant 0 : index
    %c0_293 = arith.constant 0 : index
    %695 = vector.load %arg2[%694, %c0_292, %c0_293] : memref<16x2x128xbf16, #tpu.memory_space<vmem>>, vector<1x2x128xbf16>
    %696 = vector.shape_cast %695 : vector<1x2x128xbf16> to vector<2x128xbf16>
    %697 = arith.extf %696 : vector<2x128xbf16> to vector<2x128xf32>
    %698 = vector.extract_strided_slice %689 {offsets = [0, 0], sizes = [2, 128], strides = [1, 1]} : vector<2x256xf32> to vector<2x128xf32>
    %699 = arith.addf %693, %698 : vector<2x128xf32>
    %c0_294 = arith.constant 0 : index
    %c0_295 = arith.constant 0 : index
    %700 = vector.load %arg7[%c0_294, %c0_295] : memref<2x64xf32, #tpu.memory_space<vmem>>, vector<2x32xf32>
    %701 = vector.extract_strided_slice %699 {offsets = [0, 0], sizes = [2, 96], strides = [1, 1]} : vector<2x128xf32> to vector<2x96xf32>
    %702 = arith.negf %701 : vector<2x96xf32>
    %703 = math.exp %702 : vector<2x96xf32>
    %cst_296 = arith.constant 1.000000e+00 : f32
    %704 = vector.broadcast %cst_296 : f32 to vector<2x96xf32>
    %705 = arith.addf %704, %703 : vector<2x96xf32>
    %706 = arith.divf %704, %705 : vector<2x96xf32>
    %707 = vector.extract_strided_slice %699 {offsets = [0, 96], sizes = [2, 32], strides = [1, 1]} : vector<2x128xf32> to vector<2x32xf32>
    %708 = math.tanh %707 : vector<2x32xf32>
    %709 = vector.extract_strided_slice %706 {offsets = [0, 32], sizes = [2, 32], strides = [1, 1]} : vector<2x96xf32> to vector<2x32xf32>
    %710 = arith.mulf %709, %700 : vector<2x32xf32>
    %711 = vector.extract_strided_slice %706 {offsets = [0, 0], sizes = [2, 32], strides = [1, 1]} : vector<2x96xf32> to vector<2x32xf32>
    %712 = arith.mulf %711, %708 : vector<2x32xf32>
    %713 = arith.addf %710, %712 : vector<2x32xf32>
    %714 = vector.extract_strided_slice %706 {offsets = [0, 64], sizes = [2, 32], strides = [1, 1]} : vector<2x96xf32> to vector<2x32xf32>
    %715 = math.tanh %713 : vector<2x32xf32>
    %716 = arith.mulf %714, %715 : vector<2x32xf32>
    %717 = vector.extract_strided_slice %689 {offsets = [0, 128], sizes = [2, 128], strides = [1, 1]} : vector<2x256xf32> to vector<2x128xf32>
    %718 = arith.addf %697, %717 : vector<2x128xf32>
    %c0_297 = arith.constant 0 : index
    %c32_298 = arith.constant 32 : index
    %719 = vector.load %arg7[%c0_297, %c32_298] : memref<2x64xf32, #tpu.memory_space<vmem>>, vector<2x32xf32>
    %720 = vector.extract_strided_slice %718 {offsets = [0, 0], sizes = [2, 96], strides = [1, 1]} : vector<2x128xf32> to vector<2x96xf32>
    %721 = arith.negf %720 : vector<2x96xf32>
    %722 = math.exp %721 : vector<2x96xf32>
    %cst_299 = arith.constant 1.000000e+00 : f32
    %723 = vector.broadcast %cst_299 : f32 to vector<2x96xf32>
    %724 = arith.addf %723, %722 : vector<2x96xf32>
    %725 = arith.divf %723, %724 : vector<2x96xf32>
    %726 = vector.extract_strided_slice %718 {offsets = [0, 96], sizes = [2, 32], strides = [1, 1]} : vector<2x128xf32> to vector<2x32xf32>
    %727 = math.tanh %726 : vector<2x32xf32>
    %728 = vector.extract_strided_slice %725 {offsets = [0, 32], sizes = [2, 32], strides = [1, 1]} : vector<2x96xf32> to vector<2x32xf32>
    %729 = arith.mulf %728, %719 : vector<2x32xf32>
    %730 = vector.extract_strided_slice %725 {offsets = [0, 0], sizes = [2, 32], strides = [1, 1]} : vector<2x96xf32> to vector<2x32xf32>
    %731 = arith.mulf %730, %727 : vector<2x32xf32>
    %732 = arith.addf %729, %731 : vector<2x32xf32>
    %733 = vector.extract_strided_slice %725 {offsets = [0, 64], sizes = [2, 32], strides = [1, 1]} : vector<2x96xf32> to vector<2x32xf32>
    %734 = math.tanh %732 : vector<2x32xf32>
    %735 = arith.mulf %733, %734 : vector<2x32xf32>
    %c0_300 = arith.constant 0 : index
    %c0_301 = arith.constant 0 : index
    %736 = vector.load %arg6[%c0_300, %c0_301] : memref<2x64xf32, #tpu.memory_space<vmem>>, vector<2x32xf32>
    tpu.vector_store %arg6[%c0_300, %c0_301], %716 {strides = array<i32>} : memref<2x64xf32, #tpu.memory_space<vmem>>, vector<2x32xf32>,
    %c0_302 = arith.constant 0 : index
    %c32_303 = arith.constant 32 : index
    %737 = vector.load %arg6[%c0_302, %c32_303] : memref<2x64xf32, #tpu.memory_space<vmem>>, vector<2x32xf32>
    tpu.vector_store %arg6[%c0_302, %c32_303], %735 {strides = array<i32>} : memref<2x64xf32, #tpu.memory_space<vmem>>, vector<2x32xf32>,
    %c0_304 = arith.constant 0 : index
    %c0_305 = arith.constant 0 : index
    %738 = vector.load %arg7[%c0_304, %c0_305] : memref<2x64xf32, #tpu.memory_space<vmem>>, vector<2x32xf32>
    tpu.vector_store %arg7[%c0_304, %c0_305], %713 {strides = array<i32>} : memref<2x64xf32, #tpu.memory_space<vmem>>, vector<2x32xf32>,
    %c0_306 = arith.constant 0 : index
    %c32_307 = arith.constant 32 : index
    %739 = vector.load %arg7[%c0_306, %c32_307] : memref<2x64xf32, #tpu.memory_space<vmem>>, vector<2x32xf32>
    tpu.vector_store %arg7[%c0_306, %c32_307], %732 {strides = array<i32>} : memref<2x64xf32, #tpu.memory_space<vmem>>, vector<2x32xf32>,
    %740 = arith.index_cast %c11_i32 : i32 to index
    %c0_308 = arith.constant 0 : index
    %c0_309 = arith.constant 0 : index
    %741 = vector.load %arg4[%740, %c0_308, %c0_309] : memref<16x2x32xf32, #tpu.memory_space<vmem>>, vector<1x2x32xf32>
    %742 = vector.shape_cast %741 : vector<1x2x32xf32> to vector<2x32xf32>
    %743 = vector.shape_cast %716 : vector<2x32xf32> to vector<1x2x32xf32>
    tpu.vector_store %arg4[%740, %c0_308, %c0_309], %743 {strides = array<i32>} : memref<16x2x32xf32, #tpu.memory_space<vmem>>, vector<1x2x32xf32>,
    %744 = arith.index_cast %686 : i32 to index
    %c0_310 = arith.constant 0 : index
    %c0_311 = arith.constant 0 : index
    %745 = vector.load %arg5[%744, %c0_310, %c0_311] : memref<16x2x32xf32, #tpu.memory_space<vmem>>, vector<1x2x32xf32>
    %746 = vector.shape_cast %745 : vector<1x2x32xf32> to vector<2x32xf32>
    %747 = vector.shape_cast %735 : vector<2x32xf32> to vector<1x2x32xf32>
    tpu.vector_store %arg5[%744, %c0_310, %c0_311], %747 {strides = array<i32>} : memref<16x2x32xf32, #tpu.memory_space<vmem>>, vector<1x2x32xf32>,
    %c12_i32 = arith.constant 12 : i32
    %c15_i32_312 = arith.constant 15 : i32
    %748 = arith.subi %c15_i32_312, %c12_i32 : i32
    %c0_313 = arith.constant 0 : index
    %c0_314 = arith.constant 0 : index
    %749 = vector.load %arg6[%c0_313, %c0_314] : memref<2x64xf32, #tpu.memory_space<vmem>>, vector<2x64xf32>
    %750 = arith.truncf %749 : vector<2x64xf32> to vector<2x64xbf16>
    %cst_315 = arith.constant dense<0.000000e+00> : vector<2x256xf32>
    %751 = tpu.matmul %750, %3, %cst_315 {dimension_numbers = #tpu.dot_dimension_numbers<[1], [0], [0], [1], [0, 0, 1, 1], [], []>} : vector<2x64xbf16>, vector<64x256xbf16>, vector<2x256xf32> -> vector<2x256xf32>
    %752 = arith.index_cast %c12_i32 : i32 to index
    %c0_316 = arith.constant 0 : index
    %c0_317 = arith.constant 0 : index
    %753 = vector.load %arg1[%752, %c0_316, %c0_317] : memref<16x2x128xbf16, #tpu.memory_space<vmem>>, vector<1x2x128xbf16>
    %754 = vector.shape_cast %753 : vector<1x2x128xbf16> to vector<2x128xbf16>
    %755 = arith.extf %754 : vector<2x128xbf16> to vector<2x128xf32>
    %756 = arith.index_cast %748 : i32 to index
    %c0_318 = arith.constant 0 : index
    %c0_319 = arith.constant 0 : index
    %757 = vector.load %arg2[%756, %c0_318, %c0_319] : memref<16x2x128xbf16, #tpu.memory_space<vmem>>, vector<1x2x128xbf16>
    %758 = vector.shape_cast %757 : vector<1x2x128xbf16> to vector<2x128xbf16>
    %759 = arith.extf %758 : vector<2x128xbf16> to vector<2x128xf32>
    %760 = vector.extract_strided_slice %751 {offsets = [0, 0], sizes = [2, 128], strides = [1, 1]} : vector<2x256xf32> to vector<2x128xf32>
    %761 = arith.addf %755, %760 : vector<2x128xf32>
    %c0_320 = arith.constant 0 : index
    %c0_321 = arith.constant 0 : index
    %762 = vector.load %arg7[%c0_320, %c0_321] : memref<2x64xf32, #tpu.memory_space<vmem>>, vector<2x32xf32>
    %763 = vector.extract_strided_slice %761 {offsets = [0, 0], sizes = [2, 96], strides = [1, 1]} : vector<2x128xf32> to vector<2x96xf32>
    %764 = arith.negf %763 : vector<2x96xf32>
    %765 = math.exp %764 : vector<2x96xf32>
    %cst_322 = arith.constant 1.000000e+00 : f32
    %766 = vector.broadcast %cst_322 : f32 to vector<2x96xf32>
    %767 = arith.addf %766, %765 : vector<2x96xf32>
    %768 = arith.divf %766, %767 : vector<2x96xf32>
    %769 = vector.extract_strided_slice %761 {offsets = [0, 96], sizes = [2, 32], strides = [1, 1]} : vector<2x128xf32> to vector<2x32xf32>
    %770 = math.tanh %769 : vector<2x32xf32>
    %771 = vector.extract_strided_slice %768 {offsets = [0, 32], sizes = [2, 32], strides = [1, 1]} : vector<2x96xf32> to vector<2x32xf32>
    %772 = arith.mulf %771, %762 : vector<2x32xf32>
    %773 = vector.extract_strided_slice %768 {offsets = [0, 0], sizes = [2, 32], strides = [1, 1]} : vector<2x96xf32> to vector<2x32xf32>
    %774 = arith.mulf %773, %770 : vector<2x32xf32>
    %775 = arith.addf %772, %774 : vector<2x32xf32>
    %776 = vector.extract_strided_slice %768 {offsets = [0, 64], sizes = [2, 32], strides = [1, 1]} : vector<2x96xf32> to vector<2x32xf32>
    %777 = math.tanh %775 : vector<2x32xf32>
    %778 = arith.mulf %776, %777 : vector<2x32xf32>
    %779 = vector.extract_strided_slice %751 {offsets = [0, 128], sizes = [2, 128], strides = [1, 1]} : vector<2x256xf32> to vector<2x128xf32>
    %780 = arith.addf %759, %779 : vector<2x128xf32>
    %c0_323 = arith.constant 0 : index
    %c32_324 = arith.constant 32 : index
    %781 = vector.load %arg7[%c0_323, %c32_324] : memref<2x64xf32, #tpu.memory_space<vmem>>, vector<2x32xf32>
    %782 = vector.extract_strided_slice %780 {offsets = [0, 0], sizes = [2, 96], strides = [1, 1]} : vector<2x128xf32> to vector<2x96xf32>
    %783 = arith.negf %782 : vector<2x96xf32>
    %784 = math.exp %783 : vector<2x96xf32>
    %cst_325 = arith.constant 1.000000e+00 : f32
    %785 = vector.broadcast %cst_325 : f32 to vector<2x96xf32>
    %786 = arith.addf %785, %784 : vector<2x96xf32>
    %787 = arith.divf %785, %786 : vector<2x96xf32>
    %788 = vector.extract_strided_slice %780 {offsets = [0, 96], sizes = [2, 32], strides = [1, 1]} : vector<2x128xf32> to vector<2x32xf32>
    %789 = math.tanh %788 : vector<2x32xf32>
    %790 = vector.extract_strided_slice %787 {offsets = [0, 32], sizes = [2, 32], strides = [1, 1]} : vector<2x96xf32> to vector<2x32xf32>
    %791 = arith.mulf %790, %781 : vector<2x32xf32>
    %792 = vector.extract_strided_slice %787 {offsets = [0, 0], sizes = [2, 32], strides = [1, 1]} : vector<2x96xf32> to vector<2x32xf32>
    %793 = arith.mulf %792, %789 : vector<2x32xf32>
    %794 = arith.addf %791, %793 : vector<2x32xf32>
    %795 = vector.extract_strided_slice %787 {offsets = [0, 64], sizes = [2, 32], strides = [1, 1]} : vector<2x96xf32> to vector<2x32xf32>
    %796 = math.tanh %794 : vector<2x32xf32>
    %797 = arith.mulf %795, %796 : vector<2x32xf32>
    %c0_326 = arith.constant 0 : index
    %c0_327 = arith.constant 0 : index
    %798 = vector.load %arg6[%c0_326, %c0_327] : memref<2x64xf32, #tpu.memory_space<vmem>>, vector<2x32xf32>
    tpu.vector_store %arg6[%c0_326, %c0_327], %778 {strides = array<i32>} : memref<2x64xf32, #tpu.memory_space<vmem>>, vector<2x32xf32>,
    %c0_328 = arith.constant 0 : index
    %c32_329 = arith.constant 32 : index
    %799 = vector.load %arg6[%c0_328, %c32_329] : memref<2x64xf32, #tpu.memory_space<vmem>>, vector<2x32xf32>
    tpu.vector_store %arg6[%c0_328, %c32_329], %797 {strides = array<i32>} : memref<2x64xf32, #tpu.memory_space<vmem>>, vector<2x32xf32>,
    %c0_330 = arith.constant 0 : index
    %c0_331 = arith.constant 0 : index
    %800 = vector.load %arg7[%c0_330, %c0_331] : memref<2x64xf32, #tpu.memory_space<vmem>>, vector<2x32xf32>
    tpu.vector_store %arg7[%c0_330, %c0_331], %775 {strides = array<i32>} : memref<2x64xf32, #tpu.memory_space<vmem>>, vector<2x32xf32>,
    %c0_332 = arith.constant 0 : index
    %c32_333 = arith.constant 32 : index
    %801 = vector.load %arg7[%c0_332, %c32_333] : memref<2x64xf32, #tpu.memory_space<vmem>>, vector<2x32xf32>
    tpu.vector_store %arg7[%c0_332, %c32_333], %794 {strides = array<i32>} : memref<2x64xf32, #tpu.memory_space<vmem>>, vector<2x32xf32>,
    %802 = arith.index_cast %c12_i32 : i32 to index
    %c0_334 = arith.constant 0 : index
    %c0_335 = arith.constant 0 : index
    %803 = vector.load %arg4[%802, %c0_334, %c0_335] : memref<16x2x32xf32, #tpu.memory_space<vmem>>, vector<1x2x32xf32>
    %804 = vector.shape_cast %803 : vector<1x2x32xf32> to vector<2x32xf32>
    %805 = vector.shape_cast %778 : vector<2x32xf32> to vector<1x2x32xf32>
    tpu.vector_store %arg4[%802, %c0_334, %c0_335], %805 {strides = array<i32>} : memref<16x2x32xf32, #tpu.memory_space<vmem>>, vector<1x2x32xf32>,
    %806 = arith.index_cast %748 : i32 to index
    %c0_336 = arith.constant 0 : index
    %c0_337 = arith.constant 0 : index
    %807 = vector.load %arg5[%806, %c0_336, %c0_337] : memref<16x2x32xf32, #tpu.memory_space<vmem>>, vector<1x2x32xf32>
    %808 = vector.shape_cast %807 : vector<1x2x32xf32> to vector<2x32xf32>
    %809 = vector.shape_cast %797 : vector<2x32xf32> to vector<1x2x32xf32>
    tpu.vector_store %arg5[%806, %c0_336, %c0_337], %809 {strides = array<i32>} : memref<16x2x32xf32, #tpu.memory_space<vmem>>, vector<1x2x32xf32>,
    %c13_i32 = arith.constant 13 : i32
    %c15_i32_338 = arith.constant 15 : i32
    %810 = arith.subi %c15_i32_338, %c13_i32 : i32
    %c0_339 = arith.constant 0 : index
    %c0_340 = arith.constant 0 : index
    %811 = vector.load %arg6[%c0_339, %c0_340] : memref<2x64xf32, #tpu.memory_space<vmem>>, vector<2x64xf32>
    %812 = arith.truncf %811 : vector<2x64xf32> to vector<2x64xbf16>
    %cst_341 = arith.constant dense<0.000000e+00> : vector<2x256xf32>
    %813 = tpu.matmul %812, %3, %cst_341 {dimension_numbers = #tpu.dot_dimension_numbers<[1], [0], [0], [1], [0, 0, 1, 1], [], []>} : vector<2x64xbf16>, vector<64x256xbf16>, vector<2x256xf32> -> vector<2x256xf32>
    %814 = arith.index_cast %c13_i32 : i32 to index
    %c0_342 = arith.constant 0 : index
    %c0_343 = arith.constant 0 : index
    %815 = vector.load %arg1[%814, %c0_342, %c0_343] : memref<16x2x128xbf16, #tpu.memory_space<vmem>>, vector<1x2x128xbf16>
    %816 = vector.shape_cast %815 : vector<1x2x128xbf16> to vector<2x128xbf16>
    %817 = arith.extf %816 : vector<2x128xbf16> to vector<2x128xf32>
    %818 = arith.index_cast %810 : i32 to index
    %c0_344 = arith.constant 0 : index
    %c0_345 = arith.constant 0 : index
    %819 = vector.load %arg2[%818, %c0_344, %c0_345] : memref<16x2x128xbf16, #tpu.memory_space<vmem>>, vector<1x2x128xbf16>
    %820 = vector.shape_cast %819 : vector<1x2x128xbf16> to vector<2x128xbf16>
    %821 = arith.extf %820 : vector<2x128xbf16> to vector<2x128xf32>
    %822 = vector.extract_strided_slice %813 {offsets = [0, 0], sizes = [2, 128], strides = [1, 1]} : vector<2x256xf32> to vector<2x128xf32>
    %823 = arith.addf %817, %822 : vector<2x128xf32>
    %c0_346 = arith.constant 0 : index
    %c0_347 = arith.constant 0 : index
    %824 = vector.load %arg7[%c0_346, %c0_347] : memref<2x64xf32, #tpu.memory_space<vmem>>, vector<2x32xf32>
    %825 = vector.extract_strided_slice %823 {offsets = [0, 0], sizes = [2, 96], strides = [1, 1]} : vector<2x128xf32> to vector<2x96xf32>
    %826 = arith.negf %825 : vector<2x96xf32>
    %827 = math.exp %826 : vector<2x96xf32>
    %cst_348 = arith.constant 1.000000e+00 : f32
    %828 = vector.broadcast %cst_348 : f32 to vector<2x96xf32>
    %829 = arith.addf %828, %827 : vector<2x96xf32>
    %830 = arith.divf %828, %829 : vector<2x96xf32>
    %831 = vector.extract_strided_slice %823 {offsets = [0, 96], sizes = [2, 32], strides = [1, 1]} : vector<2x128xf32> to vector<2x32xf32>
    %832 = math.tanh %831 : vector<2x32xf32>
    %833 = vector.extract_strided_slice %830 {offsets = [0, 32], sizes = [2, 32], strides = [1, 1]} : vector<2x96xf32> to vector<2x32xf32>
    %834 = arith.mulf %833, %824 : vector<2x32xf32>
    %835 = vector.extract_strided_slice %830 {offsets = [0, 0], sizes = [2, 32], strides = [1, 1]} : vector<2x96xf32> to vector<2x32xf32>
    %836 = arith.mulf %835, %832 : vector<2x32xf32>
    %837 = arith.addf %834, %836 : vector<2x32xf32>
    %838 = vector.extract_strided_slice %830 {offsets = [0, 64], sizes = [2, 32], strides = [1, 1]} : vector<2x96xf32> to vector<2x32xf32>
    %839 = math.tanh %837 : vector<2x32xf32>
    %840 = arith.mulf %838, %839 : vector<2x32xf32>
    %841 = vector.extract_strided_slice %813 {offsets = [0, 128], sizes = [2, 128], strides = [1, 1]} : vector<2x256xf32> to vector<2x128xf32>
    %842 = arith.addf %821, %841 : vector<2x128xf32>
    %c0_349 = arith.constant 0 : index
    %c32_350 = arith.constant 32 : index
    %843 = vector.load %arg7[%c0_349, %c32_350] : memref<2x64xf32, #tpu.memory_space<vmem>>, vector<2x32xf32>
    %844 = vector.extract_strided_slice %842 {offsets = [0, 0], sizes = [2, 96], strides = [1, 1]} : vector<2x128xf32> to vector<2x96xf32>
    %845 = arith.negf %844 : vector<2x96xf32>
    %846 = math.exp %845 : vector<2x96xf32>
    %cst_351 = arith.constant 1.000000e+00 : f32
    %847 = vector.broadcast %cst_351 : f32 to vector<2x96xf32>
    %848 = arith.addf %847, %846 : vector<2x96xf32>
    %849 = arith.divf %847, %848 : vector<2x96xf32>
    %850 = vector.extract_strided_slice %842 {offsets = [0, 96], sizes = [2, 32], strides = [1, 1]} : vector<2x128xf32> to vector<2x32xf32>
    %851 = math.tanh %850 : vector<2x32xf32>
    %852 = vector.extract_strided_slice %849 {offsets = [0, 32], sizes = [2, 32], strides = [1, 1]} : vector<2x96xf32> to vector<2x32xf32>
    %853 = arith.mulf %852, %843 : vector<2x32xf32>
    %854 = vector.extract_strided_slice %849 {offsets = [0, 0], sizes = [2, 32], strides = [1, 1]} : vector<2x96xf32> to vector<2x32xf32>
    %855 = arith.mulf %854, %851 : vector<2x32xf32>
    %856 = arith.addf %853, %855 : vector<2x32xf32>
    %857 = vector.extract_strided_slice %849 {offsets = [0, 64], sizes = [2, 32], strides = [1, 1]} : vector<2x96xf32> to vector<2x32xf32>
    %858 = math.tanh %856 : vector<2x32xf32>
    %859 = arith.mulf %857, %858 : vector<2x32xf32>
    %c0_352 = arith.constant 0 : index
    %c0_353 = arith.constant 0 : index
    %860 = vector.load %arg6[%c0_352, %c0_353] : memref<2x64xf32, #tpu.memory_space<vmem>>, vector<2x32xf32>
    tpu.vector_store %arg6[%c0_352, %c0_353], %840 {strides = array<i32>} : memref<2x64xf32, #tpu.memory_space<vmem>>, vector<2x32xf32>,
    %c0_354 = arith.constant 0 : index
    %c32_355 = arith.constant 32 : index
    %861 = vector.load %arg6[%c0_354, %c32_355] : memref<2x64xf32, #tpu.memory_space<vmem>>, vector<2x32xf32>
    tpu.vector_store %arg6[%c0_354, %c32_355], %859 {strides = array<i32>} : memref<2x64xf32, #tpu.memory_space<vmem>>, vector<2x32xf32>,
    %c0_356 = arith.constant 0 : index
    %c0_357 = arith.constant 0 : index
    %862 = vector.load %arg7[%c0_356, %c0_357] : memref<2x64xf32, #tpu.memory_space<vmem>>, vector<2x32xf32>
    tpu.vector_store %arg7[%c0_356, %c0_357], %837 {strides = array<i32>} : memref<2x64xf32, #tpu.memory_space<vmem>>, vector<2x32xf32>,
    %c0_358 = arith.constant 0 : index
    %c32_359 = arith.constant 32 : index
    %863 = vector.load %arg7[%c0_358, %c32_359] : memref<2x64xf32, #tpu.memory_space<vmem>>, vector<2x32xf32>
    tpu.vector_store %arg7[%c0_358, %c32_359], %856 {strides = array<i32>} : memref<2x64xf32, #tpu.memory_space<vmem>>, vector<2x32xf32>,
    %864 = arith.index_cast %c13_i32 : i32 to index
    %c0_360 = arith.constant 0 : index
    %c0_361 = arith.constant 0 : index
    %865 = vector.load %arg4[%864, %c0_360, %c0_361] : memref<16x2x32xf32, #tpu.memory_space<vmem>>, vector<1x2x32xf32>
    %866 = vector.shape_cast %865 : vector<1x2x32xf32> to vector<2x32xf32>
    %867 = vector.shape_cast %840 : vector<2x32xf32> to vector<1x2x32xf32>
    tpu.vector_store %arg4[%864, %c0_360, %c0_361], %867 {strides = array<i32>} : memref<16x2x32xf32, #tpu.memory_space<vmem>>, vector<1x2x32xf32>,
    %868 = arith.index_cast %810 : i32 to index
    %c0_362 = arith.constant 0 : index
    %c0_363 = arith.constant 0 : index
    %869 = vector.load %arg5[%868, %c0_362, %c0_363] : memref<16x2x32xf32, #tpu.memory_space<vmem>>, vector<1x2x32xf32>
    %870 = vector.shape_cast %869 : vector<1x2x32xf32> to vector<2x32xf32>
    %871 = vector.shape_cast %859 : vector<2x32xf32> to vector<1x2x32xf32>
    tpu.vector_store %arg5[%868, %c0_362, %c0_363], %871 {strides = array<i32>} : memref<16x2x32xf32, #tpu.memory_space<vmem>>, vector<1x2x32xf32>,
    %c14_i32 = arith.constant 14 : i32
    %c15_i32_364 = arith.constant 15 : i32
    %872 = arith.subi %c15_i32_364, %c14_i32 : i32
    %c0_365 = arith.constant 0 : index
    %c0_366 = arith.constant 0 : index
    %873 = vector.load %arg6[%c0_365, %c0_366] : memref<2x64xf32, #tpu.memory_space<vmem>>, vector<2x64xf32>
    %874 = arith.truncf %873 : vector<2x64xf32> to vector<2x64xbf16>
    %cst_367 = arith.constant dense<0.000000e+00> : vector<2x256xf32>
    %875 = tpu.matmul %874, %3, %cst_367 {dimension_numbers = #tpu.dot_dimension_numbers<[1], [0], [0], [1], [0, 0, 1, 1], [], []>} : vector<2x64xbf16>, vector<64x256xbf16>, vector<2x256xf32> -> vector<2x256xf32>
    %876 = arith.index_cast %c14_i32 : i32 to index
    %c0_368 = arith.constant 0 : index
    %c0_369 = arith.constant 0 : index
    %877 = vector.load %arg1[%876, %c0_368, %c0_369] : memref<16x2x128xbf16, #tpu.memory_space<vmem>>, vector<1x2x128xbf16>
    %878 = vector.shape_cast %877 : vector<1x2x128xbf16> to vector<2x128xbf16>
    %879 = arith.extf %878 : vector<2x128xbf16> to vector<2x128xf32>
    %880 = arith.index_cast %872 : i32 to index
    %c0_370 = arith.constant 0 : index
    %c0_371 = arith.constant 0 : index
    %881 = vector.load %arg2[%880, %c0_370, %c0_371] : memref<16x2x128xbf16, #tpu.memory_space<vmem>>, vector<1x2x128xbf16>
    %882 = vector.shape_cast %881 : vector<1x2x128xbf16> to vector<2x128xbf16>
    %883 = arith.extf %882 : vector<2x128xbf16> to vector<2x128xf32>
    %884 = vector.extract_strided_slice %875 {offsets = [0, 0], sizes = [2, 128], strides = [1, 1]} : vector<2x256xf32> to vector<2x128xf32>
    %885 = arith.addf %879, %884 : vector<2x128xf32>
    %c0_372 = arith.constant 0 : index
    %c0_373 = arith.constant 0 : index
    %886 = vector.load %arg7[%c0_372, %c0_373] : memref<2x64xf32, #tpu.memory_space<vmem>>, vector<2x32xf32>
    %887 = vector.extract_strided_slice %885 {offsets = [0, 0], sizes = [2, 96], strides = [1, 1]} : vector<2x128xf32> to vector<2x96xf32>
    %888 = arith.negf %887 : vector<2x96xf32>
    %889 = math.exp %888 : vector<2x96xf32>
    %cst_374 = arith.constant 1.000000e+00 : f32
    %890 = vector.broadcast %cst_374 : f32 to vector<2x96xf32>
    %891 = arith.addf %890, %889 : vector<2x96xf32>
    %892 = arith.divf %890, %891 : vector<2x96xf32>
    %893 = vector.extract_strided_slice %885 {offsets = [0, 96], sizes = [2, 32], strides = [1, 1]} : vector<2x128xf32> to vector<2x32xf32>
    %894 = math.tanh %893 : vector<2x32xf32>
    %895 = vector.extract_strided_slice %892 {offsets = [0, 32], sizes = [2, 32], strides = [1, 1]} : vector<2x96xf32> to vector<2x32xf32>
    %896 = arith.mulf %895, %886 : vector<2x32xf32>
    %897 = vector.extract_strided_slice %892 {offsets = [0, 0], sizes = [2, 32], strides = [1, 1]} : vector<2x96xf32> to vector<2x32xf32>
    %898 = arith.mulf %897, %894 : vector<2x32xf32>
    %899 = arith.addf %896, %898 : vector<2x32xf32>
    %900 = vector.extract_strided_slice %892 {offsets = [0, 64], sizes = [2, 32], strides = [1, 1]} : vector<2x96xf32> to vector<2x32xf32>
    %901 = math.tanh %899 : vector<2x32xf32>
    %902 = arith.mulf %900, %901 : vector<2x32xf32>
    %903 = vector.extract_strided_slice %875 {offsets = [0, 128], sizes = [2, 128], strides = [1, 1]} : vector<2x256xf32> to vector<2x128xf32>
    %904 = arith.addf %883, %903 : vector<2x128xf32>
    %c0_375 = arith.constant 0 : index
    %c32_376 = arith.constant 32 : index
    %905 = vector.load %arg7[%c0_375, %c32_376] : memref<2x64xf32, #tpu.memory_space<vmem>>, vector<2x32xf32>
    %906 = vector.extract_strided_slice %904 {offsets = [0, 0], sizes = [2, 96], strides = [1, 1]} : vector<2x128xf32> to vector<2x96xf32>
    %907 = arith.negf %906 : vector<2x96xf32>
    %908 = math.exp %907 : vector<2x96xf32>
    %cst_377 = arith.constant 1.000000e+00 : f32
    %909 = vector.broadcast %cst_377 : f32 to vector<2x96xf32>
    %910 = arith.addf %909, %908 : vector<2x96xf32>
    %911 = arith.divf %909, %910 : vector<2x96xf32>
    %912 = vector.extract_strided_slice %904 {offsets = [0, 96], sizes = [2, 32], strides = [1, 1]} : vector<2x128xf32> to vector<2x32xf32>
    %913 = math.tanh %912 : vector<2x32xf32>
    %914 = vector.extract_strided_slice %911 {offsets = [0, 32], sizes = [2, 32], strides = [1, 1]} : vector<2x96xf32> to vector<2x32xf32>
    %915 = arith.mulf %914, %905 : vector<2x32xf32>
    %916 = vector.extract_strided_slice %911 {offsets = [0, 0], sizes = [2, 32], strides = [1, 1]} : vector<2x96xf32> to vector<2x32xf32>
    %917 = arith.mulf %916, %913 : vector<2x32xf32>
    %918 = arith.addf %915, %917 : vector<2x32xf32>
    %919 = vector.extract_strided_slice %911 {offsets = [0, 64], sizes = [2, 32], strides = [1, 1]} : vector<2x96xf32> to vector<2x32xf32>
    %920 = math.tanh %918 : vector<2x32xf32>
    %921 = arith.mulf %919, %920 : vector<2x32xf32>
    %c0_378 = arith.constant 0 : index
    %c0_379 = arith.constant 0 : index
    %922 = vector.load %arg6[%c0_378, %c0_379] : memref<2x64xf32, #tpu.memory_space<vmem>>, vector<2x32xf32>
    tpu.vector_store %arg6[%c0_378, %c0_379], %902 {strides = array<i32>} : memref<2x64xf32, #tpu.memory_space<vmem>>, vector<2x32xf32>,
    %c0_380 = arith.constant 0 : index
    %c32_381 = arith.constant 32 : index
    %923 = vector.load %arg6[%c0_380, %c32_381] : memref<2x64xf32, #tpu.memory_space<vmem>>, vector<2x32xf32>
    tpu.vector_store %arg6[%c0_380, %c32_381], %921 {strides = array<i32>} : memref<2x64xf32, #tpu.memory_space<vmem>>, vector<2x32xf32>,
    %c0_382 = arith.constant 0 : index
    %c0_383 = arith.constant 0 : index
    %924 = vector.load %arg7[%c0_382, %c0_383] : memref<2x64xf32, #tpu.memory_space<vmem>>, vector<2x32xf32>
    tpu.vector_store %arg7[%c0_382, %c0_383], %899 {strides = array<i32>} : memref<2x64xf32, #tpu.memory_space<vmem>>, vector<2x32xf32>,
    %c0_384 = arith.constant 0 : index
    %c32_385 = arith.constant 32 : index
    %925 = vector.load %arg7[%c0_384, %c32_385] : memref<2x64xf32, #tpu.memory_space<vmem>>, vector<2x32xf32>
    tpu.vector_store %arg7[%c0_384, %c32_385], %918 {strides = array<i32>} : memref<2x64xf32, #tpu.memory_space<vmem>>, vector<2x32xf32>,
    %926 = arith.index_cast %c14_i32 : i32 to index
    %c0_386 = arith.constant 0 : index
    %c0_387 = arith.constant 0 : index
    %927 = vector.load %arg4[%926, %c0_386, %c0_387] : memref<16x2x32xf32, #tpu.memory_space<vmem>>, vector<1x2x32xf32>
    %928 = vector.shape_cast %927 : vector<1x2x32xf32> to vector<2x32xf32>
    %929 = vector.shape_cast %902 : vector<2x32xf32> to vector<1x2x32xf32>
    tpu.vector_store %arg4[%926, %c0_386, %c0_387], %929 {strides = array<i32>} : memref<16x2x32xf32, #tpu.memory_space<vmem>>, vector<1x2x32xf32>,
    %930 = arith.index_cast %872 : i32 to index
    %c0_388 = arith.constant 0 : index
    %c0_389 = arith.constant 0 : index
    %931 = vector.load %arg5[%930, %c0_388, %c0_389] : memref<16x2x32xf32, #tpu.memory_space<vmem>>, vector<1x2x32xf32>
    %932 = vector.shape_cast %931 : vector<1x2x32xf32> to vector<2x32xf32>
    %933 = vector.shape_cast %921 : vector<2x32xf32> to vector<1x2x32xf32>
    tpu.vector_store %arg5[%930, %c0_388, %c0_389], %933 {strides = array<i32>} : memref<16x2x32xf32, #tpu.memory_space<vmem>>, vector<1x2x32xf32>,
    %c15_i32_390 = arith.constant 15 : i32
    %c15_i32_391 = arith.constant 15 : i32
    %934 = arith.subi %c15_i32_391, %c15_i32_390 : i32
    %c0_392 = arith.constant 0 : index
    %c0_393 = arith.constant 0 : index
    %935 = vector.load %arg6[%c0_392, %c0_393] : memref<2x64xf32, #tpu.memory_space<vmem>>, vector<2x64xf32>
    %936 = arith.truncf %935 : vector<2x64xf32> to vector<2x64xbf16>
    %cst_394 = arith.constant dense<0.000000e+00> : vector<2x256xf32>
    %937 = tpu.matmul %936, %3, %cst_394 {dimension_numbers = #tpu.dot_dimension_numbers<[1], [0], [0], [1], [0, 0, 1, 1], [], []>} : vector<2x64xbf16>, vector<64x256xbf16>, vector<2x256xf32> -> vector<2x256xf32>
    %938 = arith.index_cast %c15_i32_390 : i32 to index
    %c0_395 = arith.constant 0 : index
    %c0_396 = arith.constant 0 : index
    %939 = vector.load %arg1[%938, %c0_395, %c0_396] : memref<16x2x128xbf16, #tpu.memory_space<vmem>>, vector<1x2x128xbf16>
    %940 = vector.shape_cast %939 : vector<1x2x128xbf16> to vector<2x128xbf16>
    %941 = arith.extf %940 : vector<2x128xbf16> to vector<2x128xf32>
    %942 = arith.index_cast %934 : i32 to index
    %c0_397 = arith.constant 0 : index
    %c0_398 = arith.constant 0 : index
    %943 = vector.load %arg2[%942, %c0_397, %c0_398] : memref<16x2x128xbf16, #tpu.memory_space<vmem>>, vector<1x2x128xbf16>
    %944 = vector.shape_cast %943 : vector<1x2x128xbf16> to vector<2x128xbf16>
    %945 = arith.extf %944 : vector<2x128xbf16> to vector<2x128xf32>
    %946 = vector.extract_strided_slice %937 {offsets = [0, 0], sizes = [2, 128], strides = [1, 1]} : vector<2x256xf32> to vector<2x128xf32>
    %947 = arith.addf %941, %946 : vector<2x128xf32>
    %c0_399 = arith.constant 0 : index
    %c0_400 = arith.constant 0 : index
    %948 = vector.load %arg7[%c0_399, %c0_400] : memref<2x64xf32, #tpu.memory_space<vmem>>, vector<2x32xf32>
    %949 = vector.extract_strided_slice %947 {offsets = [0, 0], sizes = [2, 96], strides = [1, 1]} : vector<2x128xf32> to vector<2x96xf32>
    %950 = arith.negf %949 : vector<2x96xf32>
    %951 = math.exp %950 : vector<2x96xf32>
    %cst_401 = arith.constant 1.000000e+00 : f32
    %952 = vector.broadcast %cst_401 : f32 to vector<2x96xf32>
    %953 = arith.addf %952, %951 : vector<2x96xf32>
    %954 = arith.divf %952, %953 : vector<2x96xf32>
    %955 = vector.extract_strided_slice %947 {offsets = [0, 96], sizes = [2, 32], strides = [1, 1]} : vector<2x128xf32> to vector<2x32xf32>
    %956 = math.tanh %955 : vector<2x32xf32>
    %957 = vector.extract_strided_slice %954 {offsets = [0, 32], sizes = [2, 32], strides = [1, 1]} : vector<2x96xf32> to vector<2x32xf32>
    %958 = arith.mulf %957, %948 : vector<2x32xf32>
    %959 = vector.extract_strided_slice %954 {offsets = [0, 0], sizes = [2, 32], strides = [1, 1]} : vector<2x96xf32> to vector<2x32xf32>
    %960 = arith.mulf %959, %956 : vector<2x32xf32>
    %961 = arith.addf %958, %960 : vector<2x32xf32>
    %962 = vector.extract_strided_slice %954 {offsets = [0, 64], sizes = [2, 32], strides = [1, 1]} : vector<2x96xf32> to vector<2x32xf32>
    %963 = math.tanh %961 : vector<2x32xf32>
    %964 = arith.mulf %962, %963 : vector<2x32xf32>
    %965 = vector.extract_strided_slice %937 {offsets = [0, 128], sizes = [2, 128], strides = [1, 1]} : vector<2x256xf32> to vector<2x128xf32>
    %966 = arith.addf %945, %965 : vector<2x128xf32>
    %c0_402 = arith.constant 0 : index
    %c32_403 = arith.constant 32 : index
    %967 = vector.load %arg7[%c0_402, %c32_403] : memref<2x64xf32, #tpu.memory_space<vmem>>, vector<2x32xf32>
    %968 = vector.extract_strided_slice %966 {offsets = [0, 0], sizes = [2, 96], strides = [1, 1]} : vector<2x128xf32> to vector<2x96xf32>
    %969 = arith.negf %968 : vector<2x96xf32>
    %970 = math.exp %969 : vector<2x96xf32>
    %cst_404 = arith.constant 1.000000e+00 : f32
    %971 = vector.broadcast %cst_404 : f32 to vector<2x96xf32>
    %972 = arith.addf %971, %970 : vector<2x96xf32>
    %973 = arith.divf %971, %972 : vector<2x96xf32>
    %974 = vector.extract_strided_slice %966 {offsets = [0, 96], sizes = [2, 32], strides = [1, 1]} : vector<2x128xf32> to vector<2x32xf32>
    %975 = math.tanh %974 : vector<2x32xf32>
    %976 = vector.extract_strided_slice %973 {offsets = [0, 32], sizes = [2, 32], strides = [1, 1]} : vector<2x96xf32> to vector<2x32xf32>
    %977 = arith.mulf %976, %967 : vector<2x32xf32>
    %978 = vector.extract_strided_slice %973 {offsets = [0, 0], sizes = [2, 32], strides = [1, 1]} : vector<2x96xf32> to vector<2x32xf32>
    %979 = arith.mulf %978, %975 : vector<2x32xf32>
    %980 = arith.addf %977, %979 : vector<2x32xf32>
    %981 = vector.extract_strided_slice %973 {offsets = [0, 64], sizes = [2, 32], strides = [1, 1]} : vector<2x96xf32> to vector<2x32xf32>
    %982 = math.tanh %980 : vector<2x32xf32>
    %983 = arith.mulf %981, %982 : vector<2x32xf32>
    %c0_405 = arith.constant 0 : index
    %c0_406 = arith.constant 0 : index
    %984 = vector.load %arg6[%c0_405, %c0_406] : memref<2x64xf32, #tpu.memory_space<vmem>>, vector<2x32xf32>
    tpu.vector_store %arg6[%c0_405, %c0_406], %964 {strides = array<i32>} : memref<2x64xf32, #tpu.memory_space<vmem>>, vector<2x32xf32>,
    %c0_407 = arith.constant 0 : index
    %c32_408 = arith.constant 32 : index
    %985 = vector.load %arg6[%c0_407, %c32_408] : memref<2x64xf32, #tpu.memory_space<vmem>>, vector<2x32xf32>
    tpu.vector_store %arg6[%c0_407, %c32_408], %983 {strides = array<i32>} : memref<2x64xf32, #tpu.memory_space<vmem>>, vector<2x32xf32>,
    %c0_409 = arith.constant 0 : index
    %c0_410 = arith.constant 0 : index
    %986 = vector.load %arg7[%c0_409, %c0_410] : memref<2x64xf32, #tpu.memory_space<vmem>>, vector<2x32xf32>
    tpu.vector_store %arg7[%c0_409, %c0_410], %961 {strides = array<i32>} : memref<2x64xf32, #tpu.memory_space<vmem>>, vector<2x32xf32>,
    %c0_411 = arith.constant 0 : index
    %c32_412 = arith.constant 32 : index
    %987 = vector.load %arg7[%c0_411, %c32_412] : memref<2x64xf32, #tpu.memory_space<vmem>>, vector<2x32xf32>
    tpu.vector_store %arg7[%c0_411, %c32_412], %980 {strides = array<i32>} : memref<2x64xf32, #tpu.memory_space<vmem>>, vector<2x32xf32>,
    %988 = arith.index_cast %c15_i32_390 : i32 to index
    %c0_413 = arith.constant 0 : index
    %c0_414 = arith.constant 0 : index
    %989 = vector.load %arg4[%988, %c0_413, %c0_414] : memref<16x2x32xf32, #tpu.memory_space<vmem>>, vector<1x2x32xf32>
    %990 = vector.shape_cast %989 : vector<1x2x32xf32> to vector<2x32xf32>
    %991 = vector.shape_cast %964 : vector<2x32xf32> to vector<1x2x32xf32>
    tpu.vector_store %arg4[%988, %c0_413, %c0_414], %991 {strides = array<i32>} : memref<16x2x32xf32, #tpu.memory_space<vmem>>, vector<1x2x32xf32>,
    %992 = arith.index_cast %934 : i32 to index
    %c0_415 = arith.constant 0 : index
    %c0_416 = arith.constant 0 : index
    %993 = vector.load %arg5[%992, %c0_415, %c0_416] : memref<16x2x32xf32, #tpu.memory_space<vmem>>, vector<1x2x32xf32>
    %994 = vector.shape_cast %993 : vector<1x2x32xf32> to vector<2x32xf32>
    %995 = vector.shape_cast %983 : vector<2x32xf32> to vector<1x2x32xf32>
    tpu.vector_store %arg5[%992, %c0_415, %c0_416], %995 {strides = array<i32>} : memref<16x2x32xf32, #tpu.memory_space<vmem>>, vector<1x2x32xf32>,
    %c16_i32 = arith.constant 16 : i32
    return
  }
  func.func @transform_0(%arg0: i32) -> (i32, i32, i32) {
    %c0_i32 = arith.constant 0 : i32
    %c0_i32_0 = arith.constant 0 : i32
    %c0_i32_1 = arith.constant 0 : i32
    return %arg0, %c0_i32, %c0_i32_0 : i32, i32, i32
  }
  func.func @transform_1(%arg0: i32) -> (i32, i32, i32) {
    %c1_i32 = arith.constant 1 : i32
    %0 = arith.subi %c1_i32, %arg0 : i32
    %c0_i32 = arith.constant 0 : i32
    %c1_i32_0 = arith.constant 1 : i32
    %c0_i32_1 = arith.constant 0 : i32
    return %0, %c0_i32, %c1_i32_0 : i32, i32, i32
  }
  func.func @transform_2(%arg0: i32) -> (i32, i32) {
    %c0_i32 = arith.constant 0 : i32
    %c0_i32_0 = arith.constant 0 : i32
    %c0_i32_1 = arith.constant 0 : i32
    return %c0_i32, %c0_i32_0 : i32, i32
  }
  func.func @transform_3(%arg0: i32) -> (i32, i32, i32) {
    %c0_i32 = arith.constant 0 : i32
    %c0_i32_0 = arith.constant 0 : i32
    %c0_i32_1 = arith.constant 0 : i32
    return %arg0, %c0_i32, %c0_i32_0 : i32, i32, i32
  }
  func.func @transform_4(%arg0: i32) -> (i32, i32, i32) {
    %c1_i32 = arith.constant 1 : i32
    %0 = arith.subi %c1_i32, %arg0 : i32
    %c0_i32 = arith.constant 0 : i32
    %c0_i32_0 = arith.constant 0 : i32
    %c0_i32_1 = arith.constant 0 : i32
    return %0, %c0_i32, %c0_i32_0 : i32, i32, i32
  }
}

module attributes {stable_mosaic.version = 11 : i64} {
  func.func @_linear_kernel(%arg0: i32, %arg1: i32, %arg2: memref<64x64xf32, #tpu.memory_space<vmem>>, %arg3: memref<64x256xbf16, #tpu.memory_space<vmem>>, %arg4: memref<1x256xf32, #tpu.memory_space<vmem>>, %arg5: memref<64x256xbf16, #tpu.memory_space<vmem>>) attributes {dimension_semantics = [#tpu.dimension_semantics<parallel>, #tpu.dimension_semantics<parallel>], iteration_bounds = array<i64: 1, 1>, scalar_prefetch = 0 : i64, scratch_operands = 0 : i64, tpu.core_type = #tpu.core_type<tc>, window_params = [{transform_indices = @transform_0, window_bounds = array<i64: 64, 64>}, {transform_indices = @transform_1, window_bounds = array<i64: 64, 256>}, {transform_indices = @transform_2, window_bounds = array<i64: 1, 256>}, {transform_indices = @transform_3, window_bounds = array<i64: 64, 256>}]} {
    %c0 = arith.constant 0 : index
    %c0_0 = arith.constant 0 : index
    %0 = vector.load %arg2[%c0, %c0_0] : memref<64x64xf32, #tpu.memory_space<vmem>>, vector<64x64xf32>
    %1 = arith.truncf %0 : vector<64x64xf32> to vector<64x64xbf16>
    %c0_1 = arith.constant 0 : index
    %c0_2 = arith.constant 0 : index
    %2 = vector.load %arg3[%c0_1, %c0_2] : memref<64x256xbf16, #tpu.memory_space<vmem>>, vector<64x256xbf16>
    %cst = arith.constant dense<0.000000e+00> : vector<64x256xf32>
    %3 = tpu.matmul %1, %2, %cst {dimension_numbers = #tpu.dot_dimension_numbers<[1], [0], [0], [1], [0, 0, 1, 1], [], []>} : vector<64x64xbf16>, vector<64x256xbf16>, vector<64x256xf32> -> vector<64x256xf32>
    %c0_3 = arith.constant 0 : index
    %c0_4 = arith.constant 0 : index
    %4 = vector.load %arg4[%c0_3, %c0_4] : memref<1x256xf32, #tpu.memory_space<vmem>>, vector<1x256xf32>
    %5 = vector.broadcast %4 : vector<1x256xf32> to vector<64x256xf32>
    %6 = arith.addf %3, %5 : vector<64x256xf32>
    %7 = arith.truncf %6 : vector<64x256xf32> to vector<64x256xbf16>
    %c0_5 = arith.constant 0 : index
    %c0_6 = arith.constant 0 : index
    %8 = vector.load %arg5[%c0_5, %c0_6] : memref<64x256xbf16, #tpu.memory_space<vmem>>, vector<64x256xbf16>
    tpu.vector_store %arg5[%c0_5, %c0_6], %7 {strides = array<i32>} : memref<64x256xbf16, #tpu.memory_space<vmem>>, vector<64x256xbf16>,
    return
  }
  func.func @transform_0(%arg0: i32, %arg1: i32) -> (i32, i32) {
    %c0_i32 = arith.constant 0 : i32
    %c0_i32_0 = arith.constant 0 : i32
    return %arg0, %c0_i32 : i32, i32
  }
  func.func @transform_1(%arg0: i32, %arg1: i32) -> (i32, i32) {
    %c0_i32 = arith.constant 0 : i32
    %c0_i32_0 = arith.constant 0 : i32
    return %c0_i32, %arg1 : i32, i32
  }
  func.func @transform_2(%arg0: i32, %arg1: i32) -> (i32, i32) {
    %c0_i32 = arith.constant 0 : i32
    %c0_i32_0 = arith.constant 0 : i32
    return %c0_i32, %arg1 : i32, i32
  }
  func.func @transform_3(%arg0: i32, %arg1: i32) -> (i32, i32) {
    %c0_i32 = arith.constant 0 : i32
    return %arg0, %arg1 : i32, i32
  }
}

module attributes {stable_mosaic.version = 11 : i64} {
  func.func @_res_id_ln_kernel(%arg0: i32, %arg1: memref<64x64xf32, #tpu.memory_space<vmem>>, %arg2: memref<64x32xf32, #tpu.memory_space<vmem>>, %arg3: memref<64x32xf32, #tpu.memory_space<vmem>>, %arg4: memref<1x64xf32, #tpu.memory_space<vmem>>, %arg5: memref<1x64xf32, #tpu.memory_space<vmem>>, %arg6: memref<64x64xf32, #tpu.memory_space<vmem>>) attributes {dimension_semantics = [#tpu.dimension_semantics<parallel>], iteration_bounds = array<i64: 1>, scalar_prefetch = 0 : i64, scratch_operands = 0 : i64, tpu.core_type = #tpu.core_type<tc>, window_params = [{transform_indices = @transform_0, window_bounds = array<i64: 64, 64>}, {transform_indices = @transform_1, window_bounds = array<i64: 64, 32>}, {transform_indices = @transform_2, window_bounds = array<i64: 64, 32>}, {pipeline_mode = #tpu.pipeline_mode<synchronous>, transform_indices = @transform_3, window_bounds = array<i64: 1, 64>}, {pipeline_mode = #tpu.pipeline_mode<synchronous>, transform_indices = @transform_4, window_bounds = array<i64: 1, 64>}, {transform_indices = @transform_5, window_bounds = array<i64: 64, 64>}]} {
    %c0 = arith.constant 0 : index
    %c0_0 = arith.constant 0 : index
    %0 = vector.load %arg1[%c0, %c0_0] : memref<64x64xf32, #tpu.memory_space<vmem>>, vector<64x64xf32>
    %1 = vector.extract_strided_slice %0 {offsets = [0, 0], sizes = [64, 32], strides = [1, 1]} : vector<64x64xf32> to vector<64x32xf32>
    %c0_1 = arith.constant 0 : index
    %c0_2 = arith.constant 0 : index
    %2 = vector.load %arg2[%c0_1, %c0_2] : memref<64x32xf32, #tpu.memory_space<vmem>>, vector<64x32xf32>
    %3 = arith.addf %1, %2 : vector<64x32xf32>
    %4 = vector.extract_strided_slice %0 {offsets = [0, 32], sizes = [64, 32], strides = [1, 1]} : vector<64x64xf32> to vector<64x32xf32>
    %c0_3 = arith.constant 0 : index
    %c0_4 = arith.constant 0 : index
    %5 = vector.load %arg3[%c0_3, %c0_4] : memref<64x32xf32, #tpu.memory_space<vmem>>, vector<64x32xf32>
    %6 = arith.addf %4, %5 : vector<64x32xf32>
    %cst = arith.constant dense<0.000000e+00> : vector<64xf32>
    %7 = vector.multi_reduction <add>, %3, %cst [1] : vector<64x32xf32> to vector<64xf32>
    %8 = vector.shape_cast %7 : vector<64xf32> to vector<64x1xf32>
    %cst_5 = arith.constant dense<0.000000e+00> : vector<64xf32>
    %9 = vector.multi_reduction <add>, %6, %cst_5 [1] : vector<64x32xf32> to vector<64xf32>
    %10 = vector.shape_cast %9 : vector<64xf32> to vector<64x1xf32>
    %11 = arith.addf %8, %10 : vector<64x1xf32>
    %cst_6 = arith.constant 6.400000e+01 : f32
    %12 = vector.broadcast %cst_6 : f32 to vector<64x1xf32>
    %13 = arith.divf %11, %12 : vector<64x1xf32>
    %14 = vector.broadcast %13 : vector<64x1xf32> to vector<64x32xf32>
    %15 = arith.subf %3, %14 : vector<64x32xf32>
    %16 = vector.broadcast %13 : vector<64x1xf32> to vector<64x32xf32>
    %17 = arith.subf %6, %16 : vector<64x32xf32>
    %18 = arith.mulf %15, %15 : vector<64x32xf32>
    %cst_7 = arith.constant dense<0.000000e+00> : vector<64xf32>
    %19 = vector.multi_reduction <add>, %18, %cst_7 [1] : vector<64x32xf32> to vector<64xf32>
    %20 = vector.shape_cast %19 : vector<64xf32> to vector<64x1xf32>
    %21 = arith.mulf %17, %17 : vector<64x32xf32>
    %cst_8 = arith.constant dense<0.000000e+00> : vector<64xf32>
    %22 = vector.multi_reduction <add>, %21, %cst_8 [1] : vector<64x32xf32> to vector<64xf32>
    %23 = vector.shape_cast %22 : vector<64xf32> to vector<64x1xf32>
    %24 = arith.addf %20, %23 : vector<64x1xf32>
    %cst_9 = arith.constant 6.400000e+01 : f32
    %25 = vector.broadcast %cst_9 : f32 to vector<64x1xf32>
    %26 = arith.divf %24, %25 : vector<64x1xf32>
    %cst_10 = arith.constant 9.99999974E-6 : f32
    %27 = vector.broadcast %cst_10 : f32 to vector<64x1xf32>
    %28 = arith.addf %26, %27 : vector<64x1xf32>
    %29 = math.rsqrt %28 : vector<64x1xf32>
    %30 = vector.broadcast %29 : vector<64x1xf32> to vector<64x32xf32>
    %31 = arith.mulf %15, %30 : vector<64x32xf32>
    %c0_11 = arith.constant 0 : index
    %c0_12 = arith.constant 0 : index
    %32 = vector.load %arg4[%c0_11, %c0_12] : memref<1x64xf32, #tpu.memory_space<vmem>>, vector<1x32xf32>
    %33 = vector.broadcast %32 : vector<1x32xf32> to vector<64x32xf32>
    %34 = arith.mulf %31, %33 : vector<64x32xf32>
    %c0_13 = arith.constant 0 : index
    %c0_14 = arith.constant 0 : index
    %35 = vector.load %arg5[%c0_13, %c0_14] : memref<1x64xf32, #tpu.memory_space<vmem>>, vector<1x32xf32>
    %36 = vector.broadcast %35 : vector<1x32xf32> to vector<64x32xf32>
    %37 = arith.addf %34, %36 : vector<64x32xf32>
    %c0_15 = arith.constant 0 : index
    %c0_16 = arith.constant 0 : index
    %38 = vector.load %arg6[%c0_15, %c0_16] : memref<64x64xf32, #tpu.memory_space<vmem>>, vector<64x32xf32>
    tpu.vector_store %arg6[%c0_15, %c0_16], %37 {strides = array<i32>} : memref<64x64xf32, #tpu.memory_space<vmem>>, vector<64x32xf32>,
    %39 = vector.broadcast %29 : vector<64x1xf32> to vector<64x32xf32>
    %40 = arith.mulf %17, %39 : vector<64x32xf32>
    %c0_17 = arith.constant 0 : index
    %c32 = arith.constant 32 : index
    %41 = vector.load %arg4[%c0_17, %c32] : memref<1x64xf32, #tpu.memory_space<vmem>>, vector<1x32xf32>
    %42 = vector.broadcast %41 : vector<1x32xf32> to vector<64x32xf32>
    %43 = arith.mulf %40, %42 : vector<64x32xf32>
    %c0_18 = arith.constant 0 : index
    %c32_19 = arith.constant 32 : index
    %44 = vector.load %arg5[%c0_18, %c32_19] : memref<1x64xf32, #tpu.memory_space<vmem>>, vector<1x32xf32>
    %45 = vector.broadcast %44 : vector<1x32xf32> to vector<64x32xf32>
    %46 = arith.addf %43, %45 : vector<64x32xf32>
    %c0_20 = arith.constant 0 : index
    %c32_21 = arith.constant 32 : index
    %47 = vector.load %arg6[%c0_20, %c32_21] : memref<64x64xf32, #tpu.memory_space<vmem>>, vector<64x32xf32>
    tpu.vector_store %arg6[%c0_20, %c32_21], %46 {strides = array<i32>} : memref<64x64xf32, #tpu.memory_space<vmem>>, vector<64x32xf32>,
    return
  }
  func.func @transform_0(%arg0: i32) -> (i32, i32) {
    %c0_i32 = arith.constant 0 : i32
    %c0_i32_0 = arith.constant 0 : i32
    return %arg0, %c0_i32 : i32, i32
  }
  func.func @transform_1(%arg0: i32) -> (i32, i32) {
    %c0_i32 = arith.constant 0 : i32
    %c0_i32_0 = arith.constant 0 : i32
    return %arg0, %c0_i32 : i32, i32
  }
  func.func @transform_2(%arg0: i32) -> (i32, i32) {
    %c0_i32 = arith.constant 0 : i32
    %c0_i32_0 = arith.constant 0 : i32
    return %arg0, %c0_i32 : i32, i32
  }
  func.func @transform_3(%arg0: i32) -> (i32, i32) {
    %c0_i32 = arith.constant 0 : i32
    %c0_i32_0 = arith.constant 0 : i32
    %c0_i32_1 = arith.constant 0 : i32
    return %c0_i32, %c0_i32_0 : i32, i32
  }
  func.func @transform_4(%arg0: i32) -> (i32, i32) {
    %c0_i32 = arith.constant 0 : i32
    %c0_i32_0 = arith.constant 0 : i32
    %c0_i32_1 = arith.constant 0 : i32
    return %c0_i32, %c0_i32_0 : i32, i32
  }
  func.func @transform_5(%arg0: i32) -> (i32, i32) {
    %c0_i32 = arith.constant 0 : i32
    %c0_i32_0 = arith.constant 0 : i32
    return %arg0, %c0_i32 : i32, i32
  }
}

module attributes {stable_mosaic.version = 11 : i64} {
  func.func @_head_kernel(%arg0: memref<2x64xf32, #tpu.memory_space<vmem>>, %arg1: memref<64x128xbf16, #tpu.memory_space<vmem>>, %arg2: memref<1x128xf32, #tpu.memory_space<vmem>>, %arg3: memref<128x64xbf16, #tpu.memory_space<vmem>>, %arg4: memref<1x64xf32, #tpu.memory_space<vmem>>, %arg5: memref<64x32xbf16, #tpu.memory_space<vmem>>, %arg6: memref<1x32xf32, #tpu.memory_space<vmem>>, %arg7: memref<32x1xbf16, #tpu.memory_space<vmem>>, %arg8: memref<1x1xf32, #tpu.memory_space<vmem>>, %arg9: memref<2x1xf32, #tpu.memory_space<vmem>>) attributes {dimension_semantics = [], scalar_prefetch = 0 : i64, scratch_operands = 0 : i64, tpu.core_type = #tpu.core_type<tc>} {
    %c0 = arith.constant 0 : index
    %c0_0 = arith.constant 0 : index
    %0 = vector.load %arg0[%c0, %c0_0] : memref<2x64xf32, #tpu.memory_space<vmem>>, vector<2x64xf32>
    %1 = arith.truncf %0 : vector<2x64xf32> to vector<2x64xbf16>
    %c0_1 = arith.constant 0 : index
    %c0_2 = arith.constant 0 : index
    %2 = vector.load %arg1[%c0_1, %c0_2] : memref<64x128xbf16, #tpu.memory_space<vmem>>, vector<64x128xbf16>
    %cst = arith.constant dense<0.000000e+00> : vector<2x128xf32>
    %3 = tpu.matmul %1, %2, %cst {dimension_numbers = #tpu.dot_dimension_numbers<[1], [0], [0], [1], [0, 0, 1, 1], [], []>} : vector<2x64xbf16>, vector<64x128xbf16>, vector<2x128xf32> -> vector<2x128xf32>
    %c0_3 = arith.constant 0 : index
    %c0_4 = arith.constant 0 : index
    %4 = vector.load %arg2[%c0_3, %c0_4] : memref<1x128xf32, #tpu.memory_space<vmem>>, vector<1x128xf32>
    %5 = vector.broadcast %4 : vector<1x128xf32> to vector<2x128xf32>
    %6 = arith.addf %3, %5 : vector<2x128xf32>
    %cst_5 = arith.constant 0.000000e+00 : f32
    %7 = vector.broadcast %cst_5 : f32 to vector<2x128xf32>
    %8 = arith.maximumf %6, %7 : vector<2x128xf32>
    %9 = arith.truncf %8 : vector<2x128xf32> to vector<2x128xbf16>
    %c0_6 = arith.constant 0 : index
    %c0_7 = arith.constant 0 : index
    %10 = vector.load %arg3[%c0_6, %c0_7] : memref<128x64xbf16, #tpu.memory_space<vmem>>, vector<128x64xbf16>
    %cst_8 = arith.constant dense<0.000000e+00> : vector<2x64xf32>
    %11 = tpu.matmul %9, %10, %cst_8 {dimension_numbers = #tpu.dot_dimension_numbers<[1], [0], [0], [1], [0, 0, 1, 1], [], []>} : vector<2x128xbf16>, vector<128x64xbf16>, vector<2x64xf32> -> vector<2x64xf32>
    %c0_9 = arith.constant 0 : index
    %c0_10 = arith.constant 0 : index
    %12 = vector.load %arg4[%c0_9, %c0_10] : memref<1x64xf32, #tpu.memory_space<vmem>>, vector<1x64xf32>
    %13 = vector.broadcast %12 : vector<1x64xf32> to vector<2x64xf32>
    %14 = arith.addf %11, %13 : vector<2x64xf32>
    %cst_11 = arith.constant 0.000000e+00 : f32
    %15 = vector.broadcast %cst_11 : f32 to vector<2x64xf32>
    %16 = arith.maximumf %14, %15 : vector<2x64xf32>
    %17 = arith.truncf %16 : vector<2x64xf32> to vector<2x64xbf16>
    %c0_12 = arith.constant 0 : index
    %c0_13 = arith.constant 0 : index
    %18 = vector.load %arg5[%c0_12, %c0_13] : memref<64x32xbf16, #tpu.memory_space<vmem>>, vector<64x32xbf16>
    %cst_14 = arith.constant dense<0.000000e+00> : vector<2x32xf32>
    %19 = tpu.matmul %17, %18, %cst_14 {dimension_numbers = #tpu.dot_dimension_numbers<[1], [0], [0], [1], [0, 0, 1, 1], [], []>} : vector<2x64xbf16>, vector<64x32xbf16>, vector<2x32xf32> -> vector<2x32xf32>
    %c0_15 = arith.constant 0 : index
    %c0_16 = arith.constant 0 : index
    %20 = vector.load %arg6[%c0_15, %c0_16] : memref<1x32xf32, #tpu.memory_space<vmem>>, vector<1x32xf32>
    %21 = vector.broadcast %20 : vector<1x32xf32> to vector<2x32xf32>
    %22 = arith.addf %19, %21 : vector<2x32xf32>
    %cst_17 = arith.constant 0.000000e+00 : f32
    %23 = vector.broadcast %cst_17 : f32 to vector<2x32xf32>
    %24 = arith.maximumf %22, %23 : vector<2x32xf32>
    %25 = arith.truncf %24 : vector<2x32xf32> to vector<2x32xbf16>
    %c0_18 = arith.constant 0 : index
    %c0_19 = arith.constant 0 : index
    %26 = vector.load %arg7[%c0_18, %c0_19] : memref<32x1xbf16, #tpu.memory_space<vmem>>, vector<32x1xbf16>
    %cst_20 = arith.constant dense<0.000000e+00> : vector<2x1xf32>
    %27 = tpu.matmul %25, %26, %cst_20 {dimension_numbers = #tpu.dot_dimension_numbers<[1], [0], [0], [1], [0, 0, 1, 1], [], []>} : vector<2x32xbf16>, vector<32x1xbf16>, vector<2x1xf32> -> vector<2x1xf32>
    %c0_21 = arith.constant 0 : index
    %c0_22 = arith.constant 0 : index
    %28 = vector.load %arg8[%c0_21, %c0_22] : memref<1x1xf32, #tpu.memory_space<vmem>>, vector<1x1xf32>
    %29 = vector.broadcast %28 : vector<1x1xf32> to vector<2x1xf32>
    %30 = arith.addf %27, %29 : vector<2x1xf32>
    %c0_23 = arith.constant 0 : index
    %c0_24 = arith.constant 0 : index
    %31 = vector.load %arg9[%c0_23, %c0_24] : memref<2x1xf32, #tpu.memory_space<vmem>>, vector<2x1xf32>
    tpu.vector_store %arg9[%c0_23, %c0_24], %30 {strides = array<i32>} : memref<2x1xf32, #tpu.memory_space<vmem>>, vector<2x1xf32>,
    return
  }
}

</mosaic_0001>

<llo_original>
// kernel: forward.8
$region0: #{forward.8}
  #allocation0 [shape = 'u32[]', space=smem, size = 0x4, offset = 0x4, fixed_abs, tag = 'smem constant byte address 0x4 - core index']
  #allocation1 [shape = 'u32[144,128]{1,0:T(1,128)}', space=vmem, size = 0x12000, scoped, tag = 'internal scratch']
  %s0 = inlined_call_operand.vmem [shape: f32[64,8], index: 0, kind: input, shape index: {}]
  %s1 = inlined_call_operand.vmem [shape: bf16[8,32], index: 1, kind: input, shape index: {}]
  %s2 = inlined_call_operand.vmem [shape: f32[1,32], index: 2, kind: input, shape index: {}]
  %s3 = inlined_call_operand.vmem [shape: f32[64,32], index: 3, kind: output, shape index: {}]
  %s4 = sld [smem:[#allocation0]]
  $region22: #{forward.8} parent=0
    _
  %s6 = ssub.s32 1, %s4
  %s7 = scalar_select 0, %s6, %s4
  // Predicated region
  $region2: #{forward.8} parent=0 // pred_check
    _
  $region3: #{forward.8} parent=0 // pred_check_branch
    %9 = sbr.rel (0) target = $region5
  $region4: #{forward.8} parent=0 // pred_region
    _
  $region5: #{forward.8} parent=0 // pred_fallthru
    _
  // Predicated region
  $region6: #{forward.8} parent=0 // pred_check
    _
  $region7: #{forward.8} parent=0 // pred_check_branch
    %11 = sbr.rel (0) target = $region9
  $region8: #{forward.8} parent=0 // pred_region
    _
  $region9: #{forward.8} parent=0 // pred_fallthru
    _
  // Predicated region
  $region10: #{forward.8} parent=0 // pred_check
    _
  $region11: #{forward.8} parent=0 // pred_check_branch
    %13 = sbr.rel (0) target = $region13
  $region12: #{forward.8} parent=0 // pred_region
    _
  $region13: #{forward.8} parent=0 // pred_fallthru
    _
  %v15 = vld [vmem:[%s0] sm:$0xff]
  %v16 = vld [vmem:[%s0 + $0x8] sm:$0xff]
  %v17 = vld [vmem:[%s0 + $0x10] sm:$0xff]
  %v18 = vld [vmem:[%s0 + $0x18] sm:$0xff]
  %v19 = vld [vmem:[%s0 + $0x20] sm:$0xff]
  %v20 = vld [vmem:[%s0 + $0x28] sm:$0xff]
  %v21 = vld [vmem:[%s0 + $0x30] sm:$0xff]
  %v22 = vld [vmem:[%s0 + $0x38] sm:$0xff]
  %v23 = vpack.c.bf16 %v16, %v15
  %v24 = vpack.c.bf16 %v18, %v17
  %v25 = vpack.c.bf16 %v20, %v19
  %v26 = vpack.c.bf16 %v22, %v21
  %v27 = vld [vmem:[%s1] sm:$0xf]
  %v28 = vld [vmem:[%s2] sm:$0x1]
  %v30 = vlaneseq
  %v31 = vshrl.u32 %v30, 7
  %v32 = vsub.s32 0, %v31
  %v33 = vrot.slane %v28, %v32
  %vm35 = vcmask 64512
  %v37 = vsel %vm35, %v23, 0
  %v40 = vsel %vm35, %v24, 0
  %v43 = vsel %vm35, %v25, 0
  %v46 = vsel %vm35, %v26, 0
  %vm48 = vcmask 1043456
  %v50 = vsel %vm48, %v27, 0
  %52 = vmatprep.subr.bf16.mxu0 0
  %53 = vmatpush1.bf16.msra.mxu0 0
  %54 = vmatprep.subr.bf16.mxu0 0
  %55 = vmatpush1.bf16.msra.mxu0 0
  %56 = vmatprep.subr.bf16.mxu0 0
  %57 = vmatpush1.bf16.msra.mxu0 0
  %58 = vmatprep.subr.bf16.mxu0 0
  %59 = vmatpush1.bf16.msra.mxu0 0
  %60 = vmatprep.subr.bf16.mxu0 0
  %61 = vmatpush1.bf16.msra.mxu0 0
  %62 = vmatprep.subr.bf16.mxu0 0
  %63 = vmatpush1.bf16.msra.mxu0 0
  %64 = vmatprep.subr.bf16.mxu0 0
  %65 = vmatpush1.bf16.msra.mxu0 0
  %66 = vmatprep.subr.bf16.mxu0 0
  %67 = vmatpush1.bf16.msra.mxu0 %v50
  %68 = vmatprep.subr.bf16.mxu0 0
  %69 = vmatpush2.bf16.msra.mxu0 0
  %70 = vmatprep.subr.bf16.mxu0 0
  %71 = vmatpush2.bf16.msra.mxu0 0
  %72 = vmatprep.subr.bf16.mxu0 0
  %73 = vmatpush2.bf16.msra.mxu0 0
  %74 = vmatprep.subr.bf16.mxu0 0
  %75 = vmatpush2.bf16.msra.mxu0 0
  %76 = vmatprep.subr.bf16.mxu0 0
  %77 = vmatpush2.bf16.msra.mxu0 0
  %78 = vmatprep.subr.bf16.mxu0 0
  %79 = vmatpush2.bf16.msra.mxu0 0
  %80 = vmatprep.subr.bf16.mxu0 0
  %81 = vmatpush2.bf16.msra.mxu0 0
  %82 = vmatprep.subr.bf16.mxu0 0
  %83 = vmatpush2.bf16.msra.mxu0 0
  %84 = vmatprep.mubr.bf16.mxu0 0
  %85 = vmatmul.mubr.bf16.gmra.mxu0 %v37
  %v86 = vpop.f32.mrf.mxu0
  %v87 = vadd.f32 %v33, %v86
  %v88 = vpop.f32.mrf.mxu0
  %v89 = vpop.f32.mrf.mxu0
  %v90 = vadd.f32 %v33, %v89
  %v91 = vpop.f32.mrf.mxu0
  %92 = vmatprep.mubr.bf16.mxu0 0
  %93 = vmatmul.mubr.bf16.gmra.mxu0 %v40
  %v94 = vpop.f32.mrf.mxu0
  %v95 = vadd.f32 %v33, %v94
  %v96 = vpop.f32.mrf.mxu0
  %v97 = vpop.f32.mrf.mxu0
  %v98 = vadd.f32 %v33, %v97
  %v99 = vpop.f32.mrf.mxu0
  %100 = vmatprep.mubr.bf16.mxu0 0
  %101 = vmatmul.mubr.bf16.gmra.mxu0 %v43
  %v102 = vpop.f32.mrf.mxu0
  %v103 = vadd.f32 %v33, %v102
  %v104 = vpop.f32.mrf.mxu0
  %v105 = vpop.f32.mrf.mxu0
  %v106 = vadd.f32 %v33, %v105
  %v107 = vpop.f32.mrf.mxu0
  %108 = vmatprep.mubr.bf16.mxu0 0
  %109 = vmatmul.mubr.bf16.gmra.mxu0 %v46
  %v110 = vpop.f32.mrf.mxu0
  %v111 = vadd.f32 %v33, %v110
  %v112 = vpop.f32.mrf.mxu0
  %v113 = vpop.f32.mrf.mxu0
  %v114 = vadd.f32 %v33, %v113
  %v115 = vpop.f32.mrf.mxu0
  %116 = vdwg.mxu0
  %v117 = vmax.f32 %v87, 0.0
  %v118 = vmax.f32 %v90, 0.0
  %v119 = vmax.f32 %v95, 0.0
  %v120 = vmax.f32 %v98, 0.0
  %v121 = vmax.f32 %v103, 0.0
  %v122 = vmax.f32 %v106, 0.0
  %v123 = vmax.f32 %v111, 0.0
  %v124 = vmax.f32 %v114, 0.0
  %vm125 = vcmask 261120
  %126 = vst.msk [vmem:[%s3] sm:$0xff] %vm125, %v117
  %127 = vst.msk [vmem:[%s3 + $0x8] sm:$0xff] %vm125, %v118
  %128 = vst.msk [vmem:[%s3 + $0x10] sm:$0xff] %vm125, %v119
  %129 = vst.msk [vmem:[%s3 + $0x18] sm:$0xff] %vm125, %v120
  %130 = vst.msk [vmem:[%s3 + $0x20] sm:$0xff] %vm125, %v121
  %131 = vst.msk [vmem:[%s3 + $0x28] sm:$0xff] %vm125, %v122
  %132 = vst.msk [vmem:[%s3 + $0x30] sm:$0xff] %vm125, %v123
  %133 = vst.msk [vmem:[%s3 + $0x38] sm:$0xff] %vm125, %v124
  // Predicated region
  $region14: #{forward.8} parent=0 // pred_check
    _
  $region15: #{forward.8} parent=0 // pred_check_branch
    %135 = sbr.rel (0) target = $region17
  $region16: #{forward.8} parent=0 // pred_region
    _
  $region17: #{forward.8} parent=0 // pred_fallthru
    _
  // Predicated region
  $region18: #{forward.8} parent=0 // pred_check
    _
  $region19: #{forward.8} parent=0 // pred_check_branch
    %137 = sbr.rel (0) target = $region21
  $region20: #{forward.8} parent=0 // pred_region
    _
  $region21: #{forward.8} parent=0 // pred_fallthru
    _

// kernel: forward.9
$region0: #{forward.9}
  #allocation0 [shape = 'u32[]', space=smem, size = 0x4, offset = 0x4, fixed_abs, tag = 'smem constant byte address 0x4 - core index']
  #allocation1 [shape = 'u32[144,128]{1,0:T(1,128)}', space=vmem, size = 0x12000, scoped, tag = 'internal scratch']
  %s0 = inlined_call_operand.vmem [shape: f32[64,32], index: 0, kind: input, shape index: {}]
  %s1 = inlined_call_operand.vmem [shape: bf16[32,256], index: 1, kind: input, shape index: {}]
  %s2 = inlined_call_operand.vmem [shape: f32[1,256], index: 2, kind: input, shape index: {}]
  %s3 = inlined_call_operand.vmem [shape: bf16[64,256], index: 3, kind: output, shape index: {}]
  %s4 = sld [smem:[#allocation0]]
  $region22: #{forward.9} parent=0
    _
  %s6 = ssub.s32 1, %s4
  %s7 = scalar_select 0, %s6, %s4
  // Predicated region
  $region2: #{forward.9} parent=0 // pred_check
    _
  $region3: #{forward.9} parent=0 // pred_check_branch
    %9 = sbr.rel (0) target = $region5
  $region4: #{forward.9} parent=0 // pred_region
    _
  $region5: #{forward.9} parent=0 // pred_fallthru
    _
  // Predicated region
  $region6: #{forward.9} parent=0 // pred_check
    _
  $region7: #{forward.9} parent=0 // pred_check_branch
    %11 = sbr.rel (0) target = $region9
  $region8: #{forward.9} parent=0 // pred_region
    _
  $region9: #{forward.9} parent=0 // pred_fallthru
    _
  // Predicated region
  $region10: #{forward.9} parent=0 // pred_check
    _
  $region11: #{forward.9} parent=0 // pred_check_branch
    %13 = sbr.rel (0) target = $region13
  $region12: #{forward.9} parent=0 // pred_region
    _
  $region13: #{forward.9} parent=0 // pred_fallthru
    _
  %v15 = vld [vmem:[%s0] sm:$0xff]
  %v16 = vld [vmem:[%s0 + $0x8] sm:$0xff]
  %v17 = vld [vmem:[%s0 + $0x10] sm:$0xff]
  %v18 = vld [vmem:[%s0 + $0x18] sm:$0xff]
  %v19 = vld [vmem:[%s0 + $0x20] sm:$0xff]
  %v20 = vld [vmem:[%s0 + $0x28] sm:$0xff]
  %v21 = vld [vmem:[%s0 + $0x30] sm:$0xff]
  %v22 = vld [vmem:[%s0 + $0x38] sm:$0xff]
  %v23 = vpack.c.bf16 %v16, %v15
  %v24 = vpack.c.bf16 %v18, %v17
  %v25 = vpack.c.bf16 %v20, %v19
  %v26 = vpack.c.bf16 %v22, %v21
  %v27 = vld [vmem:[%s1] sm:$0xff]
  %v28 = vld [vmem:[%s1 + $0x8] sm:$0xff]
  %v29 = vld [vmem:[%s1 + $0x10] sm:$0xff]
  %v30 = vld [vmem:[%s1 + $0x18] sm:$0xff]
  %v31 = vld [vmem:[%s2] sm:$0x3]
  %v33 = vlaneseq
  %v34 = vshrl.u32 %v33, 7
  %v35 = vsub.s32 0, %v34
  %v36 = vrot.slane %v31, %v35
  %v37 = vlaneseq
  %v38 = vshrl.u32 %v37, 7
  %v39 = vsub.s32 1, %v38
  %v40 = vrot.slane %v31, %v39
  %v47 = vunpack.c.l.b16 %v27
  %v48 = vunpack.c.h.b16 %v27
  %v49 = vunpack.c.l.b16 %v28
  %v50 = vunpack.c.h.b16 %v28
  %v51 = vunpack.c.l.b16 %v29
  %v52 = vunpack.c.h.b16 %v29
  %v53 = vunpack.c.l.b16 %v30
  %v54 = vunpack.c.h.b16 %v30
  %v55 = vpack.c.b16 %v49, %v47
  %v56 = vpack.c.b16 %v50, %v48
  %v57 = vpack.c.b16 %v53, %v51
  %v58 = vpack.c.b16 %v54, %v52
  %vm63 = vcmask 261120
  %v65 = vsel %vm63, %v23, 0
  %v68 = vsel %vm63, %v24, 0
  %v71 = vsel %vm63, %v25, 0
  %v74 = vsel %vm63, %v26, 0
  %76 = vmatprep.subr.bf16.mxu0 0
  %77 = vmatpush1.bf16.msra.mxu0 0
  %78 = vmatprep.subr.bf16.mxu0 0
  %79 = vmatpush1.bf16.msra.mxu0 0
  %80 = vmatprep.subr.bf16.mxu0 0
  %81 = vmatpush1.bf16.msra.mxu0 0
  %82 = vmatprep.subr.bf16.mxu0 0
  %83 = vmatpush1.bf16.msra.mxu0 0
  %84 = vmatprep.subr.bf16.mxu0 0
  %85 = vmatpush1.bf16.msra.mxu0 0
  %86 = vmatprep.subr.bf16.mxu0 0
  %87 = vmatpush1.bf16.msra.mxu0 0
  %88 = vmatprep.subr.bf16.mxu0 %v58
  %89 = vmatpush1.bf16.msra.mxu0 %v57
  %90 = vmatprep.subr.bf16.mxu0 %v56
  %91 = vmatpush1.bf16.msra.mxu0 %v55
  %92 = vmatprep.subr.bf16.mxu0 0
  %93 = vmatpush2.bf16.msra.mxu0 0
  %94 = vmatprep.subr.bf16.mxu0 0
  %95 = vmatpush2.bf16.msra.mxu0 0
  %96 = vmatprep.subr.bf16.mxu0 0
  %97 = vmatpush2.bf16.msra.mxu0 0
  %98 = vmatprep.subr.bf16.mxu0 0
  %99 = vmatpush2.bf16.msra.mxu0 0
  %100 = vmatprep.subr.bf16.mxu0 0
  %101 = vmatpush2.bf16.msra.mxu0 0
  %102 = vmatprep.subr.bf16.mxu0 0
  %103 = vmatpush2.bf16.msra.mxu0 0
  %104 = vmatprep.subr.bf16.mxu0 0
  %105 = vmatpush2.bf16.msra.mxu0 0
  %106 = vmatprep.subr.bf16.mxu0 0
  %107 = vmatpush2.bf16.msra.mxu0 0
  %108 = vmatprep.mubr.bf16.mxu0 0
  %109 = vmatmul.mubr.bf16.gmra.mxu0 %v65
  %v110 = vpop.f32.mrf.mxu0
  %v111 = vadd.f32 %v36, %v110
  %v112 = vpop.f32.mrf.mxu0
  %v113 = vadd.f32 %v40, %v112
  %v114 = vpop.f32.mrf.mxu0
  %v115 = vadd.f32 %v36, %v114
  %v116 = vpop.f32.mrf.mxu0
  %v117 = vadd.f32 %v40, %v116
  %118 = vmatprep.mubr.bf16.mxu0 0
  %119 = vmatmul.mubr.bf16.gmra.mxu0 %v68
  %v120 = vpop.f32.mrf.mxu0
  %v121 = vadd.f32 %v36, %v120
  %v122 = vpop.f32.mrf.mxu0
  %v123 = vadd.f32 %v40, %v122
  %v124 = vpop.f32.mrf.mxu0
  %v125 = vadd.f32 %v36, %v124
  %v126 = vpop.f32.mrf.mxu0
  %v127 = vadd.f32 %v40, %v126
  %128 = vmatprep.mubr.bf16.mxu0 0
  %129 = vmatmul.mubr.bf16.gmra.mxu0 %v71
  %v130 = vpop.f32.mrf.mxu0
  %v131 = vadd.f32 %v36, %v130
  %v132 = vpop.f32.mrf.mxu0
  %v133 = vadd.f32 %v40, %v132
  %v134 = vpop.f32.mrf.mxu0
  %v135 = vadd.f32 %v36, %v134
  %v136 = vpop.f32.mrf.mxu0
  %v137 = vadd.f32 %v40, %v136
  %138 = vmatprep.mubr.bf16.mxu0 0
  %139 = vmatmul.mubr.bf16.gmra.mxu0 %v74
  %v140 = vpop.f32.mrf.mxu0
  %v141 = vadd.f32 %v36, %v140
  %v142 = vpop.f32.mrf.mxu0
  %v143 = vadd.f32 %v40, %v142
  %v144 = vpop.f32.mrf.mxu0
  %v145 = vadd.f32 %v36, %v144
  %v146 = vpop.f32.mrf.mxu0
  %v147 = vadd.f32 %v40, %v146
  %148 = vdwg.mxu0
  %v149 = vpack.c.bf16 %v115, %v111
  %v150 = vpack.c.bf16 %v117, %v113
  %v151 = vpack.c.bf16 %v125, %v121
  %v152 = vpack.c.bf16 %v127, %v123
  %v153 = vpack.c.bf16 %v135, %v131
  %v154 = vpack.c.bf16 %v137, %v133
  %v155 = vpack.c.bf16 %v145, %v141
  %v156 = vpack.c.bf16 %v147, %v143
  %v165 = vunpack.c.l.b16 %v149
  %v166 = vunpack.c.l.b16 %v150
  %v167 = vunpack.c.h.b16 %v149
  %v168 = vunpack.c.h.b16 %v150
  %v169 = vunpack.c.l.b16 %v151
  %v170 = vunpack.c.l.b16 %v152
  %v171 = vunpack.c.h.b16 %v151
  %v172 = vunpack.c.h.b16 %v152
  %v173 = vunpack.c.l.b16 %v153
  %v174 = vunpack.c.l.b16 %v154
  %v175 = vunpack.c.h.b16 %v153
  %v176 = vunpack.c.h.b16 %v154
  %v177 = vunpack.c.l.b16 %v155
  %v178 = vunpack.c.l.b16 %v156
  %v179 = vunpack.c.h.b16 %v155
  %v180 = vunpack.c.h.b16 %v156
  %v181 = vpack.c.b16 %v166, %v165
  %v182 = vpack.c.b16 %v168, %v167
  %v183 = vpack.c.b16 %v170, %v169
  %v184 = vpack.c.b16 %v172, %v171
  %v185 = vpack.c.b16 %v174, %v173
  %v186 = vpack.c.b16 %v176, %v175
  %v187 = vpack.c.b16 %v178, %v177
  %v188 = vpack.c.b16 %v180, %v179
  %197 = vst [vmem:[%s3] sm:$0xff] %v181
  %198 = vst [vmem:[%s3 + $0x8] sm:$0xff] %v182
  %199 = vst [vmem:[%s3 + $0x10] sm:$0xff] %v183
  %200 = vst [vmem:[%s3 + $0x18] sm:$0xff] %v184
  %201 = vst [vmem:[%s3 + $0x20] sm:$0xff] %v185
  %202 = vst [vmem:[%s3 + $0x28] sm:$0xff] %v186
  %203 = vst [vmem:[%s3 + $0x30] sm:$0xff] %v187
  %204 = vst [vmem:[%s3 + $0x38] sm:$0xff] %v188
  // Predicated region
  $region14: #{forward.9} parent=0 // pred_check
    _
  $region15: #{forward.9} parent=0 // pred_check_branch
    %206 = sbr.rel (0) target = $region17
  $region16: #{forward.9} parent=0 // pred_region
    _
  $region17: #{forward.9} parent=0 // pred_fallthru
    _
  // Predicated region
  $region18: #{forward.9} parent=0 // pred_check
    _
  $region19: #{forward.9} parent=0 // pred_check_branch
    %208 = sbr.rel (0) target = $region21
  $region20: #{forward.9} parent=0 // pred_region
    _
  $region21: #{forward.9} parent=0 // pred_fallthru
    _

// kernel: forward.12
$region0: #{forward.12}
  #allocation0 [shape = 'u32[]', space=smem, size = 0x4, offset = 0x4, fixed_abs, tag = 'smem constant byte address 0x4 - core index']
  #allocation1 [shape = 'u32[144,128]{1,0:T(1,128)}', space=vmem, size = 0x12000, scoped, tag = 'internal scratch']
  %s0 = inlined_call_operand.vmem [shape: f32[64,64], index: 0, kind: input, shape index: {}]
  %s1 = inlined_call_operand.vmem [shape: bf16[64,256], index: 1, kind: input, shape index: {}]
  %s2 = inlined_call_operand.vmem [shape: f32[1,256], index: 2, kind: input, shape index: {}]
  %s3 = inlined_call_operand.vmem [shape: bf16[64,256], index: 3, kind: output, shape index: {}]
  %s4 = sld [smem:[#allocation0]]
  $region22: #{forward.12} parent=0
    _
  %s6 = ssub.s32 1, %s4
  %s7 = scalar_select 0, %s6, %s4
  // Predicated region
  $region2: #{forward.12} parent=0 // pred_check
    _
  $region3: #{forward.12} parent=0 // pred_check_branch
    %9 = sbr.rel (0) target = $region5
  $region4: #{forward.12} parent=0 // pred_region
    _
  $region5: #{forward.12} parent=0 // pred_fallthru
    _
  // Predicated region
  $region6: #{forward.12} parent=0 // pred_check
    _
  $region7: #{forward.12} parent=0 // pred_check_branch
    %11 = sbr.rel (0) target = $region9
  $region8: #{forward.12} parent=0 // pred_region
    _
  $region9: #{forward.12} parent=0 // pred_fallthru
    _
  // Predicated region
  $region10: #{forward.12} parent=0 // pred_check
    _
  $region11: #{forward.12} parent=0 // pred_check_branch
    %13 = sbr.rel (0) target = $region13
  $region12: #{forward.12} parent=0 // pred_region
    _
  $region13: #{forward.12} parent=0 // pred_fallthru
    _
  %v15 = vld [vmem:[%s0] sm:$0xff]
  %v16 = vld [vmem:[%s0 + $0x8] sm:$0xff]
  %v17 = vld [vmem:[%s0 + $0x10] sm:$0xff]
  %v18 = vld [vmem:[%s0 + $0x18] sm:$0xff]
  %v19 = vld [vmem:[%s0 + $0x20] sm:$0xff]
  %v20 = vld [vmem:[%s0 + $0x28] sm:$0xff]
  %v21 = vld [vmem:[%s0 + $0x30] sm:$0xff]
  %v22 = vld [vmem:[%s0 + $0x38] sm:$0xff]
  %v23 = vpack.c.bf16 %v16, %v15
  %v24 = vpack.c.bf16 %v18, %v17
  %v25 = vpack.c.bf16 %v20, %v19
  %v26 = vpack.c.bf16 %v22, %v21
  %v27 = vld [vmem:[%s1] sm:$0xff]
  %v28 = vld [vmem:[%s1 + $0x8] sm:$0xff]
  %v29 = vld [vmem:[%s1 + $0x10] sm:$0xff]
  %v30 = vld [vmem:[%s1 + $0x18] sm:$0xff]
  %v31 = vld [vmem:[%s1 + $0x20] sm:$0xff]
  %v32 = vld [vmem:[%s1 + $0x28] sm:$0xff]
  %v33 = vld [vmem:[%s1 + $0x30] sm:$0xff]
  %v34 = vld [vmem:[%s1 + $0x38] sm:$0xff]
  %v35 = vld [vmem:[%s2] sm:$0x3]
  %v37 = vlaneseq
  %v38 = vshrl.u32 %v37, 7
  %v39 = vsub.s32 0, %v38
  %v40 = vrot.slane %v35, %v39
  %v41 = vlaneseq
  %v42 = vshrl.u32 %v41, 7
  %v43 = vsub.s32 1, %v42
  %v44 = vrot.slane %v35, %v43
  %v55 = vunpack.c.l.b16 %v27
  %v56 = vunpack.c.h.b16 %v27
  %v57 = vunpack.c.l.b16 %v28
  %v58 = vunpack.c.h.b16 %v28
  %v59 = vunpack.c.l.b16 %v29
  %v60 = vunpack.c.h.b16 %v29
  %v61 = vunpack.c.l.b16 %v30
  %v62 = vunpack.c.h.b16 %v30
  %v63 = vunpack.c.l.b16 %v31
  %v64 = vunpack.c.h.b16 %v31
  %v65 = vunpack.c.l.b16 %v32
  %v66 = vunpack.c.h.b16 %v32
  %v67 = vunpack.c.l.b16 %v33
  %v68 = vunpack.c.h.b16 %v33
  %v69 = vunpack.c.l.b16 %v34
  %v70 = vunpack.c.h.b16 %v34
  %v71 = vpack.c.b16 %v57, %v55
  %v72 = vpack.c.b16 %v58, %v56
  %v73 = vpack.c.b16 %v61, %v59
  %v74 = vpack.c.b16 %v62, %v60
  %v75 = vpack.c.b16 %v65, %v63
  %v76 = vpack.c.b16 %v66, %v64
  %v77 = vpack.c.b16 %v69, %v67
  %v78 = vpack.c.b16 %v70, %v68
  %vm87 = vcmask 523264
  %v89 = vsel %vm87, %v23, 0
  %v92 = vsel %vm87, %v24, 0
  %v95 = vsel %vm87, %v25, 0
  %v98 = vsel %vm87, %v26, 0
  %100 = vmatprep.subr.bf16.mxu0 0
  %101 = vmatpush1.bf16.msra.mxu0 0
  %102 = vmatprep.subr.bf16.mxu0 0
  %103 = vmatpush1.bf16.msra.mxu0 0
  %104 = vmatprep.subr.bf16.mxu0 0
  %105 = vmatpush1.bf16.msra.mxu0 0
  %106 = vmatprep.subr.bf16.mxu0 0
  %107 = vmatpush1.bf16.msra.mxu0 0
  %108 = vmatprep.subr.bf16.mxu0 %v78
  %109 = vmatpush1.bf16.msra.mxu0 %v77
  %110 = vmatprep.subr.bf16.mxu0 %v76
  %111 = vmatpush1.bf16.msra.mxu0 %v75
  %112 = vmatprep.subr.bf16.mxu0 %v74
  %113 = vmatpush1.bf16.msra.mxu0 %v73
  %114 = vmatprep.subr.bf16.mxu0 %v72
  %115 = vmatpush1.bf16.msra.mxu0 %v71
  %116 = vmatprep.subr.bf16.mxu0 0
  %117 = vmatpush2.bf16.msra.mxu0 0
  %118 = vmatprep.subr.bf16.mxu0 0
  %119 = vmatpush2.bf16.msra.mxu0 0
  %120 = vmatprep.subr.bf16.mxu0 0
  %121 = vmatpush2.bf16.msra.mxu0 0
  %122 = vmatprep.subr.bf16.mxu0 0
  %123 = vmatpush2.bf16.msra.mxu0 0
  %124 = vmatprep.subr.bf16.mxu0 0
  %125 = vmatpush2.bf16.msra.mxu0 0
  %126 = vmatprep.subr.bf16.mxu0 0
  %127 = vmatpush2.bf16.msra.mxu0 0
  %128 = vmatprep.subr.bf16.mxu0 0
  %129 = vmatpush2.bf16.msra.mxu0 0
  %130 = vmatprep.subr.bf16.mxu0 0
  %131 = vmatpush2.bf16.msra.mxu0 0
  %132 = vmatprep.mubr.bf16.mxu0 0
  %133 = vmatmul.mubr.bf16.gmra.mxu0 %v89
  %v134 = vpop.f32.mrf.mxu0
  %v135 = vadd.f32 %v40, %v134
  %v136 = vpop.f32.mrf.mxu0
  %v137 = vadd.f32 %v44, %v136
  %v138 = vpop.f32.mrf.mxu0
  %v139 = vadd.f32 %v40, %v138
  %v140 = vpop.f32.mrf.mxu0
  %v141 = vadd.f32 %v44, %v140
  %142 = vmatprep.mubr.bf16.mxu0 0
  %143 = vmatmul.mubr.bf16.gmra.mxu0 %v92
  %v144 = vpop.f32.mrf.mxu0
  %v145 = vadd.f32 %v40, %v144
  %v146 = vpop.f32.mrf.mxu0
  %v147 = vadd.f32 %v44, %v146
  %v148 = vpop.f32.mrf.mxu0
  %v149 = vadd.f32 %v40, %v148
  %v150 = vpop.f32.mrf.mxu0
  %v151 = vadd.f32 %v44, %v150
  %152 = vmatprep.mubr.bf16.mxu0 0
  %153 = vmatmul.mubr.bf16.gmra.mxu0 %v95
  %v154 = vpop.f32.mrf.mxu0
  %v155 = vadd.f32 %v40, %v154
  %v156 = vpop.f32.mrf.mxu0
  %v157 = vadd.f32 %v44, %v156
  %v158 = vpop.f32.mrf.mxu0
  %v159 = vadd.f32 %v40, %v158
  %v160 = vpop.f32.mrf.mxu0
  %v161 = vadd.f32 %v44, %v160
  %162 = vmatprep.mubr.bf16.mxu0 0
  %163 = vmatmul.mubr.bf16.gmra.mxu0 %v98
  %v164 = vpop.f32.mrf.mxu0
  %v165 = vadd.f32 %v40, %v164
  %v166 = vpop.f32.mrf.mxu0
  %v167 = vadd.f32 %v44, %v166
  %v168 = vpop.f32.mrf.mxu0
  %v169 = vadd.f32 %v40, %v168
  %v170 = vpop.f32.mrf.mxu0
  %v171 = vadd.f32 %v44, %v170
  %172 = vdwg.mxu0
  %v173 = vpack.c.bf16 %v139, %v135
  %v174 = vpack.c.bf16 %v141, %v137
  %v175 = vpack.c.bf16 %v149, %v145
  %v176 = vpack.c.bf16 %v151, %v147
  %v177 = vpack.c.bf16 %v159, %v155
  %v178 = vpack.c.bf16 %v161, %v157
  %v179 = vpack.c.bf16 %v169, %v165
  %v180 = vpack.c.bf16 %v171, %v167
  %v189 = vunpack.c.l.b16 %v173
  %v190 = vunpack.c.l.b16 %v174
  %v191 = vunpack.c.h.b16 %v173
  %v192 = vunpack.c.h.b16 %v174
  %v193 = vunpack.c.l.b16 %v175
  %v194 = vunpack.c.l.b16 %v176
  %v195 = vunpack.c.h.b16 %v175
  %v196 = vunpack.c.h.b16 %v176
  %v197 = vunpack.c.l.b16 %v177
  %v198 = vunpack.c.l.b16 %v178
  %v199 = vunpack.c.h.b16 %v177
  %v200 = vunpack.c.h.b16 %v178
  %v201 = vunpack.c.l.b16 %v179
  %v202 = vunpack.c.l.b16 %v180
  %v203 = vunpack.c.h.b16 %v179
  %v204 = vunpack.c.h.b16 %v180
  %v205 = vpack.c.b16 %v190, %v189
  %v206 = vpack.c.b16 %v192, %v191
  %v207 = vpack.c.b16 %v194, %v193
  %v208 = vpack.c.b16 %v196, %v195
  %v209 = vpack.c.b16 %v198, %v197
  %v210 = vpack.c.b16 %v200, %v199
  %v211 = vpack.c.b16 %v202, %v201
  %v212 = vpack.c.b16 %v204, %v203
  %221 = vst [vmem:[%s3] sm:$0xff] %v205
  %222 = vst [vmem:[%s3 + $0x8] sm:$0xff] %v206
  %223 = vst [vmem:[%s3 + $0x10] sm:$0xff] %v207
  %224 = vst [vmem:[%s3 + $0x18] sm:$0xff] %v208
  %225 = vst [vmem:[%s3 + $0x20] sm:$0xff] %v209
  %226 = vst [vmem:[%s3 + $0x28] sm:$0xff] %v210
  %227 = vst [vmem:[%s3 + $0x30] sm:$0xff] %v211
  %228 = vst [vmem:[%s3 + $0x38] sm:$0xff] %v212
  // Predicated region
  $region14: #{forward.12} parent=0 // pred_check
    _
  $region15: #{forward.12} parent=0 // pred_check_branch
    %230 = sbr.rel (0) target = $region17
  $region16: #{forward.12} parent=0 // pred_region
    _
  $region17: #{forward.12} parent=0 // pred_fallthru
    _
  // Predicated region
  $region18: #{forward.12} parent=0 // pred_check
    _
  $region19: #{forward.12} parent=0 // pred_check_branch
    %232 = sbr.rel (0) target = $region21
  $region20: #{forward.12} parent=0 // pred_region
    _
  $region21: #{forward.12} parent=0 // pred_fallthru
    _

// kernel: forward.14
$region0: #{forward.14}
  #allocation0 [shape = 'u32[]', space=smem, size = 0x4, offset = 0x4, fixed_abs, tag = 'smem constant byte address 0x4 - core index']
  #allocation1 [shape = 'u32[144,128]{1,0:T(1,128)}', space=vmem, size = 0x12000, scoped, tag = 'internal scratch']
  %s0 = inlined_call_operand.vmem [shape: f32[64,64], index: 0, kind: input, shape index: {}]
  %s1 = inlined_call_operand.vmem [shape: f32[64,32], index: 1, kind: input, shape index: {}]
  %s2 = inlined_call_operand.vmem [shape: f32[64,32], index: 2, kind: input, shape index: {}]
  %s3 = inlined_call_operand.vmem [shape: f32[1,64], index: 3, kind: input, shape index: {}]
  %s4 = inlined_call_operand.vmem [shape: f32[1,64], index: 4, kind: input, shape index: {}]
  %s5 = inlined_call_operand.vmem [shape: f32[64,64], index: 5, kind: output, shape index: {}]
  %s6 = sld [smem:[#allocation0]]
  $region30: #{forward.14} parent=0
    _
  %s8 = ssub.s32 1, %s6
  %s9 = scalar_select 0, %s8, %s6
  // Predicated region
  $region2: #{forward.14} parent=0 // pred_check
    _
  $region3: #{forward.14} parent=0 // pred_check_branch
    %11 = sbr.rel (0) target = $region5
  $region4: #{forward.14} parent=0 // pred_region
    _
  $region5: #{forward.14} parent=0 // pred_fallthru
    _
  // Predicated region
  $region6: #{forward.14} parent=0 // pred_check
    _
  $region7: #{forward.14} parent=0 // pred_check_branch
    %13 = sbr.rel (0) target = $region9
  $region8: #{forward.14} parent=0 // pred_region
    _
  $region9: #{forward.14} parent=0 // pred_fallthru
    _
  // Predicated region
  $region10: #{forward.14} parent=0 // pred_check
    _
  $region11: #{forward.14} parent=0 // pred_check_branch
    %15 = sbr.rel (0) target = $region13
  $region12: #{forward.14} parent=0 // pred_region
    _
  $region13: #{forward.14} parent=0 // pred_fallthru
    _
  // Predicated region
  $region14: #{forward.14} parent=0 // pred_check
    _
  $region15: #{forward.14} parent=0 // pred_check_branch
    %17 = sbr.rel (0) target = $region17
  $region16: #{forward.14} parent=0 // pred_region
    _
  $region17: #{forward.14} parent=0 // pred_fallthru
    _
  // Predicated region
  $region18: #{forward.14} parent=0 // pred_check
    _
  $region19: #{forward.14} parent=0 // pred_check_branch
    %19 = sbr.rel (0) target = $region21
  $region20: #{forward.14} parent=0 // pred_region
    _
  $region21: #{forward.14} parent=0 // pred_fallthru
    _
  %v20 = vld [vmem:[%s0] sm:$0xff]
  %v21 = vld [vmem:[%s0 + $0x8] sm:$0xff]
  %v22 = vld [vmem:[%s0 + $0x10] sm:$0xff]
  %v23 = vld [vmem:[%s0 + $0x18] sm:$0xff]
  %v24 = vld [vmem:[%s0 + $0x20] sm:$0xff]
  %v25 = vld [vmem:[%s0 + $0x28] sm:$0xff]
  %v26 = vld [vmem:[%s0 + $0x30] sm:$0xff]
  %v27 = vld [vmem:[%s0 + $0x38] sm:$0xff]
  %v28 = vld [vmem:[%s1] sm:$0xff]
  %v29 = vld [vmem:[%s1 + $0x8] sm:$0xff]
  %v30 = vld [vmem:[%s1 + $0x10] sm:$0xff]
  %v31 = vld [vmem:[%s1 + $0x18] sm:$0xff]
  %v32 = vld [vmem:[%s1 + $0x20] sm:$0xff]
  %v33 = vld [vmem:[%s1 + $0x28] sm:$0xff]
  %v34 = vld [vmem:[%s1 + $0x30] sm:$0xff]
  %v35 = vld [vmem:[%s1 + $0x38] sm:$0xff]
  %v36 = vadd.f32 %v20, %v28
  %v37 = vadd.f32 %v21, %v29
  %v38 = vadd.f32 %v22, %v30
  %v39 = vadd.f32 %v23, %v31
  %v40 = vadd.f32 %v24, %v32
  %v41 = vadd.f32 %v25, %v33
  %v42 = vadd.f32 %v26, %v34
  %v43 = vadd.f32 %v27, %v35
  %v44 = vld [vmem:[%s2] sm:$0xff]
  %v45 = vld [vmem:[%s2 + $0x8] sm:$0xff]
  %v46 = vld [vmem:[%s2 + $0x10] sm:$0xff]
  %v47 = vld [vmem:[%s2 + $0x18] sm:$0xff]
  %v48 = vld [vmem:[%s2 + $0x20] sm:$0xff]
  %v49 = vld [vmem:[%s2 + $0x28] sm:$0xff]
  %v50 = vld [vmem:[%s2 + $0x30] sm:$0xff]
  %v51 = vld [vmem:[%s2 + $0x38] sm:$0xff]
  %60 = vrot.lane.b32.xlu0 %v44, 32
  %v61 = vpop.permute.xlu0 %60
  %62 = vrot.lane.b32.xlu0 %v45, 32
  %v63 = vpop.permute.xlu0 %62
  %64 = vrot.lane.b32.xlu0 %v46, 32
  %v65 = vpop.permute.xlu0 %64
  %66 = vrot.lane.b32.xlu0 %v47, 32
  %v67 = vpop.permute.xlu0 %66
  %68 = vrot.lane.b32.xlu0 %v48, 32
  %v69 = vpop.permute.xlu0 %68
  %70 = vrot.lane.b32.xlu0 %v49, 32
  %v71 = vpop.permute.xlu0 %70
  %72 = vrot.lane.b32.xlu0 %v50, 32
  %v73 = vpop.permute.xlu0 %72
  %74 = vrot.lane.b32.xlu0 %v51, 32
  %v75 = vpop.permute.xlu0 %74
  %v84 = vadd.f32 %v20, %v61
  %v85 = vadd.f32 %v21, %v63
  %v86 = vadd.f32 %v22, %v65
  %v87 = vadd.f32 %v23, %v67
  %v88 = vadd.f32 %v24, %v69
  %v89 = vadd.f32 %v25, %v71
  %v90 = vadd.f32 %v26, %v73
  %v91 = vadd.f32 %v27, %v75
  %vm92 = vcmask 261120
  %v93 = vsel %vm92, %v36, 0.0
  %94 = vadd.xlane.f32.xlu0 %v93
  %v95 = vpop.xlane.xlu0 %94
  %v96 = vsel %vm92, %v37, 0.0
  %97 = vadd.xlane.f32.xlu0 %v96
  %v98 = vpop.xlane.xlu0 %97
  %v99 = vsel %vm92, %v38, 0.0
  %100 = vadd.xlane.f32.xlu0 %v99
  %v101 = vpop.xlane.xlu0 %100
  %v102 = vsel %vm92, %v39, 0.0
  %103 = vadd.xlane.f32.xlu0 %v102
  %v104 = vpop.xlane.xlu0 %103
  %v105 = vsel %vm92, %v40, 0.0
  %106 = vadd.xlane.f32.xlu0 %v105
  %v107 = vpop.xlane.xlu0 %106
  %v108 = vsel %vm92, %v41, 0.0
  %109 = vadd.xlane.f32.xlu0 %v108
  %v110 = vpop.xlane.xlu0 %109
  %v111 = vsel %vm92, %v42, 0.0
  %112 = vadd.xlane.f32.xlu0 %v111
  %v113 = vpop.xlane.xlu0 %112
  %v114 = vsel %vm92, %v43, 0.0
  %115 = vadd.xlane.f32.xlu0 %v114
  %v116 = vpop.xlane.xlu0 %115
  %125 = vrot.lane.b32.xlu0 %v84, 96
  %v126 = vpop.permute.xlu0 %125
  %127 = vrot.lane.b32.xlu0 %v85, 96
  %v128 = vpop.permute.xlu0 %127
  %129 = vrot.lane.b32.xlu0 %v86, 96
  %v130 = vpop.permute.xlu0 %129
  %131 = vrot.lane.b32.xlu0 %v87, 96
  %v132 = vpop.permute.xlu0 %131
  %133 = vrot.lane.b32.xlu0 %v88, 96
  %v134 = vpop.permute.xlu0 %133
  %135 = vrot.lane.b32.xlu0 %v89, 96
  %v136 = vpop.permute.xlu0 %135
  %137 = vrot.lane.b32.xlu0 %v90, 96
  %v138 = vpop.permute.xlu0 %137
  %139 = vrot.lane.b32.xlu0 %v91, 96
  %v140 = vpop.permute.xlu0 %139
  %v149 = vsel %vm92, %v126, 0.0
  %150 = vadd.xlane.f32.xlu0 %v149
  %v151 = vpop.xlane.xlu0 %150
  %v152 = vsel %vm92, %v128, 0.0
  %153 = vadd.xlane.f32.xlu0 %v152
  %v154 = vpop.xlane.xlu0 %153
  %v155 = vsel %vm92, %v130, 0.0
  %156 = vadd.xlane.f32.xlu0 %v155
  %v157 = vpop.xlane.xlu0 %156
  %v158 = vsel %vm92, %v132, 0.0
  %159 = vadd.xlane.f32.xlu0 %v158
  %v160 = vpop.xlane.xlu0 %159
  %v161 = vsel %vm92, %v134, 0.0
  %162 = vadd.xlane.f32.xlu0 %v161
  %v163 = vpop.xlane.xlu0 %162
  %v164 = vsel %vm92, %v136, 0.0
  %165 = vadd.xlane.f32.xlu0 %v164
  %v166 = vpop.xlane.xlu0 %165
  %v167 = vsel %vm92, %v138, 0.0
  %168 = vadd.xlane.f32.xlu0 %v167
  %v169 = vpop.xlane.xlu0 %168
  %v170 = vsel %vm92, %v140, 0.0
  %171 = vadd.xlane.f32.xlu0 %v170
  %v172 = vpop.xlane.xlu0 %171
  %v173 = vadd.f32 %v95, %v151
  %v174 = vadd.f32 %v98, %v154
  %v175 = vadd.f32 %v101, %v157
  %v176 = vadd.f32 %v104, %v160
  %v177 = vadd.f32 %v107, %v163
  %v178 = vadd.f32 %v110, %v166
  %v179 = vadd.f32 %v113, %v169
  %v180 = vadd.f32 %v116, %v172
  %v181 = vrcp.pop 64.0
  %v182 = vmul.f32 %v173, %v181
  %v183 = vmul.f32 %v174, %v181
  %v184 = vmul.f32 %v175, %v181
  %v185 = vmul.f32 %v176, %v181
  %v186 = vmul.f32 %v177, %v181
  %v187 = vmul.f32 %v178, %v181
  %v188 = vmul.f32 %v179, %v181
  %v189 = vmul.f32 %v180, %v181
  %v190 = vsub.f32 %v36, %v182
  %v191 = vsub.f32 %v37, %v183
  %v192 = vsub.f32 %v38, %v184
  %v193 = vsub.f32 %v39, %v185
  %v194 = vsub.f32 %v40, %v186
  %v195 = vsub.f32 %v41, %v187
  %v196 = vsub.f32 %v42, %v188
  %v197 = vsub.f32 %v43, %v189
  %v198 = vsub.f32 %v84, %v182
  %v199 = vsub.f32 %v85, %v183
  %v200 = vsub.f32 %v86, %v184
  %v201 = vsub.f32 %v87, %v185
  %v202 = vsub.f32 %v88, %v186
  %v203 = vsub.f32 %v89, %v187
  %v204 = vsub.f32 %v90, %v188
  %v205 = vsub.f32 %v91, %v189
  %v206 = vmul.f32 %v190, %v190
  %v207 = vmul.f32 %v191, %v191
  %v208 = vmul.f32 %v192, %v192
  %v209 = vmul.f32 %v193, %v193
  %v210 = vmul.f32 %v194, %v194
  %v211 = vmul.f32 %v195, %v195
  %v212 = vmul.f32 %v196, %v196
  %v213 = vmul.f32 %v197, %v197
  %v214 = vsel %vm92, %v206, 0.0
  %215 = vadd.xlane.f32.xlu0 %v214
  %v216 = vpop.xlane.xlu0 %215
  %v217 = vsel %vm92, %v207, 0.0
  %218 = vadd.xlane.f32.xlu0 %v217
  %v219 = vpop.xlane.xlu0 %218
  %v220 = vsel %vm92, %v208, 0.0
  %221 = vadd.xlane.f32.xlu0 %v220
  %v222 = vpop.xlane.xlu0 %221
  %v223 = vsel %vm92, %v209, 0.0
  %224 = vadd.xlane.f32.xlu0 %v223
  %v225 = vpop.xlane.xlu0 %224
  %v226 = vsel %vm92, %v210, 0.0
  %227 = vadd.xlane.f32.xlu0 %v226
  %v228 = vpop.xlane.xlu0 %227
  %v229 = vsel %vm92, %v211, 0.0
  %230 = vadd.xlane.f32.xlu0 %v229
  %v231 = vpop.xlane.xlu0 %230
  %v232 = vsel %vm92, %v212, 0.0
  %233 = vadd.xlane.f32.xlu0 %v232
  %v234 = vpop.xlane.xlu0 %233
  %v235 = vsel %vm92, %v213, 0.0
  %236 = vadd.xlane.f32.xlu0 %v235
  %v237 = vpop.xlane.xlu0 %236
  %v238 = vmul.f32 %v198, %v198
  %v239 = vmul.f32 %v199, %v199
  %v240 = vmul.f32 %v200, %v200
  %v241 = vmul.f32 %v201, %v201
  %v242 = vmul.f32 %v202, %v202
  %v243 = vmul.f32 %v203, %v203
  %v244 = vmul.f32 %v204, %v204
  %v245 = vmul.f32 %v205, %v205
  %254 = vrot.lane.b32.xlu0 %v238, 96
  %v255 = vpop.permute.xlu0 %254
  %256 = vrot.lane.b32.xlu0 %v239, 96
  %v257 = vpop.permute.xlu0 %256
  %258 = vrot.lane.b32.xlu0 %v240, 96
  %v259 = vpop.permute.xlu0 %258
  %260 = vrot.lane.b32.xlu0 %v241, 96
  %v261 = vpop.permute.xlu0 %260
  %262 = vrot.lane.b32.xlu0 %v242, 96
  %v263 = vpop.permute.xlu0 %262
  %264 = vrot.lane.b32.xlu0 %v243, 96
  %v265 = vpop.permute.xlu0 %264
  %266 = vrot.lane.b32.xlu0 %v244, 96
  %v267 = vpop.permute.xlu0 %266
  %268 = vrot.lane.b32.xlu0 %v245, 96
  %v269 = vpop.permute.xlu0 %268
  %v278 = vsel %vm92, %v255, 0.0
  %279 = vadd.xlane.f32.xlu0 %v278
  %v280 = vpop.xlane.xlu0 %279
  %v281 = vsel %vm92, %v257, 0.0
  %282 = vadd.xlane.f32.xlu0 %v281
  %v283 = vpop.xlane.xlu0 %282
  %v284 = vsel %vm92, %v259, 0.0
  %285 = vadd.xlane.f32.xlu0 %v284
  %v286 = vpop.xlane.xlu0 %285
  %v287 = vsel %vm92, %v261, 0.0
  %288 = vadd.xlane.f32.xlu0 %v287
  %v289 = vpop.xlane.xlu0 %288
  %v290 = vsel %vm92, %v263, 0.0
  %291 = vadd.xlane.f32.xlu0 %v290
  %v292 = vpop.xlane.xlu0 %291
  %v293 = vsel %vm92, %v265, 0.0
  %294 = vadd.xlane.f32.xlu0 %v293
  %v295 = vpop.xlane.xlu0 %294
  %v296 = vsel %vm92, %v267, 0.0
  %297 = vadd.xlane.f32.xlu0 %v296
  %v298 = vpop.xlane.xlu0 %297
  %v299 = vsel %vm92, %v269, 0.0
  %300 = vadd.xlane.f32.xlu0 %v299
  %v301 = vpop.xlane.xlu0 %300
  %v302 = vadd.f32 %v216, %v280
  %v303 = vadd.f32 %v219, %v283
  %v304 = vadd.f32 %v222, %v286
  %v305 = vadd.f32 %v225, %v289
  %v306 = vadd.f32 %v228, %v292
  %v307 = vadd.f32 %v231, %v295
  %v308 = vadd.f32 %v234, %v298
  %v309 = vadd.f32 %v237, %v301
  %v310 = vmul.f32 %v302, %v181
  %v311 = vmul.f32 %v303, %v181
  %v312 = vmul.f32 %v304, %v181
  %v313 = vmul.f32 %v305, %v181
  %v314 = vmul.f32 %v306, %v181
  %v315 = vmul.f32 %v307, %v181
  %v316 = vmul.f32 %v308, %v181
  %v317 = vmul.f32 %v309, %v181
  %v318 = vadd.f32 %v310, 1e-05
  %v319 = vadd.f32 %v311, 1e-05
  %v320 = vadd.f32 %v312, 1e-05
  %v321 = vadd.f32 %v313, 1e-05
  %v322 = vadd.f32 %v314, 1e-05
  %v323 = vadd.f32 %v315, 1e-05
  %v324 = vadd.f32 %v316, 1e-05
  %v325 = vadd.f32 %v317, 1e-05
  %v326 = vrsqrt.pop %v318
  %v327 = vrsqrt.pop %v319
  %v328 = vrsqrt.pop %v320
  %v329 = vrsqrt.pop %v321
  %v330 = vrsqrt.pop %v322
  %v331 = vrsqrt.pop %v323
  %v332 = vrsqrt.pop %v324
  %v333 = vrsqrt.pop %v325
  %v334 = vmul.f32 %v190, %v326
  %v335 = vmul.f32 %v191, %v327
  %v336 = vmul.f32 %v192, %v328
  %v337 = vmul.f32 %v193, %v329
  %v338 = vmul.f32 %v194, %v330
  %v339 = vmul.f32 %v195, %v331
  %v340 = vmul.f32 %v196, %v332
  %v341 = vmul.f32 %v197, %v333
  %v342 = vld [vmem:[%s3] sm:$0x1]
  %v344 = vlaneseq
  %v345 = vshrl.u32 %v344, 7
  %v346 = vsub.s32 0, %v345
  %v347 = vrot.slane %v342, %v346
  %v349 = vmul.f32 %v334, %v347
  %v350 = vmul.f32 %v335, %v347
  %v351 = vmul.f32 %v336, %v347
  %v352 = vmul.f32 %v337, %v347
  %v353 = vmul.f32 %v338, %v347
  %v354 = vmul.f32 %v339, %v347
  %v355 = vmul.f32 %v340, %v347
  %v356 = vmul.f32 %v341, %v347
  %v357 = vld [vmem:[%s4] sm:$0x1]
  %v359 = vlaneseq
  %v360 = vshrl.u32 %v359, 7
  %v361 = vsub.s32 0, %v360
  %v362 = vrot.slane %v357, %v361
  %v364 = vadd.f32 %v349, %v362
  %v365 = vadd.f32 %v350, %v362
  %v366 = vadd.f32 %v351, %v362
  %v367 = vadd.f32 %v352, %v362
  %v368 = vadd.f32 %v353, %v362
  %v369 = vadd.f32 %v354, %v362
  %v370 = vadd.f32 %v355, %v362
  %v371 = vadd.f32 %v356, %v362
  %372 = vst.msk [vmem:[%s5] sm:$0xff] %vm92, %v364
  %373 = vst.msk [vmem:[%s5 + $0x8] sm:$0xff] %vm92, %v365
  %374 = vst.msk [vmem:[%s5 + $0x10] sm:$0xff] %vm92, %v366
  %375 = vst.msk [vmem:[%s5 + $0x18] sm:$0xff] %vm92, %v367
  %376 = vst.msk [vmem:[%s5 + $0x20] sm:$0xff] %vm92, %v368
  %377 = vst.msk [vmem:[%s5 + $0x28] sm:$0xff] %vm92, %v369
  %378 = vst.msk [vmem:[%s5 + $0x30] sm:$0xff] %vm92, %v370
  %379 = vst.msk [vmem:[%s5 + $0x38] sm:$0xff] %vm92, %v371
  %v380 = vmul.f32 %v198, %v326
  %v381 = vmul.f32 %v199, %v327
  %v382 = vmul.f32 %v200, %v328
  %v383 = vmul.f32 %v201, %v329
  %v384 = vmul.f32 %v202, %v330
  %v385 = vmul.f32 %v203, %v331
  %v386 = vmul.f32 %v204, %v332
  %v387 = vmul.f32 %v205, %v333
  %v388 = vld [vmem:[%s3] sm:$0x1]
  %v390 = vlaneseq
  %v391 = vshrl.u32 %v390, 7
  %v392 = vsub.s32 0, %v391
  %v393 = vrot.slane %v388, %v392
  %v395 = vmul.f32 %v380, %v393
  %v396 = vmul.f32 %v381, %v393
  %v397 = vmul.f32 %v382, %v393
  %v398 = vmul.f32 %v383, %v393
  %v399 = vmul.f32 %v384, %v393
  %v400 = vmul.f32 %v385, %v393
  %v401 = vmul.f32 %v386, %v393
  %v402 = vmul.f32 %v387, %v393
  %v403 = vld [vmem:[%s4] sm:$0x1]
  %v405 = vlaneseq
  %v406 = vshrl.u32 %v405, 7
  %v407 = vsub.s32 0, %v406
  %v408 = vrot.slane %v403, %v407
  %v410 = vadd.f32 %v395, %v408
  %v411 = vadd.f32 %v396, %v408
  %v412 = vadd.f32 %v397, %v408
  %v413 = vadd.f32 %v398, %v408
  %v414 = vadd.f32 %v399, %v408
  %v415 = vadd.f32 %v400, %v408
  %v416 = vadd.f32 %v401, %v408
  %v417 = vadd.f32 %v402, %v408
  %vm418 = vcmask 523520
  %419 = vst.msk [vmem:[%s5] sm:$0xff] %vm418, %v410
  %420 = vst.msk [vmem:[%s5 + $0x8] sm:$0xff] %vm418, %v411
  %421 = vst.msk [vmem:[%s5 + $0x10] sm:$0xff] %vm418, %v412
  %422 = vst.msk [vmem:[%s5 + $0x18] sm:$0xff] %vm418, %v413
  %423 = vst.msk [vmem:[%s5 + $0x20] sm:$0xff] %vm418, %v414
  %424 = vst.msk [vmem:[%s5 + $0x28] sm:$0xff] %vm418, %v415
  %425 = vst.msk [vmem:[%s5 + $0x30] sm:$0xff] %vm418, %v416
  %426 = vst.msk [vmem:[%s5 + $0x38] sm:$0xff] %vm418, %v417
  // Predicated region
  $region22: #{forward.14} parent=0 // pred_check
    _
  $region23: #{forward.14} parent=0 // pred_check_branch
    %428 = sbr.rel (0) target = $region25
  $region24: #{forward.14} parent=0 // pred_region
    _
  $region25: #{forward.14} parent=0 // pred_fallthru
    _
  // Predicated region
  $region26: #{forward.14} parent=0 // pred_check
    _
  $region27: #{forward.14} parent=0 // pred_check_branch
    %430 = sbr.rel (0) target = $region29
  $region28: #{forward.14} parent=0 // pred_region
    _
  $region29: #{forward.14} parent=0 // pred_fallthru
    _

// kernel: forward.11
$region0: #{forward.11}
  #allocation0 [shape = 'u32[]', space=smem, size = 0x4, offset = 0x4, fixed_abs, tag = 'smem constant byte address 0x4 - core index']
  #allocation1 [shape = 'u32[144,128]{1,0:T(1,128)}', space=vmem, size = 0x12000, scoped, tag = 'internal scratch']
  %s0 = inlined_call_operand.vmem [shape: f32[64,32], index: 0, kind: input, shape index: {}]
  %s1 = inlined_call_operand.vmem [shape: bf16[32,64], index: 1, kind: input, shape index: {}]
  %s2 = inlined_call_operand.vmem [shape: f32[1,64], index: 2, kind: input, shape index: {}]
  %s3 = inlined_call_operand.vmem [shape: f32[64,32], index: 3, kind: input, shape index: {}]
  %s4 = inlined_call_operand.vmem [shape: f32[64,32], index: 4, kind: input, shape index: {}]
  %s5 = inlined_call_operand.vmem [shape: f32[1,64], index: 5, kind: input, shape index: {}]
  %s6 = inlined_call_operand.vmem [shape: f32[1,64], index: 6, kind: input, shape index: {}]
  %s7 = inlined_call_operand.vmem [shape: f32[64,64], index: 7, kind: output, shape index: {}]
  %s8 = sld [smem:[#allocation0]]
  $region38: #{forward.11} parent=0
    _
  %s10 = ssub.s32 1, %s8
  %s11 = scalar_select 0, %s10, %s8
  // Predicated region
  $region2: #{forward.11} parent=0 // pred_check
    _
  $region3: #{forward.11} parent=0 // pred_check_branch
    %13 = sbr.rel (0) target = $region5
  $region4: #{forward.11} parent=0 // pred_region
    _
  $region5: #{forward.11} parent=0 // pred_fallthru
    _
  // Predicated region
  $region6: #{forward.11} parent=0 // pred_check
    _
  $region7: #{forward.11} parent=0 // pred_check_branch
    %15 = sbr.rel (0) target = $region9
  $region8: #{forward.11} parent=0 // pred_region
    _
  $region9: #{forward.11} parent=0 // pred_fallthru
    _
  // Predicated region
  $region10: #{forward.11} parent=0 // pred_check
    _
  $region11: #{forward.11} parent=0 // pred_check_branch
    %17 = sbr.rel (0) target = $region13
  $region12: #{forward.11} parent=0 // pred_region
    _
  $region13: #{forward.11} parent=0 // pred_fallthru
    _
  // Predicated region
  $region14: #{forward.11} parent=0 // pred_check
    _
  $region15: #{forward.11} parent=0 // pred_check_branch
    %19 = sbr.rel (0) target = $region17
  $region16: #{forward.11} parent=0 // pred_region
    _
  $region17: #{forward.11} parent=0 // pred_fallthru
    _
  // Predicated region
  $region18: #{forward.11} parent=0 // pred_check
    _
  $region19: #{forward.11} parent=0 // pred_check_branch
    %21 = sbr.rel (0) target = $region21
  $region20: #{forward.11} parent=0 // pred_region
    _
  $region21: #{forward.11} parent=0 // pred_fallthru
    _
  // Predicated region
  $region22: #{forward.11} parent=0 // pred_check
    _
  $region23: #{forward.11} parent=0 // pred_check_branch
    %23 = sbr.rel (0) target = $region25
  $region24: #{forward.11} parent=0 // pred_region
    _
  $region25: #{forward.11} parent=0 // pred_fallthru
    _
  // Predicated region
  $region26: #{forward.11} parent=0 // pred_check
    _
  $region27: #{forward.11} parent=0 // pred_check_branch
    %25 = sbr.rel (0) target = $region29
  $region28: #{forward.11} parent=0 // pred_region
    _
  $region29: #{forward.11} parent=0 // pred_fallthru
    _
  %v27 = vld [vmem:[%s0] sm:$0xff]
  %v28 = vld [vmem:[%s0 + $0x8] sm:$0xff]
  %v29 = vld [vmem:[%s0 + $0x10] sm:$0xff]
  %v30 = vld [vmem:[%s0 + $0x18] sm:$0xff]
  %v31 = vld [vmem:[%s0 + $0x20] sm:$0xff]
  %v32 = vld [vmem:[%s0 + $0x28] sm:$0xff]
  %v33 = vld [vmem:[%s0 + $0x30] sm:$0xff]
  %v34 = vld [vmem:[%s0 + $0x38] sm:$0xff]
  %v35 = vpack.c.bf16 %v28, %v27
  %v36 = vpack.c.bf16 %v30, %v29
  %v37 = vpack.c.bf16 %v32, %v31
  %v38 = vpack.c.bf16 %v34, %v33
  %v39 = vld [vmem:[%s1] sm:$0xf]
  %v40 = vld [vmem:[%s1 + $0x4] sm:$0xf]
  %v41 = vld [vmem:[%s1 + $0x8] sm:$0xf]
  %v42 = vld [vmem:[%s1 + $0xc] sm:$0xf]
  %v43 = vld [vmem:[%s2] sm:$0x1]
  %v45 = vlaneseq
  %v46 = vshrl.u32 %v45, 7
  %v47 = vsub.s32 0, %v46
  %v48 = vrot.slane %v43, %v47
  %v54 = vunpack.c.l.b16 %v39
  %v55 = vunpack.c.l.b16 %v40
  %v56 = vunpack.c.l.b16 %v41
  %v57 = vunpack.c.l.b16 %v42
  %v58 = vpack.c.b16 %v55, %v54
  %v59 = vpack.c.b16 %v57, %v56
  %vm62 = vcmask 261120
  %v64 = vsel %vm62, %v35, 0
  %v67 = vsel %vm62, %v36, 0
  %v70 = vsel %vm62, %v37, 0
  %v73 = vsel %vm62, %v38, 0
  %75 = vmatprep.subr.bf16.mxu0 0
  %76 = vmatpush1.bf16.msra.mxu0 0
  %77 = vmatprep.subr.bf16.mxu0 0
  %78 = vmatpush1.bf16.msra.mxu0 0
  %79 = vmatprep.subr.bf16.mxu0 0
  %80 = vmatpush1.bf16.msra.mxu0 0
  %81 = vmatprep.subr.bf16.mxu0 0
  %82 = vmatpush1.bf16.msra.mxu0 0
  %83 = vmatprep.subr.bf16.mxu0 0
  %84 = vmatpush1.bf16.msra.mxu0 0
  %85 = vmatprep.subr.bf16.mxu0 0
  %86 = vmatpush1.bf16.msra.mxu0 0
  %87 = vmatprep.subr.bf16.mxu0 0
  %88 = vmatpush1.bf16.msra.mxu0 %v59
  %89 = vmatprep.subr.bf16.mxu0 0
  %90 = vmatpush1.bf16.msra.mxu0 %v58
  %91 = vmatprep.subr.bf16.mxu0 0
  %92 = vmatpush2.bf16.msra.mxu0 0
  %93 = vmatprep.subr.bf16.mxu0 0
  %94 = vmatpush2.bf16.msra.mxu0 0
  %95 = vmatprep.subr.bf16.mxu0 0
  %96 = vmatpush2.bf16.msra.mxu0 0
  %97 = vmatprep.subr.bf16.mxu0 0
  %98 = vmatpush2.bf16.msra.mxu0 0
  %99 = vmatprep.subr.bf16.mxu0 0
  %100 = vmatpush2.bf16.msra.mxu0 0
  %101 = vmatprep.subr.bf16.mxu0 0
  %102 = vmatpush2.bf16.msra.mxu0 0
  %103 = vmatprep.subr.bf16.mxu0 0
  %104 = vmatpush2.bf16.msra.mxu0 0
  %105 = vmatprep.subr.bf16.mxu0 0
  %106 = vmatpush2.bf16.msra.mxu0 0
  %107 = vmatprep.mubr.bf16.mxu0 0
  %108 = vmatmul.mubr.bf16.gmra.mxu0 %v64
  %v109 = vpop.f32.mrf.mxu0
  %v110 = vadd.f32 %v48, %v109
  %v111 = vpop.f32.mrf.mxu0
  %v112 = vpop.f32.mrf.mxu0
  %v113 = vadd.f32 %v48, %v112
  %v114 = vpop.f32.mrf.mxu0
  %115 = vmatprep.mubr.bf16.mxu0 0
  %116 = vmatmul.mubr.bf16.gmra.mxu0 %v67
  %v117 = vpop.f32.mrf.mxu0
  %v118 = vadd.f32 %v48, %v117
  %v119 = vpop.f32.mrf.mxu0
  %v120 = vpop.f32.mrf.mxu0
  %v121 = vadd.f32 %v48, %v120
  %v122 = vpop.f32.mrf.mxu0
  %123 = vmatprep.mubr.bf16.mxu0 0
  %124 = vmatmul.mubr.bf16.gmra.mxu0 %v70
  %v125 = vpop.f32.mrf.mxu0
  %v126 = vadd.f32 %v48, %v125
  %v127 = vpop.f32.mrf.mxu0
  %v128 = vpop.f32.mrf.mxu0
  %v129 = vadd.f32 %v48, %v128
  %v130 = vpop.f32.mrf.mxu0
  %131 = vmatprep.mubr.bf16.mxu0 0
  %132 = vmatmul.mubr.bf16.gmra.mxu0 %v73
  %v133 = vpop.f32.mrf.mxu0
  %v134 = vadd.f32 %v48, %v133
  %v135 = vpop.f32.mrf.mxu0
  %v136 = vpop.f32.mrf.mxu0
  %v137 = vadd.f32 %v48, %v136
  %v138 = vpop.f32.mrf.mxu0
  %139 = vdwg.mxu0
  %v140 = vld [vmem:[%s3] sm:$0xff]
  %v141 = vld [vmem:[%s3 + $0x8] sm:$0xff]
  %v142 = vld [vmem:[%s3 + $0x10] sm:$0xff]
  %v143 = vld [vmem:[%s3 + $0x18] sm:$0xff]
  %v144 = vld [vmem:[%s3 + $0x20] sm:$0xff]
  %v145 = vld [vmem:[%s3 + $0x28] sm:$0xff]
  %v146 = vld [vmem:[%s3 + $0x30] sm:$0xff]
  %v147 = vld [vmem:[%s3 + $0x38] sm:$0xff]
  %v148 = vadd.f32 %v110, %v140
  %v149 = vadd.f32 %v113, %v141
  %v150 = vadd.f32 %v118, %v142
  %v151 = vadd.f32 %v121, %v143
  %v152 = vadd.f32 %v126, %v144
  %v153 = vadd.f32 %v129, %v145
  %v154 = vadd.f32 %v134, %v146
  %v155 = vadd.f32 %v137, %v147
  %v156 = vld [vmem:[%s4] sm:$0xff]
  %v157 = vld [vmem:[%s4 + $0x8] sm:$0xff]
  %v158 = vld [vmem:[%s4 + $0x10] sm:$0xff]
  %v159 = vld [vmem:[%s4 + $0x18] sm:$0xff]
  %v160 = vld [vmem:[%s4 + $0x20] sm:$0xff]
  %v161 = vld [vmem:[%s4 + $0x28] sm:$0xff]
  %v162 = vld [vmem:[%s4 + $0x30] sm:$0xff]
  %v163 = vld [vmem:[%s4 + $0x38] sm:$0xff]
  %172 = vrot.lane.b32.xlu0 %v156, 32
  %v173 = vpop.permute.xlu0 %172
  %174 = vrot.lane.b32.xlu0 %v157, 32
  %v175 = vpop.permute.xlu0 %174
  %176 = vrot.lane.b32.xlu0 %v158, 32
  %v177 = vpop.permute.xlu0 %176
  %178 = vrot.lane.b32.xlu0 %v159, 32
  %v179 = vpop.permute.xlu0 %178
  %180 = vrot.lane.b32.xlu0 %v160, 32
  %v181 = vpop.permute.xlu0 %180
  %182 = vrot.lane.b32.xlu0 %v161, 32
  %v183 = vpop.permute.xlu0 %182
  %184 = vrot.lane.b32.xlu0 %v162, 32
  %v185 = vpop.permute.xlu0 %184
  %186 = vrot.lane.b32.xlu0 %v163, 32
  %v187 = vpop.permute.xlu0 %186
  %v196 = vadd.f32 %v110, %v173
  %v197 = vadd.f32 %v113, %v175
  %v198 = vadd.f32 %v118, %v177
  %v199 = vadd.f32 %v121, %v179
  %v200 = vadd.f32 %v126, %v181
  %v201 = vadd.f32 %v129, %v183
  %v202 = vadd.f32 %v134, %v185
  %v203 = vadd.f32 %v137, %v187
  %v204 = vsel %vm62, %v148, 0.0
  %205 = vadd.xlane.f32.xlu0 %v204
  %v206 = vpop.xlane.xlu0 %205
  %v207 = vsel %vm62, %v149, 0.0
  %208 = vadd.xlane.f32.xlu0 %v207
  %v209 = vpop.xlane.xlu0 %208
  %v210 = vsel %vm62, %v150, 0.0
  %211 = vadd.xlane.f32.xlu0 %v210
  %v212 = vpop.xlane.xlu0 %211
  %v213 = vsel %vm62, %v151, 0.0
  %214 = vadd.xlane.f32.xlu0 %v213
  %v215 = vpop.xlane.xlu0 %214
  %v216 = vsel %vm62, %v152, 0.0
  %217 = vadd.xlane.f32.xlu0 %v216
  %v218 = vpop.xlane.xlu0 %217
  %v219 = vsel %vm62, %v153, 0.0
  %220 = vadd.xlane.f32.xlu0 %v219
  %v221 = vpop.xlane.xlu0 %220
  %v222 = vsel %vm62, %v154, 0.0
  %223 = vadd.xlane.f32.xlu0 %v222
  %v224 = vpop.xlane.xlu0 %223
  %v225 = vsel %vm62, %v155, 0.0
  %226 = vadd.xlane.f32.xlu0 %v225
  %v227 = vpop.xlane.xlu0 %226
  %236 = vrot.lane.b32.xlu0 %v196, 96
  %v237 = vpop.permute.xlu0 %236
  %238 = vrot.lane.b32.xlu0 %v197, 96
  %v239 = vpop.permute.xlu0 %238
  %240 = vrot.lane.b32.xlu0 %v198, 96
  %v241 = vpop.permute.xlu0 %240
  %242 = vrot.lane.b32.xlu0 %v199, 96
  %v243 = vpop.permute.xlu0 %242
  %244 = vrot.lane.b32.xlu0 %v200, 96
  %v245 = vpop.permute.xlu0 %244
  %246 = vrot.lane.b32.xlu0 %v201, 96
  %v247 = vpop.permute.xlu0 %246
  %248 = vrot.lane.b32.xlu0 %v202, 96
  %v249 = vpop.permute.xlu0 %248
  %250 = vrot.lane.b32.xlu0 %v203, 96
  %v251 = vpop.permute.xlu0 %250
  %v260 = vsel %vm62, %v237, 0.0
  %261 = vadd.xlane.f32.xlu0 %v260
  %v262 = vpop.xlane.xlu0 %261
  %v263 = vsel %vm62, %v239, 0.0
  %264 = vadd.xlane.f32.xlu0 %v263
  %v265 = vpop.xlane.xlu0 %264
  %v266 = vsel %vm62, %v241, 0.0
  %267 = vadd.xlane.f32.xlu0 %v266
  %v268 = vpop.xlane.xlu0 %267
  %v269 = vsel %vm62, %v243, 0.0
  %270 = vadd.xlane.f32.xlu0 %v269
  %v271 = vpop.xlane.xlu0 %270
  %v272 = vsel %vm62, %v245, 0.0
  %273 = vadd.xlane.f32.xlu0 %v272
  %v274 = vpop.xlane.xlu0 %273
  %v275 = vsel %vm62, %v247, 0.0
  %276 = vadd.xlane.f32.xlu0 %v275
  %v277 = vpop.xlane.xlu0 %276
  %v278 = vsel %vm62, %v249, 0.0
  %279 = vadd.xlane.f32.xlu0 %v278
  %v280 = vpop.xlane.xlu0 %279
  %v281 = vsel %vm62, %v251, 0.0
  %282 = vadd.xlane.f32.xlu0 %v281
  %v283 = vpop.xlane.xlu0 %282
  %v284 = vadd.f32 %v206, %v262
  %v285 = vadd.f32 %v209, %v265
  %v286 = vadd.f32 %v212, %v268
  %v287 = vadd.f32 %v215, %v271
  %v288 = vadd.f32 %v218, %v274
  %v289 = vadd.f32 %v221, %v277
  %v290 = vadd.f32 %v224, %v280
  %v291 = vadd.f32 %v227, %v283
  %v292 = vrcp.pop 64.0
  %v293 = vmul.f32 %v284, %v292
  %v294 = vmul.f32 %v285, %v292
  %v295 = vmul.f32 %v286, %v292
  %v296 = vmul.f32 %v287, %v292
  %v297 = vmul.f32 %v288, %v292
  %v298 = vmul.f32 %v289, %v292
  %v299 = vmul.f32 %v290, %v292
  %v300 = vmul.f32 %v291, %v292
  %v301 = vsub.f32 %v148, %v293
  %v302 = vsub.f32 %v149, %v294
  %v303 = vsub.f32 %v150, %v295
  %v304 = vsub.f32 %v151, %v296
  %v305 = vsub.f32 %v152, %v297
  %v306 = vsub.f32 %v153, %v298
  %v307 = vsub.f32 %v154, %v299
  %v308 = vsub.f32 %v155, %v300
  %v309 = vsub.f32 %v196, %v293
  %v310 = vsub.f32 %v197, %v294
  %v311 = vsub.f32 %v198, %v295
  %v312 = vsub.f32 %v199, %v296
  %v313 = vsub.f32 %v200, %v297
  %v314 = vsub.f32 %v201, %v298
  %v315 = vsub.f32 %v202, %v299
  %v316 = vsub.f32 %v203, %v300
  %v317 = vmul.f32 %v301, %v301
  %v318 = vmul.f32 %v302, %v302
  %v319 = vmul.f32 %v303, %v303
  %v320 = vmul.f32 %v304, %v304
  %v321 = vmul.f32 %v305, %v305
  %v322 = vmul.f32 %v306, %v306
  %v323 = vmul.f32 %v307, %v307
  %v324 = vmul.f32 %v308, %v308
  %v325 = vsel %vm62, %v317, 0.0
  %326 = vadd.xlane.f32.xlu0 %v325
  %v327 = vpop.xlane.xlu0 %326
  %v328 = vsel %vm62, %v318, 0.0
  %329 = vadd.xlane.f32.xlu0 %v328
  %v330 = vpop.xlane.xlu0 %329
  %v331 = vsel %vm62, %v319, 0.0
  %332 = vadd.xlane.f32.xlu0 %v331
  %v333 = vpop.xlane.xlu0 %332
  %v334 = vsel %vm62, %v320, 0.0
  %335 = vadd.xlane.f32.xlu0 %v334
  %v336 = vpop.xlane.xlu0 %335
  %v337 = vsel %vm62, %v321, 0.0
  %338 = vadd.xlane.f32.xlu0 %v337
  %v339 = vpop.xlane.xlu0 %338
  %v340 = vsel %vm62, %v322, 0.0
  %341 = vadd.xlane.f32.xlu0 %v340
  %v342 = vpop.xlane.xlu0 %341
  %v343 = vsel %vm62, %v323, 0.0
  %344 = vadd.xlane.f32.xlu0 %v343
  %v345 = vpop.xlane.xlu0 %344
  %v346 = vsel %vm62, %v324, 0.0
  %347 = vadd.xlane.f32.xlu0 %v346
  %v348 = vpop.xlane.xlu0 %347
  %v349 = vmul.f32 %v309, %v309
  %v350 = vmul.f32 %v310, %v310
  %v351 = vmul.f32 %v311, %v311
  %v352 = vmul.f32 %v312, %v312
  %v353 = vmul.f32 %v313, %v313
  %v354 = vmul.f32 %v314, %v314
  %v355 = vmul.f32 %v315, %v315
  %v356 = vmul.f32 %v316, %v316
  %365 = vrot.lane.b32.xlu0 %v349, 96
  %v366 = vpop.permute.xlu0 %365
  %367 = vrot.lane.b32.xlu0 %v350, 96
  %v368 = vpop.permute.xlu0 %367
  %369 = vrot.lane.b32.xlu0 %v351, 96
  %v370 = vpop.permute.xlu0 %369
  %371 = vrot.lane.b32.xlu0 %v352, 96
  %v372 = vpop.permute.xlu0 %371
  %373 = vrot.lane.b32.xlu0 %v353, 96
  %v374 = vpop.permute.xlu0 %373
  %375 = vrot.lane.b32.xlu0 %v354, 96
  %v376 = vpop.permute.xlu0 %375
  %377 = vrot.lane.b32.xlu0 %v355, 96
  %v378 = vpop.permute.xlu0 %377
  %379 = vrot.lane.b32.xlu0 %v356, 96
  %v380 = vpop.permute.xlu0 %379
  %v389 = vsel %vm62, %v366, 0.0
  %390 = vadd.xlane.f32.xlu0 %v389
  %v391 = vpop.xlane.xlu0 %390
  %v392 = vsel %vm62, %v368, 0.0
  %393 = vadd.xlane.f32.xlu0 %v392
  %v394 = vpop.xlane.xlu0 %393
  %v395 = vsel %vm62, %v370, 0.0
  %396 = vadd.xlane.f32.xlu0 %v395
  %v397 = vpop.xlane.xlu0 %396
  %v398 = vsel %vm62, %v372, 0.0
  %399 = vadd.xlane.f32.xlu0 %v398
  %v400 = vpop.xlane.xlu0 %399
  %v401 = vsel %vm62, %v374, 0.0
  %402 = vadd.xlane.f32.xlu0 %v401
  %v403 = vpop.xlane.xlu0 %402
  %v404 = vsel %vm62, %v376, 0.0
  %405 = vadd.xlane.f32.xlu0 %v404
  %v406 = vpop.xlane.xlu0 %405
  %v407 = vsel %vm62, %v378, 0.0
  %408 = vadd.xlane.f32.xlu0 %v407
  %v409 = vpop.xlane.xlu0 %408
  %v410 = vsel %vm62, %v380, 0.0
  %411 = vadd.xlane.f32.xlu0 %v410
  %v412 = vpop.xlane.xlu0 %411
  %v413 = vadd.f32 %v327, %v391
  %v414 = vadd.f32 %v330, %v394
  %v415 = vadd.f32 %v333, %v397
  %v416 = vadd.f32 %v336, %v400
  %v417 = vadd.f32 %v339, %v403
  %v418 = vadd.f32 %v342, %v406
  %v419 = vadd.f32 %v345, %v409
  %v420 = vadd.f32 %v348, %v412
  %v421 = vmul.f32 %v413, %v292
  %v422 = vmul.f32 %v414, %v292
  %v423 = vmul.f32 %v415, %v292
  %v424 = vmul.f32 %v416, %v292
  %v425 = vmul.f32 %v417, %v292
  %v426 = vmul.f32 %v418, %v292
  %v427 = vmul.f32 %v419, %v292
  %v428 = vmul.f32 %v420, %v292
  %v429 = vadd.f32 %v421, 1e-05
  %v430 = vadd.f32 %v422, 1e-05
  %v431 = vadd.f32 %v423, 1e-05
  %v432 = vadd.f32 %v424, 1e-05
  %v433 = vadd.f32 %v425, 1e-05
  %v434 = vadd.f32 %v426, 1e-05
  %v435 = vadd.f32 %v427, 1e-05
  %v436 = vadd.f32 %v428, 1e-05
  %v437 = vrsqrt.pop %v429
  %v438 = vrsqrt.pop %v430
  %v439 = vrsqrt.pop %v431
  %v440 = vrsqrt.pop %v432
  %v441 = vrsqrt.pop %v433
  %v442 = vrsqrt.pop %v434
  %v443 = vrsqrt.pop %v435
  %v444 = vrsqrt.pop %v436
  %v445 = vmul.f32 %v301, %v437
  %v446 = vmul.f32 %v302, %v438
  %v447 = vmul.f32 %v303, %v439
  %v448 = vmul.f32 %v304, %v440
  %v449 = vmul.f32 %v305, %v441
  %v450 = vmul.f32 %v306, %v442
  %v451 = vmul.f32 %v307, %v443
  %v452 = vmul.f32 %v308, %v444
  %v453 = vld [vmem:[%s5] sm:$0x1]
  %v455 = vlaneseq
  %v456 = vshrl.u32 %v455, 7
  %v457 = vsub.s32 0, %v456
  %v458 = vrot.slane %v453, %v457
  %v460 = vmul.f32 %v445, %v458
  %v461 = vmul.f32 %v446, %v458
  %v462 = vmul.f32 %v447, %v458
  %v463 = vmul.f32 %v448, %v458
  %v464 = vmul.f32 %v449, %v458
  %v465 = vmul.f32 %v450, %v458
  %v466 = vmul.f32 %v451, %v458
  %v467 = vmul.f32 %v452, %v458
  %v468 = vld [vmem:[%s6] sm:$0x1]
  %v470 = vlaneseq
  %v471 = vshrl.u32 %v470, 7
  %v472 = vsub.s32 0, %v471
  %v473 = vrot.slane %v468, %v472
  %v475 = vadd.f32 %v460, %v473
  %v476 = vadd.f32 %v461, %v473
  %v477 = vadd.f32 %v462, %v473
  %v478 = vadd.f32 %v463, %v473
  %v479 = vadd.f32 %v464, %v473
  %v480 = vadd.f32 %v465, %v473
  %v481 = vadd.f32 %v466, %v473
  %v482 = vadd.f32 %v467, %v473
  %483 = vst.msk [vmem:[%s7] sm:$0xff] %vm62, %v475
  %484 = vst.msk [vmem:[%s7 + $0x8] sm:$0xff] %vm62, %v476
  %485 = vst.msk [vmem:[%s7 + $0x10] sm:$0xff] %vm62, %v477
  %486 = vst.msk [vmem:[%s7 + $0x18] sm:$0xff] %vm62, %v478
  %487 = vst.msk [vmem:[%s7 + $0x20] sm:$0xff] %vm62, %v479
  %488 = vst.msk [vmem:[%s7 + $0x28] sm:$0xff] %vm62, %v480
  %489 = vst.msk [vmem:[%s7 + $0x30] sm:$0xff] %vm62, %v481
  %490 = vst.msk [vmem:[%s7 + $0x38] sm:$0xff] %vm62, %v482
  %v491 = vmul.f32 %v309, %v437
  %v492 = vmul.f32 %v310, %v438
  %v493 = vmul.f32 %v311, %v439
  %v494 = vmul.f32 %v312, %v440
  %v495 = vmul.f32 %v313, %v441
  %v496 = vmul.f32 %v314, %v442
  %v497 = vmul.f32 %v315, %v443
  %v498 = vmul.f32 %v316, %v444
  %v499 = vld [vmem:[%s5] sm:$0x1]
  %v501 = vlaneseq
  %v502 = vshrl.u32 %v501, 7
  %v503 = vsub.s32 0, %v502
  %v504 = vrot.slane %v499, %v503
  %v506 = vmul.f32 %v491, %v504
  %v507 = vmul.f32 %v492, %v504
  %v508 = vmul.f32 %v493, %v504
  %v509 = vmul.f32 %v494, %v504
  %v510 = vmul.f32 %v495, %v504
  %v511 = vmul.f32 %v496, %v504
  %v512 = vmul.f32 %v497, %v504
  %v513 = vmul.f32 %v498, %v504
  %v514 = vld [vmem:[%s6] sm:$0x1]
  %v516 = vlaneseq
  %v517 = vshrl.u32 %v516, 7
  %v518 = vsub.s32 0, %v517
  %v519 = vrot.slane %v514, %v518
  %v521 = vadd.f32 %v506, %v519
  %v522 = vadd.f32 %v507, %v519
  %v523 = vadd.f32 %v508, %v519
  %v524 = vadd.f32 %v509, %v519
  %v525 = vadd.f32 %v510, %v519
  %v526 = vadd.f32 %v511, %v519
  %v527 = vadd.f32 %v512, %v519
  %v528 = vadd.f32 %v513, %v519
  %vm529 = vcmask 523520
  %530 = vst.msk [vmem:[%s7] sm:$0xff] %vm529, %v521
  %531 = vst.msk [vmem:[%s7 + $0x8] sm:$0xff] %vm529, %v522
  %532 = vst.msk [vmem:[%s7 + $0x10] sm:$0xff] %vm529, %v523
  %533 = vst.msk [vmem:[%s7 + $0x18] sm:$0xff] %vm529, %v524
  %534 = vst.msk [vmem:[%s7 + $0x20] sm:$0xff] %vm529, %v525
  %535 = vst.msk [vmem:[%s7 + $0x28] sm:$0xff] %vm529, %v526
  %536 = vst.msk [vmem:[%s7 + $0x30] sm:$0xff] %vm529, %v527
  %537 = vst.msk [vmem:[%s7 + $0x38] sm:$0xff] %vm529, %v528
  // Predicated region
  $region30: #{forward.11} parent=0 // pred_check
    _
  $region31: #{forward.11} parent=0 // pred_check_branch
    %539 = sbr.rel (0) target = $region33
  $region32: #{forward.11} parent=0 // pred_region
    _
  $region33: #{forward.11} parent=0 // pred_fallthru
    _
  // Predicated region
  $region34: #{forward.11} parent=0 // pred_check
    _
  $region35: #{forward.11} parent=0 // pred_check_branch
    %541 = sbr.rel (0) target = $region37
  $region36: #{forward.11} parent=0 // pred_region
    _
  $region37: #{forward.11} parent=0 // pred_fallthru
    _

// kernel: forward.15
$region0: #{forward.15}
  #allocation0 [shape = 'u32[]', space=smem, size = 0x4, offset = 0x4, fixed_abs, tag = 'smem constant byte address 0x4 - core index']
  #allocation1 [shape = 'u32[144,128]{1,0:T(1,128)}', space=vmem, size = 0x12000, scoped, tag = 'internal scratch']
  #allocation2 [shape = 'f32[1,1]{1,0:T(1,128)S(1)}', space=vmem, size = 0x200, scoped, tag = 'scoped memory for forward.15']
  %s0 = inlined_call_operand.vmem [shape: f32[2,64], index: 0, kind: input, shape index: {}]
  %s1 = inlined_call_operand.vmem [shape: bf16[64,128], index: 1, kind: input, shape index: {}]
  %s2 = inlined_call_operand.vmem [shape: f32[1,128], index: 2, kind: input, shape index: {}]
  %s3 = inlined_call_operand.vmem [shape: bf16[128,64], index: 3, kind: input, shape index: {}]
  %s4 = inlined_call_operand.vmem [shape: f32[1,64], index: 4, kind: input, shape index: {}]
  %s5 = inlined_call_operand.vmem [shape: bf16[64,32], index: 5, kind: input, shape index: {}]
  %s6 = inlined_call_operand.vmem [shape: f32[1,32], index: 6, kind: input, shape index: {}]
  %s7 = inlined_call_operand.vmem [shape: bf16[32,1], index: 7, kind: input, shape index: {}]
  %s8 = inlined_call_operand.<no memory space> [shape: f32[1,1], index: 8, kind: input, shape index: {}]
  %s9 = inlined_call_operand.vmem [shape: f32[2,1], index: 9, kind: output, shape index: {}]
  %s10 = sld [smem:[#allocation0]]
  $region46: #{forward.15} parent=0
    _
  %s12 = ssub.s32 1, %s10
  %s13 = scalar_select 0, %s12, %s10
  %v14 = vstv %s8
  %15 = vst [vmem:[#allocation2] sm:$0x1] %v14
  // Predicated region
  $region2: #{forward.15} parent=0 // pred_check
    _
  $region3: #{forward.15} parent=0 // pred_check_branch
    %17 = sbr.rel (0) target = $region5
  $region4: #{forward.15} parent=0 // pred_region
    _
  $region5: #{forward.15} parent=0 // pred_fallthru
    _
  // Predicated region
  $region6: #{forward.15} parent=0 // pred_check
    _
  $region7: #{forward.15} parent=0 // pred_check_branch
    %19 = sbr.rel (0) target = $region9
  $region8: #{forward.15} parent=0 // pred_region
    _
  $region9: #{forward.15} parent=0 // pred_fallthru
    _
  // Predicated region
  $region10: #{forward.15} parent=0 // pred_check
    _
  $region11: #{forward.15} parent=0 // pred_check_branch
    %21 = sbr.rel (0) target = $region13
  $region12: #{forward.15} parent=0 // pred_region
    _
  $region13: #{forward.15} parent=0 // pred_fallthru
    _
  // Predicated region
  $region14: #{forward.15} parent=0 // pred_check
    _
  $region15: #{forward.15} parent=0 // pred_check_branch
    %23 = sbr.rel (0) target = $region17
  $region16: #{forward.15} parent=0 // pred_region
    _
  $region17: #{forward.15} parent=0 // pred_fallthru
    _
  // Predicated region
  $region18: #{forward.15} parent=0 // pred_check
    _
  $region19: #{forward.15} parent=0 // pred_check_branch
    %25 = sbr.rel (0) target = $region21
  $region20: #{forward.15} parent=0 // pred_region
    _
  $region21: #{forward.15} parent=0 // pred_fallthru
    _
  // Predicated region
  $region22: #{forward.15} parent=0 // pred_check
    _
  $region23: #{forward.15} parent=0 // pred_check_branch
    %27 = sbr.rel (0) target = $region25
  $region24: #{forward.15} parent=0 // pred_region
    _
  $region25: #{forward.15} parent=0 // pred_fallthru
    _
  // Predicated region
  $region26: #{forward.15} parent=0 // pred_check
    _
  $region27: #{forward.15} parent=0 // pred_check_branch
    %29 = sbr.rel (0) target = $region29
  $region28: #{forward.15} parent=0 // pred_region
    _
  $region29: #{forward.15} parent=0 // pred_fallthru
    _
  // Predicated region
  $region30: #{forward.15} parent=0 // pred_check
    _
  $region31: #{forward.15} parent=0 // pred_check_branch
    %31 = sbr.rel (0) target = $region33
  $region32: #{forward.15} parent=0 // pred_region
    _
  $region33: #{forward.15} parent=0 // pred_fallthru
    _
  // Predicated region
  $region34: #{forward.15} parent=0 // pred_check
    _
  $region35: #{forward.15} parent=0 // pred_check_branch
    %33 = sbr.rel (0) target = $region37
  $region36: #{forward.15} parent=0 // pred_region
    _
  $region37: #{forward.15} parent=0 // pred_fallthru
    _
  %v35 = vld [vmem:[%s0] sm:$0x3]
  %v36 = vpack.c.bf16 %v35, %v35
  %v37 = vld [vmem:[%s1] sm:$0xf]
  %v38 = vld [vmem:[%s1 + $0x4] sm:$0xf]
  %v39 = vld [vmem:[%s1 + $0x8] sm:$0xf]
  %v40 = vld [vmem:[%s1 + $0xc] sm:$0xf]
  %v41 = vld [vmem:[%s1 + $0x10] sm:$0xf]
  %v42 = vld [vmem:[%s1 + $0x14] sm:$0xf]
  %v43 = vld [vmem:[%s1 + $0x18] sm:$0xf]
  %v44 = vld [vmem:[%s1 + $0x1c] sm:$0xf]
  %v45 = vld [vmem:[%s2] sm:$0x1]
  %v47 = vlaneseq
  %v48 = vshrl.u32 %v47, 7
  %v49 = vsub.s32 0, %v48
  %v50 = vrot.slane %v45, %v49
  %v60 = vunpack.c.l.b16 %v37
  %v61 = vunpack.c.l.b16 %v38
  %v62 = vunpack.c.l.b16 %v39
  %v63 = vunpack.c.l.b16 %v40
  %v64 = vunpack.c.l.b16 %v41
  %v65 = vunpack.c.l.b16 %v42
  %v66 = vunpack.c.l.b16 %v43
  %v67 = vunpack.c.l.b16 %v44
  %v68 = vpack.c.b16 %v61, %v60
  %v69 = vpack.c.b16 %v63, %v62
  %v70 = vpack.c.b16 %v65, %v64
  %v71 = vpack.c.b16 %v67, %v66
  %vm76 = vcmask 523264
  %v78 = vsel %vm76, %v36, 0
  %80 = vmatprep.subr.bf16.mxu0 0
  %81 = vmatpush1.bf16.msra.mxu0 0
  %82 = vmatprep.subr.bf16.mxu0 0
  %83 = vmatpush1.bf16.msra.mxu0 0
  %84 = vmatprep.subr.bf16.mxu0 0
  %85 = vmatpush1.bf16.msra.mxu0 0
  %86 = vmatprep.subr.bf16.mxu0 0
  %87 = vmatpush1.bf16.msra.mxu0 0
  %88 = vmatprep.subr.bf16.mxu0 0
  %89 = vmatpush1.bf16.msra.mxu0 %v71
  %90 = vmatprep.subr.bf16.mxu0 0
  %91 = vmatpush1.bf16.msra.mxu0 %v70
  %92 = vmatprep.subr.bf16.mxu0 0
  %93 = vmatpush1.bf16.msra.mxu0 %v69
  %94 = vmatprep.subr.bf16.mxu0 0
  %95 = vmatpush1.bf16.msra.mxu0 %v68
  %96 = vmatprep.subr.bf16.mxu0 0
  %97 = vmatpush2.bf16.msra.mxu0 0
  %98 = vmatprep.subr.bf16.mxu0 0
  %99 = vmatpush2.bf16.msra.mxu0 0
  %100 = vmatprep.subr.bf16.mxu0 0
  %101 = vmatpush2.bf16.msra.mxu0 0
  %102 = vmatprep.subr.bf16.mxu0 0
  %103 = vmatpush2.bf16.msra.mxu0 0
  %104 = vmatprep.subr.bf16.mxu0 0
  %105 = vmatpush2.bf16.msra.mxu0 0
  %106 = vmatprep.subr.bf16.mxu0 0
  %107 = vmatpush2.bf16.msra.mxu0 0
  %108 = vmatprep.subr.bf16.mxu0 0
  %109 = vmatpush2.bf16.msra.mxu0 0
  %110 = vmatprep.subr.bf16.mxu0 0
  %111 = vmatpush2.bf16.msra.mxu0 0
  %112 = vmatprep.mubr.bf16.mxu0 0
  %113 = vmatmul.mubr.bf16.gmra.mxu0 %v78
  %v114 = vpop.f32.mrf.mxu0
  %v115 = vadd.f32 %v50, %v114
  %v116 = vpop.f32.mrf.mxu0
  %v117 = vpop.f32.mrf.mxu0
  %v118 = vpop.f32.mrf.mxu0
  %119 = vdwg.mxu0
  %v120 = vmax.f32 %v115, 0.0
  %v121 = vpack.c.bf16 %v120, %v120
  %v122 = vld [vmem:[%s3] sm:$0xf]
  %v123 = vld [vmem:[%s3 + $0x4] sm:$0xf]
  %v124 = vld [vmem:[%s3 + $0x8] sm:$0xf]
  %v125 = vld [vmem:[%s3 + $0xc] sm:$0xf]
  %v126 = vld [vmem:[%s3 + $0x10] sm:$0xf]
  %v127 = vld [vmem:[%s3 + $0x14] sm:$0xf]
  %v128 = vld [vmem:[%s3 + $0x18] sm:$0xf]
  %v129 = vld [vmem:[%s3 + $0x1c] sm:$0xf]
  %v130 = vld [vmem:[%s3 + $0x20] sm:$0xf]
  %v131 = vld [vmem:[%s3 + $0x24] sm:$0xf]
  %v132 = vld [vmem:[%s3 + $0x28] sm:$0xf]
  %v133 = vld [vmem:[%s3 + $0x2c] sm:$0xf]
  %v134 = vld [vmem:[%s3 + $0x30] sm:$0xf]
  %v135 = vld [vmem:[%s3 + $0x34] sm:$0xf]
  %v136 = vld [vmem:[%s3 + $0x38] sm:$0xf]
  %v137 = vld [vmem:[%s3 + $0x3c] sm:$0xf]
  %v138 = vld [vmem:[%s4] sm:$0x1]
  %v140 = vlaneseq
  %v141 = vshrl.u32 %v140, 7
  %v142 = vsub.s32 0, %v141
  %v143 = vrot.slane %v138, %v142
  %v161 = vunpack.c.l.b16 %v122
  %v162 = vunpack.c.l.b16 %v123
  %v163 = vunpack.c.l.b16 %v124
  %v164 = vunpack.c.l.b16 %v125
  %v165 = vunpack.c.l.b16 %v126
  %v166 = vunpack.c.l.b16 %v127
  %v167 = vunpack.c.l.b16 %v128
  %v168 = vunpack.c.l.b16 %v129
  %v169 = vunpack.c.l.b16 %v130
  %v170 = vunpack.c.l.b16 %v131
  %v171 = vunpack.c.l.b16 %v132
  %v172 = vunpack.c.l.b16 %v133
  %v173 = vunpack.c.l.b16 %v134
  %v174 = vunpack.c.l.b16 %v135
  %v175 = vunpack.c.l.b16 %v136
  %v176 = vunpack.c.l.b16 %v137
  %v177 = vpack.c.b16 %v162, %v161
  %v178 = vpack.c.b16 %v164, %v163
  %v179 = vpack.c.b16 %v166, %v165
  %v180 = vpack.c.b16 %v168, %v167
  %v181 = vpack.c.b16 %v170, %v169
  %v182 = vpack.c.b16 %v172, %v171
  %v183 = vpack.c.b16 %v174, %v173
  %v184 = vpack.c.b16 %v176, %v175
  %193 = vmatprep.subr.bf16.mxu0 0
  %194 = vmatpush1.bf16.msra.mxu0 %v184
  %195 = vmatprep.subr.bf16.mxu0 0
  %196 = vmatpush1.bf16.msra.mxu0 %v183
  %197 = vmatprep.subr.bf16.mxu0 0
  %198 = vmatpush1.bf16.msra.mxu0 %v182
  %199 = vmatprep.subr.bf16.mxu0 0
  %200 = vmatpush1.bf16.msra.mxu0 %v181
  %201 = vmatprep.subr.bf16.mxu0 0
  %202 = vmatpush1.bf16.msra.mxu0 %v180
  %203 = vmatprep.subr.bf16.mxu0 0
  %204 = vmatpush1.bf16.msra.mxu0 %v179
  %205 = vmatprep.subr.bf16.mxu0 0
  %206 = vmatpush1.bf16.msra.mxu0 %v178
  %207 = vmatprep.subr.bf16.mxu0 0
  %208 = vmatpush1.bf16.msra.mxu0 %v177
  %209 = vmatprep.subr.bf16.mxu0 0
  %210 = vmatpush2.bf16.msra.mxu0 0
  %211 = vmatprep.subr.bf16.mxu0 0
  %212 = vmatpush2.bf16.msra.mxu0 0
  %213 = vmatprep.subr.bf16.mxu0 0
  %214 = vmatpush2.bf16.msra.mxu0 0
  %215 = vmatprep.subr.bf16.mxu0 0
  %216 = vmatpush2.bf16.msra.mxu0 0
  %217 = vmatprep.subr.bf16.mxu0 0
  %218 = vmatpush2.bf16.msra.mxu0 0
  %219 = vmatprep.subr.bf16.mxu0 0
  %220 = vmatpush2.bf16.msra.mxu0 0
  %221 = vmatprep.subr.bf16.mxu0 0
  %222 = vmatpush2.bf16.msra.mxu0 0
  %223 = vmatprep.subr.bf16.mxu0 0
  %224 = vmatpush2.bf16.msra.mxu0 0
  %225 = vmatprep.mubr.bf16.mxu0 0
  %226 = vmatmul.mubr.bf16.gmra.mxu0 %v121
  %v227 = vpop.f32.mrf.mxu0
  %v228 = vadd.f32 %v143, %v227
  %v229 = vpop.f32.mrf.mxu0
  %v230 = vpop.f32.mrf.mxu0
  %v231 = vpop.f32.mrf.mxu0
  %232 = vdwg.mxu0
  %v233 = vmax.f32 %v228, 0.0
  %v234 = vpack.c.bf16 %v233, %v233
  %v235 = vld [vmem:[%s5] sm:$0xf]
  %v236 = vld [vmem:[%s5 + $0x4] sm:$0xf]
  %v237 = vld [vmem:[%s5 + $0x8] sm:$0xf]
  %v238 = vld [vmem:[%s5 + $0xc] sm:$0xf]
  %v239 = vld [vmem:[%s5 + $0x10] sm:$0xf]
  %v240 = vld [vmem:[%s5 + $0x14] sm:$0xf]
  %v241 = vld [vmem:[%s5 + $0x18] sm:$0xf]
  %v242 = vld [vmem:[%s5 + $0x1c] sm:$0xf]
  %v243 = vld [vmem:[%s6] sm:$0x1]
  %v245 = vlaneseq
  %v246 = vshrl.u32 %v245, 7
  %v247 = vsub.s32 0, %v246
  %v248 = vrot.slane %v243, %v247
  %v258 = vunpack.c.l.b16 %v235
  %v259 = vunpack.c.l.b16 %v236
  %v260 = vunpack.c.l.b16 %v237
  %v261 = vunpack.c.l.b16 %v238
  %v262 = vunpack.c.l.b16 %v239
  %v263 = vunpack.c.l.b16 %v240
  %v264 = vunpack.c.l.b16 %v241
  %v265 = vunpack.c.l.b16 %v242
  %v266 = vpack.c.b16 %v259, %v258
  %v267 = vpack.c.b16 %v261, %v260
  %v268 = vpack.c.b16 %v263, %v262
  %v269 = vpack.c.b16 %v265, %v264
  %v275 = vsel %vm76, %v234, 0
  %277 = vmatprep.subr.bf16.mxu0 0
  %278 = vmatpush1.bf16.msra.mxu0 0
  %279 = vmatprep.subr.bf16.mxu0 0
  %280 = vmatpush1.bf16.msra.mxu0 0
  %281 = vmatprep.subr.bf16.mxu0 0
  %282 = vmatpush1.bf16.msra.mxu0 0
  %283 = vmatprep.subr.bf16.mxu0 0
  %284 = vmatpush1.bf16.msra.mxu0 0
  %285 = vmatprep.subr.bf16.mxu0 0
  %286 = vmatpush1.bf16.msra.mxu0 %v269
  %287 = vmatprep.subr.bf16.mxu0 0
  %288 = vmatpush1.bf16.msra.mxu0 %v268
  %289 = vmatprep.subr.bf16.mxu0 0
  %290 = vmatpush1.bf16.msra.mxu0 %v267
  %291 = vmatprep.subr.bf16.mxu0 0
  %292 = vmatpush1.bf16.msra.mxu0 %v266
  %293 = vmatprep.subr.bf16.mxu0 0
  %294 = vmatpush2.bf16.msra.mxu0 0
  %295 = vmatprep.subr.bf16.mxu0 0
  %296 = vmatpush2.bf16.msra.mxu0 0
  %297 = vmatprep.subr.bf16.mxu0 0
  %298 = vmatpush2.bf16.msra.mxu0 0
  %299 = vmatprep.subr.bf16.mxu0 0
  %300 = vmatpush2.bf16.msra.mxu0 0
  %301 = vmatprep.subr.bf16.mxu0 0
  %302 = vmatpush2.bf16.msra.mxu0 0
  %303 = vmatprep.subr.bf16.mxu0 0
  %304 = vmatpush2.bf16.msra.mxu0 0
  %305 = vmatprep.subr.bf16.mxu0 0
  %306 = vmatpush2.bf16.msra.mxu0 0
  %307 = vmatprep.subr.bf16.mxu0 0
  %308 = vmatpush2.bf16.msra.mxu0 0
  %309 = vmatprep.mubr.bf16.mxu0 0
  %310 = vmatmul.mubr.bf16.gmra.mxu0 %v275
  %v311 = vpop.f32.mrf.mxu0
  %v312 = vadd.f32 %v248, %v311
  %v313 = vpop.f32.mrf.mxu0
  %v314 = vpop.f32.mrf.mxu0
  %v315 = vpop.f32.mrf.mxu0
  %316 = vdwg.mxu0
  %v317 = vmax.f32 %v312, 0.0
  %v318 = vpack.c.bf16 %v317, %v317
  %v319 = vld [vmem:[%s7] sm:$0xf]
  %v320 = vld [vmem:[%s7 + $0x4] sm:$0xf]
  %v321 = vld [vmem:[%s7 + $0x8] sm:$0xf]
  %v322 = vld [vmem:[%s7 + $0xc] sm:$0xf]
  %v323 = vld [vmem:[#allocation2] sm:$0x1]
  %v325 = vlaneseq
  %v326 = vshrl.u32 %v325, 7
  %v327 = vsub.s32 0, %v326
  %v328 = vrot.slane %v323, %v327
  %v334 = vunpack.c.l.b16 %v319
  %v335 = vunpack.c.l.b16 %v320
  %v336 = vunpack.c.l.b16 %v321
  %v337 = vunpack.c.l.b16 %v322
  %v338 = vpack.c.b16 %v335, %v334
  %v339 = vpack.c.b16 %v337, %v336
  %vm342 = vcmask 261120
  %v344 = vsel %vm342, %v318, 0
  %346 = vmatprep.subr.bf16.mxu0 0
  %347 = vmatpush1.bf16.msra.mxu0 0
  %348 = vmatprep.subr.bf16.mxu0 0
  %349 = vmatpush1.bf16.msra.mxu0 0
  %350 = vmatprep.subr.bf16.mxu0 0
  %351 = vmatpush1.bf16.msra.mxu0 0
  %352 = vmatprep.subr.bf16.mxu0 0
  %353 = vmatpush1.bf16.msra.mxu0 0
  %354 = vmatprep.subr.bf16.mxu0 0
  %355 = vmatpush1.bf16.msra.mxu0 0
  %356 = vmatprep.subr.bf16.mxu0 0
  %357 = vmatpush1.bf16.msra.mxu0 0
  %358 = vmatprep.subr.bf16.mxu0 0
  %359 = vmatpush1.bf16.msra.mxu0 %v339
  %360 = vmatprep.subr.bf16.mxu0 0
  %361 = vmatpush1.bf16.msra.mxu0 %v338
  %362 = vmatprep.subr.bf16.mxu0 0
  %363 = vmatpush2.bf16.msra.mxu0 0
  %364 = vmatprep.subr.bf16.mxu0 0
  %365 = vmatpush2.bf16.msra.mxu0 0
  %366 = vmatprep.subr.bf16.mxu0 0
  %367 = vmatpush2.bf16.msra.mxu0 0
  %368 = vmatprep.subr.bf16.mxu0 0
  %369 = vmatpush2.bf16.msra.mxu0 0
  %370 = vmatprep.subr.bf16.mxu0 0
  %371 = vmatpush2.bf16.msra.mxu0 0
  %372 = vmatprep.subr.bf16.mxu0 0
  %373 = vmatpush2.bf16.msra.mxu0 0
  %374 = vmatprep.subr.bf16.mxu0 0
  %375 = vmatpush2.bf16.msra.mxu0 0
  %376 = vmatprep.subr.bf16.mxu0 0
  %377 = vmatpush2.bf16.msra.mxu0 0
  %378 = vmatprep.mubr.bf16.mxu0 0
  %379 = vmatmul.mubr.bf16.gmra.mxu0 %v344
  %v380 = vpop.f32.mrf.mxu0
  %v381 = vadd.f32 %v328, %v380
  %v382 = vpop.f32.mrf.mxu0
  %v383 = vpop.f32.mrf.mxu0
  %v384 = vpop.f32.mrf.mxu0
  %385 = vdwg.mxu0
  %vm386 = vcmask 1024
  %387 = vst.msk [vmem:[%s9] sm:$0x3] %vm386, %v381
  // Predicated region
  $region38: #{forward.15} parent=0 // pred_check
    _
  $region39: #{forward.15} parent=0 // pred_check_branch
    %389 = sbr.rel (0) target = $region41
  $region40: #{forward.15} parent=0 // pred_region
    _
  $region41: #{forward.15} parent=0 // pred_fallthru
    _
  // Predicated region
  $region42: #{forward.15} parent=0 // pred_check
    _
  $region43: #{forward.15} parent=0 // pred_check_branch
    %391 = sbr.rel (0) target = $region45
  $region44: #{forward.15} parent=0 // pred_region
    _
  $region45: #{forward.15} parent=0 // pred_fallthru
    _

// kernel: forward.10
$region0: #{forward.10}
  #allocation0 [shape = 'u32[]', space=smem, size = 0x4, offset = 0x4, fixed_abs, tag = 'smem constant byte address 0x4 - core index']
  #allocation1 [shape = 'u32[144,128]{1,0:T(1,128)}', space=vmem, size = 0x12000, scoped, tag = 'internal scratch']
  #allocation2 [shape = 'f32[2,64]{1,0:T(2,128)}', space=vmem, size = 0x400, scoped, tag = 'scratch operand']
  #allocation3 [shape = 'f32[2,64]{1,0:T(2,128)}', space=vmem, size = 0x400, scoped, tag = 'scratch operand']
  %s0 = inlined_call_operand.vmem [shape: bf16[32,2,256], index: 0, kind: input, shape index: {}, may-alias: {0,1}]
  %s1 = inlined_call_operand.vmem [shape: bf16[32,2,256], index: 1, kind: input, shape index: {}, may-alias: {0,1}]
  %s2 = inlined_call_operand.vmem [shape: bf16[64,256], index: 2, kind: input, shape index: {}]
  %s3 = inlined_call_operand.vmem [shape: f32[32,2,32], index: 3, kind: output, shape index: {0}]
  %s4 = inlined_call_operand.vmem [shape: f32[32,2,32], index: 4, kind: output, shape index: {1}]
  %5 = xla_tuple %s3, %s4
  %s6 = sld [smem:[#allocation0]]
  $region139: #{forward.10} parent=0
    _
  %s8 = ssub.s32 1, %s6
  %s9 = scalar_select 0, %s8, %s6
  $region1: #{forward.10} parent=0
    #allocation4 [shape = 'u8[16384]{0}', space=vmem, size = 0x4000, scoped, tag = 'input window, operand 0']
    #allocation5 [shape = 'u8[16384]{0}', space=vmem, size = 0x4000, scoped, tag = 'input window, operand 1']
    loop: start=0, step=1, limit=4
    $region2: #{forward.10} parent=1 // loop_pre_header
      _
    $region3: #{forward.10} parent=1 // loop_header
      %s11 = sphi 0, %s15
      %p12 = scmp.ge.s32.totalorder %s11, 4
      %s21 = sphi 0, %s23
      %s24 = sphi 0, %s21
      %s25 = sphi 0, %s24
      %s41 = sphi 0, %s25
      %s49 = sphi 0, %s51
      %s52 = sphi 0, %s49
      %s53 = sphi 0, %s52
      %s69 = sphi 0, %s53
      %s73 = sphi 0, %s73
      %s75 = sphi 0, %s73
      %s76 = sphi 0, %s75
      %s90 = sphi 0, %s76
      %s96 = sphi 0, %s98
      %s99 = sphi 0, %s96
      %s100 = sphi 0, %s99
      %s116 = sphi 0, %s100
      %s124 = sphi 0, %s126
      %s127 = sphi 0, %s124
      %s128 = sphi 0, %s127
      %s144 = sphi 0, %s128
    $region4: #{forward.10} parent=1 // loop_header_branch
      %14 = sbr.rel (%p12) target = $region8
    $region5: #{forward.10} parent=1 // loop_body
      %s16 = ssub.s32 %s11, 1
      %s17 = ssub.s32 %s11, 2
      %s18 = sadd.s32 %s11, 1
      %s19 = ssub.s32 %s11, %s18
      %p20 = scmp.eq.s32.totalorder %s19, 0
      %s22 = sadd.s32 %s21, 1
      %s23 = scalar_select %p20, %s21, %s22
      %p26 = pneg %p20
      %p27 = scmp.eq.s32.totalorder %s11, 1
      %p28 = por %p26, %p27
      %p29 = scmp.ne.s32.totalorder %s21, %s24
      %p30 = scmp.eq.s32.totalorder %s11, 0
      %p31 = por %p29, %p30
      %p32 = scmp.ne.s32.totalorder %s21, %s24
      %p33 = scmp.eq.s32.totalorder %s16, 1
      %p34 = por %p32, %p33
      %p35 = scmp.ne.s32.totalorder %s24, %s25
      %p36 = scmp.eq.s32.totalorder %s16, 0
      %p37 = por %p35, %p36
      %p38 = scmp.ne.s32.totalorder %s24, %s25
      %p39 = scmp.eq.s32.totalorder %s17, 1
      %p40 = por %p38, %p39
      %p42 = scmp.ne.s32.totalorder %s25, %s41
      %p43 = scmp.eq.s32.totalorder %s17, 0
      %p44 = por %p42, %p43
      %s45 = ssub.s32 1, %s11
      %s46 = ssub.s32 1, %s18
      %s47 = ssub.s32 %s45, %s46
      %p48 = scmp.eq.s32.totalorder %s47, 0
      %s50 = sadd.s32 %s49, 1
      %s51 = scalar_select %p48, %s49, %s50
      %p54 = pneg %p48
      %p55 = scmp.eq.s32.totalorder %s11, 1
      %p56 = por %p54, %p55
      %p57 = scmp.ne.s32.totalorder %s49, %s52
      %p58 = scmp.eq.s32.totalorder %s11, 0
      %p59 = por %p57, %p58
      %p60 = scmp.ne.s32.totalorder %s49, %s52
      %p61 = scmp.eq.s32.totalorder %s16, 1
      %p62 = por %p60, %p61
      %p63 = scmp.ne.s32.totalorder %s52, %s53
      %p64 = scmp.eq.s32.totalorder %s16, 0
      %p65 = por %p63, %p64
      %p66 = scmp.ne.s32.totalorder %s52, %s53
      %p67 = scmp.eq.s32.totalorder %s17, 1
      %p68 = por %p66, %p67
      %p70 = scmp.ne.s32.totalorder %s53, %s69
      %p71 = scmp.eq.s32.totalorder %s17, 0
      %p72 = por %p70, %p71
      %s74 = sadd.s32 %s73, 1
      %p77 = scmp.eq.s32.totalorder %s11, 1
      %p78 = scmp.ne.s32.totalorder %s73, %s75
      %p79 = scmp.eq.s32.totalorder %s11, 0
      %p80 = por %p78, %p79
      %p81 = scmp.ne.s32.totalorder %s73, %s75
      %p82 = scmp.eq.s32.totalorder %s16, 1
      %p83 = por %p81, %p82
      %p84 = scmp.ne.s32.totalorder %s75, %s76
      %p85 = scmp.eq.s32.totalorder %s16, 0
      %p86 = por %p84, %p85
      %p87 = scmp.ne.s32.totalorder %s75, %s76
      %p88 = scmp.eq.s32.totalorder %s17, 1
      %p89 = por %p87, %p88
      %p91 = scmp.ne.s32.totalorder %s76, %s90
      %p92 = scmp.eq.s32.totalorder %s17, 0
      %p93 = por %p91, %p92
      %s94 = ssub.s32 %s11, %s18
      %p95 = scmp.eq.s32.totalorder %s94, 0
      %s97 = sadd.s32 %s96, 1
      %s98 = scalar_select %p95, %s96, %s97
      %p101 = pneg %p95
      %p102 = scmp.eq.s32.totalorder %s11, 1
      %p103 = por %p101, %p102
      %p104 = scmp.ne.s32.totalorder %s96, %s99
      %p105 = scmp.eq.s32.totalorder %s11, 0
      %p106 = por %p104, %p105
      %p107 = scmp.ne.s32.totalorder %s96, %s99
      %p108 = scmp.eq.s32.totalorder %s16, 1
      %p109 = por %p107, %p108
      %p110 = scmp.ne.s32.totalorder %s99, %s100
      %p111 = scmp.eq.s32.totalorder %s16, 0
      %p112 = por %p110, %p111
      %p113 = scmp.ne.s32.totalorder %s99, %s100
      %p114 = scmp.eq.s32.totalorder %s17, 1
      %p115 = por %p113, %p114
      %p117 = scmp.ne.s32.totalorder %s100, %s116
      %p118 = scmp.eq.s32.totalorder %s17, 0
      %p119 = por %p117, %p118
      %s120 = ssub.s32 1, %s11
      %s121 = ssub.s32 1, %s18
      %s122 = ssub.s32 %s120, %s121
      %p123 = scmp.eq.s32.totalorder %s122, 0
      %s125 = sadd.s32 %s124, 1
      %s126 = scalar_select %p123, %s124, %s125
      %p129 = pneg %p123
      %p130 = scmp.eq.s32.totalorder %s11, 1
      %p131 = por %p129, %p130
      %p132 = scmp.ne.s32.totalorder %s124, %s127
      %p133 = scmp.eq.s32.totalorder %s11, 0
      %p134 = por %p132, %p133
      %p135 = scmp.ne.s32.totalorder %s124, %s127
      %p136 = scmp.eq.s32.totalorder %s16, 1
      %p137 = por %p135, %p136
      %p138 = scmp.ne.s32.totalorder %s127, %s128
      %p139 = scmp.eq.s32.totalorder %s16, 0
      %p140 = por %p138, %p139
      %p141 = scmp.ne.s32.totalorder %s127, %s128
      %p142 = scmp.eq.s32.totalorder %s17, 1
      %p143 = por %p141, %p142
      %p145 = scmp.ne.s32.totalorder %s128, %s144
      %p146 = scmp.eq.s32.totalorder %s17, 0
      %p147 = por %p145, %p146
      %p148 = scmp.le.s32.totalorder 1, %s11
      %p149 = scmp.lt.s32.totalorder %s11, 3
      %p150 = pnand %p148, %p149
      %p151 = pneg %p150
      // Predicated region
      $region9: #{forward.10} parent=5 // pred_check
        _
      $region10: #{forward.10} parent=5 // pred_check_branch
        %153 = sbr.rel (%p150) target = $region12
      $region11: #{forward.10} parent=5 // pred_region
        %s154 = ssub.s32 %s11, 1
        // Predicated region
        $region13: #{forward.10} parent=11 // pred_check
          %p155 = pneg %p86
        $region14: #{forward.10} parent=11 // pred_check_branch
          %157 = sbr.rel (%p155) target = $region16
        $region15: #{forward.10} parent=11 // pred_region
          _
        $region16: #{forward.10} parent=11 // pred_fallthru
          _
      $region12: #{forward.10} parent=5 // pred_fallthru
        _
      %p158 = scmp.lt.s32.totalorder %s11, 2
      // Predicated region
      $region17: #{forward.10} parent=5 // pred_check
        %p159 = pneg %p158
      $region18: #{forward.10} parent=5 // pred_check_branch
        %161 = sbr.rel (%p159) target = $region20
      $region19: #{forward.10} parent=5 // pred_region
        // Predicated region
        $region21: #{forward.10} parent=19 // pred_check
          %p162 = pneg %p31
        $region22: #{forward.10} parent=19 // pred_check_branch
          %164 = sbr.rel (%p162) target = $region24
        $region23: #{forward.10} parent=19 // pred_region
          %s165 = sand.u32 %s21, 1
          %s166 = sand.u32 %s21, 1
          %s167 = smul.addr %s166, 16
          %s168 = scalar_lea.vmem [#allocation4], %s167
          %s169 = smul.u32 16, %s11
          %s170 = smul.addr %s169, 2
          %s171 = scalar_lea.vmem %s0, %s170
          // Predicated region
          $region25: #{forward.10} parent=23 // pred_check
            _
          $region26: #{forward.10} parent=23 // pred_check_branch
            %173 = sbr.rel (0) target = $region28
          $region27: #{forward.10} parent=23 // pred_region
            // Predicated region
            $region29: #{forward.10} parent=27 // pred_check
              _
            $region30: #{forward.10} parent=27 // pred_check_branch
              %175 = sbr.rel target = $region32
            $region31: #{forward.10} parent=27 // pred_region
              // Predicated region
              $region44: #{forward.10} parent=31 // pred_check
                _
              $region45: #{forward.10} parent=31 // pred_check_branch
                %221 = sbr.rel (0) target = $region47
              $region46: #{forward.10} parent=31 // pred_region
                loop: start=0, step=1, limit=1
                $region48: #{forward.10} parent=46 // loop_pre_header
                  _
                $region49: #{forward.10} parent=46 // loop_header
                  %s223 = sphi 0, %s227
                  %p224 = scmp.ge.s32.totalorder %s223, 1
                  %s228 = sphi %s171, %s171
                  %s229 = sphi %s168, %s168
                $region50: #{forward.10} parent=46 // loop_header_branch
                  %226 = sbr.rel (%p224) target = $region54
                $region51: #{forward.10} parent=46 // loop_body
                  _
                $region52: #{forward.10} parent=46 // loop_footer
                  %s227 = sadd.s32 1, %s223
                $region53: #{forward.10} parent=46 // loop_footer_branch
                  %222 = sbr.rel target = $region49
                $region54: #{forward.10} parent=46 // loop_exit
                  _
                %s231 = ssub.s32 2, 1
                loop: start=0, step=1, limit=1
                $region55: #{forward.10} parent=46 // loop_pre_header
                  _
                $region56: #{forward.10} parent=46 // loop_header
                  %s233 = sphi 0, %s237
                  %p234 = scmp.ge.s32.totalorder %s233, 1
                  %s238 = sphi %s171, %s171
                  %s239 = sphi %s168, %s168
                $region57: #{forward.10} parent=46 // loop_header_branch
                  %236 = sbr.rel (%p234) target = $region61
                $region58: #{forward.10} parent=46 // loop_body
                  %v240 = vld [vmem:[%s238] sm:%s231]
                  %241 = vst [vmem:[%s239] sm:%s231] %v240
                  %v242 = vld [vmem:[%s238 + $0x2] sm:%s231]
                  %243 = vst [vmem:[%s239 + $0x1] sm:%s231] %v242
                  %v244 = vld [vmem:[%s238 + $0x4] sm:%s231]
                  %245 = vst [vmem:[%s239 + $0x2] sm:%s231] %v244
                  %v246 = vld [vmem:[%s238 + $0x6] sm:%s231]
                  %247 = vst [vmem:[%s239 + $0x3] sm:%s231] %v246
                  %v248 = vld [vmem:[%s238 + $0x8] sm:%s231]
                  %249 = vst [vmem:[%s239 + $0x4] sm:%s231] %v248
                  %v250 = vld [vmem:[%s238 + $0xa] sm:%s231]
                  %251 = vst [vmem:[%s239 + $0x5] sm:%s231] %v250
                  %v252 = vld [vmem:[%s238 + $0xc] sm:%s231]
                  %253 = vst [vmem:[%s239 + $0x6] sm:%s231] %v252
                  %v254 = vld [vmem:[%s238 + $0xe] sm:%s231]
                  %255 = vst [vmem:[%s239 + $0x7] sm:%s231] %v254
                  %v256 = vld [vmem:[%s238 + $0x10] sm:%s231]
                  %257 = vst [vmem:[%s239 + $0x8] sm:%s231] %v256
                  %v258 = vld [vmem:[%s238 + $0x12] sm:%s231]
                  %259 = vst [vmem:[%s239 + $0x9] sm:%s231] %v258
                  %v260 = vld [vmem:[%s238 + $0x14] sm:%s231]
                  %261 = vst [vmem:[%s239 + $0xa] sm:%s231] %v260
                  %v262 = vld [vmem:[%s238 + $0x16] sm:%s231]
                  %263 = vst [vmem:[%s239 + $0xb] sm:%s231] %v262
                  %v264 = vld [vmem:[%s238 + $0x18] sm:%s231]
                  %265 = vst [vmem:[%s239 + $0xc] sm:%s231] %v264
                  %v266 = vld [vmem:[%s238 + $0x1a] sm:%s231]
                  %267 = vst [vmem:[%s239 + $0xd] sm:%s231] %v266
                  %v268 = vld [vmem:[%s238 + $0x1c] sm:%s231]
                  %269 = vst [vmem:[%s239 + $0xe] sm:%s231] %v268
                  %v270 = vld [vmem:[%s238 + $0x1e] sm:%s231]
                  %271 = vst [vmem:[%s239 + $0xf] sm:%s231] %v270
                $region59: #{forward.10} parent=46 // loop_footer
                  %s237 = sadd.s32 1, %s233
                $region60: #{forward.10} parent=46 // loop_footer_branch
                  %232 = sbr.rel target = $region56
                $region61: #{forward.10} parent=46 // loop_exit
                  _
              $region47: #{forward.10} parent=31 // pred_fallthru
                _
            $region32: #{forward.10} parent=27 // pred_fallthru
              _
            // Predicated region
            $region33: #{forward.10} parent=27 // pred_check
              _
            $region34: #{forward.10} parent=27 // pred_check_branch
              %177 = sbr.rel (0) target = $region36
            $region35: #{forward.10} parent=27 // pred_region
              %s179 = ssub.s32 2, 1
              loop: start=0, step=1, limit=1
              $region37: #{forward.10} parent=35 // loop_pre_header
                _
              $region38: #{forward.10} parent=35 // loop_header
                %s181 = sphi 0, %s185
                %p182 = scmp.ge.s32.totalorder %s181, 1
                %s186 = sphi %s171, %s171
                %s187 = sphi %s168, %s168
              $region39: #{forward.10} parent=35 // loop_header_branch
                %184 = sbr.rel (%p182) target = $region43
              $region40: #{forward.10} parent=35 // loop_body
                %v188 = vld [vmem:[%s186] sm:%s179]
                %189 = vst [vmem:[%s187] sm:%s179] %v188
                %v190 = vld [vmem:[%s186 + $0x2] sm:%s179]
                %191 = vst [vmem:[%s187 + $0x1] sm:%s179] %v190
                %v192 = vld [vmem:[%s186 + $0x4] sm:%s179]
                %193 = vst [vmem:[%s187 + $0x2] sm:%s179] %v192
                %v194 = vld [vmem:[%s186 + $0x6] sm:%s179]
                %195 = vst [vmem:[%s187 + $0x3] sm:%s179] %v194
                %v196 = vld [vmem:[%s186 + $0x8] sm:%s179]
                %197 = vst [vmem:[%s187 + $0x4] sm:%s179] %v196
                %v198 = vld [vmem:[%s186 + $0xa] sm:%s179]
                %199 = vst [vmem:[%s187 + $0x5] sm:%s179] %v198
                %v200 = vld [vmem:[%s186 + $0xc] sm:%s179]
                %201 = vst [vmem:[%s187 + $0x6] sm:%s179] %v200
                %v202 = vld [vmem:[%s186 + $0xe] sm:%s179]
                %203 = vst [vmem:[%s187 + $0x7] sm:%s179] %v202
                %v204 = vld [vmem:[%s186 + $0x10] sm:%s179]
                %205 = vst [vmem:[%s187 + $0x8] sm:%s179] %v204
                %v206 = vld [vmem:[%s186 + $0x12] sm:%s179]
                %207 = vst [vmem:[%s187 + $0x9] sm:%s179] %v206
                %v208 = vld [vmem:[%s186 + $0x14] sm:%s179]
                %209 = vst [vmem:[%s187 + $0xa] sm:%s179] %v208
                %v210 = vld [vmem:[%s186 + $0x16] sm:%s179]
                %211 = vst [vmem:[%s187 + $0xb] sm:%s179] %v210
                %v212 = vld [vmem:[%s186 + $0x18] sm:%s179]
                %213 = vst [vmem:[%s187 + $0xc] sm:%s179] %v212
                %v214 = vld [vmem:[%s186 + $0x1a] sm:%s179]
                %215 = vst [vmem:[%s187 + $0xd] sm:%s179] %v214
                %v216 = vld [vmem:[%s186 + $0x1c] sm:%s179]
                %217 = vst [vmem:[%s187 + $0xe] sm:%s179] %v216
                %v218 = vld [vmem:[%s186 + $0x1e] sm:%s179]
                %219 = vst [vmem:[%s187 + $0xf] sm:%s179] %v218
              $region41: #{forward.10} parent=35 // loop_footer
                %s185 = sadd.s32 1, %s181
              $region42: #{forward.10} parent=35 // loop_footer_branch
                %180 = sbr.rel target = $region38
              $region43: #{forward.10} parent=35 // loop_exit
                _
            $region36: #{forward.10} parent=27 // pred_fallthru
              _
          $region28: #{forward.10} parent=23 // pred_fallthru
            _
          %272 = vnop
        $region24: #{forward.10} parent=19 // pred_fallthru
          _
        // Predicated region
        $region62: #{forward.10} parent=19 // pred_check
          %p273 = pneg %p59
        $region63: #{forward.10} parent=19 // pred_check_branch
          %275 = sbr.rel (%p273) target = $region65
        $region64: #{forward.10} parent=19 // pred_region
          %s276 = sand.u32 %s49, 1
          %s277 = sand.u32 %s49, 1
          %s278 = smul.addr %s277, 16
          %s279 = scalar_lea.vmem [#allocation5], %s278
          %s280 = ssub.s32 1, %s11
          %s281 = smul.u32 16, %s280
          %s282 = smul.addr %s281, 2
          %s283 = sadd.s32 1, %s282
          %s284 = scalar_lea.vmem %s1, %s283
          // Predicated region
          $region66: #{forward.10} parent=64 // pred_check
            _
          $region67: #{forward.10} parent=64 // pred_check_branch
            %286 = sbr.rel (0) target = $region69
          $region68: #{forward.10} parent=64 // pred_region
            // Predicated region
            $region70: #{forward.10} parent=68 // pred_check
              _
            $region71: #{forward.10} parent=68 // pred_check_branch
              %288 = sbr.rel target = $region73
            $region72: #{forward.10} parent=68 // pred_region
              // Predicated region
              $region85: #{forward.10} parent=72 // pred_check
                _
              $region86: #{forward.10} parent=72 // pred_check_branch
                %334 = sbr.rel (0) target = $region88
              $region87: #{forward.10} parent=72 // pred_region
                loop: start=0, step=1, limit=1
                $region89: #{forward.10} parent=87 // loop_pre_header
                  _
                $region90: #{forward.10} parent=87 // loop_header
                  %s336 = sphi 0, %s340
                  %p337 = scmp.ge.s32.totalorder %s336, 1
                  %s341 = sphi %s284, %s284
                  %s342 = sphi %s279, %s279
                $region91: #{forward.10} parent=87 // loop_header_branch
                  %339 = sbr.rel (%p337) target = $region95
                $region92: #{forward.10} parent=87 // loop_body
                  _
                $region93: #{forward.10} parent=87 // loop_footer
                  %s340 = sadd.s32 1, %s336
                $region94: #{forward.10} parent=87 // loop_footer_branch
                  %335 = sbr.rel target = $region90
                $region95: #{forward.10} parent=87 // loop_exit
                  _
                %s344 = ssub.s32 2, 1
                loop: start=0, step=1, limit=1
                $region96: #{forward.10} parent=87 // loop_pre_header
                  _
                $region97: #{forward.10} parent=87 // loop_header
                  %s346 = sphi 0, %s350
                  %p347 = scmp.ge.s32.totalorder %s346, 1
                  %s351 = sphi %s284, %s284
                  %s352 = sphi %s279, %s279
                $region98: #{forward.10} parent=87 // loop_header_branch
                  %349 = sbr.rel (%p347) target = $region102
                $region99: #{forward.10} parent=87 // loop_body
                  %v353 = vld [vmem:[%s351] sm:%s344]
                  %354 = vst [vmem:[%s352] sm:%s344] %v353
                  %v355 = vld [vmem:[%s351 + $0x2] sm:%s344]
                  %356 = vst [vmem:[%s352 + $0x1] sm:%s344] %v355
                  %v357 = vld [vmem:[%s351 + $0x4] sm:%s344]
                  %358 = vst [vmem:[%s352 + $0x2] sm:%s344] %v357
                  %v359 = vld [vmem:[%s351 + $0x6] sm:%s344]
                  %360 = vst [vmem:[%s352 + $0x3] sm:%s344] %v359
                  %v361 = vld [vmem:[%s351 + $0x8] sm:%s344]
                  %362 = vst [vmem:[%s352 + $0x4] sm:%s344] %v361
                  %v363 = vld [vmem:[%s351 + $0xa] sm:%s344]
                  %364 = vst [vmem:[%s352 + $0x5] sm:%s344] %v363
                  %v365 = vld [vmem:[%s351 + $0xc] sm:%s344]
                  %366 = vst [vmem:[%s352 + $0x6] sm:%s344] %v365
                  %v367 = vld [vmem:[%s351 + $0xe] sm:%s344]
                  %368 = vst [vmem:[%s352 + $0x7] sm:%s344] %v367
                  %v369 = vld [vmem:[%s351 + $0x10] sm:%s344]
                  %370 = vst [vmem:[%s352 + $0x8] sm:%s344] %v369
                  %v371 = vld [vmem:[%s351 + $0x12] sm:%s344]
                  %372 = vst [vmem:[%s352 + $0x9] sm:%s344] %v371
                  %v373 = vld [vmem:[%s351 + $0x14] sm:%s344]
                  %374 = vst [vmem:[%s352 + $0xa] sm:%s344] %v373
                  %v375 = vld [vmem:[%s351 + $0x16] sm:%s344]
                  %376 = vst [vmem:[%s352 + $0xb] sm:%s344] %v375
                  %v377 = vld [vmem:[%s351 + $0x18] sm:%s344]
                  %378 = vst [vmem:[%s352 + $0xc] sm:%s344] %v377
                  %v379 = vld [vmem:[%s351 + $0x1a] sm:%s344]
                  %380 = vst [vmem:[%s352 + $0xd] sm:%s344] %v379
                  %v381 = vld [vmem:[%s351 + $0x1c] sm:%s344]
                  %382 = vst [vmem:[%s352 + $0xe] sm:%s344] %v381
                  %v383 = vld [vmem:[%s351 + $0x1e] sm:%s344]
                  %384 = vst [vmem:[%s352 + $0xf] sm:%s344] %v383
                $region100: #{forward.10} parent=87 // loop_footer
                  %s350 = sadd.s32 1, %s346
                $region101: #{forward.10} parent=87 // loop_footer_branch
                  %345 = sbr.rel target = $region97
                $region102: #{forward.10} parent=87 // loop_exit
                  _
              $region88: #{forward.10} parent=72 // pred_fallthru
                _
            $region73: #{forward.10} parent=68 // pred_fallthru
              _
            // Predicated region
            $region74: #{forward.10} parent=68 // pred_check
              _
            $region75: #{forward.10} parent=68 // pred_check_branch
              %290 = sbr.rel (0) target = $region77
            $region76: #{forward.10} parent=68 // pred_region
              %s292 = ssub.s32 2, 1
              loop: start=0, step=1, limit=1
              $region78: #{forward.10} parent=76 // loop_pre_header
                _
              $region79: #{forward.10} parent=76 // loop_header
                %s294 = sphi 0, %s298
                %p295 = scmp.ge.s32.totalorder %s294, 1
                %s299 = sphi %s284, %s284
                %s300 = sphi %s279, %s279
              $region80: #{forward.10} parent=76 // loop_header_branch
                %297 = sbr.rel (%p295) target = $region84
              $region81: #{forward.10} parent=76 // loop_body
                %v301 = vld [vmem:[%s299] sm:%s292]
                %302 = vst [vmem:[%s300] sm:%s292] %v301
                %v303 = vld [vmem:[%s299 + $0x2] sm:%s292]
                %304 = vst [vmem:[%s300 + $0x1] sm:%s292] %v303
                %v305 = vld [vmem:[%s299 + $0x4] sm:%s292]
                %306 = vst [vmem:[%s300 + $0x2] sm:%s292] %v305
                %v307 = vld [vmem:[%s299 + $0x6] sm:%s292]
                %308 = vst [vmem:[%s300 + $0x3] sm:%s292] %v307
                %v309 = vld [vmem:[%s299 + $0x8] sm:%s292]
                %310 = vst [vmem:[%s300 + $0x4] sm:%s292] %v309
                %v311 = vld [vmem:[%s299 + $0xa] sm:%s292]
                %312 = vst [vmem:[%s300 + $0x5] sm:%s292] %v311
                %v313 = vld [vmem:[%s299 + $0xc] sm:%s292]
                %314 = vst [vmem:[%s300 + $0x6] sm:%s292] %v313
                %v315 = vld [vmem:[%s299 + $0xe] sm:%s292]
                %316 = vst [vmem:[%s300 + $0x7] sm:%s292] %v315
                %v317 = vld [vmem:[%s299 + $0x10] sm:%s292]
                %318 = vst [vmem:[%s300 + $0x8] sm:%s292] %v317
                %v319 = vld [vmem:[%s299 + $0x12] sm:%s292]
                %320 = vst [vmem:[%s300 + $0x9] sm:%s292] %v319
                %v321 = vld [vmem:[%s299 + $0x14] sm:%s292]
                %322 = vst [vmem:[%s300 + $0xa] sm:%s292] %v321
                %v323 = vld [vmem:[%s299 + $0x16] sm:%s292]
                %324 = vst [vmem:[%s300 + $0xb] sm:%s292] %v323
                %v325 = vld [vmem:[%s299 + $0x18] sm:%s292]
                %326 = vst [vmem:[%s300 + $0xc] sm:%s292] %v325
                %v327 = vld [vmem:[%s299 + $0x1a] sm:%s292]
                %328 = vst [vmem:[%s300 + $0xd] sm:%s292] %v327
                %v329 = vld [vmem:[%s299 + $0x1c] sm:%s292]
                %330 = vst [vmem:[%s300 + $0xe] sm:%s292] %v329
                %v331 = vld [vmem:[%s299 + $0x1e] sm:%s292]
                %332 = vst [vmem:[%s300 + $0xf] sm:%s292] %v331
              $region82: #{forward.10} parent=76 // loop_footer
                %s298 = sadd.s32 1, %s294
              $region83: #{forward.10} parent=76 // loop_footer_branch
                %293 = sbr.rel target = $region79
              $region84: #{forward.10} parent=76 // loop_exit
                _
            $region77: #{forward.10} parent=68 // pred_fallthru
              _
          $region69: #{forward.10} parent=64 // pred_fallthru
            _
          %385 = vnop
        $region65: #{forward.10} parent=19 // pred_fallthru
          _
      $region20: #{forward.10} parent=5 // pred_fallthru
        _
      %p386 = scmp.le.s32.totalorder 1, %s11
      %p387 = scmp.lt.s32.totalorder %s11, 3
      %p388 = pnand %p386, %p387
      %p389 = pneg %p388
      // Predicated region
      $region103: #{forward.10} parent=5 // pred_check
        _
      $region104: #{forward.10} parent=5 // pred_check_branch
        %391 = sbr.rel (%p388) target = $region106
      $region105: #{forward.10} parent=5 // pred_region
        %s392 = ssub.s32 %s11, 1
        %s393 = sand.u32 %s24, 1
        %s394 = sand.u32 %s24, 1
        %s395 = smul.addr %s394, 16
        %s396 = scalar_lea.vmem [#allocation4], %s395
        // Predicated region
        $region107: #{forward.10} parent=105 // pred_check
          %p397 = pneg %p37
        $region108: #{forward.10} parent=105 // pred_check_branch
          %399 = sbr.rel (%p397) target = $region110
        $region109: #{forward.10} parent=105 // pred_region
          _
        $region110: #{forward.10} parent=105 // pred_fallthru
          _
        %s400 = sand.u32 %s52, 1
        %s401 = sand.u32 %s52, 1
        %s402 = smul.addr %s401, 16
        %s403 = scalar_lea.vmem [#allocation5], %s402
        // Predicated region
        $region111: #{forward.10} parent=105 // pred_check
          %p404 = pneg %p65
        $region112: #{forward.10} parent=105 // pred_check_branch
          %406 = sbr.rel (%p404) target = $region114
        $region113: #{forward.10} parent=105 // pred_region
          _
        $region114: #{forward.10} parent=105 // pred_fallthru
          _
        %s407 = sand.u32 %s24, 1
        %s408 = sand.u32 %s24, 1
        %s409 = smul.addr %s408, 16
        %s410 = scalar_lea.vmem [#allocation4], %s409
        %p411 = pneg %p37
        %p412 = pneg %p34
        %s413 = sand.u32 %s52, 1
        %s414 = sand.u32 %s52, 1
        %s415 = smul.addr %s414, 16
        %s416 = scalar_lea.vmem [#allocation5], %s415
        %p417 = pneg %p65
        %p418 = pneg %p62
        %p419 = pneg %p86
        %p420 = pneg %p83
        %p421 = pneg %p112
        %p422 = pneg %p109
        %s423 = smul.u32 16, %s16
        %p424 = scmp.lt.s32.totalorder %s423, 31
        %s425 = scalar_select %p424, %s423, 31
        %s426 = smul.addr %s425, 2
        %s427 = scalar_lea.vmem %s3, %s426
        %p428 = pneg %p140
        %p429 = pneg %p137
        %s430 = ssub.s32 1, %s16
        %s431 = smul.u32 16, %s430
        %p432 = scmp.lt.s32.totalorder %s431, 31
        %s433 = scalar_select %p432, %s431, 31
        %s434 = smul.addr %s433, 2
        %s435 = scalar_lea.vmem %s4, %s434
        %s436 = smul.u32 16, %s16
        %s437 = ssub.s32 1, %s16
        %s438 = smul.u32 16, %s437
        %s439 = smul.u32 16, %s16
        %p440 = scmp.lt.s32.totalorder %s439, 31
        %s441 = scalar_select %p440, %s439, 31
        %s442 = smul.addr %s441, 2
        %s443 = scalar_lea.vmem %s3, %s442
        %s444 = smul.u32 16, %s16
        %s445 = ssub.s32 1, %s16
        %s446 = smul.u32 16, %s445
        %p447 = scmp.lt.s32.totalorder %s446, 31
        %s448 = scalar_select %p447, %s446, 31
        %s449 = smul.addr %s448, 2
        %s450 = scalar_lea.vmem %s4, %s449
        %s451 = ssub.s32 1, %s16
        %s452 = smul.u32 16, %s451
        %p454 = scmp.eq.s32.totalorder %s16, 0
        // Predicated region
        $region115: #{forward.10} parent=105 // pred_check
          %p455 = pneg %p454
        $region116: #{forward.10} parent=105 // pred_check_branch
          %457 = sbr.rel (%p455) target = $region118
        $region117: #{forward.10} parent=105 // pred_region
          %vm458 = vcmask 517120
          %459 = vst.msk [vmem:[#allocation2] sm:$0x3] %vm458, 0.0
          %460 = vst.msk [vmem:[#allocation3] sm:$0x3] %vm458, 0.0
        $region118: #{forward.10} parent=105 // pred_fallthru
          _
        %v461 = vld [vmem:[%s2] sm:$0xff]
        %v462 = vld [vmem:[%s2 + $0x8] sm:$0xff]
        %v463 = vld [vmem:[%s2 + $0x10] sm:$0xff]
        %v464 = vld [vmem:[%s2 + $0x18] sm:$0xff]
        %v465 = vld [vmem:[%s2 + $0x20] sm:$0xff]
        %v466 = vld [vmem:[%s2 + $0x28] sm:$0xff]
        %v467 = vld [vmem:[%s2 + $0x30] sm:$0xff]
        %v468 = vld [vmem:[%s2 + $0x38] sm:$0xff]
        %v469 = vld [vmem:[#allocation2] sm:$0x3]
        %v470 = vpack.c.bf16 %v469, %v469
        %v479 = vunpack.c.l.b16 %v461
        %v480 = vunpack.c.h.b16 %v461
        %v481 = vunpack.c.l.b16 %v462
        %v482 = vunpack.c.h.b16 %v462
        %v483 = vunpack.c.l.b16 %v463
        %v484 = vunpack.c.h.b16 %v463
        %v485 = vunpack.c.l.b16 %v464
        %v486 = vunpack.c.h.b16 %v464
        %v487 = vunpack.c.l.b16 %v465
        %v488 = vunpack.c.h.b16 %v465
        %v489 = vunpack.c.l.b16 %v466
        %v490 = vunpack.c.h.b16 %v466
        %v491 = vunpack.c.l.b16 %v467
        %v492 = vunpack.c.h.b16 %v467
        %v493 = vunpack.c.l.b16 %v468
        %v494 = vunpack.c.h.b16 %v468
        %v495 = vpack.c.b16 %v481, %v479
        %v496 = vpack.c.b16 %v482, %v480
        %v497 = vpack.c.b16 %v485, %v483
        %v498 = vpack.c.b16 %v486, %v484
        %v499 = vpack.c.b16 %v489, %v487
        %v500 = vpack.c.b16 %v490, %v488
        %v501 = vpack.c.b16 %v493, %v491
        %v502 = vpack.c.b16 %v494, %v492
        %vm511 = vcmask 523264
        %v513 = vsel %vm511, %v470, 0
        %515 = vmatprep.subr.bf16.mxu0 0
        %516 = vmatpush1.bf16.msra.mxu0 0
        %517 = vmatprep.subr.bf16.mxu0 0
        %518 = vmatpush1.bf16.msra.mxu0 0
        %519 = vmatprep.subr.bf16.mxu0 0
        %520 = vmatpush1.bf16.msra.mxu0 0
        %521 = vmatprep.subr.bf16.mxu0 0
        %522 = vmatpush1.bf16.msra.mxu0 0
        %523 = vmatprep.subr.bf16.mxu0 %v502
        %524 = vmatpush1.bf16.msra.mxu0 %v501
        %525 = vmatprep.subr.bf16.mxu0 %v500
        %526 = vmatpush1.bf16.msra.mxu0 %v499
        %527 = vmatprep.subr.bf16.mxu0 %v498
        %528 = vmatpush1.bf16.msra.mxu0 %v497
        %529 = vmatprep.subr.bf16.mxu0 %v496
        %530 = vmatpush1.bf16.msra.mxu0 %v495
        %531 = vmatprep.subr.bf16.mxu0 0
        %532 = vmatpush2.bf16.msra.mxu0 0
        %533 = vmatprep.subr.bf16.mxu0 0
        %534 = vmatpush2.bf16.msra.mxu0 0
        %535 = vmatprep.subr.bf16.mxu0 0
        %536 = vmatpush2.bf16.msra.mxu0 0
        %537 = vmatprep.subr.bf16.mxu0 0
        %538 = vmatpush2.bf16.msra.mxu0 0
        %539 = vmatprep.subr.bf16.mxu0 0
        %540 = vmatpush2.bf16.msra.mxu0 0
        %541 = vmatprep.subr.bf16.mxu0 0
        %542 = vmatpush2.bf16.msra.mxu0 0
        %543 = vmatprep.subr.bf16.mxu0 0
        %544 = vmatpush2.bf16.msra.mxu0 0
        %545 = vmatprep.subr.bf16.mxu0 0
        %546 = vmatpush2.bf16.msra.mxu0 0
        %547 = vmatprep.mubr.bf16.mxu0 0
        %548 = vmatmul.mubr.bf16.gmra.mxu0 %v513
        %v549 = vpop.f32.mrf.mxu0
        %v550 = vadd.f32 0.0, %v549
        %v551 = vpop.f32.mrf.mxu0
        %v552 = vadd.f32 0.0, %v551
        %v553 = vpop.f32.mrf.mxu0
        %v554 = vpop.f32.mrf.mxu0
        %555 = vdwg.mxu0
        %v556 = vld [vmem:[%s396] sm:$0x1]
        %v557 = vunpack.c.l.bf16 %v556
        %s558 = scalar_lea.vmem %s403, 15 [#allocation5]
        %v559 = vld [vmem:[%s558] sm:$0x1]
        %v560 = vunpack.c.l.bf16 %v559
        %v561 = vadd.f32 %v557, %v550
        %v562 = vld [vmem:[#allocation3] sm:$0x3]
        %v563 = vxor.u32 %v561, 2147483648
        %v564 = vmul.f32 %v563, 1.442695
        %v565 = vpow.pop %v564
        %v566 = vadd.f32 %v565, 1.0
        %v567 = vrcp.pop %v566
        %v568 = vmul.f32 1.0, %v567
        %v569 = vtanh.pop %v561
        %v572 = vunpack.c.l.s4 1983009808
        %v573 = vunpack.c.0.s8 %v572
        %v574 = vlaneseq
        %v575 = vshrl.u32 %v574, 7
        %v576 = vsub.s32 %v573, %v575
        %v577 = vrot.slane %v562, %v576
        %578 = vrot.lane.b32.xlu0 %v577, 32
        %v579 = vpop.permute.xlu0 %578
        %v581 = vmul.f32 %v568, %v579
        %583 = vrot.lane.b32.xlu0 %v569, 32
        %v584 = vpop.permute.xlu0 %583
        %v586 = vmul.f32 %v568, %v584
        %588 = vrot.lane.b32.xlu0 %v586, 32
        %v589 = vpop.permute.xlu0 %588
        %v591 = vadd.f32 %v581, %v589
        %v592 = vtanh.pop %v591
        %594 = vrot.lane.b32.xlu0 %v592, 32
        %v595 = vpop.permute.xlu0 %594
        %v597 = vmul.f32 %v568, %v595
        %v598 = vadd.f32 %v560, %v552
        %v599 = vxor.u32 %v598, 2147483648
        %v600 = vmul.f32 %v599, 1.442695
        %v601 = vpow.pop %v600
        %v602 = vadd.f32 %v601, 1.0
        %v603 = vrcp.pop %v602
        %v604 = vmul.f32 1.0, %v603
        %v605 = vtanh.pop %v598
        %v606 = vmul.f32 %v604, %v562
        %608 = vrot.lane.b32.xlu0 %v605, 32
        %v609 = vpop.permute.xlu0 %608
        %v611 = vmul.f32 %v604, %v609
        %613 = vrot.lane.b32.xlu0 %v611, 32
        %v614 = vpop.permute.xlu0 %613
        %v616 = vadd.f32 %v606, %v614
        %v617 = vtanh.pop %v616
        %619 = vrot.lane.b32.xlu0 %v617, 32
        %v620 = vpop.permute.xlu0 %619
        %v622 = vmul.f32 %v604, %v620
        %v625 = vunpack.c.l.s4 1983009808
        %v626 = vunpack.c.0.s8 %v625
        %v627 = vlaneseq
        %v628 = vshrl.u32 %v627, 7
        %v629 = vsub.s32 %v626, %v628
        %v630 = vrot.slane %v597, %v629
        %631 = vrot.lane.b32.xlu0 %v630, 64
        %v632 = vpop.permute.xlu0 %631
        %vm634 = vcmask 254976
        %635 = vst.msk [vmem:[#allocation2] sm:$0x3] %vm634, %v632
        %v638 = vunpack.c.l.s4 1983009808
        %v639 = vunpack.c.0.s8 %v638
        %v640 = vlaneseq
        %v641 = vshrl.u32 %v640, 7
        %v642 = vsub.s32 %v639, %v641
        %v643 = vrot.slane %v622, %v642
        %644 = vrot.lane.b32.xlu0 %v643, 96
        %v645 = vpop.permute.xlu0 %644
        %vm647 = vcmask 517376
        %648 = vst.msk [vmem:[#allocation2] sm:$0x3] %vm647, %v645
        %v651 = vunpack.c.l.s4 1983009808
        %v652 = vunpack.c.0.s8 %v651
        %v653 = vlaneseq
        %v654 = vshrl.u32 %v653, 7
        %v655 = vsub.s32 %v652, %v654
        %v656 = vrot.slane %v591, %v655
        %657 = vrot.lane.b32.xlu0 %v656, 96
        %v658 = vpop.permute.xlu0 %657
        %660 = vst.msk [vmem:[#allocation3] sm:$0x3] %vm634, %v658
        %661 = vst.msk [vmem:[#allocation3] sm:$0x3] %vm647, %v616
        %662 = vst.msk [vmem:[%s443] sm:$0x3] %vm634, %v632
        %663 = vrot.lane.b32.xlu0 %v643, 64
        %v664 = vpop.permute.xlu0 %663
        %s666 = scalar_lea.vmem %s450, 30
        %667 = vst.msk [vmem:[%s666] sm:$0x3] %vm634, %v664
        %v668 = vld [vmem:[#allocation2] sm:$0x3]
        %v669 = vpack.c.bf16 %v668, %v668
        %v671 = vsel %vm511, %v669, 0
        %673 = vmatprep.subr.bf16.mxu0 0
        %674 = vmatpush1.bf16.msra.mxu0 0
        %675 = vmatprep.subr.bf16.mxu0 0
        %676 = vmatpush1.bf16.msra.mxu0 0
        %677 = vmatprep.subr.bf16.mxu0 0
        %678 = vmatpush1.bf16.msra.mxu0 0
        %679 = vmatprep.subr.bf16.mxu0 0
        %680 = vmatpush1.bf16.msra.mxu0 0
        %681 = vmatprep.subr.bf16.mxu0 %v502
        %682 = vmatpush1.bf16.msra.mxu0 %v501
        %683 = vmatprep.subr.bf16.mxu0 %v500
        %684 = vmatpush1.bf16.msra.mxu0 %v499
        %685 = vmatprep.subr.bf16.mxu0 %v498
        %686 = vmatpush1.bf16.msra.mxu0 %v497
        %687 = vmatprep.subr.bf16.mxu0 %v496
        %688 = vmatpush1.bf16.msra.mxu0 %v495
        %689 = vmatprep.subr.bf16.mxu0 0
        %690 = vmatpush2.bf16.msra.mxu0 0
        %691 = vmatprep.subr.bf16.mxu0 0
        %692 = vmatpush2.bf16.msra.mxu0 0
        %693 = vmatprep.subr.bf16.mxu0 0
        %694 = vmatpush2.bf16.msra.mxu0 0
        %695 = vmatprep.subr.bf16.mxu0 0
        %696 = vmatpush2.bf16.msra.mxu0 0
        %697 = vmatprep.subr.bf16.mxu0 0
        %698 = vmatpush2.bf16.msra.mxu0 0
        %699 = vmatprep.subr.bf16.mxu0 0
        %700 = vmatpush2.bf16.msra.mxu0 0
        %701 = vmatprep.subr.bf16.mxu0 0
        %702 = vmatpush2.bf16.msra.mxu0 0
        %703 = vmatprep.subr.bf16.mxu0 0
        %704 = vmatpush2.bf16.msra.mxu0 0
        %705 = vmatprep.mubr.bf16.mxu0 0
        %706 = vmatmul.mubr.bf16.gmra.mxu0 %v671
        %v707 = vpop.f32.mrf.mxu0
        %v708 = vadd.f32 0.0, %v707
        %v709 = vpop.f32.mrf.mxu0
        %v710 = vadd.f32 0.0, %v709
        %v711 = vpop.f32.mrf.mxu0
        %v712 = vpop.f32.mrf.mxu0
        %713 = vdwg.mxu0
        %s714 = scalar_lea.vmem %s396, 1 [#allocation4]
        %v715 = vld [vmem:[%s714] sm:$0x1]
        %v716 = vunpack.c.l.bf16 %v715
        %s717 = scalar_lea.vmem %s403, 14 [#allocation5]
        %v718 = vld [vmem:[%s717] sm:$0x1]
        %v719 = vunpack.c.l.bf16 %v718
        %v720 = vadd.f32 %v716, %v708
        %v721 = vld [vmem:[#allocation3] sm:$0x3]
        %v722 = vxor.u32 %v720, 2147483648
        %v723 = vmul.f32 %v722, 1.442695
        %v724 = vpow.pop %v723
        %v725 = vadd.f32 %v724, 1.0
        %v726 = vrcp.pop %v725
        %v727 = vmul.f32 1.0, %v726
        %v728 = vtanh.pop %v720
        %v731 = vunpack.c.l.s4 1983009808
        %v732 = vunpack.c.0.s8 %v731
        %v733 = vlaneseq
        %v734 = vshrl.u32 %v733, 7
        %v735 = vsub.s32 %v732, %v734
        %v736 = vrot.slane %v721, %v735
        %737 = vrot.lane.b32.xlu0 %v736, 32
        %v738 = vpop.permute.xlu0 %737
        %v740 = vmul.f32 %v727, %v738
        %742 = vrot.lane.b32.xlu0 %v728, 32
        %v743 = vpop.permute.xlu0 %742
        %v745 = vmul.f32 %v727, %v743
        %747 = vrot.lane.b32.xlu0 %v745, 32
        %v748 = vpop.permute.xlu0 %747
        %v750 = vadd.f32 %v740, %v748
        %v751 = vtanh.pop %v750
        %753 = vrot.lane.b32.xlu0 %v751, 32
        %v754 = vpop.permute.xlu0 %753
        %v756 = vmul.f32 %v727, %v754
        %v757 = vadd.f32 %v719, %v710
        %v758 = vxor.u32 %v757, 2147483648
        %v759 = vmul.f32 %v758, 1.442695
        %v760 = vpow.pop %v759
        %v761 = vadd.f32 %v760, 1.0
        %v762 = vrcp.pop %v761
        %v763 = vmul.f32 1.0, %v762
        %v764 = vtanh.pop %v757
        %v765 = vmul.f32 %v763, %v721
        %767 = vrot.lane.b32.xlu0 %v764, 32
        %v768 = vpop.permute.xlu0 %767
        %v770 = vmul.f32 %v763, %v768
        %772 = vrot.lane.b32.xlu0 %v770, 32
        %v773 = vpop.permute.xlu0 %772
        %v775 = vadd.f32 %v765, %v773
        %v776 = vtanh.pop %v775
        %778 = vrot.lane.b32.xlu0 %v776, 32
        %v779 = vpop.permute.xlu0 %778
        %v781 = vmul.f32 %v763, %v779
        %v784 = vunpack.c.l.s4 1983009808
        %v785 = vunpack.c.0.s8 %v784
        %v786 = vlaneseq
        %v787 = vshrl.u32 %v786, 7
        %v788 = vsub.s32 %v785, %v787
        %v789 = vrot.slane %v756, %v788
        %790 = vrot.lane.b32.xlu0 %v789, 64
        %v791 = vpop.permute.xlu0 %790
        %793 = vst.msk [vmem:[#allocation2] sm:$0x3] %vm634, %v791
        %v796 = vunpack.c.l.s4 1983009808
        %v797 = vunpack.c.0.s8 %v796
        %v798 = vlaneseq
        %v799 = vshrl.u32 %v798, 7
        %v800 = vsub.s32 %v797, %v799
        %v801 = vrot.slane %v781, %v800
        %802 = vrot.lane.b32.xlu0 %v801, 96
        %v803 = vpop.permute.xlu0 %802
        %805 = vst.msk [vmem:[#allocation2] sm:$0x3] %vm647, %v803
        %v808 = vunpack.c.l.s4 1983009808
        %v809 = vunpack.c.0.s8 %v808
        %v810 = vlaneseq
        %v811 = vshrl.u32 %v810, 7
        %v812 = vsub.s32 %v809, %v811
        %v813 = vrot.slane %v750, %v812
        %814 = vrot.lane.b32.xlu0 %v813, 96
        %v815 = vpop.permute.xlu0 %814
        %817 = vst.msk [vmem:[#allocation3] sm:$0x3] %vm634, %v815
        %818 = vst.msk [vmem:[#allocation3] sm:$0x3] %vm647, %v775
        %s819 = scalar_lea.vmem %s443, 2
        %820 = vst.msk [vmem:[%s819] sm:$0x3] %vm634, %v791
        %821 = vrot.lane.b32.xlu0 %v801, 64
        %v822 = vpop.permute.xlu0 %821
        %s824 = scalar_lea.vmem %s450, 28
        %825 = vst.msk [vmem:[%s824] sm:$0x3] %vm634, %v822
        %v826 = vld [vmem:[#allocation2] sm:$0x3]
        %v827 = vpack.c.bf16 %v826, %v826
        %v829 = vsel %vm511, %v827, 0
        %831 = vmatprep.subr.bf16.mxu0 0
        %832 = vmatpush1.bf16.msra.mxu0 0
        %833 = vmatprep.subr.bf16.mxu0 0
        %834 = vmatpush1.bf16.msra.mxu0 0
        %835 = vmatprep.subr.bf16.mxu0 0
        %836 = vmatpush1.bf16.msra.mxu0 0
        %837 = vmatprep.subr.bf16.mxu0 0
        %838 = vmatpush1.bf16.msra.mxu0 0
        %839 = vmatprep.subr.bf16.mxu0 %v502
        %840 = vmatpush1.bf16.msra.mxu0 %v501
        %841 = vmatprep.subr.bf16.mxu0 %v500
        %842 = vmatpush1.bf16.msra.mxu0 %v499
        %843 = vmatprep.subr.bf16.mxu0 %v498
        %844 = vmatpush1.bf16.msra.mxu0 %v497
        %845 = vmatprep.subr.bf16.mxu0 %v496
        %846 = vmatpush1.bf16.msra.mxu0 %v495
        %847 = vmatprep.subr.bf16.mxu0 0
        %848 = vmatpush2.bf16.msra.mxu0 0
        %849 = vmatprep.subr.bf16.mxu0 0
        %850 = vmatpush2.bf16.msra.mxu0 0
        %851 = vmatprep.subr.bf16.mxu0 0
        %852 = vmatpush2.bf16.msra.mxu0 0
        %853 = vmatprep.subr.bf16.mxu0 0
        %854 = vmatpush2.bf16.msra.mxu0 0
        %855 = vmatprep.subr.bf16.mxu0 0
        %856 = vmatpush2.bf16.msra.mxu0 0
        %857 = vmatprep.subr.bf16.mxu0 0
        %858 = vmatpush2.bf16.msra.mxu0 0
        %859 = vmatprep.subr.bf16.mxu0 0
        %860 = vmatpush2.bf16.msra.mxu0 0
        %861 = vmatprep.subr.bf16.mxu0 0
        %862 = vmatpush2.bf16.msra.mxu0 0
        %863 = vmatprep.mubr.bf16.mxu0 0
        %864 = vmatmul.mubr.bf16.gmra.mxu0 %v829
        %v865 = vpop.f32.mrf.mxu0
        %v866 = vadd.f32 0.0, %v865
        %v867 = vpop.f32.mrf.mxu0
        %v868 = vadd.f32 0.0, %v867
        %v869 = vpop.f32.mrf.mxu0
        %v870 = vpop.f32.mrf.mxu0
        %871 = vdwg.mxu0
        %s872 = scalar_lea.vmem %s396, 2 [#allocation4]
        %v873 = vld [vmem:[%s872] sm:$0x1]
        %v874 = vunpack.c.l.bf16 %v873
        %s875 = scalar_lea.vmem %s403, 13 [#allocation5]
        %v876 = vld [vmem:[%s875] sm:$0x1]
        %v877 = vunpack.c.l.bf16 %v876
        %v878 = vadd.f32 %v874, %v866
        %v879 = vld [vmem:[#allocation3] sm:$0x3]
        %v880 = vxor.u32 %v878, 2147483648
        %v881 = vmul.f32 %v880, 1.442695
        %v882 = vpow.pop %v881
        %v883 = vadd.f32 %v882, 1.0
        %v884 = vrcp.pop %v883
        %v885 = vmul.f32 1.0, %v884
        %v886 = vtanh.pop %v878
        %v889 = vunpack.c.l.s4 1983009808
        %v890 = vunpack.c.0.s8 %v889
        %v891 = vlaneseq
        %v892 = vshrl.u32 %v891, 7
        %v893 = vsub.s32 %v890, %v892
        %v894 = vrot.slane %v879, %v893
        %895 = vrot.lane.b32.xlu0 %v894, 32
        %v896 = vpop.permute.xlu0 %895
        %v898 = vmul.f32 %v885, %v896
        %900 = vrot.lane.b32.xlu0 %v886, 32
        %v901 = vpop.permute.xlu0 %900
        %v903 = vmul.f32 %v885, %v901
        %905 = vrot.lane.b32.xlu0 %v903, 32
        %v906 = vpop.permute.xlu0 %905
        %v908 = vadd.f32 %v898, %v906
        %v909 = vtanh.pop %v908
        %911 = vrot.lane.b32.xlu0 %v909, 32
        %v912 = vpop.permute.xlu0 %911
        %v914 = vmul.f32 %v885, %v912
        %v915 = vadd.f32 %v877, %v868
        %v916 = vxor.u32 %v915, 2147483648
        %v917 = vmul.f32 %v916, 1.442695
        %v918 = vpow.pop %v917
        %v919 = vadd.f32 %v918, 1.0
        %v920 = vrcp.pop %v919
        %v921 = vmul.f32 1.0, %v920
        %v922 = vtanh.pop %v915
        %v923 = vmul.f32 %v921, %v879
        %925 = vrot.lane.b32.xlu0 %v922, 32
        %v926 = vpop.permute.xlu0 %925
        %v928 = vmul.f32 %v921, %v926
        %930 = vrot.lane.b32.xlu0 %v928, 32
        %v931 = vpop.permute.xlu0 %930
        %v933 = vadd.f32 %v923, %v931
        %v934 = vtanh.pop %v933
        %936 = vrot.lane.b32.xlu0 %v934, 32
        %v937 = vpop.permute.xlu0 %936
        %v939 = vmul.f32 %v921, %v937
        %v942 = vunpack.c.l.s4 1983009808
        %v943 = vunpack.c.0.s8 %v942
        %v944 = vlaneseq
        %v945 = vshrl.u32 %v944, 7
        %v946 = vsub.s32 %v943, %v945
        %v947 = vrot.slane %v914, %v946
        %948 = vrot.lane.b32.xlu0 %v947, 64
        %v949 = vpop.permute.xlu0 %948
        %951 = vst.msk [vmem:[#allocation2] sm:$0x3] %vm634, %v949
        %v954 = vunpack.c.l.s4 1983009808
        %v955 = vunpack.c.0.s8 %v954
        %v956 = vlaneseq
        %v957 = vshrl.u32 %v956, 7
        %v958 = vsub.s32 %v955, %v957
        %v959 = vrot.slane %v939, %v958
        %960 = vrot.lane.b32.xlu0 %v959, 96
        %v961 = vpop.permute.xlu0 %960
        %963 = vst.msk [vmem:[#allocation2] sm:$0x3] %vm647, %v961
        %v966 = vunpack.c.l.s4 1983009808
        %v967 = vunpack.c.0.s8 %v966
        %v968 = vlaneseq
        %v969 = vshrl.u32 %v968, 7
        %v970 = vsub.s32 %v967, %v969
        %v971 = vrot.slane %v908, %v970
        %972 = vrot.lane.b32.xlu0 %v971, 96
        %v973 = vpop.permute.xlu0 %972
        %975 = vst.msk [vmem:[#allocation3] sm:$0x3] %vm634, %v973
        %976 = vst.msk [vmem:[#allocation3] sm:$0x3] %vm647, %v933
        %s977 = scalar_lea.vmem %s443, 4
        %978 = vst.msk [vmem:[%s977] sm:$0x3] %vm634, %v949
        %979 = vrot.lane.b32.xlu0 %v959, 64
        %v980 = vpop.permute.xlu0 %979
        %s982 = scalar_lea.vmem %s450, 26
        %983 = vst.msk [vmem:[%s982] sm:$0x3] %vm634, %v980
        %v984 = vld [vmem:[#allocation2] sm:$0x3]
        %v985 = vpack.c.bf16 %v984, %v984
        %v987 = vsel %vm511, %v985, 0
        %989 = vmatprep.subr.bf16.mxu0 0
        %990 = vmatpush1.bf16.msra.mxu0 0
        %991 = vmatprep.subr.bf16.mxu0 0
        %992 = vmatpush1.bf16.msra.mxu0 0
        %993 = vmatprep.subr.bf16.mxu0 0
        %994 = vmatpush1.bf16.msra.mxu0 0
        %995 = vmatprep.subr.bf16.mxu0 0
        %996 = vmatpush1.bf16.msra.mxu0 0
        %997 = vmatprep.subr.bf16.mxu0 %v502
        %998 = vmatpush1.bf16.msra.mxu0 %v501
        %999 = vmatprep.subr.bf16.mxu0 %v500
        %1000 = vmatpush1.bf16.msra.mxu0 %v499
        %1001 = vmatprep.subr.bf16.mxu0 %v498
        %1002 = vmatpush1.bf16.msra.mxu0 %v497
        %1003 = vmatprep.subr.bf16.mxu0 %v496
        %1004 = vmatpush1.bf16.msra.mxu0 %v495
        %1005 = vmatprep.subr.bf16.mxu0 0
        %1006 = vmatpush2.bf16.msra.mxu0 0
        %1007 = vmatprep.subr.bf16.mxu0 0
        %1008 = vmatpush2.bf16.msra.mxu0 0
        %1009 = vmatprep.subr.bf16.mxu0 0
        %1010 = vmatpush2.bf16.msra.mxu0 0
        %1011 = vmatprep.subr.bf16.mxu0 0
        %1012 = vmatpush2.bf16.msra.mxu0 0
        %1013 = vmatprep.subr.bf16.mxu0 0
        %1014 = vmatpush2.bf16.msra.mxu0 0
        %1015 = vmatprep.subr.bf16.mxu0 0
        %1016 = vmatpush2.bf16.msra.mxu0 0
        %1017 = vmatprep.subr.bf16.mxu0 0
        %1018 = vmatpush2.bf16.msra.mxu0 0
        %1019 = vmatprep.subr.bf16.mxu0 0
        %1020 = vmatpush2.bf16.msra.mxu0 0
        %1021 = vmatprep.mubr.bf16.mxu0 0
        %1022 = vmatmul.mubr.bf16.gmra.mxu0 %v987
        %v1023 = vpop.f32.mrf.mxu0
        %v1024 = vadd.f32 0.0, %v1023
        %v1025 = vpop.f32.mrf.mxu0
        %v1026 = vadd.f32 0.0, %v1025
        %v1027 = vpop.f32.mrf.mxu0
        %v1028 = vpop.f32.mrf.mxu0
        %1029 = vdwg.mxu0
        %s1030 = scalar_lea.vmem %s396, 3 [#allocation4]
        %v1031 = vld [vmem:[%s1030] sm:$0x1]
        %v1032 = vunpack.c.l.bf16 %v1031
        %s1033 = scalar_lea.vmem %s403, 12 [#allocation5]
        %v1034 = vld [vmem:[%s1033] sm:$0x1]
        %v1035 = vunpack.c.l.bf16 %v1034
        %v1036 = vadd.f32 %v1032, %v1024
        %v1037 = vld [vmem:[#allocation3] sm:$0x3]
        %v1038 = vxor.u32 %v1036, 2147483648
        %v1039 = vmul.f32 %v1038, 1.442695
        %v1040 = vpow.pop %v1039
        %v1041 = vadd.f32 %v1040, 1.0
        %v1042 = vrcp.pop %v1041
        %v1043 = vmul.f32 1.0, %v1042
        %v1044 = vtanh.pop %v1036
        %v1047 = vunpack.c.l.s4 1983009808
        %v1048 = vunpack.c.0.s8 %v1047
        %v1049 = vlaneseq
        %v1050 = vshrl.u32 %v1049, 7
        %v1051 = vsub.s32 %v1048, %v1050
        %v1052 = vrot.slane %v1037, %v1051
        %1053 = vrot.lane.b32.xlu0 %v1052, 32
        %v1054 = vpop.permute.xlu0 %1053
        %v1056 = vmul.f32 %v1043, %v1054
        %1058 = vrot.lane.b32.xlu0 %v1044, 32
        %v1059 = vpop.permute.xlu0 %1058
        %v1061 = vmul.f32 %v1043, %v1059
        %1063 = vrot.lane.b32.xlu0 %v1061, 32
        %v1064 = vpop.permute.xlu0 %1063
        %v1066 = vadd.f32 %v1056, %v1064
        %v1067 = vtanh.pop %v1066
        %1069 = vrot.lane.b32.xlu0 %v1067, 32
        %v1070 = vpop.permute.xlu0 %1069
        %v1072 = vmul.f32 %v1043, %v1070
        %v1073 = vadd.f32 %v1035, %v1026
        %v1074 = vxor.u32 %v1073, 2147483648
        %v1075 = vmul.f32 %v1074, 1.442695
        %v1076 = vpow.pop %v1075
        %v1077 = vadd.f32 %v1076, 1.0
        %v1078 = vrcp.pop %v1077
        %v1079 = vmul.f32 1.0, %v1078
        %v1080 = vtanh.pop %v1073
        %v1081 = vmul.f32 %v1079, %v1037
        %1083 = vrot.lane.b32.xlu0 %v1080, 32
        %v1084 = vpop.permute.xlu0 %1083
        %v1086 = vmul.f32 %v1079, %v1084
        %1088 = vrot.lane.b32.xlu0 %v1086, 32
        %v1089 = vpop.permute.xlu0 %1088
        %v1091 = vadd.f32 %v1081, %v1089
        %v1092 = vtanh.pop %v1091
        %1094 = vrot.lane.b32.xlu0 %v1092, 32
        %v1095 = vpop.permute.xlu0 %1094
        %v1097 = vmul.f32 %v1079, %v1095
        %v1100 = vunpack.c.l.s4 1983009808
        %v1101 = vunpack.c.0.s8 %v1100
        %v1102 = vlaneseq
        %v1103 = vshrl.u32 %v1102, 7
        %v1104 = vsub.s32 %v1101, %v1103
        %v1105 = vrot.slane %v1072, %v1104
        %1106 = vrot.lane.b32.xlu0 %v1105, 64
        %v1107 = vpop.permute.xlu0 %1106
        %1109 = vst.msk [vmem:[#allocation2] sm:$0x3] %vm634, %v1107
        %v1112 = vunpack.c.l.s4 1983009808
        %v1113 = vunpack.c.0.s8 %v1112
        %v1114 = vlaneseq
        %v1115 = vshrl.u32 %v1114, 7
        %v1116 = vsub.s32 %v1113, %v1115
        %v1117 = vrot.slane %v1097, %v1116
        %1118 = vrot.lane.b32.xlu0 %v1117, 96
        %v1119 = vpop.permute.xlu0 %1118
        %1121 = vst.msk [vmem:[#allocation2] sm:$0x3] %vm647, %v1119
        %v1124 = vunpack.c.l.s4 1983009808
        %v1125 = vunpack.c.0.s8 %v1124
        %v1126 = vlaneseq
        %v1127 = vshrl.u32 %v1126, 7
        %v1128 = vsub.s32 %v1125, %v1127
        %v1129 = vrot.slane %v1066, %v1128
        %1130 = vrot.lane.b32.xlu0 %v1129, 96
        %v1131 = vpop.permute.xlu0 %1130
        %1133 = vst.msk [vmem:[#allocation3] sm:$0x3] %vm634, %v1131
        %1134 = vst.msk [vmem:[#allocation3] sm:$0x3] %vm647, %v1091
        %s1135 = scalar_lea.vmem %s443, 6
        %1136 = vst.msk [vmem:[%s1135] sm:$0x3] %vm634, %v1107
        %1137 = vrot.lane.b32.xlu0 %v1117, 64
        %v1138 = vpop.permute.xlu0 %1137
        %s1140 = scalar_lea.vmem %s450, 24
        %1141 = vst.msk [vmem:[%s1140] sm:$0x3] %vm634, %v1138
        %v1142 = vld [vmem:[#allocation2] sm:$0x3]
        %v1143 = vpack.c.bf16 %v1142, %v1142
        %v1145 = vsel %vm511, %v1143, 0
        %1147 = vmatprep.subr.bf16.mxu0 0
        %1148 = vmatpush1.bf16.msra.mxu0 0
        %1149 = vmatprep.subr.bf16.mxu0 0
        %1150 = vmatpush1.bf16.msra.mxu0 0
        %1151 = vmatprep.subr.bf16.mxu0 0
        %1152 = vmatpush1.bf16.msra.mxu0 0
        %1153 = vmatprep.subr.bf16.mxu0 0
        %1154 = vmatpush1.bf16.msra.mxu0 0
        %1155 = vmatprep.subr.bf16.mxu0 %v502
        %1156 = vmatpush1.bf16.msra.mxu0 %v501
        %1157 = vmatprep.subr.bf16.mxu0 %v500
        %1158 = vmatpush1.bf16.msra.mxu0 %v499
        %1159 = vmatprep.subr.bf16.mxu0 %v498
        %1160 = vmatpush1.bf16.msra.mxu0 %v497
        %1161 = vmatprep.subr.bf16.mxu0 %v496
        %1162 = vmatpush1.bf16.msra.mxu0 %v495
        %1163 = vmatprep.subr.bf16.mxu0 0
        %1164 = vmatpush2.bf16.msra.mxu0 0
        %1165 = vmatprep.subr.bf16.mxu0 0
        %1166 = vmatpush2.bf16.msra.mxu0 0
        %1167 = vmatprep.subr.bf16.mxu0 0
        %1168 = vmatpush2.bf16.msra.mxu0 0
        %1169 = vmatprep.subr.bf16.mxu0 0
        %1170 = vmatpush2.bf16.msra.mxu0 0
        %1171 = vmatprep.subr.bf16.mxu0 0
        %1172 = vmatpush2.bf16.msra.mxu0 0
        %1173 = vmatprep.subr.bf16.mxu0 0
        %1174 = vmatpush2.bf16.msra.mxu0 0
        %1175 = vmatprep.subr.bf16.mxu0 0
        %1176 = vmatpush2.bf16.msra.mxu0 0
        %1177 = vmatprep.subr.bf16.mxu0 0
        %1178 = vmatpush2.bf16.msra.mxu0 0
        %1179 = vmatprep.mubr.bf16.mxu0 0
        %1180 = vmatmul.mubr.bf16.gmra.mxu0 %v1145
        %v1181 = vpop.f32.mrf.mxu0
        %v1182 = vadd.f32 0.0, %v1181
        %v1183 = vpop.f32.mrf.mxu0
        %v1184 = vadd.f32 0.0, %v1183
        %v1185 = vpop.f32.mrf.mxu0
        %v1186 = vpop.f32.mrf.mxu0
        %1187 = vdwg.mxu0
        %s1188 = scalar_lea.vmem %s396, 4 [#allocation4]
        %v1189 = vld [vmem:[%s1188] sm:$0x1]
        %v1190 = vunpack.c.l.bf16 %v1189
        %s1191 = scalar_lea.vmem %s403, 11 [#allocation5]
        %v1192 = vld [vmem:[%s1191] sm:$0x1]
        %v1193 = vunpack.c.l.bf16 %v1192
        %v1194 = vadd.f32 %v1190, %v1182
        %v1195 = vld [vmem:[#allocation3] sm:$0x3]
        %v1196 = vxor.u32 %v1194, 2147483648
        %v1197 = vmul.f32 %v1196, 1.442695
        %v1198 = vpow.pop %v1197
        %v1199 = vadd.f32 %v1198, 1.0
        %v1200 = vrcp.pop %v1199
        %v1201 = vmul.f32 1.0, %v1200
        %v1202 = vtanh.pop %v1194
        %v1205 = vunpack.c.l.s4 1983009808
        %v1206 = vunpack.c.0.s8 %v1205
        %v1207 = vlaneseq
        %v1208 = vshrl.u32 %v1207, 7
        %v1209 = vsub.s32 %v1206, %v1208
        %v1210 = vrot.slane %v1195, %v1209
        %1211 = vrot.lane.b32.xlu0 %v1210, 32
        %v1212 = vpop.permute.xlu0 %1211
        %v1214 = vmul.f32 %v1201, %v1212
        %1216 = vrot.lane.b32.xlu0 %v1202, 32
        %v1217 = vpop.permute.xlu0 %1216
        %v1219 = vmul.f32 %v1201, %v1217
        %1221 = vrot.lane.b32.xlu0 %v1219, 32
        %v1222 = vpop.permute.xlu0 %1221
        %v1224 = vadd.f32 %v1214, %v1222
        %v1225 = vtanh.pop %v1224
        %1227 = vrot.lane.b32.xlu0 %v1225, 32
        %v1228 = vpop.permute.xlu0 %1227
        %v1230 = vmul.f32 %v1201, %v1228
        %v1231 = vadd.f32 %v1193, %v1184
        %v1232 = vxor.u32 %v1231, 2147483648
        %v1233 = vmul.f32 %v1232, 1.442695
        %v1234 = vpow.pop %v1233
        %v1235 = vadd.f32 %v1234, 1.0
        %v1236 = vrcp.pop %v1235
        %v1237 = vmul.f32 1.0, %v1236
        %v1238 = vtanh.pop %v1231
        %v1239 = vmul.f32 %v1237, %v1195
        %1241 = vrot.lane.b32.xlu0 %v1238, 32
        %v1242 = vpop.permute.xlu0 %1241
        %v1244 = vmul.f32 %v1237, %v1242
        %1246 = vrot.lane.b32.xlu0 %v1244, 32
        %v1247 = vpop.permute.xlu0 %1246
        %v1249 = vadd.f32 %v1239, %v1247
        %v1250 = vtanh.pop %v1249
        %1252 = vrot.lane.b32.xlu0 %v1250, 32
        %v1253 = vpop.permute.xlu0 %1252
        %v1255 = vmul.f32 %v1237, %v1253
        %v1258 = vunpack.c.l.s4 1983009808
        %v1259 = vunpack.c.0.s8 %v1258
        %v1260 = vlaneseq
        %v1261 = vshrl.u32 %v1260, 7
        %v1262 = vsub.s32 %v1259, %v1261
        %v1263 = vrot.slane %v1230, %v1262
        %1264 = vrot.lane.b32.xlu0 %v1263, 64
        %v1265 = vpop.permute.xlu0 %1264
        %1267 = vst.msk [vmem:[#allocation2] sm:$0x3] %vm634, %v1265
        %v1270 = vunpack.c.l.s4 1983009808
        %v1271 = vunpack.c.0.s8 %v1270
        %v1272 = vlaneseq
        %v1273 = vshrl.u32 %v1272, 7
        %v1274 = vsub.s32 %v1271, %v1273
        %v1275 = vrot.slane %v1255, %v1274
        %1276 = vrot.lane.b32.xlu0 %v1275, 96
        %v1277 = vpop.permute.xlu0 %1276
        %1279 = vst.msk [vmem:[#allocation2] sm:$0x3] %vm647, %v1277
        %v1282 = vunpack.c.l.s4 1983009808
        %v1283 = vunpack.c.0.s8 %v1282
        %v1284 = vlaneseq
        %v1285 = vshrl.u32 %v1284, 7
        %v1286 = vsub.s32 %v1283, %v1285
        %v1287 = vrot.slane %v1224, %v1286
        %1288 = vrot.lane.b32.xlu0 %v1287, 96
        %v1289 = vpop.permute.xlu0 %1288
        %1291 = vst.msk [vmem:[#allocation3] sm:$0x3] %vm634, %v1289
        %1292 = vst.msk [vmem:[#allocation3] sm:$0x3] %vm647, %v1249
        %s1293 = scalar_lea.vmem %s443, 8
        %1294 = vst.msk [vmem:[%s1293] sm:$0x3] %vm634, %v1265
        %1295 = vrot.lane.b32.xlu0 %v1275, 64
        %v1296 = vpop.permute.xlu0 %1295
        %s1298 = scalar_lea.vmem %s450, 22
        %1299 = vst.msk [vmem:[%s1298] sm:$0x3] %vm634, %v1296
        %v1300 = vld [vmem:[#allocation2] sm:$0x3]
        %v1301 = vpack.c.bf16 %v1300, %v1300
        %v1303 = vsel %vm511, %v1301, 0
        %1305 = vmatprep.subr.bf16.mxu0 0
        %1306 = vmatpush1.bf16.msra.mxu0 0
        %1307 = vmatprep.subr.bf16.mxu0 0
        %1308 = vmatpush1.bf16.msra.mxu0 0
        %1309 = vmatprep.subr.bf16.mxu0 0
        %1310 = vmatpush1.bf16.msra.mxu0 0
        %1311 = vmatprep.subr.bf16.mxu0 0
        %1312 = vmatpush1.bf16.msra.mxu0 0
        %1313 = vmatprep.subr.bf16.mxu0 %v502
        %1314 = vmatpush1.bf16.msra.mxu0 %v501
        %1315 = vmatprep.subr.bf16.mxu0 %v500
        %1316 = vmatpush1.bf16.msra.mxu0 %v499
        %1317 = vmatprep.subr.bf16.mxu0 %v498
        %1318 = vmatpush1.bf16.msra.mxu0 %v497
        %1319 = vmatprep.subr.bf16.mxu0 %v496
        %1320 = vmatpush1.bf16.msra.mxu0 %v495
        %1321 = vmatprep.subr.bf16.mxu0 0
        %1322 = vmatpush2.bf16.msra.mxu0 0
        %1323 = vmatprep.subr.bf16.mxu0 0
        %1324 = vmatpush2.bf16.msra.mxu0 0
        %1325 = vmatprep.subr.bf16.mxu0 0
        %1326 = vmatpush2.bf16.msra.mxu0 0
        %1327 = vmatprep.subr.bf16.mxu0 0
        %1328 = vmatpush2.bf16.msra.mxu0 0
        %1329 = vmatprep.subr.bf16.mxu0 0
        %1330 = vmatpush2.bf16.msra.mxu0 0
        %1331 = vmatprep.subr.bf16.mxu0 0
        %1332 = vmatpush2.bf16.msra.mxu0 0
        %1333 = vmatprep.subr.bf16.mxu0 0
        %1334 = vmatpush2.bf16.msra.mxu0 0
        %1335 = vmatprep.subr.bf16.mxu0 0
        %1336 = vmatpush2.bf16.msra.mxu0 0
        %1337 = vmatprep.mubr.bf16.mxu0 0
        %1338 = vmatmul.mubr.bf16.gmra.mxu0 %v1303
        %v1339 = vpop.f32.mrf.mxu0
        %v1340 = vadd.f32 0.0, %v1339
        %v1341 = vpop.f32.mrf.mxu0
        %v1342 = vadd.f32 0.0, %v1341
        %v1343 = vpop.f32.mrf.mxu0
        %v1344 = vpop.f32.mrf.mxu0
        %1345 = vdwg.mxu0
        %s1346 = scalar_lea.vmem %s396, 5 [#allocation4]
        %v1347 = vld [vmem:[%s1346] sm:$0x1]
        %v1348 = vunpack.c.l.bf16 %v1347
        %s1349 = scalar_lea.vmem %s403, 10 [#allocation5]
        %v1350 = vld [vmem:[%s1349] sm:$0x1]
        %v1351 = vunpack.c.l.bf16 %v1350
        %v1352 = vadd.f32 %v1348, %v1340
        %v1353 = vld [vmem:[#allocation3] sm:$0x3]
        %v1354 = vxor.u32 %v1352, 2147483648
        %v1355 = vmul.f32 %v1354, 1.442695
        %v1356 = vpow.pop %v1355
        %v1357 = vadd.f32 %v1356, 1.0
        %v1358 = vrcp.pop %v1357
        %v1359 = vmul.f32 1.0, %v1358
        %v1360 = vtanh.pop %v1352
        %v1363 = vunpack.c.l.s4 1983009808
        %v1364 = vunpack.c.0.s8 %v1363
        %v1365 = vlaneseq
        %v1366 = vshrl.u32 %v1365, 7
        %v1367 = vsub.s32 %v1364, %v1366
        %v1368 = vrot.slane %v1353, %v1367
        %1369 = vrot.lane.b32.xlu0 %v1368, 32
        %v1370 = vpop.permute.xlu0 %1369
        %v1372 = vmul.f32 %v1359, %v1370
        %1374 = vrot.lane.b32.xlu0 %v1360, 32
        %v1375 = vpop.permute.xlu0 %1374
        %v1377 = vmul.f32 %v1359, %v1375
        %1379 = vrot.lane.b32.xlu0 %v1377, 32
        %v1380 = vpop.permute.xlu0 %1379
        %v1382 = vadd.f32 %v1372, %v1380
        %v1383 = vtanh.pop %v1382
        %1385 = vrot.lane.b32.xlu0 %v1383, 32
        %v1386 = vpop.permute.xlu0 %1385
        %v1388 = vmul.f32 %v1359, %v1386
        %v1389 = vadd.f32 %v1351, %v1342
        %v1390 = vxor.u32 %v1389, 2147483648
        %v1391 = vmul.f32 %v1390, 1.442695
        %v1392 = vpow.pop %v1391
        %v1393 = vadd.f32 %v1392, 1.0
        %v1394 = vrcp.pop %v1393
        %v1395 = vmul.f32 1.0, %v1394
        %v1396 = vtanh.pop %v1389
        %v1397 = vmul.f32 %v1395, %v1353
        %1399 = vrot.lane.b32.xlu0 %v1396, 32
        %v1400 = vpop.permute.xlu0 %1399
        %v1402 = vmul.f32 %v1395, %v1400
        %1404 = vrot.lane.b32.xlu0 %v1402, 32
        %v1405 = vpop.permute.xlu0 %1404
        %v1407 = vadd.f32 %v1397, %v1405
        %v1408 = vtanh.pop %v1407
        %1410 = vrot.lane.b32.xlu0 %v1408, 32
        %v1411 = vpop.permute.xlu0 %1410
        %v1413 = vmul.f32 %v1395, %v1411
        %v1416 = vunpack.c.l.s4 1983009808
        %v1417 = vunpack.c.0.s8 %v1416
        %v1418 = vlaneseq
        %v1419 = vshrl.u32 %v1418, 7
        %v1420 = vsub.s32 %v1417, %v1419
        %v1421 = vrot.slane %v1388, %v1420
        %1422 = vrot.lane.b32.xlu0 %v1421, 64
        %v1423 = vpop.permute.xlu0 %1422
        %1425 = vst.msk [vmem:[#allocation2] sm:$0x3] %vm634, %v1423
        %v1428 = vunpack.c.l.s4 1983009808
        %v1429 = vunpack.c.0.s8 %v1428
        %v1430 = vlaneseq
        %v1431 = vshrl.u32 %v1430, 7
        %v1432 = vsub.s32 %v1429, %v1431
        %v1433 = vrot.slane %v1413, %v1432
        %1434 = vrot.lane.b32.xlu0 %v1433, 96
        %v1435 = vpop.permute.xlu0 %1434
        %1437 = vst.msk [vmem:[#allocation2] sm:$0x3] %vm647, %v1435
        %v1440 = vunpack.c.l.s4 1983009808
        %v1441 = vunpack.c.0.s8 %v1440
        %v1442 = vlaneseq
        %v1443 = vshrl.u32 %v1442, 7
        %v1444 = vsub.s32 %v1441, %v1443
        %v1445 = vrot.slane %v1382, %v1444
        %1446 = vrot.lane.b32.xlu0 %v1445, 96
        %v1447 = vpop.permute.xlu0 %1446
        %1449 = vst.msk [vmem:[#allocation3] sm:$0x3] %vm634, %v1447
        %1450 = vst.msk [vmem:[#allocation3] sm:$0x3] %vm647, %v1407
        %s1451 = scalar_lea.vmem %s443, 10
        %1452 = vst.msk [vmem:[%s1451] sm:$0x3] %vm634, %v1423
        %1453 = vrot.lane.b32.xlu0 %v1433, 64
        %v1454 = vpop.permute.xlu0 %1453
        %s1456 = scalar_lea.vmem %s450, 20
        %1457 = vst.msk [vmem:[%s1456] sm:$0x3] %vm634, %v1454
        %v1458 = vld [vmem:[#allocation2] sm:$0x3]
        %v1459 = vpack.c.bf16 %v1458, %v1458
        %v1461 = vsel %vm511, %v1459, 0
        %1463 = vmatprep.subr.bf16.mxu0 0
        %1464 = vmatpush1.bf16.msra.mxu0 0
        %1465 = vmatprep.subr.bf16.mxu0 0
        %1466 = vmatpush1.bf16.msra.mxu0 0
        %1467 = vmatprep.subr.bf16.mxu0 0
        %1468 = vmatpush1.bf16.msra.mxu0 0
        %1469 = vmatprep.subr.bf16.mxu0 0
        %1470 = vmatpush1.bf16.msra.mxu0 0
        %1471 = vmatprep.subr.bf16.mxu0 %v502
        %1472 = vmatpush1.bf16.msra.mxu0 %v501
        %1473 = vmatprep.subr.bf16.mxu0 %v500
        %1474 = vmatpush1.bf16.msra.mxu0 %v499
        %1475 = vmatprep.subr.bf16.mxu0 %v498
        %1476 = vmatpush1.bf16.msra.mxu0 %v497
        %1477 = vmatprep.subr.bf16.mxu0 %v496
        %1478 = vmatpush1.bf16.msra.mxu0 %v495
        %1479 = vmatprep.subr.bf16.mxu0 0
        %1480 = vmatpush2.bf16.msra.mxu0 0
        %1481 = vmatprep.subr.bf16.mxu0 0
        %1482 = vmatpush2.bf16.msra.mxu0 0
        %1483 = vmatprep.subr.bf16.mxu0 0
        %1484 = vmatpush2.bf16.msra.mxu0 0
        %1485 = vmatprep.subr.bf16.mxu0 0
        %1486 = vmatpush2.bf16.msra.mxu0 0
        %1487 = vmatprep.subr.bf16.mxu0 0
        %1488 = vmatpush2.bf16.msra.mxu0 0
        %1489 = vmatprep.subr.bf16.mxu0 0
        %1490 = vmatpush2.bf16.msra.mxu0 0
        %1491 = vmatprep.subr.bf16.mxu0 0
        %1492 = vmatpush2.bf16.msra.mxu0 0
        %1493 = vmatprep.subr.bf16.mxu0 0
        %1494 = vmatpush2.bf16.msra.mxu0 0
        %1495 = vmatprep.mubr.bf16.mxu0 0
        %1496 = vmatmul.mubr.bf16.gmra.mxu0 %v1461
        %v1497 = vpop.f32.mrf.mxu0
        %v1498 = vadd.f32 0.0, %v1497
        %v1499 = vpop.f32.mrf.mxu0
        %v1500 = vadd.f32 0.0, %v1499
        %v1501 = vpop.f32.mrf.mxu0
        %v1502 = vpop.f32.mrf.mxu0
        %1503 = vdwg.mxu0
        %s1504 = scalar_lea.vmem %s396, 6 [#allocation4]
        %v1505 = vld [vmem:[%s1504] sm:$0x1]
        %v1506 = vunpack.c.l.bf16 %v1505
        %s1507 = scalar_lea.vmem %s403, 9 [#allocation5]
        %v1508 = vld [vmem:[%s1507] sm:$0x1]
        %v1509 = vunpack.c.l.bf16 %v1508
        %v1510 = vadd.f32 %v1506, %v1498
        %v1511 = vld [vmem:[#allocation3] sm:$0x3]
        %v1512 = vxor.u32 %v1510, 2147483648
        %v1513 = vmul.f32 %v1512, 1.442695
        %v1514 = vpow.pop %v1513
        %v1515 = vadd.f32 %v1514, 1.0
        %v1516 = vrcp.pop %v1515
        %v1517 = vmul.f32 1.0, %v1516
        %v1518 = vtanh.pop %v1510
        %v1521 = vunpack.c.l.s4 1983009808
        %v1522 = vunpack.c.0.s8 %v1521
        %v1523 = vlaneseq
        %v1524 = vshrl.u32 %v1523, 7
        %v1525 = vsub.s32 %v1522, %v1524
        %v1526 = vrot.slane %v1511, %v1525
        %1527 = vrot.lane.b32.xlu0 %v1526, 32
        %v1528 = vpop.permute.xlu0 %1527
        %v1530 = vmul.f32 %v1517, %v1528
        %1532 = vrot.lane.b32.xlu0 %v1518, 32
        %v1533 = vpop.permute.xlu0 %1532
        %v1535 = vmul.f32 %v1517, %v1533
        %1537 = vrot.lane.b32.xlu0 %v1535, 32
        %v1538 = vpop.permute.xlu0 %1537
        %v1540 = vadd.f32 %v1530, %v1538
        %v1541 = vtanh.pop %v1540
        %1543 = vrot.lane.b32.xlu0 %v1541, 32
        %v1544 = vpop.permute.xlu0 %1543
        %v1546 = vmul.f32 %v1517, %v1544
        %v1547 = vadd.f32 %v1509, %v1500
        %v1548 = vxor.u32 %v1547, 2147483648
        %v1549 = vmul.f32 %v1548, 1.442695
        %v1550 = vpow.pop %v1549
        %v1551 = vadd.f32 %v1550, 1.0
        %v1552 = vrcp.pop %v1551
        %v1553 = vmul.f32 1.0, %v1552
        %v1554 = vtanh.pop %v1547
        %v1555 = vmul.f32 %v1553, %v1511
        %1557 = vrot.lane.b32.xlu0 %v1554, 32
        %v1558 = vpop.permute.xlu0 %1557
        %v1560 = vmul.f32 %v1553, %v1558
        %1562 = vrot.lane.b32.xlu0 %v1560, 32
        %v1563 = vpop.permute.xlu0 %1562
        %v1565 = vadd.f32 %v1555, %v1563
        %v1566 = vtanh.pop %v1565
        %1568 = vrot.lane.b32.xlu0 %v1566, 32
        %v1569 = vpop.permute.xlu0 %1568
        %v1571 = vmul.f32 %v1553, %v1569
        %v1574 = vunpack.c.l.s4 1983009808
        %v1575 = vunpack.c.0.s8 %v1574
        %v1576 = vlaneseq
        %v1577 = vshrl.u32 %v1576, 7
        %v1578 = vsub.s32 %v1575, %v1577
        %v1579 = vrot.slane %v1546, %v1578
        %1580 = vrot.lane.b32.xlu0 %v1579, 64
        %v1581 = vpop.permute.xlu0 %1580
        %1583 = vst.msk [vmem:[#allocation2] sm:$0x3] %vm634, %v1581
        %v1586 = vunpack.c.l.s4 1983009808
        %v1587 = vunpack.c.0.s8 %v1586
        %v1588 = vlaneseq
        %v1589 = vshrl.u32 %v1588, 7
        %v1590 = vsub.s32 %v1587, %v1589
        %v1591 = vrot.slane %v1571, %v1590
        %1592 = vrot.lane.b32.xlu0 %v1591, 96
        %v1593 = vpop.permute.xlu0 %1592
        %1595 = vst.msk [vmem:[#allocation2] sm:$0x3] %vm647, %v1593
        %v1598 = vunpack.c.l.s4 1983009808
        %v1599 = vunpack.c.0.s8 %v1598
        %v1600 = vlaneseq
        %v1601 = vshrl.u32 %v1600, 7
        %v1602 = vsub.s32 %v1599, %v1601
        %v1603 = vrot.slane %v1540, %v1602
        %1604 = vrot.lane.b32.xlu0 %v1603, 96
        %v1605 = vpop.permute.xlu0 %1604
        %1607 = vst.msk [vmem:[#allocation3] sm:$0x3] %vm634, %v1605
        %1608 = vst.msk [vmem:[#allocation3] sm:$0x3] %vm647, %v1565
        %s1609 = scalar_lea.vmem %s443, 12
        %1610 = vst.msk [vmem:[%s1609] sm:$0x3] %vm634, %v1581
        %1611 = vrot.lane.b32.xlu0 %v1591, 64
        %v1612 = vpop.permute.xlu0 %1611
        %s1614 = scalar_lea.vmem %s450, 18
        %1615 = vst.msk [vmem:[%s1614] sm:$0x3] %vm634, %v1612
        %v1616 = vld [vmem:[#allocation2] sm:$0x3]
        %v1617 = vpack.c.bf16 %v1616, %v1616
        %v1619 = vsel %vm511, %v1617, 0
        %1621 = vmatprep.subr.bf16.mxu0 0
        %1622 = vmatpush1.bf16.msra.mxu0 0
        %1623 = vmatprep.subr.bf16.mxu0 0
        %1624 = vmatpush1.bf16.msra.mxu0 0
        %1625 = vmatprep.subr.bf16.mxu0 0
        %1626 = vmatpush1.bf16.msra.mxu0 0
        %1627 = vmatprep.subr.bf16.mxu0 0
        %1628 = vmatpush1.bf16.msra.mxu0 0
        %1629 = vmatprep.subr.bf16.mxu0 %v502
        %1630 = vmatpush1.bf16.msra.mxu0 %v501
        %1631 = vmatprep.subr.bf16.mxu0 %v500
        %1632 = vmatpush1.bf16.msra.mxu0 %v499
        %1633 = vmatprep.subr.bf16.mxu0 %v498
        %1634 = vmatpush1.bf16.msra.mxu0 %v497
        %1635 = vmatprep.subr.bf16.mxu0 %v496
        %1636 = vmatpush1.bf16.msra.mxu0 %v495
        %1637 = vmatprep.subr.bf16.mxu0 0
        %1638 = vmatpush2.bf16.msra.mxu0 0
        %1639 = vmatprep.subr.bf16.mxu0 0
        %1640 = vmatpush2.bf16.msra.mxu0 0
        %1641 = vmatprep.subr.bf16.mxu0 0
        %1642 = vmatpush2.bf16.msra.mxu0 0
        %1643 = vmatprep.subr.bf16.mxu0 0
        %1644 = vmatpush2.bf16.msra.mxu0 0
        %1645 = vmatprep.subr.bf16.mxu0 0
        %1646 = vmatpush2.bf16.msra.mxu0 0
        %1647 = vmatprep.subr.bf16.mxu0 0
        %1648 = vmatpush2.bf16.msra.mxu0 0
        %1649 = vmatprep.subr.bf16.mxu0 0
        %1650 = vmatpush2.bf16.msra.mxu0 0
        %1651 = vmatprep.subr.bf16.mxu0 0
        %1652 = vmatpush2.bf16.msra.mxu0 0
        %1653 = vmatprep.mubr.bf16.mxu0 0
        %1654 = vmatmul.mubr.bf16.gmra.mxu0 %v1619
        %v1655 = vpop.f32.mrf.mxu0
        %v1656 = vadd.f32 0.0, %v1655
        %v1657 = vpop.f32.mrf.mxu0
        %v1658 = vadd.f32 0.0, %v1657
        %v1659 = vpop.f32.mrf.mxu0
        %v1660 = vpop.f32.mrf.mxu0
        %1661 = vdwg.mxu0
        %s1662 = scalar_lea.vmem %s396, 7 [#allocation4]
        %v1663 = vld [vmem:[%s1662] sm:$0x1]
        %v1664 = vunpack.c.l.bf16 %v1663
        %s1665 = scalar_lea.vmem %s403, 8 [#allocation5]
        %v1666 = vld [vmem:[%s1665] sm:$0x1]
        %v1667 = vunpack.c.l.bf16 %v1666
        %v1668 = vadd.f32 %v1664, %v1656
        %v1669 = vld [vmem:[#allocation3] sm:$0x3]
        %v1670 = vxor.u32 %v1668, 2147483648
        %v1671 = vmul.f32 %v1670, 1.442695
        %v1672 = vpow.pop %v1671
        %v1673 = vadd.f32 %v1672, 1.0
        %v1674 = vrcp.pop %v1673
        %v1675 = vmul.f32 1.0, %v1674
        %v1676 = vtanh.pop %v1668
        %v1679 = vunpack.c.l.s4 1983009808
        %v1680 = vunpack.c.0.s8 %v1679
        %v1681 = vlaneseq
        %v1682 = vshrl.u32 %v1681, 7
        %v1683 = vsub.s32 %v1680, %v1682
        %v1684 = vrot.slane %v1669, %v1683
        %1685 = vrot.lane.b32.xlu0 %v1684, 32
        %v1686 = vpop.permute.xlu0 %1685
        %v1688 = vmul.f32 %v1675, %v1686
        %1690 = vrot.lane.b32.xlu0 %v1676, 32
        %v1691 = vpop.permute.xlu0 %1690
        %v1693 = vmul.f32 %v1675, %v1691
        %1695 = vrot.lane.b32.xlu0 %v1693, 32
        %v1696 = vpop.permute.xlu0 %1695
        %v1698 = vadd.f32 %v1688, %v1696
        %v1699 = vtanh.pop %v1698
        %1701 = vrot.lane.b32.xlu0 %v1699, 32
        %v1702 = vpop.permute.xlu0 %1701
        %v1704 = vmul.f32 %v1675, %v1702
        %v1705 = vadd.f32 %v1667, %v1658
        %v1706 = vxor.u32 %v1705, 2147483648
        %v1707 = vmul.f32 %v1706, 1.442695
        %v1708 = vpow.pop %v1707
        %v1709 = vadd.f32 %v1708, 1.0
        %v1710 = vrcp.pop %v1709
        %v1711 = vmul.f32 1.0, %v1710
        %v1712 = vtanh.pop %v1705
        %v1713 = vmul.f32 %v1711, %v1669
        %1715 = vrot.lane.b32.xlu0 %v1712, 32
        %v1716 = vpop.permute.xlu0 %1715
        %v1718 = vmul.f32 %v1711, %v1716
        %1720 = vrot.lane.b32.xlu0 %v1718, 32
        %v1721 = vpop.permute.xlu0 %1720
        %v1723 = vadd.f32 %v1713, %v1721
        %v1724 = vtanh.pop %v1723
        %1726 = vrot.lane.b32.xlu0 %v1724, 32
        %v1727 = vpop.permute.xlu0 %1726
        %v1729 = vmul.f32 %v1711, %v1727
        %v1732 = vunpack.c.l.s4 1983009808
        %v1733 = vunpack.c.0.s8 %v1732
        %v1734 = vlaneseq
        %v1735 = vshrl.u32 %v1734, 7
        %v1736 = vsub.s32 %v1733, %v1735
        %v1737 = vrot.slane %v1704, %v1736
        %1738 = vrot.lane.b32.xlu0 %v1737, 64
        %v1739 = vpop.permute.xlu0 %1738
        %1741 = vst.msk [vmem:[#allocation2] sm:$0x3] %vm634, %v1739
        %v1744 = vunpack.c.l.s4 1983009808
        %v1745 = vunpack.c.0.s8 %v1744
        %v1746 = vlaneseq
        %v1747 = vshrl.u32 %v1746, 7
        %v1748 = vsub.s32 %v1745, %v1747
        %v1749 = vrot.slane %v1729, %v1748
        %1750 = vrot.lane.b32.xlu0 %v1749, 96
        %v1751 = vpop.permute.xlu0 %1750
        %1753 = vst.msk [vmem:[#allocation2] sm:$0x3] %vm647, %v1751
        %v1756 = vunpack.c.l.s4 1983009808
        %v1757 = vunpack.c.0.s8 %v1756
        %v1758 = vlaneseq
        %v1759 = vshrl.u32 %v1758, 7
        %v1760 = vsub.s32 %v1757, %v1759
        %v1761 = vrot.slane %v1698, %v1760
        %1762 = vrot.lane.b32.xlu0 %v1761, 96
        %v1763 = vpop.permute.xlu0 %1762
        %1765 = vst.msk [vmem:[#allocation3] sm:$0x3] %vm634, %v1763
        %1766 = vst.msk [vmem:[#allocation3] sm:$0x3] %vm647, %v1723
        %s1767 = scalar_lea.vmem %s443, 14
        %1768 = vst.msk [vmem:[%s1767] sm:$0x3] %vm634, %v1739
        %1769 = vrot.lane.b32.xlu0 %v1749, 64
        %v1770 = vpop.permute.xlu0 %1769
        %s1772 = scalar_lea.vmem %s450, 16
        %1773 = vst.msk [vmem:[%s1772] sm:$0x3] %vm634, %v1770
        %v1774 = vld [vmem:[#allocation2] sm:$0x3]
        %v1775 = vpack.c.bf16 %v1774, %v1774
        %v1777 = vsel %vm511, %v1775, 0
        %1779 = vmatprep.subr.bf16.mxu0 0
        %1780 = vmatpush1.bf16.msra.mxu0 0
        %1781 = vmatprep.subr.bf16.mxu0 0
        %1782 = vmatpush1.bf16.msra.mxu0 0
        %1783 = vmatprep.subr.bf16.mxu0 0
        %1784 = vmatpush1.bf16.msra.mxu0 0
        %1785 = vmatprep.subr.bf16.mxu0 0
        %1786 = vmatpush1.bf16.msra.mxu0 0
        %1787 = vmatprep.subr.bf16.mxu0 %v502
        %1788 = vmatpush1.bf16.msra.mxu0 %v501
        %1789 = vmatprep.subr.bf16.mxu0 %v500
        %1790 = vmatpush1.bf16.msra.mxu0 %v499
        %1791 = vmatprep.subr.bf16.mxu0 %v498
        %1792 = vmatpush1.bf16.msra.mxu0 %v497
        %1793 = vmatprep.subr.bf16.mxu0 %v496
        %1794 = vmatpush1.bf16.msra.mxu0 %v495
        %1795 = vmatprep.subr.bf16.mxu0 0
        %1796 = vmatpush2.bf16.msra.mxu0 0
        %1797 = vmatprep.subr.bf16.mxu0 0
        %1798 = vmatpush2.bf16.msra.mxu0 0
        %1799 = vmatprep.subr.bf16.mxu0 0
        %1800 = vmatpush2.bf16.msra.mxu0 0
        %1801 = vmatprep.subr.bf16.mxu0 0
        %1802 = vmatpush2.bf16.msra.mxu0 0
        %1803 = vmatprep.subr.bf16.mxu0 0
        %1804 = vmatpush2.bf16.msra.mxu0 0
        %1805 = vmatprep.subr.bf16.mxu0 0
        %1806 = vmatpush2.bf16.msra.mxu0 0
        %1807 = vmatprep.subr.bf16.mxu0 0
        %1808 = vmatpush2.bf16.msra.mxu0 0
        %1809 = vmatprep.subr.bf16.mxu0 0
        %1810 = vmatpush2.bf16.msra.mxu0 0
        %1811 = vmatprep.mubr.bf16.mxu0 0
        %1812 = vmatmul.mubr.bf16.gmra.mxu0 %v1777
        %v1813 = vpop.f32.mrf.mxu0
        %v1814 = vadd.f32 0.0, %v1813
        %v1815 = vpop.f32.mrf.mxu0
        %v1816 = vadd.f32 0.0, %v1815
        %v1817 = vpop.f32.mrf.mxu0
        %v1818 = vpop.f32.mrf.mxu0
        %1819 = vdwg.mxu0
        %s1820 = scalar_lea.vmem %s396, 8 [#allocation4]
        %v1821 = vld [vmem:[%s1820] sm:$0x1]
        %v1822 = vunpack.c.l.bf16 %v1821
        %s1823 = scalar_lea.vmem %s403, 7 [#allocation5]
        %v1824 = vld [vmem:[%s1823] sm:$0x1]
        %v1825 = vunpack.c.l.bf16 %v1824
        %v1826 = vadd.f32 %v1822, %v1814
        %v1827 = vld [vmem:[#allocation3] sm:$0x3]
        %v1828 = vxor.u32 %v1826, 2147483648
        %v1829 = vmul.f32 %v1828, 1.442695
        %v1830 = vpow.pop %v1829
        %v1831 = vadd.f32 %v1830, 1.0
        %v1832 = vrcp.pop %v1831
        %v1833 = vmul.f32 1.0, %v1832
        %v1834 = vtanh.pop %v1826
        %v1837 = vunpack.c.l.s4 1983009808
        %v1838 = vunpack.c.0.s8 %v1837
        %v1839 = vlaneseq
        %v1840 = vshrl.u32 %v1839, 7
        %v1841 = vsub.s32 %v1838, %v1840
        %v1842 = vrot.slane %v1827, %v1841
        %1843 = vrot.lane.b32.xlu0 %v1842, 32
        %v1844 = vpop.permute.xlu0 %1843
        %v1846 = vmul.f32 %v1833, %v1844
        %1848 = vrot.lane.b32.xlu0 %v1834, 32
        %v1849 = vpop.permute.xlu0 %1848
        %v1851 = vmul.f32 %v1833, %v1849
        %1853 = vrot.lane.b32.xlu0 %v1851, 32
        %v1854 = vpop.permute.xlu0 %1853
        %v1856 = vadd.f32 %v1846, %v1854
        %v1857 = vtanh.pop %v1856
        %1859 = vrot.lane.b32.xlu0 %v1857, 32
        %v1860 = vpop.permute.xlu0 %1859
        %v1862 = vmul.f32 %v1833, %v1860
        %v1863 = vadd.f32 %v1825, %v1816
        %v1864 = vxor.u32 %v1863, 2147483648
        %v1865 = vmul.f32 %v1864, 1.442695
        %v1866 = vpow.pop %v1865
        %v1867 = vadd.f32 %v1866, 1.0
        %v1868 = vrcp.pop %v1867
        %v1869 = vmul.f32 1.0, %v1868
        %v1870 = vtanh.pop %v1863
        %v1871 = vmul.f32 %v1869, %v1827
        %1873 = vrot.lane.b32.xlu0 %v1870, 32
        %v1874 = vpop.permute.xlu0 %1873
        %v1876 = vmul.f32 %v1869, %v1874
        %1878 = vrot.lane.b32.xlu0 %v1876, 32
        %v1879 = vpop.permute.xlu0 %1878
        %v1881 = vadd.f32 %v1871, %v1879
        %v1882 = vtanh.pop %v1881
        %1884 = vrot.lane.b32.xlu0 %v1882, 32
        %v1885 = vpop.permute.xlu0 %1884
        %v1887 = vmul.f32 %v1869, %v1885
        %v1890 = vunpack.c.l.s4 1983009808
        %v1891 = vunpack.c.0.s8 %v1890
        %v1892 = vlaneseq
        %v1893 = vshrl.u32 %v1892, 7
        %v1894 = vsub.s32 %v1891, %v1893
        %v1895 = vrot.slane %v1862, %v1894
        %1896 = vrot.lane.b32.xlu0 %v1895, 64
        %v1897 = vpop.permute.xlu0 %1896
        %1899 = vst.msk [vmem:[#allocation2] sm:$0x3] %vm634, %v1897
        %v1902 = vunpack.c.l.s4 1983009808
        %v1903 = vunpack.c.0.s8 %v1902
        %v1904 = vlaneseq
        %v1905 = vshrl.u32 %v1904, 7
        %v1906 = vsub.s32 %v1903, %v1905
        %v1907 = vrot.slane %v1887, %v1906
        %1908 = vrot.lane.b32.xlu0 %v1907, 96
        %v1909 = vpop.permute.xlu0 %1908
        %1911 = vst.msk [vmem:[#allocation2] sm:$0x3] %vm647, %v1909
        %v1914 = vunpack.c.l.s4 1983009808
        %v1915 = vunpack.c.0.s8 %v1914
        %v1916 = vlaneseq
        %v1917 = vshrl.u32 %v1916, 7
        %v1918 = vsub.s32 %v1915, %v1917
        %v1919 = vrot.slane %v1856, %v1918
        %1920 = vrot.lane.b32.xlu0 %v1919, 96
        %v1921 = vpop.permute.xlu0 %1920
        %1923 = vst.msk [vmem:[#allocation3] sm:$0x3] %vm634, %v1921
        %1924 = vst.msk [vmem:[#allocation3] sm:$0x3] %vm647, %v1881
        %s1925 = scalar_lea.vmem %s443, 16
        %1926 = vst.msk [vmem:[%s1925] sm:$0x3] %vm634, %v1897
        %1927 = vrot.lane.b32.xlu0 %v1907, 64
        %v1928 = vpop.permute.xlu0 %1927
        %s1930 = scalar_lea.vmem %s450, 14
        %1931 = vst.msk [vmem:[%s1930] sm:$0x3] %vm634, %v1928
        %v1932 = vld [vmem:[#allocation2] sm:$0x3]
        %v1933 = vpack.c.bf16 %v1932, %v1932
        %v1935 = vsel %vm511, %v1933, 0
        %1937 = vmatprep.subr.bf16.mxu0 0
        %1938 = vmatpush1.bf16.msra.mxu0 0
        %1939 = vmatprep.subr.bf16.mxu0 0
        %1940 = vmatpush1.bf16.msra.mxu0 0
        %1941 = vmatprep.subr.bf16.mxu0 0
        %1942 = vmatpush1.bf16.msra.mxu0 0
        %1943 = vmatprep.subr.bf16.mxu0 0
        %1944 = vmatpush1.bf16.msra.mxu0 0
        %1945 = vmatprep.subr.bf16.mxu0 %v502
        %1946 = vmatpush1.bf16.msra.mxu0 %v501
        %1947 = vmatprep.subr.bf16.mxu0 %v500
        %1948 = vmatpush1.bf16.msra.mxu0 %v499
        %1949 = vmatprep.subr.bf16.mxu0 %v498
        %1950 = vmatpush1.bf16.msra.mxu0 %v497
        %1951 = vmatprep.subr.bf16.mxu0 %v496
        %1952 = vmatpush1.bf16.msra.mxu0 %v495
        %1953 = vmatprep.subr.bf16.mxu0 0
        %1954 = vmatpush2.bf16.msra.mxu0 0
        %1955 = vmatprep.subr.bf16.mxu0 0
        %1956 = vmatpush2.bf16.msra.mxu0 0
        %1957 = vmatprep.subr.bf16.mxu0 0
        %1958 = vmatpush2.bf16.msra.mxu0 0
        %1959 = vmatprep.subr.bf16.mxu0 0
        %1960 = vmatpush2.bf16.msra.mxu0 0
        %1961 = vmatprep.subr.bf16.mxu0 0
        %1962 = vmatpush2.bf16.msra.mxu0 0
        %1963 = vmatprep.subr.bf16.mxu0 0
        %1964 = vmatpush2.bf16.msra.mxu0 0
        %1965 = vmatprep.subr.bf16.mxu0 0
        %1966 = vmatpush2.bf16.msra.mxu0 0
        %1967 = vmatprep.subr.bf16.mxu0 0
        %1968 = vmatpush2.bf16.msra.mxu0 0
        %1969 = vmatprep.mubr.bf16.mxu0 0
        %1970 = vmatmul.mubr.bf16.gmra.mxu0 %v1935
        %v1971 = vpop.f32.mrf.mxu0
        %v1972 = vadd.f32 0.0, %v1971
        %v1973 = vpop.f32.mrf.mxu0
        %v1974 = vadd.f32 0.0, %v1973
        %v1975 = vpop.f32.mrf.mxu0
        %v1976 = vpop.f32.mrf.mxu0
        %1977 = vdwg.mxu0
        %s1978 = scalar_lea.vmem %s396, 9 [#allocation4]
        %v1979 = vld [vmem:[%s1978] sm:$0x1]
        %v1980 = vunpack.c.l.bf16 %v1979
        %s1981 = scalar_lea.vmem %s403, 6 [#allocation5]
        %v1982 = vld [vmem:[%s1981] sm:$0x1]
        %v1983 = vunpack.c.l.bf16 %v1982
        %v1984 = vadd.f32 %v1980, %v1972
        %v1985 = vld [vmem:[#allocation3] sm:$0x3]
        %v1986 = vxor.u32 %v1984, 2147483648
        %v1987 = vmul.f32 %v1986, 1.442695
        %v1988 = vpow.pop %v1987
        %v1989 = vadd.f32 %v1988, 1.0
        %v1990 = vrcp.pop %v1989
        %v1991 = vmul.f32 1.0, %v1990
        %v1992 = vtanh.pop %v1984
        %v1995 = vunpack.c.l.s4 1983009808
        %v1996 = vunpack.c.0.s8 %v1995
        %v1997 = vlaneseq
        %v1998 = vshrl.u32 %v1997, 7
        %v1999 = vsub.s32 %v1996, %v1998
        %v2000 = vrot.slane %v1985, %v1999
        %2001 = vrot.lane.b32.xlu0 %v2000, 32
        %v2002 = vpop.permute.xlu0 %2001
        %v2004 = vmul.f32 %v1991, %v2002
        %2006 = vrot.lane.b32.xlu0 %v1992, 32
        %v2007 = vpop.permute.xlu0 %2006
        %v2009 = vmul.f32 %v1991, %v2007
        %2011 = vrot.lane.b32.xlu0 %v2009, 32
        %v2012 = vpop.permute.xlu0 %2011
        %v2014 = vadd.f32 %v2004, %v2012
        %v2015 = vtanh.pop %v2014
        %2017 = vrot.lane.b32.xlu0 %v2015, 32
        %v2018 = vpop.permute.xlu0 %2017
        %v2020 = vmul.f32 %v1991, %v2018
        %v2021 = vadd.f32 %v1983, %v1974
        %v2022 = vxor.u32 %v2021, 2147483648
        %v2023 = vmul.f32 %v2022, 1.442695
        %v2024 = vpow.pop %v2023
        %v2025 = vadd.f32 %v2024, 1.0
        %v2026 = vrcp.pop %v2025
        %v2027 = vmul.f32 1.0, %v2026
        %v2028 = vtanh.pop %v2021
        %v2029 = vmul.f32 %v2027, %v1985
        %2031 = vrot.lane.b32.xlu0 %v2028, 32
        %v2032 = vpop.permute.xlu0 %2031
        %v2034 = vmul.f32 %v2027, %v2032
        %2036 = vrot.lane.b32.xlu0 %v2034, 32
        %v2037 = vpop.permute.xlu0 %2036
        %v2039 = vadd.f32 %v2029, %v2037
        %v2040 = vtanh.pop %v2039
        %2042 = vrot.lane.b32.xlu0 %v2040, 32
        %v2043 = vpop.permute.xlu0 %2042
        %v2045 = vmul.f32 %v2027, %v2043
        %v2048 = vunpack.c.l.s4 1983009808
        %v2049 = vunpack.c.0.s8 %v2048
        %v2050 = vlaneseq
        %v2051 = vshrl.u32 %v2050, 7
        %v2052 = vsub.s32 %v2049, %v2051
        %v2053 = vrot.slane %v2020, %v2052
        %2054 = vrot.lane.b32.xlu0 %v2053, 64
        %v2055 = vpop.permute.xlu0 %2054
        %2057 = vst.msk [vmem:[#allocation2] sm:$0x3] %vm634, %v2055
        %v2060 = vunpack.c.l.s4 1983009808
        %v2061 = vunpack.c.0.s8 %v2060
        %v2062 = vlaneseq
        %v2063 = vshrl.u32 %v2062, 7
        %v2064 = vsub.s32 %v2061, %v2063
        %v2065 = vrot.slane %v2045, %v2064
        %2066 = vrot.lane.b32.xlu0 %v2065, 96
        %v2067 = vpop.permute.xlu0 %2066
        %2069 = vst.msk [vmem:[#allocation2] sm:$0x3] %vm647, %v2067
        %v2072 = vunpack.c.l.s4 1983009808
        %v2073 = vunpack.c.0.s8 %v2072
        %v2074 = vlaneseq
        %v2075 = vshrl.u32 %v2074, 7
        %v2076 = vsub.s32 %v2073, %v2075
        %v2077 = vrot.slane %v2014, %v2076
        %2078 = vrot.lane.b32.xlu0 %v2077, 96
        %v2079 = vpop.permute.xlu0 %2078
        %2081 = vst.msk [vmem:[#allocation3] sm:$0x3] %vm634, %v2079
        %2082 = vst.msk [vmem:[#allocation3] sm:$0x3] %vm647, %v2039
        %s2083 = scalar_lea.vmem %s443, 18
        %2084 = vst.msk [vmem:[%s2083] sm:$0x3] %vm634, %v2055
        %2085 = vrot.lane.b32.xlu0 %v2065, 64
        %v2086 = vpop.permute.xlu0 %2085
        %s2088 = scalar_lea.vmem %s450, 12
        %2089 = vst.msk [vmem:[%s2088] sm:$0x3] %vm634, %v2086
        %v2090 = vld [vmem:[#allocation2] sm:$0x3]
        %v2091 = vpack.c.bf16 %v2090, %v2090
        %v2093 = vsel %vm511, %v2091, 0
        %2095 = vmatprep.subr.bf16.mxu0 0
        %2096 = vmatpush1.bf16.msra.mxu0 0
        %2097 = vmatprep.subr.bf16.mxu0 0
        %2098 = vmatpush1.bf16.msra.mxu0 0
        %2099 = vmatprep.subr.bf16.mxu0 0
        %2100 = vmatpush1.bf16.msra.mxu0 0
        %2101 = vmatprep.subr.bf16.mxu0 0
        %2102 = vmatpush1.bf16.msra.mxu0 0
        %2103 = vmatprep.subr.bf16.mxu0 %v502
        %2104 = vmatpush1.bf16.msra.mxu0 %v501
        %2105 = vmatprep.subr.bf16.mxu0 %v500
        %2106 = vmatpush1.bf16.msra.mxu0 %v499
        %2107 = vmatprep.subr.bf16.mxu0 %v498
        %2108 = vmatpush1.bf16.msra.mxu0 %v497
        %2109 = vmatprep.subr.bf16.mxu0 %v496
        %2110 = vmatpush1.bf16.msra.mxu0 %v495
        %2111 = vmatprep.subr.bf16.mxu0 0
        %2112 = vmatpush2.bf16.msra.mxu0 0
        %2113 = vmatprep.subr.bf16.mxu0 0
        %2114 = vmatpush2.bf16.msra.mxu0 0
        %2115 = vmatprep.subr.bf16.mxu0 0
        %2116 = vmatpush2.bf16.msra.mxu0 0
        %2117 = vmatprep.subr.bf16.mxu0 0
        %2118 = vmatpush2.bf16.msra.mxu0 0
        %2119 = vmatprep.subr.bf16.mxu0 0
        %2120 = vmatpush2.bf16.msra.mxu0 0
        %2121 = vmatprep.subr.bf16.mxu0 0
        %2122 = vmatpush2.bf16.msra.mxu0 0
        %2123 = vmatprep.subr.bf16.mxu0 0
        %2124 = vmatpush2.bf16.msra.mxu0 0
        %2125 = vmatprep.subr.bf16.mxu0 0
        %2126 = vmatpush2.bf16.msra.mxu0 0
        %2127 = vmatprep.mubr.bf16.mxu0 0
        %2128 = vmatmul.mubr.bf16.gmra.mxu0 %v2093
        %v2129 = vpop.f32.mrf.mxu0
        %v2130 = vadd.f32 0.0, %v2129
        %v2131 = vpop.f32.mrf.mxu0
        %v2132 = vadd.f32 0.0, %v2131
        %v2133 = vpop.f32.mrf.mxu0
        %v2134 = vpop.f32.mrf.mxu0
        %2135 = vdwg.mxu0
        %s2136 = scalar_lea.vmem %s396, 10 [#allocation4]
        %v2137 = vld [vmem:[%s2136] sm:$0x1]
        %v2138 = vunpack.c.l.bf16 %v2137
        %s2139 = scalar_lea.vmem %s403, 5 [#allocation5]
        %v2140 = vld [vmem:[%s2139] sm:$0x1]
        %v2141 = vunpack.c.l.bf16 %v2140
        %v2142 = vadd.f32 %v2138, %v2130
        %v2143 = vld [vmem:[#allocation3] sm:$0x3]
        %v2144 = vxor.u32 %v2142, 2147483648
        %v2145 = vmul.f32 %v2144, 1.442695
        %v2146 = vpow.pop %v2145
        %v2147 = vadd.f32 %v2146, 1.0
        %v2148 = vrcp.pop %v2147
        %v2149 = vmul.f32 1.0, %v2148
        %v2150 = vtanh.pop %v2142
        %v2153 = vunpack.c.l.s4 1983009808
        %v2154 = vunpack.c.0.s8 %v2153
        %v2155 = vlaneseq
        %v2156 = vshrl.u32 %v2155, 7
        %v2157 = vsub.s32 %v2154, %v2156
        %v2158 = vrot.slane %v2143, %v2157
        %2159 = vrot.lane.b32.xlu0 %v2158, 32
        %v2160 = vpop.permute.xlu0 %2159
        %v2162 = vmul.f32 %v2149, %v2160
        %2164 = vrot.lane.b32.xlu0 %v2150, 32
        %v2165 = vpop.permute.xlu0 %2164
        %v2167 = vmul.f32 %v2149, %v2165
        %2169 = vrot.lane.b32.xlu0 %v2167, 32
        %v2170 = vpop.permute.xlu0 %2169
        %v2172 = vadd.f32 %v2162, %v2170
        %v2173 = vtanh.pop %v2172
        %2175 = vrot.lane.b32.xlu0 %v2173, 32
        %v2176 = vpop.permute.xlu0 %2175
        %v2178 = vmul.f32 %v2149, %v2176
        %v2179 = vadd.f32 %v2141, %v2132
        %v2180 = vxor.u32 %v2179, 2147483648
        %v2181 = vmul.f32 %v2180, 1.442695
        %v2182 = vpow.pop %v2181
        %v2183 = vadd.f32 %v2182, 1.0
        %v2184 = vrcp.pop %v2183
        %v2185 = vmul.f32 1.0, %v2184
        %v2186 = vtanh.pop %v2179
        %v2187 = vmul.f32 %v2185, %v2143
        %2189 = vrot.lane.b32.xlu0 %v2186, 32
        %v2190 = vpop.permute.xlu0 %2189
        %v2192 = vmul.f32 %v2185, %v2190
        %2194 = vrot.lane.b32.xlu0 %v2192, 32
        %v2195 = vpop.permute.xlu0 %2194
        %v2197 = vadd.f32 %v2187, %v2195
        %v2198 = vtanh.pop %v2197
        %2200 = vrot.lane.b32.xlu0 %v2198, 32
        %v2201 = vpop.permute.xlu0 %2200
        %v2203 = vmul.f32 %v2185, %v2201
        %v2206 = vunpack.c.l.s4 1983009808
        %v2207 = vunpack.c.0.s8 %v2206
        %v2208 = vlaneseq
        %v2209 = vshrl.u32 %v2208, 7
        %v2210 = vsub.s32 %v2207, %v2209
        %v2211 = vrot.slane %v2178, %v2210
        %2212 = vrot.lane.b32.xlu0 %v2211, 64
        %v2213 = vpop.permute.xlu0 %2212
        %2215 = vst.msk [vmem:[#allocation2] sm:$0x3] %vm634, %v2213
        %v2218 = vunpack.c.l.s4 1983009808
        %v2219 = vunpack.c.0.s8 %v2218
        %v2220 = vlaneseq
        %v2221 = vshrl.u32 %v2220, 7
        %v2222 = vsub.s32 %v2219, %v2221
        %v2223 = vrot.slane %v2203, %v2222
        %2224 = vrot.lane.b32.xlu0 %v2223, 96
        %v2225 = vpop.permute.xlu0 %2224
        %2227 = vst.msk [vmem:[#allocation2] sm:$0x3] %vm647, %v2225
        %v2230 = vunpack.c.l.s4 1983009808
        %v2231 = vunpack.c.0.s8 %v2230
        %v2232 = vlaneseq
        %v2233 = vshrl.u32 %v2232, 7
        %v2234 = vsub.s32 %v2231, %v2233
        %v2235 = vrot.slane %v2172, %v2234
        %2236 = vrot.lane.b32.xlu0 %v2235, 96
        %v2237 = vpop.permute.xlu0 %2236
        %2239 = vst.msk [vmem:[#allocation3] sm:$0x3] %vm634, %v2237
        %2240 = vst.msk [vmem:[#allocation3] sm:$0x3] %vm647, %v2197
        %s2241 = scalar_lea.vmem %s443, 20
        %2242 = vst.msk [vmem:[%s2241] sm:$0x3] %vm634, %v2213
        %2243 = vrot.lane.b32.xlu0 %v2223, 64
        %v2244 = vpop.permute.xlu0 %2243
        %s2246 = scalar_lea.vmem %s450, 10
        %2247 = vst.msk [vmem:[%s2246] sm:$0x3] %vm634, %v2244
        %v2248 = vld [vmem:[#allocation2] sm:$0x3]
        %v2249 = vpack.c.bf16 %v2248, %v2248
        %v2251 = vsel %vm511, %v2249, 0
        %2253 = vmatprep.subr.bf16.mxu0 0
        %2254 = vmatpush1.bf16.msra.mxu0 0
        %2255 = vmatprep.subr.bf16.mxu0 0
        %2256 = vmatpush1.bf16.msra.mxu0 0
        %2257 = vmatprep.subr.bf16.mxu0 0
        %2258 = vmatpush1.bf16.msra.mxu0 0
        %2259 = vmatprep.subr.bf16.mxu0 0
        %2260 = vmatpush1.bf16.msra.mxu0 0
        %2261 = vmatprep.subr.bf16.mxu0 %v502
        %2262 = vmatpush1.bf16.msra.mxu0 %v501
        %2263 = vmatprep.subr.bf16.mxu0 %v500
        %2264 = vmatpush1.bf16.msra.mxu0 %v499
        %2265 = vmatprep.subr.bf16.mxu0 %v498
        %2266 = vmatpush1.bf16.msra.mxu0 %v497
        %2267 = vmatprep.subr.bf16.mxu0 %v496
        %2268 = vmatpush1.bf16.msra.mxu0 %v495
        %2269 = vmatprep.subr.bf16.mxu0 0
        %2270 = vmatpush2.bf16.msra.mxu0 0
        %2271 = vmatprep.subr.bf16.mxu0 0
        %2272 = vmatpush2.bf16.msra.mxu0 0
        %2273 = vmatprep.subr.bf16.mxu0 0
        %2274 = vmatpush2.bf16.msra.mxu0 0
        %2275 = vmatprep.subr.bf16.mxu0 0
        %2276 = vmatpush2.bf16.msra.mxu0 0
        %2277 = vmatprep.subr.bf16.mxu0 0
        %2278 = vmatpush2.bf16.msra.mxu0 0
        %2279 = vmatprep.subr.bf16.mxu0 0
        %2280 = vmatpush2.bf16.msra.mxu0 0
        %2281 = vmatprep.subr.bf16.mxu0 0
        %2282 = vmatpush2.bf16.msra.mxu0 0
        %2283 = vmatprep.subr.bf16.mxu0 0
        %2284 = vmatpush2.bf16.msra.mxu0 0
        %2285 = vmatprep.mubr.bf16.mxu0 0
        %2286 = vmatmul.mubr.bf16.gmra.mxu0 %v2251
        %v2287 = vpop.f32.mrf.mxu0
        %v2288 = vadd.f32 0.0, %v2287
        %v2289 = vpop.f32.mrf.mxu0
        %v2290 = vadd.f32 0.0, %v2289
        %v2291 = vpop.f32.mrf.mxu0
        %v2292 = vpop.f32.mrf.mxu0
        %2293 = vdwg.mxu0
        %s2294 = scalar_lea.vmem %s396, 11 [#allocation4]
        %v2295 = vld [vmem:[%s2294] sm:$0x1]
        %v2296 = vunpack.c.l.bf16 %v2295
        %s2297 = scalar_lea.vmem %s403, 4 [#allocation5]
        %v2298 = vld [vmem:[%s2297] sm:$0x1]
        %v2299 = vunpack.c.l.bf16 %v2298
        %v2300 = vadd.f32 %v2296, %v2288
        %v2301 = vld [vmem:[#allocation3] sm:$0x3]
        %v2302 = vxor.u32 %v2300, 2147483648
        %v2303 = vmul.f32 %v2302, 1.442695
        %v2304 = vpow.pop %v2303
        %v2305 = vadd.f32 %v2304, 1.0
        %v2306 = vrcp.pop %v2305
        %v2307 = vmul.f32 1.0, %v2306
        %v2308 = vtanh.pop %v2300
        %v2311 = vunpack.c.l.s4 1983009808
        %v2312 = vunpack.c.0.s8 %v2311
        %v2313 = vlaneseq
        %v2314 = vshrl.u32 %v2313, 7
        %v2315 = vsub.s32 %v2312, %v2314
        %v2316 = vrot.slane %v2301, %v2315
        %2317 = vrot.lane.b32.xlu0 %v2316, 32
        %v2318 = vpop.permute.xlu0 %2317
        %v2320 = vmul.f32 %v2307, %v2318
        %2322 = vrot.lane.b32.xlu0 %v2308, 32
        %v2323 = vpop.permute.xlu0 %2322
        %v2325 = vmul.f32 %v2307, %v2323
        %2327 = vrot.lane.b32.xlu0 %v2325, 32
        %v2328 = vpop.permute.xlu0 %2327
        %v2330 = vadd.f32 %v2320, %v2328
        %v2331 = vtanh.pop %v2330
        %2333 = vrot.lane.b32.xlu0 %v2331, 32
        %v2334 = vpop.permute.xlu0 %2333
        %v2336 = vmul.f32 %v2307, %v2334
        %v2337 = vadd.f32 %v2299, %v2290
        %v2338 = vxor.u32 %v2337, 2147483648
        %v2339 = vmul.f32 %v2338, 1.442695
        %v2340 = vpow.pop %v2339
        %v2341 = vadd.f32 %v2340, 1.0
        %v2342 = vrcp.pop %v2341
        %v2343 = vmul.f32 1.0, %v2342
        %v2344 = vtanh.pop %v2337
        %v2345 = vmul.f32 %v2343, %v2301
        %2347 = vrot.lane.b32.xlu0 %v2344, 32
        %v2348 = vpop.permute.xlu0 %2347
        %v2350 = vmul.f32 %v2343, %v2348
        %2352 = vrot.lane.b32.xlu0 %v2350, 32
        %v2353 = vpop.permute.xlu0 %2352
        %v2355 = vadd.f32 %v2345, %v2353
        %v2356 = vtanh.pop %v2355
        %2358 = vrot.lane.b32.xlu0 %v2356, 32
        %v2359 = vpop.permute.xlu0 %2358
        %v2361 = vmul.f32 %v2343, %v2359
        %v2364 = vunpack.c.l.s4 1983009808
        %v2365 = vunpack.c.0.s8 %v2364
        %v2366 = vlaneseq
        %v2367 = vshrl.u32 %v2366, 7
        %v2368 = vsub.s32 %v2365, %v2367
        %v2369 = vrot.slane %v2336, %v2368
        %2370 = vrot.lane.b32.xlu0 %v2369, 64
        %v2371 = vpop.permute.xlu0 %2370
        %2373 = vst.msk [vmem:[#allocation2] sm:$0x3] %vm634, %v2371
        %v2376 = vunpack.c.l.s4 1983009808
        %v2377 = vunpack.c.0.s8 %v2376
        %v2378 = vlaneseq
        %v2379 = vshrl.u32 %v2378, 7
        %v2380 = vsub.s32 %v2377, %v2379
        %v2381 = vrot.slane %v2361, %v2380
        %2382 = vrot.lane.b32.xlu0 %v2381, 96
        %v2383 = vpop.permute.xlu0 %2382
        %2385 = vst.msk [vmem:[#allocation2] sm:$0x3] %vm647, %v2383
        %v2388 = vunpack.c.l.s4 1983009808
        %v2389 = vunpack.c.0.s8 %v2388
        %v2390 = vlaneseq
        %v2391 = vshrl.u32 %v2390, 7
        %v2392 = vsub.s32 %v2389, %v2391
        %v2393 = vrot.slane %v2330, %v2392
        %2394 = vrot.lane.b32.xlu0 %v2393, 96
        %v2395 = vpop.permute.xlu0 %2394
        %2397 = vst.msk [vmem:[#allocation3] sm:$0x3] %vm634, %v2395
        %2398 = vst.msk [vmem:[#allocation3] sm:$0x3] %vm647, %v2355
        %s2399 = scalar_lea.vmem %s443, 22
        %2400 = vst.msk [vmem:[%s2399] sm:$0x3] %vm634, %v2371
        %2401 = vrot.lane.b32.xlu0 %v2381, 64
        %v2402 = vpop.permute.xlu0 %2401
        %s2404 = scalar_lea.vmem %s450, 8
        %2405 = vst.msk [vmem:[%s2404] sm:$0x3] %vm634, %v2402
        %v2406 = vld [vmem:[#allocation2] sm:$0x3]
        %v2407 = vpack.c.bf16 %v2406, %v2406
        %v2409 = vsel %vm511, %v2407, 0
        %2411 = vmatprep.subr.bf16.mxu0 0
        %2412 = vmatpush1.bf16.msra.mxu0 0
        %2413 = vmatprep.subr.bf16.mxu0 0
        %2414 = vmatpush1.bf16.msra.mxu0 0
        %2415 = vmatprep.subr.bf16.mxu0 0
        %2416 = vmatpush1.bf16.msra.mxu0 0
        %2417 = vmatprep.subr.bf16.mxu0 0
        %2418 = vmatpush1.bf16.msra.mxu0 0
        %2419 = vmatprep.subr.bf16.mxu0 %v502
        %2420 = vmatpush1.bf16.msra.mxu0 %v501
        %2421 = vmatprep.subr.bf16.mxu0 %v500
        %2422 = vmatpush1.bf16.msra.mxu0 %v499
        %2423 = vmatprep.subr.bf16.mxu0 %v498
        %2424 = vmatpush1.bf16.msra.mxu0 %v497
        %2425 = vmatprep.subr.bf16.mxu0 %v496
        %2426 = vmatpush1.bf16.msra.mxu0 %v495
        %2427 = vmatprep.subr.bf16.mxu0 0
        %2428 = vmatpush2.bf16.msra.mxu0 0
        %2429 = vmatprep.subr.bf16.mxu0 0
        %2430 = vmatpush2.bf16.msra.mxu0 0
        %2431 = vmatprep.subr.bf16.mxu0 0
        %2432 = vmatpush2.bf16.msra.mxu0 0
        %2433 = vmatprep.subr.bf16.mxu0 0
        %2434 = vmatpush2.bf16.msra.mxu0 0
        %2435 = vmatprep.subr.bf16.mxu0 0
        %2436 = vmatpush2.bf16.msra.mxu0 0
        %2437 = vmatprep.subr.bf16.mxu0 0
        %2438 = vmatpush2.bf16.msra.mxu0 0
        %2439 = vmatprep.subr.bf16.mxu0 0
        %2440 = vmatpush2.bf16.msra.mxu0 0
        %2441 = vmatprep.subr.bf16.mxu0 0
        %2442 = vmatpush2.bf16.msra.mxu0 0
        %2443 = vmatprep.mubr.bf16.mxu0 0
        %2444 = vmatmul.mubr.bf16.gmra.mxu0 %v2409
        %v2445 = vpop.f32.mrf.mxu0
        %v2446 = vadd.f32 0.0, %v2445
        %v2447 = vpop.f32.mrf.mxu0
        %v2448 = vadd.f32 0.0, %v2447
        %v2449 = vpop.f32.mrf.mxu0
        %v2450 = vpop.f32.mrf.mxu0
        %2451 = vdwg.mxu0
        %s2452 = scalar_lea.vmem %s396, 12 [#allocation4]
        %v2453 = vld [vmem:[%s2452] sm:$0x1]
        %v2454 = vunpack.c.l.bf16 %v2453
        %s2455 = scalar_lea.vmem %s403, 3 [#allocation5]
        %v2456 = vld [vmem:[%s2455] sm:$0x1]
        %v2457 = vunpack.c.l.bf16 %v2456
        %v2458 = vadd.f32 %v2454, %v2446
        %v2459 = vld [vmem:[#allocation3] sm:$0x3]
        %v2460 = vxor.u32 %v2458, 2147483648
        %v2461 = vmul.f32 %v2460, 1.442695
        %v2462 = vpow.pop %v2461
        %v2463 = vadd.f32 %v2462, 1.0
        %v2464 = vrcp.pop %v2463
        %v2465 = vmul.f32 1.0, %v2464
        %v2466 = vtanh.pop %v2458
        %v2469 = vunpack.c.l.s4 1983009808
        %v2470 = vunpack.c.0.s8 %v2469
        %v2471 = vlaneseq
        %v2472 = vshrl.u32 %v2471, 7
        %v2473 = vsub.s32 %v2470, %v2472
        %v2474 = vrot.slane %v2459, %v2473
        %2475 = vrot.lane.b32.xlu0 %v2474, 32
        %v2476 = vpop.permute.xlu0 %2475
        %v2478 = vmul.f32 %v2465, %v2476
        %2480 = vrot.lane.b32.xlu0 %v2466, 32
        %v2481 = vpop.permute.xlu0 %2480
        %v2483 = vmul.f32 %v2465, %v2481
        %2485 = vrot.lane.b32.xlu0 %v2483, 32
        %v2486 = vpop.permute.xlu0 %2485
        %v2488 = vadd.f32 %v2478, %v2486
        %v2489 = vtanh.pop %v2488
        %2491 = vrot.lane.b32.xlu0 %v2489, 32
        %v2492 = vpop.permute.xlu0 %2491
        %v2494 = vmul.f32 %v2465, %v2492
        %v2495 = vadd.f32 %v2457, %v2448
        %v2496 = vxor.u32 %v2495, 2147483648
        %v2497 = vmul.f32 %v2496, 1.442695
        %v2498 = vpow.pop %v2497
        %v2499 = vadd.f32 %v2498, 1.0
        %v2500 = vrcp.pop %v2499
        %v2501 = vmul.f32 1.0, %v2500
        %v2502 = vtanh.pop %v2495
        %v2503 = vmul.f32 %v2501, %v2459
        %2505 = vrot.lane.b32.xlu0 %v2502, 32
        %v2506 = vpop.permute.xlu0 %2505
        %v2508 = vmul.f32 %v2501, %v2506
        %2510 = vrot.lane.b32.xlu0 %v2508, 32
        %v2511 = vpop.permute.xlu0 %2510
        %v2513 = vadd.f32 %v2503, %v2511
        %v2514 = vtanh.pop %v2513
        %2516 = vrot.lane.b32.xlu0 %v2514, 32
        %v2517 = vpop.permute.xlu0 %2516
        %v2519 = vmul.f32 %v2501, %v2517
        %v2522 = vunpack.c.l.s4 1983009808
        %v2523 = vunpack.c.0.s8 %v2522
        %v2524 = vlaneseq
        %v2525 = vshrl.u32 %v2524, 7
        %v2526 = vsub.s32 %v2523, %v2525
        %v2527 = vrot.slane %v2494, %v2526
        %2528 = vrot.lane.b32.xlu0 %v2527, 64
        %v2529 = vpop.permute.xlu0 %2528
        %2531 = vst.msk [vmem:[#allocation2] sm:$0x3] %vm634, %v2529
        %v2534 = vunpack.c.l.s4 1983009808
        %v2535 = vunpack.c.0.s8 %v2534
        %v2536 = vlaneseq
        %v2537 = vshrl.u32 %v2536, 7
        %v2538 = vsub.s32 %v2535, %v2537
        %v2539 = vrot.slane %v2519, %v2538
        %2540 = vrot.lane.b32.xlu0 %v2539, 96
        %v2541 = vpop.permute.xlu0 %2540
        %2543 = vst.msk [vmem:[#allocation2] sm:$0x3] %vm647, %v2541
        %v2546 = vunpack.c.l.s4 1983009808
        %v2547 = vunpack.c.0.s8 %v2546
        %v2548 = vlaneseq
        %v2549 = vshrl.u32 %v2548, 7
        %v2550 = vsub.s32 %v2547, %v2549
        %v2551 = vrot.slane %v2488, %v2550
        %2552 = vrot.lane.b32.xlu0 %v2551, 96
        %v2553 = vpop.permute.xlu0 %2552
        %2555 = vst.msk [vmem:[#allocation3] sm:$0x3] %vm634, %v2553
        %2556 = vst.msk [vmem:[#allocation3] sm:$0x3] %vm647, %v2513
        %s2557 = scalar_lea.vmem %s443, 24
        %2558 = vst.msk [vmem:[%s2557] sm:$0x3] %vm634, %v2529
        %2559 = vrot.lane.b32.xlu0 %v2539, 64
        %v2560 = vpop.permute.xlu0 %2559
        %s2562 = scalar_lea.vmem %s450, 6
        %2563 = vst.msk [vmem:[%s2562] sm:$0x3] %vm634, %v2560
        %v2564 = vld [vmem:[#allocation2] sm:$0x3]
        %v2565 = vpack.c.bf16 %v2564, %v2564
        %v2567 = vsel %vm511, %v2565, 0
        %2569 = vmatprep.subr.bf16.mxu0 0
        %2570 = vmatpush1.bf16.msra.mxu0 0
        %2571 = vmatprep.subr.bf16.mxu0 0
        %2572 = vmatpush1.bf16.msra.mxu0 0
        %2573 = vmatprep.subr.bf16.mxu0 0
        %2574 = vmatpush1.bf16.msra.mxu0 0
        %2575 = vmatprep.subr.bf16.mxu0 0
        %2576 = vmatpush1.bf16.msra.mxu0 0
        %2577 = vmatprep.subr.bf16.mxu0 %v502
        %2578 = vmatpush1.bf16.msra.mxu0 %v501
        %2579 = vmatprep.subr.bf16.mxu0 %v500
        %2580 = vmatpush1.bf16.msra.mxu0 %v499
        %2581 = vmatprep.subr.bf16.mxu0 %v498
        %2582 = vmatpush1.bf16.msra.mxu0 %v497
        %2583 = vmatprep.subr.bf16.mxu0 %v496
        %2584 = vmatpush1.bf16.msra.mxu0 %v495
        %2585 = vmatprep.subr.bf16.mxu0 0
        %2586 = vmatpush2.bf16.msra.mxu0 0
        %2587 = vmatprep.subr.bf16.mxu0 0
        %2588 = vmatpush2.bf16.msra.mxu0 0
        %2589 = vmatprep.subr.bf16.mxu0 0
        %2590 = vmatpush2.bf16.msra.mxu0 0
        %2591 = vmatprep.subr.bf16.mxu0 0
        %2592 = vmatpush2.bf16.msra.mxu0 0
        %2593 = vmatprep.subr.bf16.mxu0 0
        %2594 = vmatpush2.bf16.msra.mxu0 0
        %2595 = vmatprep.subr.bf16.mxu0 0
        %2596 = vmatpush2.bf16.msra.mxu0 0
        %2597 = vmatprep.subr.bf16.mxu0 0
        %2598 = vmatpush2.bf16.msra.mxu0 0
        %2599 = vmatprep.subr.bf16.mxu0 0
        %2600 = vmatpush2.bf16.msra.mxu0 0
        %2601 = vmatprep.mubr.bf16.mxu0 0
        %2602 = vmatmul.mubr.bf16.gmra.mxu0 %v2567
        %v2603 = vpop.f32.mrf.mxu0
        %v2604 = vadd.f32 0.0, %v2603
        %v2605 = vpop.f32.mrf.mxu0
        %v2606 = vadd.f32 0.0, %v2605
        %v2607 = vpop.f32.mrf.mxu0
        %v2608 = vpop.f32.mrf.mxu0
        %2609 = vdwg.mxu0
        %s2610 = scalar_lea.vmem %s396, 13 [#allocation4]
        %v2611 = vld [vmem:[%s2610] sm:$0x1]
        %v2612 = vunpack.c.l.bf16 %v2611
        %s2613 = scalar_lea.vmem %s403, 2 [#allocation5]
        %v2614 = vld [vmem:[%s2613] sm:$0x1]
        %v2615 = vunpack.c.l.bf16 %v2614
        %v2616 = vadd.f32 %v2612, %v2604
        %v2617 = vld [vmem:[#allocation3] sm:$0x3]
        %v2618 = vxor.u32 %v2616, 2147483648
        %v2619 = vmul.f32 %v2618, 1.442695
        %v2620 = vpow.pop %v2619
        %v2621 = vadd.f32 %v2620, 1.0
        %v2622 = vrcp.pop %v2621
        %v2623 = vmul.f32 1.0, %v2622
        %v2624 = vtanh.pop %v2616
        %v2627 = vunpack.c.l.s4 1983009808
        %v2628 = vunpack.c.0.s8 %v2627
        %v2629 = vlaneseq
        %v2630 = vshrl.u32 %v2629, 7
        %v2631 = vsub.s32 %v2628, %v2630
        %v2632 = vrot.slane %v2617, %v2631
        %2633 = vrot.lane.b32.xlu0 %v2632, 32
        %v2634 = vpop.permute.xlu0 %2633
        %v2636 = vmul.f32 %v2623, %v2634
        %2638 = vrot.lane.b32.xlu0 %v2624, 32
        %v2639 = vpop.permute.xlu0 %2638
        %v2641 = vmul.f32 %v2623, %v2639
        %2643 = vrot.lane.b32.xlu0 %v2641, 32
        %v2644 = vpop.permute.xlu0 %2643
        %v2646 = vadd.f32 %v2636, %v2644
        %v2647 = vtanh.pop %v2646
        %2649 = vrot.lane.b32.xlu0 %v2647, 32
        %v2650 = vpop.permute.xlu0 %2649
        %v2652 = vmul.f32 %v2623, %v2650
        %v2653 = vadd.f32 %v2615, %v2606
        %v2654 = vxor.u32 %v2653, 2147483648
        %v2655 = vmul.f32 %v2654, 1.442695
        %v2656 = vpow.pop %v2655
        %v2657 = vadd.f32 %v2656, 1.0
        %v2658 = vrcp.pop %v2657
        %v2659 = vmul.f32 1.0, %v2658
        %v2660 = vtanh.pop %v2653
        %v2661 = vmul.f32 %v2659, %v2617
        %2663 = vrot.lane.b32.xlu0 %v2660, 32
        %v2664 = vpop.permute.xlu0 %2663
        %v2666 = vmul.f32 %v2659, %v2664
        %2668 = vrot.lane.b32.xlu0 %v2666, 32
        %v2669 = vpop.permute.xlu0 %2668
        %v2671 = vadd.f32 %v2661, %v2669
        %v2672 = vtanh.pop %v2671
        %2674 = vrot.lane.b32.xlu0 %v2672, 32
        %v2675 = vpop.permute.xlu0 %2674
        %v2677 = vmul.f32 %v2659, %v2675
        %v2680 = vunpack.c.l.s4 1983009808
        %v2681 = vunpack.c.0.s8 %v2680
        %v2682 = vlaneseq
        %v2683 = vshrl.u32 %v2682, 7
        %v2684 = vsub.s32 %v2681, %v2683
        %v2685 = vrot.slane %v2652, %v2684
        %2686 = vrot.lane.b32.xlu0 %v2685, 64
        %v2687 = vpop.permute.xlu0 %2686
        %2689 = vst.msk [vmem:[#allocation2] sm:$0x3] %vm634, %v2687
        %v2692 = vunpack.c.l.s4 1983009808
        %v2693 = vunpack.c.0.s8 %v2692
        %v2694 = vlaneseq
        %v2695 = vshrl.u32 %v2694, 7
        %v2696 = vsub.s32 %v2693, %v2695
        %v2697 = vrot.slane %v2677, %v2696
        %2698 = vrot.lane.b32.xlu0 %v2697, 96
        %v2699 = vpop.permute.xlu0 %2698
        %2701 = vst.msk [vmem:[#allocation2] sm:$0x3] %vm647, %v2699
        %v2704 = vunpack.c.l.s4 1983009808
        %v2705 = vunpack.c.0.s8 %v2704
        %v2706 = vlaneseq
        %v2707 = vshrl.u32 %v2706, 7
        %v2708 = vsub.s32 %v2705, %v2707
        %v2709 = vrot.slane %v2646, %v2708
        %2710 = vrot.lane.b32.xlu0 %v2709, 96
        %v2711 = vpop.permute.xlu0 %2710
        %2713 = vst.msk [vmem:[#allocation3] sm:$0x3] %vm634, %v2711
        %2714 = vst.msk [vmem:[#allocation3] sm:$0x3] %vm647, %v2671
        %s2715 = scalar_lea.vmem %s443, 26
        %2716 = vst.msk [vmem:[%s2715] sm:$0x3] %vm634, %v2687
        %2717 = vrot.lane.b32.xlu0 %v2697, 64
        %v2718 = vpop.permute.xlu0 %2717
        %s2720 = scalar_lea.vmem %s450, 4
        %2721 = vst.msk [vmem:[%s2720] sm:$0x3] %vm634, %v2718
        %v2722 = vld [vmem:[#allocation2] sm:$0x3]
        %v2723 = vpack.c.bf16 %v2722, %v2722
        %v2725 = vsel %vm511, %v2723, 0
        %2727 = vmatprep.subr.bf16.mxu0 0
        %2728 = vmatpush1.bf16.msra.mxu0 0
        %2729 = vmatprep.subr.bf16.mxu0 0
        %2730 = vmatpush1.bf16.msra.mxu0 0
        %2731 = vmatprep.subr.bf16.mxu0 0
        %2732 = vmatpush1.bf16.msra.mxu0 0
        %2733 = vmatprep.subr.bf16.mxu0 0
        %2734 = vmatpush1.bf16.msra.mxu0 0
        %2735 = vmatprep.subr.bf16.mxu0 %v502
        %2736 = vmatpush1.bf16.msra.mxu0 %v501
        %2737 = vmatprep.subr.bf16.mxu0 %v500
        %2738 = vmatpush1.bf16.msra.mxu0 %v499
        %2739 = vmatprep.subr.bf16.mxu0 %v498
        %2740 = vmatpush1.bf16.msra.mxu0 %v497
        %2741 = vmatprep.subr.bf16.mxu0 %v496
        %2742 = vmatpush1.bf16.msra.mxu0 %v495
        %2743 = vmatprep.subr.bf16.mxu0 0
        %2744 = vmatpush2.bf16.msra.mxu0 0
        %2745 = vmatprep.subr.bf16.mxu0 0
        %2746 = vmatpush2.bf16.msra.mxu0 0
        %2747 = vmatprep.subr.bf16.mxu0 0
        %2748 = vmatpush2.bf16.msra.mxu0 0
        %2749 = vmatprep.subr.bf16.mxu0 0
        %2750 = vmatpush2.bf16.msra.mxu0 0
        %2751 = vmatprep.subr.bf16.mxu0 0
        %2752 = vmatpush2.bf16.msra.mxu0 0
        %2753 = vmatprep.subr.bf16.mxu0 0
        %2754 = vmatpush2.bf16.msra.mxu0 0
        %2755 = vmatprep.subr.bf16.mxu0 0
        %2756 = vmatpush2.bf16.msra.mxu0 0
        %2757 = vmatprep.subr.bf16.mxu0 0
        %2758 = vmatpush2.bf16.msra.mxu0 0
        %2759 = vmatprep.mubr.bf16.mxu0 0
        %2760 = vmatmul.mubr.bf16.gmra.mxu0 %v2725
        %v2761 = vpop.f32.mrf.mxu0
        %v2762 = vadd.f32 0.0, %v2761
        %v2763 = vpop.f32.mrf.mxu0
        %v2764 = vadd.f32 0.0, %v2763
        %v2765 = vpop.f32.mrf.mxu0
        %v2766 = vpop.f32.mrf.mxu0
        %2767 = vdwg.mxu0
        %s2768 = scalar_lea.vmem %s396, 14 [#allocation4]
        %v2769 = vld [vmem:[%s2768] sm:$0x1]
        %v2770 = vunpack.c.l.bf16 %v2769
        %s2771 = scalar_lea.vmem %s403, 1 [#allocation5]
        %v2772 = vld [vmem:[%s2771] sm:$0x1]
        %v2773 = vunpack.c.l.bf16 %v2772
        %v2774 = vadd.f32 %v2770, %v2762
        %v2775 = vld [vmem:[#allocation3] sm:$0x3]
        %v2776 = vxor.u32 %v2774, 2147483648
        %v2777 = vmul.f32 %v2776, 1.442695
        %v2778 = vpow.pop %v2777
        %v2779 = vadd.f32 %v2778, 1.0
        %v2780 = vrcp.pop %v2779
        %v2781 = vmul.f32 1.0, %v2780
        %v2782 = vtanh.pop %v2774
        %v2785 = vunpack.c.l.s4 1983009808
        %v2786 = vunpack.c.0.s8 %v2785
        %v2787 = vlaneseq
        %v2788 = vshrl.u32 %v2787, 7
        %v2789 = vsub.s32 %v2786, %v2788
        %v2790 = vrot.slane %v2775, %v2789
        %2791 = vrot.lane.b32.xlu0 %v2790, 32
        %v2792 = vpop.permute.xlu0 %2791
        %v2794 = vmul.f32 %v2781, %v2792
        %2796 = vrot.lane.b32.xlu0 %v2782, 32
        %v2797 = vpop.permute.xlu0 %2796
        %v2799 = vmul.f32 %v2781, %v2797
        %2801 = vrot.lane.b32.xlu0 %v2799, 32
        %v2802 = vpop.permute.xlu0 %2801
        %v2804 = vadd.f32 %v2794, %v2802
        %v2805 = vtanh.pop %v2804
        %2807 = vrot.lane.b32.xlu0 %v2805, 32
        %v2808 = vpop.permute.xlu0 %2807
        %v2810 = vmul.f32 %v2781, %v2808
        %v2811 = vadd.f32 %v2773, %v2764
        %v2812 = vxor.u32 %v2811, 2147483648
        %v2813 = vmul.f32 %v2812, 1.442695
        %v2814 = vpow.pop %v2813
        %v2815 = vadd.f32 %v2814, 1.0
        %v2816 = vrcp.pop %v2815
        %v2817 = vmul.f32 1.0, %v2816
        %v2818 = vtanh.pop %v2811
        %v2819 = vmul.f32 %v2817, %v2775
        %2821 = vrot.lane.b32.xlu0 %v2818, 32
        %v2822 = vpop.permute.xlu0 %2821
        %v2824 = vmul.f32 %v2817, %v2822
        %2826 = vrot.lane.b32.xlu0 %v2824, 32
        %v2827 = vpop.permute.xlu0 %2826
        %v2829 = vadd.f32 %v2819, %v2827
        %v2830 = vtanh.pop %v2829
        %2832 = vrot.lane.b32.xlu0 %v2830, 32
        %v2833 = vpop.permute.xlu0 %2832
        %v2835 = vmul.f32 %v2817, %v2833
        %v2838 = vunpack.c.l.s4 1983009808
        %v2839 = vunpack.c.0.s8 %v2838
        %v2840 = vlaneseq
        %v2841 = vshrl.u32 %v2840, 7
        %v2842 = vsub.s32 %v2839, %v2841
        %v2843 = vrot.slane %v2810, %v2842
        %2844 = vrot.lane.b32.xlu0 %v2843, 64
        %v2845 = vpop.permute.xlu0 %2844
        %2847 = vst.msk [vmem:[#allocation2] sm:$0x3] %vm634, %v2845
        %v2850 = vunpack.c.l.s4 1983009808
        %v2851 = vunpack.c.0.s8 %v2850
        %v2852 = vlaneseq
        %v2853 = vshrl.u32 %v2852, 7
        %v2854 = vsub.s32 %v2851, %v2853
        %v2855 = vrot.slane %v2835, %v2854
        %2856 = vrot.lane.b32.xlu0 %v2855, 96
        %v2857 = vpop.permute.xlu0 %2856
        %2859 = vst.msk [vmem:[#allocation2] sm:$0x3] %vm647, %v2857
        %v2862 = vunpack.c.l.s4 1983009808
        %v2863 = vunpack.c.0.s8 %v2862
        %v2864 = vlaneseq
        %v2865 = vshrl.u32 %v2864, 7
        %v2866 = vsub.s32 %v2863, %v2865
        %v2867 = vrot.slane %v2804, %v2866
        %2868 = vrot.lane.b32.xlu0 %v2867, 96
        %v2869 = vpop.permute.xlu0 %2868
        %2871 = vst.msk [vmem:[#allocation3] sm:$0x3] %vm634, %v2869
        %2872 = vst.msk [vmem:[#allocation3] sm:$0x3] %vm647, %v2829
        %s2873 = scalar_lea.vmem %s443, 28
        %2874 = vst.msk [vmem:[%s2873] sm:$0x3] %vm634, %v2845
        %2875 = vrot.lane.b32.xlu0 %v2855, 64
        %v2876 = vpop.permute.xlu0 %2875
        %s2878 = scalar_lea.vmem %s450, 2
        %2879 = vst.msk [vmem:[%s2878] sm:$0x3] %vm634, %v2876
        %v2880 = vld [vmem:[#allocation2] sm:$0x3]
        %v2881 = vpack.c.bf16 %v2880, %v2880
        %v2883 = vsel %vm511, %v2881, 0
        %2885 = vmatprep.subr.bf16.mxu0 0
        %2886 = vmatpush1.bf16.msra.mxu0 0
        %2887 = vmatprep.subr.bf16.mxu0 0
        %2888 = vmatpush1.bf16.msra.mxu0 0
        %2889 = vmatprep.subr.bf16.mxu0 0
        %2890 = vmatpush1.bf16.msra.mxu0 0
        %2891 = vmatprep.subr.bf16.mxu0 0
        %2892 = vmatpush1.bf16.msra.mxu0 0
        %2893 = vmatprep.subr.bf16.mxu0 %v502
        %2894 = vmatpush1.bf16.msra.mxu0 %v501
        %2895 = vmatprep.subr.bf16.mxu0 %v500
        %2896 = vmatpush1.bf16.msra.mxu0 %v499
        %2897 = vmatprep.subr.bf16.mxu0 %v498
        %2898 = vmatpush1.bf16.msra.mxu0 %v497
        %2899 = vmatprep.subr.bf16.mxu0 %v496
        %2900 = vmatpush1.bf16.msra.mxu0 %v495
        %2901 = vmatprep.subr.bf16.mxu0 0
        %2902 = vmatpush2.bf16.msra.mxu0 0
        %2903 = vmatprep.subr.bf16.mxu0 0
        %2904 = vmatpush2.bf16.msra.mxu0 0
        %2905 = vmatprep.subr.bf16.mxu0 0
        %2906 = vmatpush2.bf16.msra.mxu0 0
        %2907 = vmatprep.subr.bf16.mxu0 0
        %2908 = vmatpush2.bf16.msra.mxu0 0
        %2909 = vmatprep.subr.bf16.mxu0 0
        %2910 = vmatpush2.bf16.msra.mxu0 0
        %2911 = vmatprep.subr.bf16.mxu0 0
        %2912 = vmatpush2.bf16.msra.mxu0 0
        %2913 = vmatprep.subr.bf16.mxu0 0
        %2914 = vmatpush2.bf16.msra.mxu0 0
        %2915 = vmatprep.subr.bf16.mxu0 0
        %2916 = vmatpush2.bf16.msra.mxu0 0
        %2917 = vmatprep.mubr.bf16.mxu0 0
        %2918 = vmatmul.mubr.bf16.gmra.mxu0 %v2883
        %v2919 = vpop.f32.mrf.mxu0
        %v2920 = vadd.f32 0.0, %v2919
        %v2921 = vpop.f32.mrf.mxu0
        %v2922 = vadd.f32 0.0, %v2921
        %v2923 = vpop.f32.mrf.mxu0
        %v2924 = vpop.f32.mrf.mxu0
        %2925 = vdwg.mxu0
        %s2926 = scalar_lea.vmem %s396, 15 [#allocation4]
        %v2927 = vld [vmem:[%s2926] sm:$0x1]
        %v2928 = vunpack.c.l.bf16 %v2927
        %v2929 = vld [vmem:[%s403] sm:$0x1]
        %v2930 = vunpack.c.l.bf16 %v2929
        %v2931 = vadd.f32 %v2928, %v2920
        %v2932 = vld [vmem:[#allocation3] sm:$0x3]
        %v2933 = vxor.u32 %v2931, 2147483648
        %v2934 = vmul.f32 %v2933, 1.442695
        %v2935 = vpow.pop %v2934
        %v2936 = vadd.f32 %v2935, 1.0
        %v2937 = vrcp.pop %v2936
        %v2938 = vmul.f32 1.0, %v2937
        %v2939 = vtanh.pop %v2931
        %v2942 = vunpack.c.l.s4 1983009808
        %v2943 = vunpack.c.0.s8 %v2942
        %v2944 = vlaneseq
        %v2945 = vshrl.u32 %v2944, 7
        %v2946 = vsub.s32 %v2943, %v2945
        %v2947 = vrot.slane %v2932, %v2946
        %2948 = vrot.lane.b32.xlu0 %v2947, 32
        %v2949 = vpop.permute.xlu0 %2948
        %v2951 = vmul.f32 %v2938, %v2949
        %2953 = vrot.lane.b32.xlu0 %v2939, 32
        %v2954 = vpop.permute.xlu0 %2953
        %v2956 = vmul.f32 %v2938, %v2954
        %2958 = vrot.lane.b32.xlu0 %v2956, 32
        %v2959 = vpop.permute.xlu0 %2958
        %v2961 = vadd.f32 %v2951, %v2959
        %v2962 = vtanh.pop %v2961
        %2964 = vrot.lane.b32.xlu0 %v2962, 32
        %v2965 = vpop.permute.xlu0 %2964
        %v2967 = vmul.f32 %v2938, %v2965
        %v2968 = vadd.f32 %v2930, %v2922
        %v2969 = vxor.u32 %v2968, 2147483648
        %v2970 = vmul.f32 %v2969, 1.442695
        %v2971 = vpow.pop %v2970
        %v2972 = vadd.f32 %v2971, 1.0
        %v2973 = vrcp.pop %v2972
        %v2974 = vmul.f32 1.0, %v2973
        %v2975 = vtanh.pop %v2968
        %v2976 = vmul.f32 %v2974, %v2932
        %2978 = vrot.lane.b32.xlu0 %v2975, 32
        %v2979 = vpop.permute.xlu0 %2978
        %v2981 = vmul.f32 %v2974, %v2979
        %2983 = vrot.lane.b32.xlu0 %v2981, 32
        %v2984 = vpop.permute.xlu0 %2983
        %v2986 = vadd.f32 %v2976, %v2984
        %v2987 = vtanh.pop %v2986
        %2989 = vrot.lane.b32.xlu0 %v2987, 32
        %v2990 = vpop.permute.xlu0 %2989
        %v2992 = vmul.f32 %v2974, %v2990
        %v2995 = vunpack.c.l.s4 1983009808
        %v2996 = vunpack.c.0.s8 %v2995
        %v2997 = vlaneseq
        %v2998 = vshrl.u32 %v2997, 7
        %v2999 = vsub.s32 %v2996, %v2998
        %v3000 = vrot.slane %v2967, %v2999
        %3001 = vrot.lane.b32.xlu0 %v3000, 64
        %v3002 = vpop.permute.xlu0 %3001
        %3004 = vst.msk [vmem:[#allocation2] sm:$0x3] %vm634, %v3002
        %v3007 = vunpack.c.l.s4 1983009808
        %v3008 = vunpack.c.0.s8 %v3007
        %v3009 = vlaneseq
        %v3010 = vshrl.u32 %v3009, 7
        %v3011 = vsub.s32 %v3008, %v3010
        %v3012 = vrot.slane %v2992, %v3011
        %3013 = vrot.lane.b32.xlu0 %v3012, 96
        %v3014 = vpop.permute.xlu0 %3013
        %3016 = vst.msk [vmem:[#allocation2] sm:$0x3] %vm647, %v3014
        %v3019 = vunpack.c.l.s4 1983009808
        %v3020 = vunpack.c.0.s8 %v3019
        %v3021 = vlaneseq
        %v3022 = vshrl.u32 %v3021, 7
        %v3023 = vsub.s32 %v3020, %v3022
        %v3024 = vrot.slane %v2961, %v3023
        %3025 = vrot.lane.b32.xlu0 %v3024, 96
        %v3026 = vpop.permute.xlu0 %3025
        %3028 = vst.msk [vmem:[#allocation3] sm:$0x3] %vm634, %v3026
        %3029 = vst.msk [vmem:[#allocation3] sm:$0x3] %vm647, %v2986
        %s3030 = scalar_lea.vmem %s443, 30
        %3031 = vst.msk [vmem:[%s3030] sm:$0x3] %vm634, %v3002
        %3032 = vrot.lane.b32.xlu0 %v3012, 64
        %v3033 = vpop.permute.xlu0 %3032
        %3035 = vst.msk [vmem:[%s450] sm:$0x3] %vm634, %v3033
        %s3036 = smul.u32 16, %s16
        %p3037 = scmp.lt.s32.totalorder %s3036, 31
        %s3038 = scalar_select %p3037, %s3036, 31
        %s3039 = smul.addr %s3038, 2
        %s3040 = scalar_lea.vmem %s3, %s3039
        %s3041 = ssub.s32 1, %s16
        %s3042 = smul.u32 16, %s3041
        %p3043 = scmp.lt.s32.totalorder %s3042, 31
        %s3044 = scalar_select %p3043, %s3042, 31
        %s3045 = smul.addr %s3044, 2
        %s3046 = scalar_lea.vmem %s4, %s3045
        // Predicated region
        $region119: #{forward.10} parent=105 // pred_check
          %p3047 = pneg %p109
        $region120: #{forward.10} parent=105 // pred_check_branch
          %3049 = sbr.rel (%p3047) target = $region122
        $region121: #{forward.10} parent=105 // pred_region
          %s3050 = smul.u32 16, %s16
        $region122: #{forward.10} parent=105 // pred_fallthru
          _
        // Predicated region
        $region123: #{forward.10} parent=105 // pred_check
          %p3051 = pneg %p137
        $region124: #{forward.10} parent=105 // pred_check_branch
          %3053 = sbr.rel (%p3051) target = $region126
        $region125: #{forward.10} parent=105 // pred_region
          %s3054 = ssub.s32 1, %s16
          %s3055 = smul.u32 16, %s3054
        $region126: #{forward.10} parent=105 // pred_fallthru
          _
      $region106: #{forward.10} parent=5 // pred_fallthru
        _
      %p3056 = scmp.le.s32.totalorder 2, %s11
      // Predicated region
      $region127: #{forward.10} parent=5 // pred_check
        %p3057 = pneg %p3056
      $region128: #{forward.10} parent=5 // pred_check_branch
        %3059 = sbr.rel (%p3057) target = $region130
      $region129: #{forward.10} parent=5 // pred_region
        %s3060 = ssub.s32 %s11, 2
        // Predicated region
        $region131: #{forward.10} parent=129 // pred_check
          %p3061 = pneg %p115
        $region132: #{forward.10} parent=129 // pred_check_branch
          %3063 = sbr.rel (%p3061) target = $region134
        $region133: #{forward.10} parent=129 // pred_region
          %s3064 = smul.u32 16, %s17
          %p3065 = scmp.lt.s32.totalorder %s3064, 31
          %s3066 = scalar_select %p3065, %s3064, 31
          %s3067 = smul.addr %s3066, 2
          %s3068 = scalar_lea.vmem %s3, %s3067
        $region134: #{forward.10} parent=129 // pred_fallthru
          _
        // Predicated region
        $region135: #{forward.10} parent=129 // pred_check
          %p3069 = pneg %p143
        $region136: #{forward.10} parent=129 // pred_check_branch
          %3071 = sbr.rel (%p3069) target = $region138
        $region137: #{forward.10} parent=129 // pred_region
          %s3072 = ssub.s32 1, %s17
          %s3073 = smul.u32 16, %s3072
          %p3074 = scmp.lt.s32.totalorder %s3073, 31
          %s3075 = scalar_select %p3074, %s3073, 31
          %s3076 = smul.addr %s3075, 2
          %s3077 = scalar_lea.vmem %s4, %s3076
        $region138: #{forward.10} parent=129 // pred_fallthru
          _
      $region130: #{forward.10} parent=5 // pred_fallthru
        _
    $region6: #{forward.10} parent=1 // loop_footer
      %s15 = sadd.s32 1, %s11
    $region7: #{forward.10} parent=1 // loop_footer_branch
      %10 = sbr.rel target = $region3
    $region8: #{forward.10} parent=1 // loop_exit
      _

</llo_original>
